<compile_context>
chip_gen: v7x
topology: tpu7x:2x2x1
jax: 0.10.0
libtpu: 0.0.40
codegen_flags: <defaults>
</compile_context>

<pallas_src>
import functools

import jax
import jax.numpy as jnp
from jax import lax
from jax.experimental import pallas as pl
from jax.experimental.pallas import tpu as pltpu

BN_EPS = 1e-5
LANE = 128


def _round_up(x, m):
    return ((x + m - 1) // m) * m


# ---------------------------------------------------------------------------
# Pallas kernels
# ---------------------------------------------------------------------------
def _fused_matmul_kernel(x_ref, w_ref, b_ref, o_ref, *, activation):
    acc = jnp.dot(x_ref[...], w_ref[...], preferred_element_type=jnp.float32)
    acc = acc + b_ref[...]
    if activation == "relu":
        acc = jnp.maximum(acc, 0.0)
    elif activation == "sigmoid":
        # sigmoid(x) = 0.5*(tanh(x/2)+1): tanh goes to the (idle) EUP slot and
        # keeps the result exactly within [0, 1].
        acc = 0.5 * (jnp.tanh(0.5 * acc) + 1.0)
    o_ref[...] = acc.astype(o_ref.dtype)


def fused_matmul(x, w, bias, *, activation="none", out_dtype=jnp.bfloat16):
    """x: (M, K) bf16 (M%8==0, K%16==0); w: (K, N) bf16 pre-padded (N%128==0);
    bias: (1, N) f32.  Returns (M, N) out_dtype."""
    M, K = x.shape
    Kw, N = w.shape
    assert K == Kw and M % 8 == 0 and K % 16 == 0 and N % LANE == 0, (x.shape, w.shape)
    grid_m = 2 if M >= 1024 else 1          # 2 parallel steps only on the big layer
    tile_m = M // grid_m
    return pl.pallas_call(
        functools.partial(_fused_matmul_kernel, activation=activation),
        out_shape=jax.ShapeDtypeStruct((M, N), out_dtype),
        grid_spec=pltpu.PrefetchScalarGridSpec(
            num_scalar_prefetch=0,
            grid=(grid_m,),
            in_specs=[
                pl.BlockSpec((tile_m, K), lambda i: (i, 0)),   # patch tile
                pl.BlockSpec((K, N), lambda i: (0, 0)),        # full weight
                pl.BlockSpec((1, N), lambda i: (0, 0)),        # bias row
            ],
            out_specs=pl.BlockSpec((tile_m, N), lambda i: (i, 0)),
        ),
        compiler_params=pltpu.CompilerParams(
            dimension_semantics=("parallel",)),
    )(x, w, bias)


def _classifier_kernel(x_ref, w1_ref, b1_ref, w2_ref, b2_ref, o_ref):
    h = jnp.dot(x_ref[...], w1_ref[...], preferred_element_type=jnp.float32)
    h = jnp.maximum(h + b1_ref[...], 0.0)
    out = jnp.dot(h.astype(w2_ref.dtype), w2_ref[...],
                  preferred_element_type=jnp.float32)
    o_ref[...] = (out + b2_ref[...]).astype(o_ref.dtype)


def classifier_fused(feat, w1, b1, w2, b2):
    """feat: (M, K1) bf16; w1: (K1, H) bf16; w2: (H, C) bf16 -> (M, C) f32."""
    M, K1 = feat.shape
    H = w1.shape[1]
    C = w2.shape[1]
    M_pad = _round_up(M, 8)                 # sublane minimum, not 128
    feat = jnp.pad(feat, ((0, M_pad - M), (0, 0)))
    out = pl.pallas_call(
        _classifier_kernel,
        out_shape=jax.ShapeDtypeStruct((M_pad, C), jnp.float32),
        grid_spec=pltpu.PrefetchScalarGridSpec(
            num_scalar_prefetch=0,
            grid=(1,),
            in_specs=[
                pl.BlockSpec((M_pad, K1), lambda i: (0, 0)),
                pl.BlockSpec((K1, H), lambda i: (0, 0)),
                pl.BlockSpec((1, H), lambda i: (0, 0)),
                pl.BlockSpec((H, C), lambda i: (0, 0)),
                pl.BlockSpec((1, C), lambda i: (0, 0)),
            ],
            out_specs=pl.BlockSpec((M_pad, C), lambda i: (0, 0)),
        ),
    )(feat, w1, b1, w2, b2)
    return out[:M]


# ---------------------------------------------------------------------------
# JAX glue: im2col (bf16), conv / transposed-conv wrappers.
# ---------------------------------------------------------------------------
def _im2col(x, k, stride, pad):
    """x: (B, H, W, C) -> (B, Ho, Wo, k*k*C), taps (kh, kw) outer, channel inner."""
    B, H, W, C = x.shape
    if pad:
        x = jnp.pad(x, ((0, 0), (pad, pad), (pad, pad), (0, 0)))
    Ho = (H + 2 * pad - k) // stride + 1
    Wo = (W + 2 * pad - k) // stride + 1
    taps = []
    for di in range(k):
        for dj in range(k):
            taps.append(x[:, di:di + stride * Ho:stride,
                          dj:dj + stride * Wo:stride, :])
    p = jnp.stack(taps, axis=-2)                     # (B, Ho, Wo, k*k, C)
    return p.reshape(B, Ho, Wo, k * k * C), Ho, Wo


def _conv_block(x, w, b, *, stride, pad, activation, out_ch):
    """3x3 conv: x (B,H,W,C) bf16, w (K_pad, 128) bf16 prepped -> (B,Ho,Wo,out_ch) bf16."""
    B = x.shape[0]
    patches, Ho, Wo = _im2col(x, 3, stride, pad)
    pm = patches.reshape(B * Ho * Wo, -1)
    K_pad = w.shape[0]
    if pm.shape[1] != K_pad:                         # only conv1 (27 -> 32)
        pm = jnp.pad(pm, ((0, 0), (0, K_pad - pm.shape[1])))
    out = fused_matmul(pm, w, b, activation=activation)
    return out.reshape(B, Ho, Wo, LANE)[..., :out_ch]


def _deconv_block(x, w, b, *, activation, out_ch):
    """ConvTranspose2d(k=3, stride=2, padding=1, output_padding=1) == direct 3x3
    stride-1 conv over the stride-2 zero-dilated input padded by (1, 2)."""
    zero = jnp.array(0, x.dtype)
    xd = lax.pad(x, zero, ((0, 0, 0), (1, 2, 1), (1, 2, 1), (0, 0, 0)))
    return _conv_block(xd, w, b, stride=1, pad=0, activation=activation,
                       out_ch=out_ch)


# ---------------------------------------------------------------------------
# Parameters: raw (PyTorch layouts) + one-time Pallas-ready preparation.
# ---------------------------------------------------------------------------
def init_raw_params(key):
    ks = iter(jax.random.split(key, 32))

    def w(shape, fan_in):
        return jax.random.normal(next(ks), shape, jnp.float32) / jnp.sqrt(fan_in)

    def b(shape):
        return 0.1 * jax.random.normal(next(ks), shape, jnp.float32)

    return {
        "conv1_w": w((32, 3, 3, 3), 27),   "conv1_b": b((32,)),
        "bn1_g": 1.0 + 0.1 * jax.random.normal(next(ks), (32,), jnp.float32),
        "bn1_b": b((32,)),
        "conv2_w": w((64, 32, 3, 3), 288), "conv2_b": b((64,)),
        "bn2_g": 1.0 + 0.1 * jax.random.normal(next(ks), (64,), jnp.float32),
        "bn2_b": b((64,)),
        "deconv1_w": w((64, 32, 3, 3), 576), "deconv1_b": b((32,)),
        "bn3_g": 1.0 + 0.1 * jax.random.normal(next(ks), (32,), jnp.float32),
        "bn3_b": b((32,)),
        "deconv2_w": w((32, 3, 3, 3), 288), "deconv2_b": b((3,)),
        "fc1_w": w((128, 64 * 8 * 8), 64 * 8 * 8), "fc1_b": b((128,)),
        "fc2_w": w((10, 128), 128), "fc2_b": b((10,)),
    }


def _bn_scale_bias(gamma, beta, conv_bias):
    # Inference-mode BN with running_mean=0, running_var=1 (see TODO above).
    scale = gamma / jnp.sqrt(1.0 + BN_EPS)
    return scale, conv_bias * scale + beta


def _prep_w(w_kn, scale):
    """(K, N) f32 -> fold per-channel scale, pad K->mult 16 / N->mult 128, bf16."""
    if scale is not None:
        w_kn = w_kn * scale[None, :]
    K, N = w_kn.shape
    wp = jnp.pad(w_kn, ((0, _round_up(K, 16) - K), (0, _round_up(N, LANE) - N)))
    return wp.astype(jnp.bfloat16)


def _prep_b(bias):
    N = bias.shape[0]
    return jnp.pad(bias, (0, _round_up(N, LANE) - N)).reshape(1, -1).astype(jnp.float32)


def prepare_params(p):
    """One-time weight prep: BN fold, (K,N) matmul layout, pad, bf16 cast."""
    out = {}
    # conv1 / conv2: OIHW -> (kh, kw, Cin, Cout) -> (k*k*Cin, Cout)
    s1, b1 = _bn_scale_bias(p["bn1_g"], p["bn1_b"], p["conv1_b"])
    out["conv1_w"] = _prep_w(jnp.transpose(p["conv1_w"], (2, 3, 1, 0)).reshape(27, 32), s1)
    out["conv1_b"] = _prep_b(b1)
    s2, b2 = _bn_scale_bias(p["bn2_g"], p["bn2_b"], p["conv2_b"])
    out["conv2_w"] = _prep_w(jnp.transpose(p["conv2_w"], (2, 3, 1, 0)).reshape(288, 64), s2)
    out["conv2_b"] = _prep_b(b2)
    # deconvs: ConvTranspose2d weight (Cin, Cout, kh, kw); equivalent direct-conv
    # weight = spatial flip + in/out swap -> (kh, kw, Cin, Cout) -> (k*k*Cin, Cout)
    s3, b3 = _bn_scale_bias(p["bn3_g"], p["bn3_b"], p["deconv1_b"])
    w3 = jnp.transpose(p["deconv1_w"][:, :, ::-1, ::-1], (2, 3, 0, 1)).reshape(576, 32)
    out["deconv1_w"], out["deconv1_b"] = _prep_w(w3, s3), _prep_b(b3)
    w4 = jnp.transpose(p["deconv2_w"][:, :, ::-1, ::-1], (2, 3, 0, 1)).reshape(288, 3)
    out["deconv2_w"], out["deconv2_b"] = _prep_w(w4, None), _prep_b(p["deconv2_b"])
    # fc1: torch (128, 4096) with input index c*64 + hw; re-permute rows to the
    # (hw, c) order produced by flattening the NHWC enc activation.
    w_fc1 = jnp.transpose(p["fc1_w"].reshape(128, 64, 64), (2, 1, 0)).reshape(4096, 128)
    out["fc1_w"], out["fc1_b"] = _prep_w(w_fc1, None), _prep_b(p["fc1_b"])
    out["fc2_w"], out["fc2_b"] = _prep_w(jnp.transpose(p["fc2_w"]), None), _prep_b(p["fc2_b"])
    return out


# ---------------------------------------------------------------------------
# Full forward pass (PyTorch NCHW in / out).
# ---------------------------------------------------------------------------
def autoencoder_forward(params, x_nchw):
    B = x_nchw.shape[0]
    x = jnp.transpose(x_nchw.astype(jnp.bfloat16), (0, 2, 3, 1))        # NHWC bf16

    # --- encoder ---
    h = _conv_block(x, params["conv1_w"], params["conv1_b"],
                    stride=2, pad=1, activation="relu", out_ch=32)      # (B,16,16,32)
    enc = _conv_block(h, params["conv2_w"], params["conv2_b"],
                      stride=2, pad=1, activation="relu", out_ch=64)    # (B,8,8,64)

    # --- decoder ---
    d = _deconv_block(enc, params["deconv1_w"], params["deconv1_b"],
                      activation="relu", out_ch=32)                     # (B,16,16,32)
    d = _deconv_block(d, params["deconv2_w"], params["deconv2_b"],
                      activation="sigmoid", out_ch=3)                   # (B,32,32,3)
    decoded = jnp.transpose(d, (0, 3, 1, 2)).astype(jnp.float32)        # NCHW f32

    # --- classifier: fc1 rows are pre-permuted so the NHWC flatten matches
    #     PyTorch's (C,H,W) Flatten; fc1+fc2 run fused in one kernel ---
    feat = enc.reshape(B, 64 * 8 * 8)                                   # bf16 (B,4096)
    logits = classifier_fused(feat, params["fc1_w"], params["fc1_b"],
                              params["fc2_w"], params["fc2_b"])[:, :10]
    return decoded, logits


if __name__ == "__main__":
    key = jax.random.PRNGKey(0)
    raw = init_raw_params(key)
    params = prepare_params(raw)            # one-time weight prep (outside jit)
    x = jax.random.normal(jax.random.fold_in(key, 999), (2, 3, 32, 32),
                          jnp.float32)

    fwd = jax.jit(autoencoder_forward)
    decoded, classified = fwd(params, x)
    jax.block_until_ready((decoded, classified))

    assert decoded.shape == (2, 3, 32, 32), decoded.shape
    assert classified.shape == (2, 10), classified.shape
    assert decoded.dtype == jnp.float32 and classified.dtype == jnp.float32
    # sigmoid output range sanity check
    assert float(decoded.min()) >= 0.0 and float(decoded.max()) <= 1.0
    print("KERNEL_OK")
</pallas_src>

<mosaic_0001>
module attributes {stable_mosaic.version = 11 : i64} {
  func.func @_fused_matmul_kernel(%arg0: i32, %arg1: memref<512x32xbf16, #tpu.memory_space<vmem>>, %arg2: memref<32x128xbf16, #tpu.memory_space<vmem>>, %arg3: memref<1x128xf32, #tpu.memory_space<vmem>>, %arg4: memref<512x128xbf16, #tpu.memory_space<vmem>>) attributes {dimension_semantics = [#tpu.dimension_semantics<parallel>], iteration_bounds = array<i64: 1>, scalar_prefetch = 0 : i64, scratch_operands = 0 : i64, tpu.core_type = #tpu.core_type<tc>, window_params = [{transform_indices = @transform_0, window_bounds = array<i64: 512, 32>}, {pipeline_mode = #tpu.pipeline_mode<synchronous>, transform_indices = @transform_1, window_bounds = array<i64: 32, 128>}, {pipeline_mode = #tpu.pipeline_mode<synchronous>, transform_indices = @transform_2, window_bounds = array<i64: 1, 128>}, {transform_indices = @transform_3, window_bounds = array<i64: 512, 128>}]} {
    %c0 = arith.constant 0 : index
    %c0_0 = arith.constant 0 : index
    %0 = vector.load %arg1[%c0, %c0_0] : memref<512x32xbf16, #tpu.memory_space<vmem>>, vector<512x32xbf16>
    %c0_1 = arith.constant 0 : index
    %c0_2 = arith.constant 0 : index
    %1 = vector.load %arg2[%c0_1, %c0_2] : memref<32x128xbf16, #tpu.memory_space<vmem>>, vector<32x128xbf16>
    %cst = arith.constant dense<0.000000e+00> : vector<512x128xf32>
    %2 = tpu.matmul %0, %1, %cst {dimension_numbers = #tpu.dot_dimension_numbers<[1], [0], [0], [1], [0, 0, 1, 1], [], []>} : vector<512x32xbf16>, vector<32x128xbf16>, vector<512x128xf32> -> vector<512x128xf32>
    %c0_3 = arith.constant 0 : index
    %c0_4 = arith.constant 0 : index
    %3 = vector.load %arg3[%c0_3, %c0_4] : memref<1x128xf32, #tpu.memory_space<vmem>>, vector<1x128xf32>
    %4 = vector.broadcast %3 : vector<1x128xf32> to vector<512x128xf32>
    %5 = arith.addf %2, %4 : vector<512x128xf32>
    %cst_5 = arith.constant 0.000000e+00 : f32
    %6 = vector.broadcast %cst_5 : f32 to vector<512x128xf32>
    %7 = arith.maximumf %5, %6 : vector<512x128xf32>
    %8 = arith.truncf %7 : vector<512x128xf32> to vector<512x128xbf16>
    %c0_6 = arith.constant 0 : index
    %c0_7 = arith.constant 0 : index
    %9 = vector.load %arg4[%c0_6, %c0_7] : memref<512x128xbf16, #tpu.memory_space<vmem>>, vector<512x128xbf16>
    tpu.vector_store %arg4[%c0_6, %c0_7], %8 {strides = array<i32>} : memref<512x128xbf16, #tpu.memory_space<vmem>>, vector<512x128xbf16>,
    return
  }
  func.func @transform_0(%arg0: i32) -> (i32, i32) {
    %c0_i32 = arith.constant 0 : i32
    %c0_i32_0 = arith.constant 0 : i32
    return %arg0, %c0_i32 : i32, i32
  }
  func.func @transform_1(%arg0: i32) -> (i32, i32) {
    %c0_i32 = arith.constant 0 : i32
    %c0_i32_0 = arith.constant 0 : i32
    %c0_i32_1 = arith.constant 0 : i32
    return %c0_i32, %c0_i32_0 : i32, i32
  }
  func.func @transform_2(%arg0: i32) -> (i32, i32) {
    %c0_i32 = arith.constant 0 : i32
    %c0_i32_0 = arith.constant 0 : i32
    %c0_i32_1 = arith.constant 0 : i32
    return %c0_i32, %c0_i32_0 : i32, i32
  }
  func.func @transform_3(%arg0: i32) -> (i32, i32) {
    %c0_i32 = arith.constant 0 : i32
    %c0_i32_0 = arith.constant 0 : i32
    return %arg0, %c0_i32 : i32, i32
  }
}

module attributes {stable_mosaic.version = 11 : i64} {
  func.func @_fused_matmul_kernel(%arg0: i32, %arg1: memref<128x288xbf16, #tpu.memory_space<vmem>>, %arg2: memref<288x128xbf16, #tpu.memory_space<vmem>>, %arg3: memref<1x128xf32, #tpu.memory_space<vmem>>, %arg4: memref<128x128xbf16, #tpu.memory_space<vmem>>) attributes {dimension_semantics = [#tpu.dimension_semantics<parallel>], iteration_bounds = array<i64: 1>, scalar_prefetch = 0 : i64, scratch_operands = 0 : i64, tpu.core_type = #tpu.core_type<tc>, window_params = [{transform_indices = @transform_0, window_bounds = array<i64: 128, 288>}, {pipeline_mode = #tpu.pipeline_mode<synchronous>, transform_indices = @transform_1, window_bounds = array<i64: 288, 128>}, {pipeline_mode = #tpu.pipeline_mode<synchronous>, transform_indices = @transform_2, window_bounds = array<i64: 1, 128>}, {transform_indices = @transform_3, window_bounds = array<i64: 128, 128>}]} {
    %c0 = arith.constant 0 : index
    %c0_0 = arith.constant 0 : index
    %0 = vector.load %arg1[%c0, %c0_0] : memref<128x288xbf16, #tpu.memory_space<vmem>>, vector<128x288xbf16>
    %c0_1 = arith.constant 0 : index
    %c0_2 = arith.constant 0 : index
    %1 = vector.load %arg2[%c0_1, %c0_2] : memref<288x128xbf16, #tpu.memory_space<vmem>>, vector<288x128xbf16>
    %cst = arith.constant dense<0.000000e+00> : vector<128x128xf32>
    %2 = tpu.matmul %0, %1, %cst {dimension_numbers = #tpu.dot_dimension_numbers<[1], [0], [0], [1], [0, 0, 1, 1], [], []>} : vector<128x288xbf16>, vector<288x128xbf16>, vector<128x128xf32> -> vector<128x128xf32>
    %c0_3 = arith.constant 0 : index
    %c0_4 = arith.constant 0 : index
    %3 = vector.load %arg3[%c0_3, %c0_4] : memref<1x128xf32, #tpu.memory_space<vmem>>, vector<1x128xf32>
    %4 = vector.broadcast %3 : vector<1x128xf32> to vector<128x128xf32>
    %5 = arith.addf %2, %4 : vector<128x128xf32>
    %cst_5 = arith.constant 0.000000e+00 : f32
    %6 = vector.broadcast %cst_5 : f32 to vector<128x128xf32>
    %7 = arith.maximumf %5, %6 : vector<128x128xf32>
    %8 = arith.truncf %7 : vector<128x128xf32> to vector<128x128xbf16>
    %c0_6 = arith.constant 0 : index
    %c0_7 = arith.constant 0 : index
    %9 = vector.load %arg4[%c0_6, %c0_7] : memref<128x128xbf16, #tpu.memory_space<vmem>>, vector<128x128xbf16>
    tpu.vector_store %arg4[%c0_6, %c0_7], %8 {strides = array<i32>} : memref<128x128xbf16, #tpu.memory_space<vmem>>, vector<128x128xbf16>,
    return
  }
  func.func @transform_0(%arg0: i32) -> (i32, i32) {
    %c0_i32 = arith.constant 0 : i32
    %c0_i32_0 = arith.constant 0 : i32
    return %arg0, %c0_i32 : i32, i32
  }
  func.func @transform_1(%arg0: i32) -> (i32, i32) {
    %c0_i32 = arith.constant 0 : i32
    %c0_i32_0 = arith.constant 0 : i32
    %c0_i32_1 = arith.constant 0 : i32
    return %c0_i32, %c0_i32_0 : i32, i32
  }
  func.func @transform_2(%arg0: i32) -> (i32, i32) {
    %c0_i32 = arith.constant 0 : i32
    %c0_i32_0 = arith.constant 0 : i32
    %c0_i32_1 = arith.constant 0 : i32
    return %c0_i32, %c0_i32_0 : i32, i32
  }
  func.func @transform_3(%arg0: i32) -> (i32, i32) {
    %c0_i32 = arith.constant 0 : i32
    %c0_i32_0 = arith.constant 0 : i32
    return %arg0, %c0_i32 : i32, i32
  }
}

module attributes {stable_mosaic.version = 11 : i64} {
  func.func @_classifier_kernel(%arg0: i32, %arg1: memref<8x4096xbf16, #tpu.memory_space<vmem>>, %arg2: memref<4096x128xbf16, #tpu.memory_space<vmem>>, %arg3: memref<1x128xf32, #tpu.memory_space<vmem>>, %arg4: memref<128x128xbf16, #tpu.memory_space<vmem>>, %arg5: memref<1x128xf32, #tpu.memory_space<vmem>>, %arg6: memref<8x128xf32, #tpu.memory_space<vmem>>) attributes {dimension_semantics = [#tpu.dimension_semantics<arbitrary>], iteration_bounds = array<i64: 1>, scalar_prefetch = 0 : i64, scratch_operands = 0 : i64, tpu.core_type = #tpu.core_type<tc>, window_params = [{pipeline_mode = #tpu.pipeline_mode<synchronous>, transform_indices = @transform_0, window_bounds = array<i64: 8, 4096>}, {pipeline_mode = #tpu.pipeline_mode<synchronous>, transform_indices = @transform_1, window_bounds = array<i64: 4096, 128>}, {pipeline_mode = #tpu.pipeline_mode<synchronous>, transform_indices = @transform_2, window_bounds = array<i64: 1, 128>}, {pipeline_mode = #tpu.pipeline_mode<synchronous>, transform_indices = @transform_3, window_bounds = array<i64: 128, 128>}, {pipeline_mode = #tpu.pipeline_mode<synchronous>, transform_indices = @transform_4, window_bounds = array<i64: 1, 128>}, {pipeline_mode = #tpu.pipeline_mode<synchronous>, transform_indices = @transform_5, window_bounds = array<i64: 8, 128>}]} {
    %c0 = arith.constant 0 : index
    %c0_0 = arith.constant 0 : index
    %0 = vector.load %arg1[%c0, %c0_0] : memref<8x4096xbf16, #tpu.memory_space<vmem>>, vector<8x4096xbf16>
    %c0_1 = arith.constant 0 : index
    %c0_2 = arith.constant 0 : index
    %1 = vector.load %arg2[%c0_1, %c0_2] : memref<4096x128xbf16, #tpu.memory_space<vmem>>, vector<4096x128xbf16>
    %cst = arith.constant dense<0.000000e+00> : vector<8x128xf32>
    %2 = tpu.matmul %0, %1, %cst {dimension_numbers = #tpu.dot_dimension_numbers<[1], [0], [0], [1], [0, 0, 1, 1], [], []>} : vector<8x4096xbf16>, vector<4096x128xbf16>, vector<8x128xf32> -> vector<8x128xf32>
    %c0_3 = arith.constant 0 : index
    %c0_4 = arith.constant 0 : index
    %3 = vector.load %arg3[%c0_3, %c0_4] : memref<1x128xf32, #tpu.memory_space<vmem>>, vector<1x128xf32>
    %4 = vector.broadcast %3 : vector<1x128xf32> to vector<8x128xf32>
    %5 = arith.addf %2, %4 : vector<8x128xf32>
    %cst_5 = arith.constant 0.000000e+00 : f32
    %6 = vector.broadcast %cst_5 : f32 to vector<8x128xf32>
    %7 = arith.maximumf %5, %6 : vector<8x128xf32>
    %8 = arith.truncf %7 : vector<8x128xf32> to vector<8x128xbf16>
    %c0_6 = arith.constant 0 : index
    %c0_7 = arith.constant 0 : index
    %9 = vector.load %arg4[%c0_6, %c0_7] : memref<128x128xbf16, #tpu.memory_space<vmem>>, vector<128x128xbf16>
    %cst_8 = arith.constant dense<0.000000e+00> : vector<8x128xf32>
    %10 = tpu.matmul %8, %9, %cst_8 {dimension_numbers = #tpu.dot_dimension_numbers<[1], [0], [0], [1], [0, 0, 1, 1], [], []>} : vector<8x128xbf16>, vector<128x128xbf16>, vector<8x128xf32> -> vector<8x128xf32>
    %c0_9 = arith.constant 0 : index
    %c0_10 = arith.constant 0 : index
    %11 = vector.load %arg5[%c0_9, %c0_10] : memref<1x128xf32, #tpu.memory_space<vmem>>, vector<1x128xf32>
    %12 = vector.broadcast %11 : vector<1x128xf32> to vector<8x128xf32>
    %13 = arith.addf %10, %12 : vector<8x128xf32>
    %c0_11 = arith.constant 0 : index
    %c0_12 = arith.constant 0 : index
    %14 = vector.load %arg6[%c0_11, %c0_12] : memref<8x128xf32, #tpu.memory_space<vmem>>, vector<8x128xf32>
    tpu.vector_store %arg6[%c0_11, %c0_12], %13 {strides = array<i32>} : memref<8x128xf32, #tpu.memory_space<vmem>>, vector<8x128xf32>,
    return
  }
  func.func @transform_0(%arg0: i32) -> (i32, i32) {
    %c0_i32 = arith.constant 0 : i32
    %c0_i32_0 = arith.constant 0 : i32
    %c0_i32_1 = arith.constant 0 : i32
    return %c0_i32, %c0_i32_0 : i32, i32
  }
  func.func @transform_1(%arg0: i32) -> (i32, i32) {
    %c0_i32 = arith.constant 0 : i32
    %c0_i32_0 = arith.constant 0 : i32
    %c0_i32_1 = arith.constant 0 : i32
    return %c0_i32, %c0_i32_0 : i32, i32
  }
  func.func @transform_2(%arg0: i32) -> (i32, i32) {
    %c0_i32 = arith.constant 0 : i32
    %c0_i32_0 = arith.constant 0 : i32
    %c0_i32_1 = arith.constant 0 : i32
    return %c0_i32, %c0_i32_0 : i32, i32
  }
  func.func @transform_3(%arg0: i32) -> (i32, i32) {
    %c0_i32 = arith.constant 0 : i32
    %c0_i32_0 = arith.constant 0 : i32
    %c0_i32_1 = arith.constant 0 : i32
    return %c0_i32, %c0_i32_0 : i32, i32
  }
  func.func @transform_4(%arg0: i32) -> (i32, i32) {
    %c0_i32 = arith.constant 0 : i32
    %c0_i32_0 = arith.constant 0 : i32
    %c0_i32_1 = arith.constant 0 : i32
    return %c0_i32, %c0_i32_0 : i32, i32
  }
  func.func @transform_5(%arg0: i32) -> (i32, i32) {
    %c0_i32 = arith.constant 0 : i32
    %c0_i32_0 = arith.constant 0 : i32
    %c0_i32_1 = arith.constant 0 : i32
    return %c0_i32, %c0_i32_0 : i32, i32
  }
}

module attributes {stable_mosaic.version = 11 : i64} {
  func.func @_fused_matmul_kernel(%arg0: i32, %arg1: memref<512x576xbf16, #tpu.memory_space<vmem>>, %arg2: memref<576x128xbf16, #tpu.memory_space<vmem>>, %arg3: memref<1x128xf32, #tpu.memory_space<vmem>>, %arg4: memref<512x128xbf16, #tpu.memory_space<vmem>>) attributes {dimension_semantics = [#tpu.dimension_semantics<parallel>], iteration_bounds = array<i64: 1>, scalar_prefetch = 0 : i64, scratch_operands = 0 : i64, tpu.core_type = #tpu.core_type<tc>, window_params = [{transform_indices = @transform_0, window_bounds = array<i64: 512, 576>}, {pipeline_mode = #tpu.pipeline_mode<synchronous>, transform_indices = @transform_1, window_bounds = array<i64: 576, 128>}, {pipeline_mode = #tpu.pipeline_mode<synchronous>, transform_indices = @transform_2, window_bounds = array<i64: 1, 128>}, {transform_indices = @transform_3, window_bounds = array<i64: 512, 128>}]} {
    %c0 = arith.constant 0 : index
    %c0_0 = arith.constant 0 : index
    %0 = vector.load %arg1[%c0, %c0_0] : memref<512x576xbf16, #tpu.memory_space<vmem>>, vector<512x576xbf16>
    %c0_1 = arith.constant 0 : index
    %c0_2 = arith.constant 0 : index
    %1 = vector.load %arg2[%c0_1, %c0_2] : memref<576x128xbf16, #tpu.memory_space<vmem>>, vector<576x128xbf16>
    %cst = arith.constant dense<0.000000e+00> : vector<512x128xf32>
    %2 = tpu.matmul %0, %1, %cst {dimension_numbers = #tpu.dot_dimension_numbers<[1], [0], [0], [1], [0, 0, 1, 1], [], []>} : vector<512x576xbf16>, vector<576x128xbf16>, vector<512x128xf32> -> vector<512x128xf32>
    %c0_3 = arith.constant 0 : index
    %c0_4 = arith.constant 0 : index
    %3 = vector.load %arg3[%c0_3, %c0_4] : memref<1x128xf32, #tpu.memory_space<vmem>>, vector<1x128xf32>
    %4 = vector.broadcast %3 : vector<1x128xf32> to vector<512x128xf32>
    %5 = arith.addf %2, %4 : vector<512x128xf32>
    %cst_5 = arith.constant 0.000000e+00 : f32
    %6 = vector.broadcast %cst_5 : f32 to vector<512x128xf32>
    %7 = arith.maximumf %5, %6 : vector<512x128xf32>
    %8 = arith.truncf %7 : vector<512x128xf32> to vector<512x128xbf16>
    %c0_6 = arith.constant 0 : index
    %c0_7 = arith.constant 0 : index
    %9 = vector.load %arg4[%c0_6, %c0_7] : memref<512x128xbf16, #tpu.memory_space<vmem>>, vector<512x128xbf16>
    tpu.vector_store %arg4[%c0_6, %c0_7], %8 {strides = array<i32>} : memref<512x128xbf16, #tpu.memory_space<vmem>>, vector<512x128xbf16>,
    return
  }
  func.func @transform_0(%arg0: i32) -> (i32, i32) {
    %c0_i32 = arith.constant 0 : i32
    %c0_i32_0 = arith.constant 0 : i32
    return %arg0, %c0_i32 : i32, i32
  }
  func.func @transform_1(%arg0: i32) -> (i32, i32) {
    %c0_i32 = arith.constant 0 : i32
    %c0_i32_0 = arith.constant 0 : i32
    %c0_i32_1 = arith.constant 0 : i32
    return %c0_i32, %c0_i32_0 : i32, i32
  }
  func.func @transform_2(%arg0: i32) -> (i32, i32) {
    %c0_i32 = arith.constant 0 : i32
    %c0_i32_0 = arith.constant 0 : i32
    %c0_i32_1 = arith.constant 0 : i32
    return %c0_i32, %c0_i32_0 : i32, i32
  }
  func.func @transform_3(%arg0: i32) -> (i32, i32) {
    %c0_i32 = arith.constant 0 : i32
    %c0_i32_0 = arith.constant 0 : i32
    return %arg0, %c0_i32 : i32, i32
  }
}

module attributes {stable_mosaic.version = 11 : i64} {
  func.func @_fused_matmul_kernel(%arg0: i32, %arg1: memref<1024x288xbf16, #tpu.memory_space<vmem>>, %arg2: memref<288x128xbf16, #tpu.memory_space<vmem>>, %arg3: memref<1x128xf32, #tpu.memory_space<vmem>>, %arg4: memref<1024x128xbf16, #tpu.memory_space<vmem>>) attributes {dimension_semantics = [#tpu.dimension_semantics<parallel>], iteration_bounds = array<i64: 2>, scalar_prefetch = 0 : i64, scratch_operands = 0 : i64, tpu.core_type = #tpu.core_type<tc>, window_params = [{transform_indices = @transform_0, window_bounds = array<i64: 1024, 288>}, {pipeline_mode = #tpu.pipeline_mode<synchronous>, transform_indices = @transform_1, window_bounds = array<i64: 288, 128>}, {pipeline_mode = #tpu.pipeline_mode<synchronous>, transform_indices = @transform_2, window_bounds = array<i64: 1, 128>}, {transform_indices = @transform_3, window_bounds = array<i64: 1024, 128>}]} {
    %c0 = arith.constant 0 : index
    %c0_0 = arith.constant 0 : index
    %0 = vector.load %arg1[%c0, %c0_0] : memref<1024x288xbf16, #tpu.memory_space<vmem>>, vector<1024x288xbf16>
    %c0_1 = arith.constant 0 : index
    %c0_2 = arith.constant 0 : index
    %1 = vector.load %arg2[%c0_1, %c0_2] : memref<288x128xbf16, #tpu.memory_space<vmem>>, vector<288x128xbf16>
    %cst = arith.constant dense<0.000000e+00> : vector<1024x128xf32>
    %2 = tpu.matmul %0, %1, %cst {dimension_numbers = #tpu.dot_dimension_numbers<[1], [0], [0], [1], [0, 0, 1, 1], [], []>} : vector<1024x288xbf16>, vector<288x128xbf16>, vector<1024x128xf32> -> vector<1024x128xf32>
    %c0_3 = arith.constant 0 : index
    %c0_4 = arith.constant 0 : index
    %3 = vector.load %arg3[%c0_3, %c0_4] : memref<1x128xf32, #tpu.memory_space<vmem>>, vector<1x128xf32>
    %4 = vector.broadcast %3 : vector<1x128xf32> to vector<1024x128xf32>
    %5 = arith.addf %2, %4 : vector<1024x128xf32>
    %cst_5 = arith.constant 5.000000e-01 : f32
    %6 = vector.broadcast %cst_5 : f32 to vector<1024x128xf32>
    %7 = arith.mulf %6, %5 : vector<1024x128xf32>
    %8 = math.tanh %7 : vector<1024x128xf32>
    %cst_6 = arith.constant 1.000000e+00 : f32
    %9 = vector.broadcast %cst_6 : f32 to vector<1024x128xf32>
    %10 = arith.addf %8, %9 : vector<1024x128xf32>
    %cst_7 = arith.constant 5.000000e-01 : f32
    %11 = vector.broadcast %cst_7 : f32 to vector<1024x128xf32>
    %12 = arith.mulf %11, %10 : vector<1024x128xf32>
    %13 = arith.truncf %12 : vector<1024x128xf32> to vector<1024x128xbf16>
    %c0_8 = arith.constant 0 : index
    %c0_9 = arith.constant 0 : index
    %14 = vector.load %arg4[%c0_8, %c0_9] : memref<1024x128xbf16, #tpu.memory_space<vmem>>, vector<1024x128xbf16>
    tpu.vector_store %arg4[%c0_8, %c0_9], %13 {strides = array<i32>} : memref<1024x128xbf16, #tpu.memory_space<vmem>>, vector<1024x128xbf16>,
    return
  }
  func.func @transform_0(%arg0: i32) -> (i32, i32) {
    %c0_i32 = arith.constant 0 : i32
    %c0_i32_0 = arith.constant 0 : i32
    return %arg0, %c0_i32 : i32, i32
  }
  func.func @transform_1(%arg0: i32) -> (i32, i32) {
    %c0_i32 = arith.constant 0 : i32
    %c0_i32_0 = arith.constant 0 : i32
    %c0_i32_1 = arith.constant 0 : i32
    return %c0_i32, %c0_i32_0 : i32, i32
  }
  func.func @transform_2(%arg0: i32) -> (i32, i32) {
    %c0_i32 = arith.constant 0 : i32
    %c0_i32_0 = arith.constant 0 : i32
    %c0_i32_1 = arith.constant 0 : i32
    return %c0_i32, %c0_i32_0 : i32, i32
  }
  func.func @transform_3(%arg0: i32) -> (i32, i32) {
    %c0_i32 = arith.constant 0 : i32
    %c0_i32_0 = arith.constant 0 : i32
    return %arg0, %c0_i32 : i32, i32
  }
}

</mosaic_0001>

<llo_original>
// kernel: autoencoder_forward.5
$region0: #{autoencoder_forward.5}
  #allocation0 [shape = 'u32[]', space=smem, size = 0x4, offset = 0x4, fixed_abs, tag = 'smem constant byte address 0x4 - core index']
  #allocation1 [shape = 'u32[144,128]{1,0:T(1,128)}', space=vmem, size = 0x12000, scoped, tag = 'internal scratch']
  %s0 = inlined_call_operand.vmem [shape: bf16[512,32], index: 0, kind: input, shape index: {}]
  %s1 = inlined_call_operand.vmem [shape: bf16[32,128], index: 1, kind: input, shape index: {}]
  %s2 = inlined_call_operand.vmem [shape: f32[1,128], index: 2, kind: input, shape index: {}]
  %s3 = inlined_call_operand.vmem [shape: bf16[512,128], index: 3, kind: output, shape index: {}]
  %s4 = sld [smem:[#allocation0]]
  $region22: #{autoencoder_forward.5} parent=0
    _
  %s6 = ssub.s32 1, %s4
  %s7 = scalar_select 0, %s6, %s4
  // Predicated region
  $region2: #{autoencoder_forward.5} parent=0 // pred_check
    _
  $region3: #{autoencoder_forward.5} parent=0 // pred_check_branch
    %9 = sbr.rel (0) target = $region5
  $region4: #{autoencoder_forward.5} parent=0 // pred_region
    _
  $region5: #{autoencoder_forward.5} parent=0 // pred_fallthru
    _
  // Predicated region
  $region6: #{autoencoder_forward.5} parent=0 // pred_check
    _
  $region7: #{autoencoder_forward.5} parent=0 // pred_check_branch
    %11 = sbr.rel (0) target = $region9
  $region8: #{autoencoder_forward.5} parent=0 // pred_region
    _
  $region9: #{autoencoder_forward.5} parent=0 // pred_fallthru
    _
  // Predicated region
  $region10: #{autoencoder_forward.5} parent=0 // pred_check
    _
  $region11: #{autoencoder_forward.5} parent=0 // pred_check_branch
    %13 = sbr.rel (0) target = $region13
  $region12: #{autoencoder_forward.5} parent=0 // pred_region
    _
  $region13: #{autoencoder_forward.5} parent=0 // pred_fallthru
    _
  %v15 = vld [vmem:[%s0] sm:$0xf]
  %v16 = vld [vmem:[%s0 + $0x4] sm:$0xf]
  %v17 = vld [vmem:[%s0 + $0x8] sm:$0xf]
  %v18 = vld [vmem:[%s0 + $0xc] sm:$0xf]
  %v19 = vld [vmem:[%s0 + $0x10] sm:$0xf]
  %v20 = vld [vmem:[%s0 + $0x14] sm:$0xf]
  %v21 = vld [vmem:[%s0 + $0x18] sm:$0xf]
  %v22 = vld [vmem:[%s0 + $0x1c] sm:$0xf]
  %v23 = vld [vmem:[%s0 + $0x20] sm:$0xf]
  %v24 = vld [vmem:[%s0 + $0x24] sm:$0xf]
  %v25 = vld [vmem:[%s0 + $0x28] sm:$0xf]
  %v26 = vld [vmem:[%s0 + $0x2c] sm:$0xf]
  %v27 = vld [vmem:[%s0 + $0x30] sm:$0xf]
  %v28 = vld [vmem:[%s0 + $0x34] sm:$0xf]
  %v29 = vld [vmem:[%s0 + $0x38] sm:$0xf]
  %v30 = vld [vmem:[%s0 + $0x3c] sm:$0xf]
  %v31 = vld [vmem:[%s0 + $0x40] sm:$0xf]
  %v32 = vld [vmem:[%s0 + $0x44] sm:$0xf]
  %v33 = vld [vmem:[%s0 + $0x48] sm:$0xf]
  %v34 = vld [vmem:[%s0 + $0x4c] sm:$0xf]
  %v35 = vld [vmem:[%s0 + $0x50] sm:$0xf]
  %v36 = vld [vmem:[%s0 + $0x54] sm:$0xf]
  %v37 = vld [vmem:[%s0 + $0x58] sm:$0xf]
  %v38 = vld [vmem:[%s0 + $0x5c] sm:$0xf]
  %v39 = vld [vmem:[%s0 + $0x60] sm:$0xf]
  %v40 = vld [vmem:[%s0 + $0x64] sm:$0xf]
  %v41 = vld [vmem:[%s0 + $0x68] sm:$0xf]
  %v42 = vld [vmem:[%s0 + $0x6c] sm:$0xf]
  %v43 = vld [vmem:[%s0 + $0x70] sm:$0xf]
  %v44 = vld [vmem:[%s0 + $0x74] sm:$0xf]
  %v45 = vld [vmem:[%s0 + $0x78] sm:$0xf]
  %v46 = vld [vmem:[%s0 + $0x7c] sm:$0xf]
  %v47 = vld [vmem:[%s0 + $0x80] sm:$0xf]
  %v48 = vld [vmem:[%s0 + $0x84] sm:$0xf]
  %v49 = vld [vmem:[%s0 + $0x88] sm:$0xf]
  %v50 = vld [vmem:[%s0 + $0x8c] sm:$0xf]
  %v51 = vld [vmem:[%s0 + $0x90] sm:$0xf]
  %v52 = vld [vmem:[%s0 + $0x94] sm:$0xf]
  %v53 = vld [vmem:[%s0 + $0x98] sm:$0xf]
  %v54 = vld [vmem:[%s0 + $0x9c] sm:$0xf]
  %v55 = vld [vmem:[%s0 + $0xa0] sm:$0xf]
  %v56 = vld [vmem:[%s0 + $0xa4] sm:$0xf]
  %v57 = vld [vmem:[%s0 + $0xa8] sm:$0xf]
  %v58 = vld [vmem:[%s0 + $0xac] sm:$0xf]
  %v59 = vld [vmem:[%s0 + $0xb0] sm:$0xf]
  %v60 = vld [vmem:[%s0 + $0xb4] sm:$0xf]
  %v61 = vld [vmem:[%s0 + $0xb8] sm:$0xf]
  %v62 = vld [vmem:[%s0 + $0xbc] sm:$0xf]
  %v63 = vld [vmem:[%s0 + $0xc0] sm:$0xf]
  %v64 = vld [vmem:[%s0 + $0xc4] sm:$0xf]
  %v65 = vld [vmem:[%s0 + $0xc8] sm:$0xf]
  %v66 = vld [vmem:[%s0 + $0xcc] sm:$0xf]
  %v67 = vld [vmem:[%s0 + $0xd0] sm:$0xf]
  %v68 = vld [vmem:[%s0 + $0xd4] sm:$0xf]
  %v69 = vld [vmem:[%s0 + $0xd8] sm:$0xf]
  %v70 = vld [vmem:[%s0 + $0xdc] sm:$0xf]
  %v71 = vld [vmem:[%s0 + $0xe0] sm:$0xf]
  %v72 = vld [vmem:[%s0 + $0xe4] sm:$0xf]
  %v73 = vld [vmem:[%s0 + $0xe8] sm:$0xf]
  %v74 = vld [vmem:[%s0 + $0xec] sm:$0xf]
  %v75 = vld [vmem:[%s0 + $0xf0] sm:$0xf]
  %v76 = vld [vmem:[%s0 + $0xf4] sm:$0xf]
  %v77 = vld [vmem:[%s0 + $0xf8] sm:$0xf]
  %v78 = vld [vmem:[%s0 + $0xfc] sm:$0xf]
  %v79 = vld [vmem:[%s1] sm:$0xf]
  %v80 = vld [vmem:[%s1 + $0x4] sm:$0xf]
  %v81 = vld [vmem:[%s1 + $0x8] sm:$0xf]
  %v82 = vld [vmem:[%s1 + $0xc] sm:$0xf]
  %v83 = vld [vmem:[%s2] sm:$0x1]
  %v85 = vlaneseq
  %v86 = vshrl.u32 %v85, 7
  %v87 = vsub.s32 0, %v86
  %v88 = vrot.slane %v83, %v87
  %v154 = vunpack.c.l.b16 %v15
  %v155 = vunpack.c.l.b16 %v16
  %v156 = vunpack.c.l.b16 %v17
  %v157 = vunpack.c.l.b16 %v18
  %v158 = vunpack.c.l.b16 %v19
  %v159 = vunpack.c.l.b16 %v20
  %v160 = vunpack.c.l.b16 %v21
  %v161 = vunpack.c.l.b16 %v22
  %v162 = vunpack.c.l.b16 %v23
  %v163 = vunpack.c.l.b16 %v24
  %v164 = vunpack.c.l.b16 %v25
  %v165 = vunpack.c.l.b16 %v26
  %v166 = vunpack.c.l.b16 %v27
  %v167 = vunpack.c.l.b16 %v28
  %v168 = vunpack.c.l.b16 %v29
  %v169 = vunpack.c.l.b16 %v30
  %v170 = vunpack.c.l.b16 %v31
  %v171 = vunpack.c.l.b16 %v32
  %v172 = vunpack.c.l.b16 %v33
  %v173 = vunpack.c.l.b16 %v34
  %v174 = vunpack.c.l.b16 %v35
  %v175 = vunpack.c.l.b16 %v36
  %v176 = vunpack.c.l.b16 %v37
  %v177 = vunpack.c.l.b16 %v38
  %v178 = vunpack.c.l.b16 %v39
  %v179 = vunpack.c.l.b16 %v40
  %v180 = vunpack.c.l.b16 %v41
  %v181 = vunpack.c.l.b16 %v42
  %v182 = vunpack.c.l.b16 %v43
  %v183 = vunpack.c.l.b16 %v44
  %v184 = vunpack.c.l.b16 %v45
  %v185 = vunpack.c.l.b16 %v46
  %v186 = vunpack.c.l.b16 %v47
  %v187 = vunpack.c.l.b16 %v48
  %v188 = vunpack.c.l.b16 %v49
  %v189 = vunpack.c.l.b16 %v50
  %v190 = vunpack.c.l.b16 %v51
  %v191 = vunpack.c.l.b16 %v52
  %v192 = vunpack.c.l.b16 %v53
  %v193 = vunpack.c.l.b16 %v54
  %v194 = vunpack.c.l.b16 %v55
  %v195 = vunpack.c.l.b16 %v56
  %v196 = vunpack.c.l.b16 %v57
  %v197 = vunpack.c.l.b16 %v58
  %v198 = vunpack.c.l.b16 %v59
  %v199 = vunpack.c.l.b16 %v60
  %v200 = vunpack.c.l.b16 %v61
  %v201 = vunpack.c.l.b16 %v62
  %v202 = vunpack.c.l.b16 %v63
  %v203 = vunpack.c.l.b16 %v64
  %v204 = vunpack.c.l.b16 %v65
  %v205 = vunpack.c.l.b16 %v66
  %v206 = vunpack.c.l.b16 %v67
  %v207 = vunpack.c.l.b16 %v68
  %v208 = vunpack.c.l.b16 %v69
  %v209 = vunpack.c.l.b16 %v70
  %v210 = vunpack.c.l.b16 %v71
  %v211 = vunpack.c.l.b16 %v72
  %v212 = vunpack.c.l.b16 %v73
  %v213 = vunpack.c.l.b16 %v74
  %v214 = vunpack.c.l.b16 %v75
  %v215 = vunpack.c.l.b16 %v76
  %v216 = vunpack.c.l.b16 %v77
  %v217 = vunpack.c.l.b16 %v78
  %v218 = vpack.c.b16 %v155, %v154
  %v219 = vpack.c.b16 %v157, %v156
  %v220 = vpack.c.b16 %v159, %v158
  %v221 = vpack.c.b16 %v161, %v160
  %v222 = vpack.c.b16 %v163, %v162
  %v223 = vpack.c.b16 %v165, %v164
  %v224 = vpack.c.b16 %v167, %v166
  %v225 = vpack.c.b16 %v169, %v168
  %v226 = vpack.c.b16 %v171, %v170
  %v227 = vpack.c.b16 %v173, %v172
  %v228 = vpack.c.b16 %v175, %v174
  %v229 = vpack.c.b16 %v177, %v176
  %v230 = vpack.c.b16 %v179, %v178
  %v231 = vpack.c.b16 %v181, %v180
  %v232 = vpack.c.b16 %v183, %v182
  %v233 = vpack.c.b16 %v185, %v184
  %v234 = vpack.c.b16 %v187, %v186
  %v235 = vpack.c.b16 %v189, %v188
  %v236 = vpack.c.b16 %v191, %v190
  %v237 = vpack.c.b16 %v193, %v192
  %v238 = vpack.c.b16 %v195, %v194
  %v239 = vpack.c.b16 %v197, %v196
  %v240 = vpack.c.b16 %v199, %v198
  %v241 = vpack.c.b16 %v201, %v200
  %v242 = vpack.c.b16 %v203, %v202
  %v243 = vpack.c.b16 %v205, %v204
  %v244 = vpack.c.b16 %v207, %v206
  %v245 = vpack.c.b16 %v209, %v208
  %v246 = vpack.c.b16 %v211, %v210
  %v247 = vpack.c.b16 %v213, %v212
  %v248 = vpack.c.b16 %v215, %v214
  %v249 = vpack.c.b16 %v217, %v216
  %v254 = vunpack.c.l.b16 %v79
  %v255 = vunpack.c.l.b16 %v80
  %v256 = vunpack.c.l.b16 %v81
  %v257 = vunpack.c.l.b16 %v82
  %v258 = vpack.c.b16 %v255, %v254
  %v259 = vpack.c.b16 %v257, %v256
  %vm262 = vcmask 261120
  %v264 = vsel %vm262, %v218, 0
  %v267 = vsel %vm262, %v219, 0
  %v270 = vsel %vm262, %v220, 0
  %v273 = vsel %vm262, %v221, 0
  %v276 = vsel %vm262, %v222, 0
  %v279 = vsel %vm262, %v223, 0
  %v282 = vsel %vm262, %v224, 0
  %v285 = vsel %vm262, %v225, 0
  %v288 = vsel %vm262, %v226, 0
  %v291 = vsel %vm262, %v227, 0
  %v294 = vsel %vm262, %v228, 0
  %v297 = vsel %vm262, %v229, 0
  %v300 = vsel %vm262, %v230, 0
  %v303 = vsel %vm262, %v231, 0
  %v306 = vsel %vm262, %v232, 0
  %v309 = vsel %vm262, %v233, 0
  %v312 = vsel %vm262, %v234, 0
  %v315 = vsel %vm262, %v235, 0
  %v318 = vsel %vm262, %v236, 0
  %v321 = vsel %vm262, %v237, 0
  %v324 = vsel %vm262, %v238, 0
  %v327 = vsel %vm262, %v239, 0
  %v330 = vsel %vm262, %v240, 0
  %v333 = vsel %vm262, %v241, 0
  %v336 = vsel %vm262, %v242, 0
  %v339 = vsel %vm262, %v243, 0
  %v342 = vsel %vm262, %v244, 0
  %v345 = vsel %vm262, %v245, 0
  %v348 = vsel %vm262, %v246, 0
  %v351 = vsel %vm262, %v247, 0
  %v354 = vsel %vm262, %v248, 0
  %v357 = vsel %vm262, %v249, 0
  %359 = vmatprep.subr.bf16.mxu0 0
  %360 = vmatpush1.bf16.msra.mxu0 %v258
  %361 = vmatprep.subr.bf16.mxu0 0
  %362 = vmatpush1.bf16.msra.mxu0 %v259
  %363 = vmatprep.subr.bf16.mxu0 0
  %364 = vmatpush1.bf16.msra.mxu0 0
  %365 = vmatprep.subr.bf16.mxu0 0
  %366 = vmatpush1.bf16.msra.mxu0 0
  %367 = vmatprep.subr.bf16.mxu0 0
  %368 = vmatpush1.bf16.msra.mxu0 0
  %369 = vmatprep.subr.bf16.mxu0 0
  %370 = vmatpush1.bf16.msra.mxu0 0
  %371 = vmatprep.subr.bf16.mxu0 0
  %372 = vmatpush1.bf16.msra.mxu0 0
  %373 = vmatprep.subr.bf16.mxu0 0
  %374 = vmatpush1.bf16.msra.mxu0 0
  %375 = vmatprep.subr.bf16.mxu0 0
  %376 = vmatpush1.bf16.msra.mxu0 0
  %377 = vmatprep.subr.bf16.mxu0 0
  %378 = vmatpush1.bf16.msra.mxu0 0
  %379 = vmatprep.subr.bf16.mxu0 0
  %380 = vmatpush1.bf16.msra.mxu0 0
  %381 = vmatprep.subr.bf16.mxu0 0
  %382 = vmatpush1.bf16.msra.mxu0 0
  %383 = vmatprep.subr.bf16.mxu0 0
  %384 = vmatpush1.bf16.msra.mxu0 0
  %385 = vmatprep.subr.bf16.mxu0 0
  %386 = vmatpush1.bf16.msra.mxu0 0
  %387 = vmatprep.subr.bf16.mxu0 0
  %388 = vmatpush1.bf16.msra.mxu0 0
  %389 = vmatprep.subr.bf16.mxu0 0
  %390 = vmatpush1.bf16.msra.mxu0 0
  %391 = vmatprep.mubr.bf16.mxu0 0
  %392 = vmatmul.mubr.bf16.gmra.mrb[0].mxu0 %v264
  %v393 = vpop.f32.mrb[0].mxu0
  %v394 = vadd.f32 %v88, %v393
  %v395 = vpop.f32.mrb[0].mxu0
  %v396 = vpop.f32.mrb[0].mxu0
  %v397 = vadd.f32 %v88, %v396
  %v398 = vpop.f32.mrb[0].mxu0
  %399 = vmatprep.mubr.bf16.mxu0 0
  %400 = vmatmul.mubr.bf16.gmra.mrb[0].mxu0 %v267
  %v401 = vpop.f32.mrb[0].mxu0
  %v402 = vadd.f32 %v88, %v401
  %v403 = vpop.f32.mrb[0].mxu0
  %v404 = vpop.f32.mrb[0].mxu0
  %v405 = vadd.f32 %v88, %v404
  %v406 = vpop.f32.mrb[0].mxu0
  %407 = vmatprep.mubr.bf16.mxu0 0
  %408 = vmatmul.mubr.bf16.gmra.mrb[0].mxu0 %v270
  %v409 = vpop.f32.mrb[0].mxu0
  %v410 = vadd.f32 %v88, %v409
  %v411 = vpop.f32.mrb[0].mxu0
  %v412 = vpop.f32.mrb[0].mxu0
  %v413 = vadd.f32 %v88, %v412
  %v414 = vpop.f32.mrb[0].mxu0
  %415 = vmatprep.mubr.bf16.mxu0 0
  %416 = vmatmul.mubr.bf16.gmra.mrb[0].mxu0 %v273
  %v417 = vpop.f32.mrb[0].mxu0
  %v418 = vadd.f32 %v88, %v417
  %v419 = vpop.f32.mrb[0].mxu0
  %v420 = vpop.f32.mrb[0].mxu0
  %v421 = vadd.f32 %v88, %v420
  %v422 = vpop.f32.mrb[0].mxu0
  %423 = vmatprep.mubr.bf16.mxu0 0
  %424 = vmatmul.mubr.bf16.gmra.mrb[0].mxu0 %v276
  %v425 = vpop.f32.mrb[0].mxu0
  %v426 = vadd.f32 %v88, %v425
  %v427 = vpop.f32.mrb[0].mxu0
  %v428 = vpop.f32.mrb[0].mxu0
  %v429 = vadd.f32 %v88, %v428
  %v430 = vpop.f32.mrb[0].mxu0
  %431 = vmatprep.mubr.bf16.mxu0 0
  %432 = vmatmul.mubr.bf16.gmra.mrb[0].mxu0 %v279
  %v433 = vpop.f32.mrb[0].mxu0
  %v434 = vadd.f32 %v88, %v433
  %v435 = vpop.f32.mrb[0].mxu0
  %v436 = vpop.f32.mrb[0].mxu0
  %v437 = vadd.f32 %v88, %v436
  %v438 = vpop.f32.mrb[0].mxu0
  %439 = vmatprep.mubr.bf16.mxu0 0
  %440 = vmatmul.mubr.bf16.gmra.mrb[0].mxu0 %v282
  %v441 = vpop.f32.mrb[0].mxu0
  %v442 = vadd.f32 %v88, %v441
  %v443 = vpop.f32.mrb[0].mxu0
  %v444 = vpop.f32.mrb[0].mxu0
  %v445 = vadd.f32 %v88, %v444
  %v446 = vpop.f32.mrb[0].mxu0
  %447 = vmatprep.mubr.bf16.mxu0 0
  %448 = vmatmul.mubr.bf16.gmra.mrb[0].mxu0 %v285
  %v449 = vpop.f32.mrb[0].mxu0
  %v450 = vadd.f32 %v88, %v449
  %v451 = vpop.f32.mrb[0].mxu0
  %v452 = vpop.f32.mrb[0].mxu0
  %v453 = vadd.f32 %v88, %v452
  %v454 = vpop.f32.mrb[0].mxu0
  %455 = vmatprep.mubr.bf16.mxu0 0
  %456 = vmatmul.mubr.bf16.gmra.mrb[0].mxu0 %v288
  %v457 = vpop.f32.mrb[0].mxu0
  %v458 = vadd.f32 %v88, %v457
  %v459 = vpop.f32.mrb[0].mxu0
  %v460 = vpop.f32.mrb[0].mxu0
  %v461 = vadd.f32 %v88, %v460
  %v462 = vpop.f32.mrb[0].mxu0
  %463 = vmatprep.mubr.bf16.mxu0 0
  %464 = vmatmul.mubr.bf16.gmra.mrb[0].mxu0 %v291
  %v465 = vpop.f32.mrb[0].mxu0
  %v466 = vadd.f32 %v88, %v465
  %v467 = vpop.f32.mrb[0].mxu0
  %v468 = vpop.f32.mrb[0].mxu0
  %v469 = vadd.f32 %v88, %v468
  %v470 = vpop.f32.mrb[0].mxu0
  %471 = vmatprep.mubr.bf16.mxu0 0
  %472 = vmatmul.mubr.bf16.gmra.mrb[0].mxu0 %v294
  %v473 = vpop.f32.mrb[0].mxu0
  %v474 = vadd.f32 %v88, %v473
  %v475 = vpop.f32.mrb[0].mxu0
  %v476 = vpop.f32.mrb[0].mxu0
  %v477 = vadd.f32 %v88, %v476
  %v478 = vpop.f32.mrb[0].mxu0
  %479 = vmatprep.mubr.bf16.mxu0 0
  %480 = vmatmul.mubr.bf16.gmra.mrb[0].mxu0 %v297
  %v481 = vpop.f32.mrb[0].mxu0
  %v482 = vadd.f32 %v88, %v481
  %v483 = vpop.f32.mrb[0].mxu0
  %v484 = vpop.f32.mrb[0].mxu0
  %v485 = vadd.f32 %v88, %v484
  %v486 = vpop.f32.mrb[0].mxu0
  %487 = vmatprep.mubr.bf16.mxu0 0
  %488 = vmatmul.mubr.bf16.gmra.mrb[0].mxu0 %v300
  %v489 = vpop.f32.mrb[0].mxu0
  %v490 = vadd.f32 %v88, %v489
  %v491 = vpop.f32.mrb[0].mxu0
  %v492 = vpop.f32.mrb[0].mxu0
  %v493 = vadd.f32 %v88, %v492
  %v494 = vpop.f32.mrb[0].mxu0
  %495 = vmatprep.mubr.bf16.mxu0 0
  %496 = vmatmul.mubr.bf16.gmra.mrb[0].mxu0 %v303
  %v497 = vpop.f32.mrb[0].mxu0
  %v498 = vadd.f32 %v88, %v497
  %v499 = vpop.f32.mrb[0].mxu0
  %v500 = vpop.f32.mrb[0].mxu0
  %v501 = vadd.f32 %v88, %v500
  %v502 = vpop.f32.mrb[0].mxu0
  %503 = vmatprep.mubr.bf16.mxu0 0
  %504 = vmatmul.mubr.bf16.gmra.mrb[0].mxu0 %v306
  %v505 = vpop.f32.mrb[0].mxu0
  %v506 = vadd.f32 %v88, %v505
  %v507 = vpop.f32.mrb[0].mxu0
  %v508 = vpop.f32.mrb[0].mxu0
  %v509 = vadd.f32 %v88, %v508
  %v510 = vpop.f32.mrb[0].mxu0
  %511 = vmatprep.mubr.bf16.mxu0 0
  %512 = vmatmul.mubr.bf16.gmra.mrb[0].mxu0 %v309
  %v513 = vpop.f32.mrb[0].mxu0
  %v514 = vadd.f32 %v88, %v513
  %v515 = vpop.f32.mrb[0].mxu0
  %v516 = vpop.f32.mrb[0].mxu0
  %v517 = vadd.f32 %v88, %v516
  %v518 = vpop.f32.mrb[0].mxu0
  %519 = vmatprep.mubr.bf16.mxu0 0
  %520 = vmatmul.mubr.bf16.gmra.mrb[0].mxu0 %v312
  %v521 = vpop.f32.mrb[0].mxu0
  %v522 = vadd.f32 %v88, %v521
  %v523 = vpop.f32.mrb[0].mxu0
  %v524 = vpop.f32.mrb[0].mxu0
  %v525 = vadd.f32 %v88, %v524
  %v526 = vpop.f32.mrb[0].mxu0
  %527 = vmatprep.mubr.bf16.mxu0 0
  %528 = vmatmul.mubr.bf16.gmra.mrb[0].mxu0 %v315
  %v529 = vpop.f32.mrb[0].mxu0
  %v530 = vadd.f32 %v88, %v529
  %v531 = vpop.f32.mrb[0].mxu0
  %v532 = vpop.f32.mrb[0].mxu0
  %v533 = vadd.f32 %v88, %v532
  %v534 = vpop.f32.mrb[0].mxu0
  %535 = vmatprep.mubr.bf16.mxu0 0
  %536 = vmatmul.mubr.bf16.gmra.mrb[0].mxu0 %v318
  %v537 = vpop.f32.mrb[0].mxu0
  %v538 = vadd.f32 %v88, %v537
  %v539 = vpop.f32.mrb[0].mxu0
  %v540 = vpop.f32.mrb[0].mxu0
  %v541 = vadd.f32 %v88, %v540
  %v542 = vpop.f32.mrb[0].mxu0
  %543 = vmatprep.mubr.bf16.mxu0 0
  %544 = vmatmul.mubr.bf16.gmra.mrb[0].mxu0 %v321
  %v545 = vpop.f32.mrb[0].mxu0
  %v546 = vadd.f32 %v88, %v545
  %v547 = vpop.f32.mrb[0].mxu0
  %v548 = vpop.f32.mrb[0].mxu0
  %v549 = vadd.f32 %v88, %v548
  %v550 = vpop.f32.mrb[0].mxu0
  %551 = vmatprep.mubr.bf16.mxu0 0
  %552 = vmatmul.mubr.bf16.gmra.mrb[0].mxu0 %v324
  %v553 = vpop.f32.mrb[0].mxu0
  %v554 = vadd.f32 %v88, %v553
  %v555 = vpop.f32.mrb[0].mxu0
  %v556 = vpop.f32.mrb[0].mxu0
  %v557 = vadd.f32 %v88, %v556
  %v558 = vpop.f32.mrb[0].mxu0
  %559 = vmatprep.mubr.bf16.mxu0 0
  %560 = vmatmul.mubr.bf16.gmra.mrb[0].mxu0 %v327
  %v561 = vpop.f32.mrb[0].mxu0
  %v562 = vadd.f32 %v88, %v561
  %v563 = vpop.f32.mrb[0].mxu0
  %v564 = vpop.f32.mrb[0].mxu0
  %v565 = vadd.f32 %v88, %v564
  %v566 = vpop.f32.mrb[0].mxu0
  %567 = vmatprep.mubr.bf16.mxu0 0
  %568 = vmatmul.mubr.bf16.gmra.mrb[0].mxu0 %v330
  %v569 = vpop.f32.mrb[0].mxu0
  %v570 = vadd.f32 %v88, %v569
  %v571 = vpop.f32.mrb[0].mxu0
  %v572 = vpop.f32.mrb[0].mxu0
  %v573 = vadd.f32 %v88, %v572
  %v574 = vpop.f32.mrb[0].mxu0
  %575 = vmatprep.mubr.bf16.mxu0 0
  %576 = vmatmul.mubr.bf16.gmra.mrb[0].mxu0 %v333
  %v577 = vpop.f32.mrb[0].mxu0
  %v578 = vadd.f32 %v88, %v577
  %v579 = vpop.f32.mrb[0].mxu0
  %v580 = vpop.f32.mrb[0].mxu0
  %v581 = vadd.f32 %v88, %v580
  %v582 = vpop.f32.mrb[0].mxu0
  %583 = vmatprep.mubr.bf16.mxu0 0
  %584 = vmatmul.mubr.bf16.gmra.mrb[0].mxu0 %v336
  %v585 = vpop.f32.mrb[0].mxu0
  %v586 = vadd.f32 %v88, %v585
  %v587 = vpop.f32.mrb[0].mxu0
  %v588 = vpop.f32.mrb[0].mxu0
  %v589 = vadd.f32 %v88, %v588
  %v590 = vpop.f32.mrb[0].mxu0
  %591 = vmatprep.mubr.bf16.mxu0 0
  %592 = vmatmul.mubr.bf16.gmra.mrb[0].mxu0 %v339
  %v593 = vpop.f32.mrb[0].mxu0
  %v594 = vadd.f32 %v88, %v593
  %v595 = vpop.f32.mrb[0].mxu0
  %v596 = vpop.f32.mrb[0].mxu0
  %v597 = vadd.f32 %v88, %v596
  %v598 = vpop.f32.mrb[0].mxu0
  %599 = vmatprep.mubr.bf16.mxu0 0
  %600 = vmatmul.mubr.bf16.gmra.mrb[0].mxu0 %v342
  %v601 = vpop.f32.mrb[0].mxu0
  %v602 = vadd.f32 %v88, %v601
  %v603 = vpop.f32.mrb[0].mxu0
  %v604 = vpop.f32.mrb[0].mxu0
  %v605 = vadd.f32 %v88, %v604
  %v606 = vpop.f32.mrb[0].mxu0
  %607 = vmatprep.mubr.bf16.mxu0 0
  %608 = vmatmul.mubr.bf16.gmra.mrb[0].mxu0 %v345
  %v609 = vpop.f32.mrb[0].mxu0
  %v610 = vadd.f32 %v88, %v609
  %v611 = vpop.f32.mrb[0].mxu0
  %v612 = vpop.f32.mrb[0].mxu0
  %v613 = vadd.f32 %v88, %v612
  %v614 = vpop.f32.mrb[0].mxu0
  %615 = vmatprep.mubr.bf16.mxu0 0
  %616 = vmatmul.mubr.bf16.gmra.mrb[0].mxu0 %v348
  %v617 = vpop.f32.mrb[0].mxu0
  %v618 = vadd.f32 %v88, %v617
  %v619 = vpop.f32.mrb[0].mxu0
  %v620 = vpop.f32.mrb[0].mxu0
  %v621 = vadd.f32 %v88, %v620
  %v622 = vpop.f32.mrb[0].mxu0
  %623 = vmatprep.mubr.bf16.mxu0 0
  %624 = vmatmul.mubr.bf16.gmra.mrb[0].mxu0 %v351
  %v625 = vpop.f32.mrb[0].mxu0
  %v626 = vadd.f32 %v88, %v625
  %v627 = vpop.f32.mrb[0].mxu0
  %v628 = vpop.f32.mrb[0].mxu0
  %v629 = vadd.f32 %v88, %v628
  %v630 = vpop.f32.mrb[0].mxu0
  %631 = vmatprep.mubr.bf16.mxu0 0
  %632 = vmatmul.mubr.bf16.gmra.mrb[0].mxu0 %v354
  %v633 = vpop.f32.mrb[0].mxu0
  %v634 = vadd.f32 %v88, %v633
  %v635 = vpop.f32.mrb[0].mxu0
  %v636 = vpop.f32.mrb[0].mxu0
  %v637 = vadd.f32 %v88, %v636
  %v638 = vpop.f32.mrb[0].mxu0
  %639 = vmatprep.mubr.bf16.mxu0 0
  %640 = vmatmul.mubr.bf16.gmra.mrb[0].mxu0 %v357
  %v641 = vpop.f32.mrb[0].mxu0
  %v642 = vadd.f32 %v88, %v641
  %v643 = vpop.f32.mrb[0].mxu0
  %v644 = vpop.f32.mrb[0].mxu0
  %v645 = vadd.f32 %v88, %v644
  %v646 = vpop.f32.mrb[0].mxu0
  %647 = vdwg.mxu0
  %v648 = vmax.f32 %v394, 0.0
  %v649 = vmax.f32 %v397, 0.0
  %v650 = vmax.f32 %v402, 0.0
  %v651 = vmax.f32 %v405, 0.0
  %v652 = vmax.f32 %v410, 0.0
  %v653 = vmax.f32 %v413, 0.0
  %v654 = vmax.f32 %v418, 0.0
  %v655 = vmax.f32 %v421, 0.0
  %v656 = vmax.f32 %v426, 0.0
  %v657 = vmax.f32 %v429, 0.0
  %v658 = vmax.f32 %v434, 0.0
  %v659 = vmax.f32 %v437, 0.0
  %v660 = vmax.f32 %v442, 0.0
  %v661 = vmax.f32 %v445, 0.0
  %v662 = vmax.f32 %v450, 0.0
  %v663 = vmax.f32 %v453, 0.0
  %v664 = vmax.f32 %v458, 0.0
  %v665 = vmax.f32 %v461, 0.0
  %v666 = vmax.f32 %v466, 0.0
  %v667 = vmax.f32 %v469, 0.0
  %v668 = vmax.f32 %v474, 0.0
  %v669 = vmax.f32 %v477, 0.0
  %v670 = vmax.f32 %v482, 0.0
  %v671 = vmax.f32 %v485, 0.0
  %v672 = vmax.f32 %v490, 0.0
  %v673 = vmax.f32 %v493, 0.0
  %v674 = vmax.f32 %v498, 0.0
  %v675 = vmax.f32 %v501, 0.0
  %v676 = vmax.f32 %v506, 0.0
  %v677 = vmax.f32 %v509, 0.0
  %v678 = vmax.f32 %v514, 0.0
  %v679 = vmax.f32 %v517, 0.0
  %v680 = vmax.f32 %v522, 0.0
  %v681 = vmax.f32 %v525, 0.0
  %v682 = vmax.f32 %v530, 0.0
  %v683 = vmax.f32 %v533, 0.0
  %v684 = vmax.f32 %v538, 0.0
  %v685 = vmax.f32 %v541, 0.0
  %v686 = vmax.f32 %v546, 0.0
  %v687 = vmax.f32 %v549, 0.0
  %v688 = vmax.f32 %v554, 0.0
  %v689 = vmax.f32 %v557, 0.0
  %v690 = vmax.f32 %v562, 0.0
  %v691 = vmax.f32 %v565, 0.0
  %v692 = vmax.f32 %v570, 0.0
  %v693 = vmax.f32 %v573, 0.0
  %v694 = vmax.f32 %v578, 0.0
  %v695 = vmax.f32 %v581, 0.0
  %v696 = vmax.f32 %v586, 0.0
  %v697 = vmax.f32 %v589, 0.0
  %v698 = vmax.f32 %v594, 0.0
  %v699 = vmax.f32 %v597, 0.0
  %v700 = vmax.f32 %v602, 0.0
  %v701 = vmax.f32 %v605, 0.0
  %v702 = vmax.f32 %v610, 0.0
  %v703 = vmax.f32 %v613, 0.0
  %v704 = vmax.f32 %v618, 0.0
  %v705 = vmax.f32 %v621, 0.0
  %v706 = vmax.f32 %v626, 0.0
  %v707 = vmax.f32 %v629, 0.0
  %v708 = vmax.f32 %v634, 0.0
  %v709 = vmax.f32 %v637, 0.0
  %v710 = vmax.f32 %v642, 0.0
  %v711 = vmax.f32 %v645, 0.0
  %v712 = vpack.c.bf16 %v649, %v648
  %v713 = vpack.c.bf16 %v651, %v650
  %v714 = vpack.c.bf16 %v653, %v652
  %v715 = vpack.c.bf16 %v655, %v654
  %v716 = vpack.c.bf16 %v657, %v656
  %v717 = vpack.c.bf16 %v659, %v658
  %v718 = vpack.c.bf16 %v661, %v660
  %v719 = vpack.c.bf16 %v663, %v662
  %v720 = vpack.c.bf16 %v665, %v664
  %v721 = vpack.c.bf16 %v667, %v666
  %v722 = vpack.c.bf16 %v669, %v668
  %v723 = vpack.c.bf16 %v671, %v670
  %v724 = vpack.c.bf16 %v673, %v672
  %v725 = vpack.c.bf16 %v675, %v674
  %v726 = vpack.c.bf16 %v677, %v676
  %v727 = vpack.c.bf16 %v679, %v678
  %v728 = vpack.c.bf16 %v681, %v680
  %v729 = vpack.c.bf16 %v683, %v682
  %v730 = vpack.c.bf16 %v685, %v684
  %v731 = vpack.c.bf16 %v687, %v686
  %v732 = vpack.c.bf16 %v689, %v688
  %v733 = vpack.c.bf16 %v691, %v690
  %v734 = vpack.c.bf16 %v693, %v692
  %v735 = vpack.c.bf16 %v695, %v694
  %v736 = vpack.c.bf16 %v697, %v696
  %v737 = vpack.c.bf16 %v699, %v698
  %v738 = vpack.c.bf16 %v701, %v700
  %v739 = vpack.c.bf16 %v703, %v702
  %v740 = vpack.c.bf16 %v705, %v704
  %v741 = vpack.c.bf16 %v707, %v706
  %v742 = vpack.c.bf16 %v709, %v708
  %v743 = vpack.c.bf16 %v711, %v710
  %v776 = vunpack.c.l.b16 %v712
  %v777 = vunpack.c.h.b16 %v712
  %v778 = vunpack.c.l.b16 %v713
  %v779 = vunpack.c.h.b16 %v713
  %v780 = vunpack.c.l.b16 %v714
  %v781 = vunpack.c.h.b16 %v714
  %v782 = vunpack.c.l.b16 %v715
  %v783 = vunpack.c.h.b16 %v715
  %v784 = vunpack.c.l.b16 %v716
  %v785 = vunpack.c.h.b16 %v716
  %v786 = vunpack.c.l.b16 %v717
  %v787 = vunpack.c.h.b16 %v717
  %v788 = vunpack.c.l.b16 %v718
  %v789 = vunpack.c.h.b16 %v718
  %v790 = vunpack.c.l.b16 %v719
  %v791 = vunpack.c.h.b16 %v719
  %v792 = vunpack.c.l.b16 %v720
  %v793 = vunpack.c.h.b16 %v720
  %v794 = vunpack.c.l.b16 %v721
  %v795 = vunpack.c.h.b16 %v721
  %v796 = vunpack.c.l.b16 %v722
  %v797 = vunpack.c.h.b16 %v722
  %v798 = vunpack.c.l.b16 %v723
  %v799 = vunpack.c.h.b16 %v723
  %v800 = vunpack.c.l.b16 %v724
  %v801 = vunpack.c.h.b16 %v724
  %v802 = vunpack.c.l.b16 %v725
  %v803 = vunpack.c.h.b16 %v725
  %v804 = vunpack.c.l.b16 %v726
  %v805 = vunpack.c.h.b16 %v726
  %v806 = vunpack.c.l.b16 %v727
  %v807 = vunpack.c.h.b16 %v727
  %v808 = vunpack.c.l.b16 %v728
  %v809 = vunpack.c.h.b16 %v728
  %v810 = vunpack.c.l.b16 %v729
  %v811 = vunpack.c.h.b16 %v729
  %v812 = vunpack.c.l.b16 %v730
  %v813 = vunpack.c.h.b16 %v730
  %v814 = vunpack.c.l.b16 %v731
  %v815 = vunpack.c.h.b16 %v731
  %v816 = vunpack.c.l.b16 %v732
  %v817 = vunpack.c.h.b16 %v732
  %v818 = vunpack.c.l.b16 %v733
  %v819 = vunpack.c.h.b16 %v733
  %v820 = vunpack.c.l.b16 %v734
  %v821 = vunpack.c.h.b16 %v734
  %v822 = vunpack.c.l.b16 %v735
  %v823 = vunpack.c.h.b16 %v735
  %v824 = vunpack.c.l.b16 %v736
  %v825 = vunpack.c.h.b16 %v736
  %v826 = vunpack.c.l.b16 %v737
  %v827 = vunpack.c.h.b16 %v737
  %v828 = vunpack.c.l.b16 %v738
  %v829 = vunpack.c.h.b16 %v738
  %v830 = vunpack.c.l.b16 %v739
  %v831 = vunpack.c.h.b16 %v739
  %v832 = vunpack.c.l.b16 %v740
  %v833 = vunpack.c.h.b16 %v740
  %v834 = vunpack.c.l.b16 %v741
  %v835 = vunpack.c.h.b16 %v741
  %v836 = vunpack.c.l.b16 %v742
  %v837 = vunpack.c.h.b16 %v742
  %v838 = vunpack.c.l.b16 %v743
  %v839 = vunpack.c.h.b16 %v743
  %v840 = vpack.c.b16 %v776, %v776
  %v841 = vpack.c.b16 %v777, %v777
  %v842 = vpack.c.b16 %v778, %v778
  %v843 = vpack.c.b16 %v779, %v779
  %v844 = vpack.c.b16 %v780, %v780
  %v845 = vpack.c.b16 %v781, %v781
  %v846 = vpack.c.b16 %v782, %v782
  %v847 = vpack.c.b16 %v783, %v783
  %v848 = vpack.c.b16 %v784, %v784
  %v849 = vpack.c.b16 %v785, %v785
  %v850 = vpack.c.b16 %v786, %v786
  %v851 = vpack.c.b16 %v787, %v787
  %v852 = vpack.c.b16 %v788, %v788
  %v853 = vpack.c.b16 %v789, %v789
  %v854 = vpack.c.b16 %v790, %v790
  %v855 = vpack.c.b16 %v791, %v791
  %v856 = vpack.c.b16 %v792, %v792
  %v857 = vpack.c.b16 %v793, %v793
  %v858 = vpack.c.b16 %v794, %v794
  %v859 = vpack.c.b16 %v795, %v795
  %v860 = vpack.c.b16 %v796, %v796
  %v861 = vpack.c.b16 %v797, %v797
  %v862 = vpack.c.b16 %v798, %v798
  %v863 = vpack.c.b16 %v799, %v799
  %v864 = vpack.c.b16 %v800, %v800
  %v865 = vpack.c.b16 %v801, %v801
  %v866 = vpack.c.b16 %v802, %v802
  %v867 = vpack.c.b16 %v803, %v803
  %v868 = vpack.c.b16 %v804, %v804
  %v869 = vpack.c.b16 %v805, %v805
  %v870 = vpack.c.b16 %v806, %v806
  %v871 = vpack.c.b16 %v807, %v807
  %v872 = vpack.c.b16 %v808, %v808
  %v873 = vpack.c.b16 %v809, %v809
  %v874 = vpack.c.b16 %v810, %v810
  %v875 = vpack.c.b16 %v811, %v811
  %v876 = vpack.c.b16 %v812, %v812
  %v877 = vpack.c.b16 %v813, %v813
  %v878 = vpack.c.b16 %v814, %v814
  %v879 = vpack.c.b16 %v815, %v815
  %v880 = vpack.c.b16 %v816, %v816
  %v881 = vpack.c.b16 %v817, %v817
  %v882 = vpack.c.b16 %v818, %v818
  %v883 = vpack.c.b16 %v819, %v819
  %v884 = vpack.c.b16 %v820, %v820
  %v885 = vpack.c.b16 %v821, %v821
  %v886 = vpack.c.b16 %v822, %v822
  %v887 = vpack.c.b16 %v823, %v823
  %v888 = vpack.c.b16 %v824, %v824
  %v889 = vpack.c.b16 %v825, %v825
  %v890 = vpack.c.b16 %v826, %v826
  %v891 = vpack.c.b16 %v827, %v827
  %v892 = vpack.c.b16 %v828, %v828
  %v893 = vpack.c.b16 %v829, %v829
  %v894 = vpack.c.b16 %v830, %v830
  %v895 = vpack.c.b16 %v831, %v831
  %v896 = vpack.c.b16 %v832, %v832
  %v897 = vpack.c.b16 %v833, %v833
  %v898 = vpack.c.b16 %v834, %v834
  %v899 = vpack.c.b16 %v835, %v835
  %v900 = vpack.c.b16 %v836, %v836
  %v901 = vpack.c.b16 %v837, %v837
  %v902 = vpack.c.b16 %v838, %v838
  %v903 = vpack.c.b16 %v839, %v839
  %968 = vst [vmem:[%s3] sm:$0xf] %v840
  %969 = vst [vmem:[%s3 + $0x4] sm:$0xf] %v841
  %970 = vst [vmem:[%s3 + $0x8] sm:$0xf] %v842
  %971 = vst [vmem:[%s3 + $0xc] sm:$0xf] %v843
  %972 = vst [vmem:[%s3 + $0x10] sm:$0xf] %v844
  %973 = vst [vmem:[%s3 + $0x14] sm:$0xf] %v845
  %974 = vst [vmem:[%s3 + $0x18] sm:$0xf] %v846
  %975 = vst [vmem:[%s3 + $0x1c] sm:$0xf] %v847
  %976 = vst [vmem:[%s3 + $0x20] sm:$0xf] %v848
  %977 = vst [vmem:[%s3 + $0x24] sm:$0xf] %v849
  %978 = vst [vmem:[%s3 + $0x28] sm:$0xf] %v850
  %979 = vst [vmem:[%s3 + $0x2c] sm:$0xf] %v851
  %980 = vst [vmem:[%s3 + $0x30] sm:$0xf] %v852
  %981 = vst [vmem:[%s3 + $0x34] sm:$0xf] %v853
  %982 = vst [vmem:[%s3 + $0x38] sm:$0xf] %v854
  %983 = vst [vmem:[%s3 + $0x3c] sm:$0xf] %v855
  %984 = vst [vmem:[%s3 + $0x40] sm:$0xf] %v856
  %985 = vst [vmem:[%s3 + $0x44] sm:$0xf] %v857
  %986 = vst [vmem:[%s3 + $0x48] sm:$0xf] %v858
  %987 = vst [vmem:[%s3 + $0x4c] sm:$0xf] %v859
  %988 = vst [vmem:[%s3 + $0x50] sm:$0xf] %v860
  %989 = vst [vmem:[%s3 + $0x54] sm:$0xf] %v861
  %990 = vst [vmem:[%s3 + $0x58] sm:$0xf] %v862
  %991 = vst [vmem:[%s3 + $0x5c] sm:$0xf] %v863
  %992 = vst [vmem:[%s3 + $0x60] sm:$0xf] %v864
  %993 = vst [vmem:[%s3 + $0x64] sm:$0xf] %v865
  %994 = vst [vmem:[%s3 + $0x68] sm:$0xf] %v866
  %995 = vst [vmem:[%s3 + $0x6c] sm:$0xf] %v867
  %996 = vst [vmem:[%s3 + $0x70] sm:$0xf] %v868
  %997 = vst [vmem:[%s3 + $0x74] sm:$0xf] %v869
  %998 = vst [vmem:[%s3 + $0x78] sm:$0xf] %v870
  %999 = vst [vmem:[%s3 + $0x7c] sm:$0xf] %v871
  %1000 = vst [vmem:[%s3 + $0x80] sm:$0xf] %v872
  %1001 = vst [vmem:[%s3 + $0x84] sm:$0xf] %v873
  %1002 = vst [vmem:[%s3 + $0x88] sm:$0xf] %v874
  %1003 = vst [vmem:[%s3 + $0x8c] sm:$0xf] %v875
  %1004 = vst [vmem:[%s3 + $0x90] sm:$0xf] %v876
  %1005 = vst [vmem:[%s3 + $0x94] sm:$0xf] %v877
  %1006 = vst [vmem:[%s3 + $0x98] sm:$0xf] %v878
  %1007 = vst [vmem:[%s3 + $0x9c] sm:$0xf] %v879
  %1008 = vst [vmem:[%s3 + $0xa0] sm:$0xf] %v880
  %1009 = vst [vmem:[%s3 + $0xa4] sm:$0xf] %v881
  %1010 = vst [vmem:[%s3 + $0xa8] sm:$0xf] %v882
  %1011 = vst [vmem:[%s3 + $0xac] sm:$0xf] %v883
  %1012 = vst [vmem:[%s3 + $0xb0] sm:$0xf] %v884
  %1013 = vst [vmem:[%s3 + $0xb4] sm:$0xf] %v885
  %1014 = vst [vmem:[%s3 + $0xb8] sm:$0xf] %v886
  %1015 = vst [vmem:[%s3 + $0xbc] sm:$0xf] %v887
  %1016 = vst [vmem:[%s3 + $0xc0] sm:$0xf] %v888
  %1017 = vst [vmem:[%s3 + $0xc4] sm:$0xf] %v889
  %1018 = vst [vmem:[%s3 + $0xc8] sm:$0xf] %v890
  %1019 = vst [vmem:[%s3 + $0xcc] sm:$0xf] %v891
  %1020 = vst [vmem:[%s3 + $0xd0] sm:$0xf] %v892
  %1021 = vst [vmem:[%s3 + $0xd4] sm:$0xf] %v893
  %1022 = vst [vmem:[%s3 + $0xd8] sm:$0xf] %v894
  %1023 = vst [vmem:[%s3 + $0xdc] sm:$0xf] %v895
  %1024 = vst [vmem:[%s3 + $0xe0] sm:$0xf] %v896
  %1025 = vst [vmem:[%s3 + $0xe4] sm:$0xf] %v897
  %1026 = vst [vmem:[%s3 + $0xe8] sm:$0xf] %v898
  %1027 = vst [vmem:[%s3 + $0xec] sm:$0xf] %v899
  %1028 = vst [vmem:[%s3 + $0xf0] sm:$0xf] %v900
  %1029 = vst [vmem:[%s3 + $0xf4] sm:$0xf] %v901
  %1030 = vst [vmem:[%s3 + $0xf8] sm:$0xf] %v902
  %1031 = vst [vmem:[%s3 + $0xfc] sm:$0xf] %v903
  // Predicated region
  $region14: #{autoencoder_forward.5} parent=0 // pred_check
    _
  $region15: #{autoencoder_forward.5} parent=0 // pred_check_branch
    %1033 = sbr.rel (0) target = $region17
  $region16: #{autoencoder_forward.5} parent=0 // pred_region
    _
  $region17: #{autoencoder_forward.5} parent=0 // pred_fallthru
    _
  // Predicated region
  $region18: #{autoencoder_forward.5} parent=0 // pred_check
    _
  $region19: #{autoencoder_forward.5} parent=0 // pred_check_branch
    %1035 = sbr.rel (0) target = $region21
  $region20: #{autoencoder_forward.5} parent=0 // pred_region
    _
  $region21: #{autoencoder_forward.5} parent=0 // pred_fallthru
    _

// kernel: autoencoder_forward.6
$region0: #{autoencoder_forward.6}
  #allocation0 [shape = 'u32[]', space=smem, size = 0x4, offset = 0x4, fixed_abs, tag = 'smem constant byte address 0x4 - core index']
  #allocation1 [shape = 'u32[144,128]{1,0:T(1,128)}', space=vmem, size = 0x12000, scoped, tag = 'internal scratch']
  %s0 = inlined_call_operand.vmem [shape: bf16[128,288], index: 0, kind: input, shape index: {}]
  %s1 = inlined_call_operand.vmem [shape: bf16[288,128], index: 1, kind: input, shape index: {}]
  %s2 = inlined_call_operand.vmem [shape: f32[1,128], index: 2, kind: input, shape index: {}]
  %s3 = inlined_call_operand.vmem [shape: bf16[128,128], index: 3, kind: output, shape index: {}]
  %s4 = sld [smem:[#allocation0]]
  $region22: #{autoencoder_forward.6} parent=0
    _
  %s6 = ssub.s32 1, %s4
  %s7 = scalar_select 0, %s6, %s4
  // Predicated region
  $region2: #{autoencoder_forward.6} parent=0 // pred_check
    _
  $region3: #{autoencoder_forward.6} parent=0 // pred_check_branch
    %9 = sbr.rel (0) target = $region5
  $region4: #{autoencoder_forward.6} parent=0 // pred_region
    _
  $region5: #{autoencoder_forward.6} parent=0 // pred_fallthru
    _
  // Predicated region
  $region6: #{autoencoder_forward.6} parent=0 // pred_check
    _
  $region7: #{autoencoder_forward.6} parent=0 // pred_check_branch
    %11 = sbr.rel (0) target = $region9
  $region8: #{autoencoder_forward.6} parent=0 // pred_region
    _
  $region9: #{autoencoder_forward.6} parent=0 // pred_fallthru
    _
  // Predicated region
  $region10: #{autoencoder_forward.6} parent=0 // pred_check
    _
  $region11: #{autoencoder_forward.6} parent=0 // pred_check_branch
    %13 = sbr.rel (0) target = $region13
  $region12: #{autoencoder_forward.6} parent=0 // pred_region
    _
  $region13: #{autoencoder_forward.6} parent=0 // pred_fallthru
    _
  %v15 = vld [vmem:[%s0] sm:$0xff]
  %v16 = vld [vmem:[%s0 + $0x8] sm:$0xf]
  %v17 = vld [vmem:[%s0 + $0xc] sm:$0xff]
  %v18 = vld [vmem:[%s0 + $0x14] sm:$0xf]
  %v19 = vld [vmem:[%s0 + $0x18] sm:$0xff]
  %v20 = vld [vmem:[%s0 + $0x20] sm:$0xf]
  %v21 = vld [vmem:[%s0 + $0x24] sm:$0xff]
  %v22 = vld [vmem:[%s0 + $0x2c] sm:$0xf]
  %v23 = vld [vmem:[%s0 + $0x30] sm:$0xff]
  %v24 = vld [vmem:[%s0 + $0x38] sm:$0xf]
  %v25 = vld [vmem:[%s0 + $0x3c] sm:$0xff]
  %v26 = vld [vmem:[%s0 + $0x44] sm:$0xf]
  %v27 = vld [vmem:[%s0 + $0x48] sm:$0xff]
  %v28 = vld [vmem:[%s0 + $0x50] sm:$0xf]
  %v29 = vld [vmem:[%s0 + $0x54] sm:$0xff]
  %v30 = vld [vmem:[%s0 + $0x5c] sm:$0xf]
  %v31 = vld [vmem:[%s0 + $0x60] sm:$0xff]
  %v32 = vld [vmem:[%s0 + $0x68] sm:$0xf]
  %v33 = vld [vmem:[%s0 + $0x6c] sm:$0xff]
  %v34 = vld [vmem:[%s0 + $0x74] sm:$0xf]
  %v35 = vld [vmem:[%s0 + $0x78] sm:$0xff]
  %v36 = vld [vmem:[%s0 + $0x80] sm:$0xf]
  %v37 = vld [vmem:[%s0 + $0x84] sm:$0xff]
  %v38 = vld [vmem:[%s0 + $0x8c] sm:$0xf]
  %v39 = vld [vmem:[%s0 + $0x90] sm:$0xff]
  %v40 = vld [vmem:[%s0 + $0x98] sm:$0xf]
  %v41 = vld [vmem:[%s0 + $0x9c] sm:$0xff]
  %v42 = vld [vmem:[%s0 + $0xa4] sm:$0xf]
  %v43 = vld [vmem:[%s0 + $0xa8] sm:$0xff]
  %v44 = vld [vmem:[%s0 + $0xb0] sm:$0xf]
  %v45 = vld [vmem:[%s0 + $0xb4] sm:$0xff]
  %v46 = vld [vmem:[%s0 + $0xbc] sm:$0xf]
  %v47 = vld [vmem:[%s1] sm:$0xf]
  %v48 = vld [vmem:[%s1 + $0x4] sm:$0xf]
  %v49 = vld [vmem:[%s1 + $0x8] sm:$0xf]
  %v50 = vld [vmem:[%s1 + $0xc] sm:$0xf]
  %v51 = vld [vmem:[%s1 + $0x10] sm:$0xf]
  %v52 = vld [vmem:[%s1 + $0x14] sm:$0xf]
  %v53 = vld [vmem:[%s1 + $0x18] sm:$0xf]
  %v54 = vld [vmem:[%s1 + $0x1c] sm:$0xf]
  %v55 = vld [vmem:[%s1 + $0x20] sm:$0xf]
  %v56 = vld [vmem:[%s1 + $0x24] sm:$0xf]
  %v57 = vld [vmem:[%s1 + $0x28] sm:$0xf]
  %v58 = vld [vmem:[%s1 + $0x2c] sm:$0xf]
  %v59 = vld [vmem:[%s1 + $0x30] sm:$0xf]
  %v60 = vld [vmem:[%s1 + $0x34] sm:$0xf]
  %v61 = vld [vmem:[%s1 + $0x38] sm:$0xf]
  %v62 = vld [vmem:[%s1 + $0x3c] sm:$0xf]
  %v63 = vld [vmem:[%s1 + $0x40] sm:$0xf]
  %v64 = vld [vmem:[%s1 + $0x44] sm:$0xf]
  %v65 = vld [vmem:[%s1 + $0x48] sm:$0xf]
  %v66 = vld [vmem:[%s1 + $0x4c] sm:$0xf]
  %v67 = vld [vmem:[%s1 + $0x50] sm:$0xf]
  %v68 = vld [vmem:[%s1 + $0x54] sm:$0xf]
  %v69 = vld [vmem:[%s1 + $0x58] sm:$0xf]
  %v70 = vld [vmem:[%s1 + $0x5c] sm:$0xf]
  %v71 = vld [vmem:[%s1 + $0x60] sm:$0xf]
  %v72 = vld [vmem:[%s1 + $0x64] sm:$0xf]
  %v73 = vld [vmem:[%s1 + $0x68] sm:$0xf]
  %v74 = vld [vmem:[%s1 + $0x6c] sm:$0xf]
  %v75 = vld [vmem:[%s1 + $0x70] sm:$0xf]
  %v76 = vld [vmem:[%s1 + $0x74] sm:$0xf]
  %v77 = vld [vmem:[%s1 + $0x78] sm:$0xf]
  %v78 = vld [vmem:[%s1 + $0x7c] sm:$0xf]
  %v79 = vld [vmem:[%s1 + $0x80] sm:$0xf]
  %v80 = vld [vmem:[%s1 + $0x84] sm:$0xf]
  %v81 = vld [vmem:[%s1 + $0x88] sm:$0xf]
  %v82 = vld [vmem:[%s1 + $0x8c] sm:$0xf]
  %v83 = vld [vmem:[%s2] sm:$0x1]
  %v85 = vlaneseq
  %v86 = vshrl.u32 %v85, 7
  %v87 = vsub.s32 0, %v86
  %v88 = vrot.slane %v83, %v87
  %v122 = vunpack.c.l.b16 %v15
  %v123 = vunpack.c.h.b16 %v15
  %v124 = vunpack.c.l.b16 %v16
  %v125 = vunpack.c.l.b16 %v17
  %v126 = vunpack.c.h.b16 %v17
  %v127 = vunpack.c.l.b16 %v18
  %v128 = vunpack.c.l.b16 %v19
  %v129 = vunpack.c.h.b16 %v19
  %v130 = vunpack.c.l.b16 %v20
  %v131 = vunpack.c.l.b16 %v21
  %v132 = vunpack.c.h.b16 %v21
  %v133 = vunpack.c.l.b16 %v22
  %v134 = vunpack.c.l.b16 %v23
  %v135 = vunpack.c.h.b16 %v23
  %v136 = vunpack.c.l.b16 %v24
  %v137 = vunpack.c.l.b16 %v25
  %v138 = vunpack.c.h.b16 %v25
  %v139 = vunpack.c.l.b16 %v26
  %v140 = vunpack.c.l.b16 %v27
  %v141 = vunpack.c.h.b16 %v27
  %v142 = vunpack.c.l.b16 %v28
  %v143 = vunpack.c.l.b16 %v29
  %v144 = vunpack.c.h.b16 %v29
  %v145 = vunpack.c.l.b16 %v30
  %v146 = vunpack.c.l.b16 %v31
  %v147 = vunpack.c.h.b16 %v31
  %v148 = vunpack.c.l.b16 %v32
  %v149 = vunpack.c.l.b16 %v33
  %v150 = vunpack.c.h.b16 %v33
  %v151 = vunpack.c.l.b16 %v34
  %v152 = vunpack.c.l.b16 %v35
  %v153 = vunpack.c.h.b16 %v35
  %v154 = vunpack.c.l.b16 %v36
  %v155 = vunpack.c.l.b16 %v37
  %v156 = vunpack.c.h.b16 %v37
  %v157 = vunpack.c.l.b16 %v38
  %v158 = vunpack.c.l.b16 %v39
  %v159 = vunpack.c.h.b16 %v39
  %v160 = vunpack.c.l.b16 %v40
  %v161 = vunpack.c.l.b16 %v41
  %v162 = vunpack.c.h.b16 %v41
  %v163 = vunpack.c.l.b16 %v42
  %v164 = vunpack.c.l.b16 %v43
  %v165 = vunpack.c.h.b16 %v43
  %v166 = vunpack.c.l.b16 %v44
  %v167 = vunpack.c.l.b16 %v45
  %v168 = vunpack.c.h.b16 %v45
  %v169 = vunpack.c.l.b16 %v46
  %v170 = vpack.c.b16 %v125, %v122
  %v171 = vpack.c.b16 %v126, %v123
  %v172 = vpack.c.b16 %v127, %v124
  %v173 = vpack.c.b16 %v131, %v128
  %v174 = vpack.c.b16 %v132, %v129
  %v175 = vpack.c.b16 %v133, %v130
  %v176 = vpack.c.b16 %v137, %v134
  %v177 = vpack.c.b16 %v138, %v135
  %v178 = vpack.c.b16 %v139, %v136
  %v179 = vpack.c.b16 %v143, %v140
  %v180 = vpack.c.b16 %v144, %v141
  %v181 = vpack.c.b16 %v145, %v142
  %v182 = vpack.c.b16 %v149, %v146
  %v183 = vpack.c.b16 %v150, %v147
  %v184 = vpack.c.b16 %v151, %v148
  %v185 = vpack.c.b16 %v155, %v152
  %v186 = vpack.c.b16 %v156, %v153
  %v187 = vpack.c.b16 %v157, %v154
  %v188 = vpack.c.b16 %v161, %v158
  %v189 = vpack.c.b16 %v162, %v159
  %v190 = vpack.c.b16 %v163, %v160
  %v191 = vpack.c.b16 %v167, %v164
  %v192 = vpack.c.b16 %v168, %v165
  %v193 = vpack.c.b16 %v169, %v166
  %v246 = vunpack.c.l.b16 %v47
  %v247 = vunpack.c.l.b16 %v48
  %v248 = vunpack.c.l.b16 %v49
  %v249 = vunpack.c.l.b16 %v50
  %v250 = vunpack.c.l.b16 %v51
  %v251 = vunpack.c.l.b16 %v52
  %v252 = vunpack.c.l.b16 %v53
  %v253 = vunpack.c.l.b16 %v54
  %v254 = vunpack.c.l.b16 %v55
  %v255 = vunpack.c.l.b16 %v56
  %v256 = vunpack.c.l.b16 %v57
  %v257 = vunpack.c.l.b16 %v58
  %v258 = vunpack.c.l.b16 %v59
  %v259 = vunpack.c.l.b16 %v60
  %v260 = vunpack.c.l.b16 %v61
  %v261 = vunpack.c.l.b16 %v62
  %v262 = vunpack.c.l.b16 %v63
  %v263 = vunpack.c.l.b16 %v64
  %v264 = vunpack.c.l.b16 %v65
  %v265 = vunpack.c.l.b16 %v66
  %v266 = vunpack.c.l.b16 %v67
  %v267 = vunpack.c.l.b16 %v68
  %v268 = vunpack.c.l.b16 %v69
  %v269 = vunpack.c.l.b16 %v70
  %v270 = vunpack.c.l.b16 %v71
  %v271 = vunpack.c.l.b16 %v72
  %v272 = vunpack.c.l.b16 %v73
  %v273 = vunpack.c.l.b16 %v74
  %v274 = vunpack.c.l.b16 %v75
  %v275 = vunpack.c.l.b16 %v76
  %v276 = vunpack.c.l.b16 %v77
  %v277 = vunpack.c.l.b16 %v78
  %v278 = vunpack.c.l.b16 %v79
  %v279 = vunpack.c.l.b16 %v80
  %v280 = vunpack.c.l.b16 %v81
  %v281 = vunpack.c.l.b16 %v82
  %v282 = vpack.c.b16 %v247, %v246
  %v283 = vpack.c.b16 %v249, %v248
  %v284 = vpack.c.b16 %v251, %v250
  %v285 = vpack.c.b16 %v253, %v252
  %v286 = vpack.c.b16 %v255, %v254
  %v287 = vpack.c.b16 %v257, %v256
  %v288 = vpack.c.b16 %v259, %v258
  %v289 = vpack.c.b16 %v261, %v260
  %v290 = vpack.c.b16 %v263, %v262
  %v291 = vpack.c.b16 %v265, %v264
  %v292 = vpack.c.b16 %v267, %v266
  %v293 = vpack.c.b16 %v269, %v268
  %v294 = vpack.c.b16 %v271, %v270
  %v295 = vpack.c.b16 %v273, %v272
  %v296 = vpack.c.b16 %v275, %v274
  %v297 = vpack.c.b16 %v277, %v276
  %v298 = vpack.c.b16 %v279, %v278
  %v299 = vpack.c.b16 %v281, %v280
  %vm318 = vcmask 261120
  %v320 = vsel %vm318, %v172, 0
  %v323 = vsel %vm318, %v175, 0
  %v326 = vsel %vm318, %v178, 0
  %v329 = vsel %vm318, %v181, 0
  %v332 = vsel %vm318, %v184, 0
  %v335 = vsel %vm318, %v187, 0
  %v338 = vsel %vm318, %v190, 0
  %v341 = vsel %vm318, %v193, 0
  %343 = vmatprep.subr.bf16.mxu0 0
  %344 = vmatpush1.bf16.msra.mxu0 %v282
  %345 = vmatprep.subr.bf16.mxu0 0
  %346 = vmatpush1.bf16.msra.mxu0 %v283
  %347 = vmatprep.subr.bf16.mxu0 0
  %348 = vmatpush1.bf16.msra.mxu0 %v284
  %349 = vmatprep.subr.bf16.mxu0 0
  %350 = vmatpush1.bf16.msra.mxu0 %v285
  %351 = vmatprep.subr.bf16.mxu0 0
  %352 = vmatpush1.bf16.msra.mxu0 %v286
  %353 = vmatprep.subr.bf16.mxu0 0
  %354 = vmatpush1.bf16.msra.mxu0 %v287
  %355 = vmatprep.subr.bf16.mxu0 0
  %356 = vmatpush1.bf16.msra.mxu0 %v288
  %357 = vmatprep.subr.bf16.mxu0 0
  %358 = vmatpush1.bf16.msra.mxu0 %v289
  %359 = vmatprep.subr.bf16.mxu0 0
  %360 = vmatpush1.bf16.msra.mxu0 %v290
  %361 = vmatprep.subr.bf16.mxu0 0
  %362 = vmatpush1.bf16.msra.mxu0 %v291
  %363 = vmatprep.subr.bf16.mxu0 0
  %364 = vmatpush1.bf16.msra.mxu0 %v292
  %365 = vmatprep.subr.bf16.mxu0 0
  %366 = vmatpush1.bf16.msra.mxu0 %v293
  %367 = vmatprep.subr.bf16.mxu0 0
  %368 = vmatpush1.bf16.msra.mxu0 %v294
  %369 = vmatprep.subr.bf16.mxu0 0
  %370 = vmatpush1.bf16.msra.mxu0 %v295
  %371 = vmatprep.subr.bf16.mxu0 0
  %372 = vmatpush1.bf16.msra.mxu0 %v296
  %373 = vmatprep.subr.bf16.mxu0 0
  %374 = vmatpush1.bf16.msra.mxu0 %v297
  %375 = vmatprep.mubr.bf16.mxu0 %v171
  %376 = vmatmul.mubr.bf16.gmra.mrb[0].mxu0 %v170
  %v377 = vpop.f32.mrb[0].mxu0
  %v378 = vadd.f32 %v88, %v377
  %v379 = vpop.f32.mrb[0].mxu0
  %v380 = vpop.f32.mrb[0].mxu0
  %v381 = vadd.f32 %v88, %v380
  %v382 = vpop.f32.mrb[0].mxu0
  %383 = vmatprep.mubr.bf16.mxu0 %v174
  %384 = vmatmul.mubr.bf16.gmra.mrb[0].mxu0 %v173
  %v385 = vpop.f32.mrb[0].mxu0
  %v386 = vadd.f32 %v88, %v385
  %v387 = vpop.f32.mrb[0].mxu0
  %v388 = vpop.f32.mrb[0].mxu0
  %v389 = vadd.f32 %v88, %v388
  %v390 = vpop.f32.mrb[0].mxu0
  %391 = vmatprep.mubr.bf16.mxu0 %v177
  %392 = vmatmul.mubr.bf16.gmra.mrb[0].mxu0 %v176
  %v393 = vpop.f32.mrb[0].mxu0
  %v394 = vadd.f32 %v88, %v393
  %v395 = vpop.f32.mrb[0].mxu0
  %v396 = vpop.f32.mrb[0].mxu0
  %v397 = vadd.f32 %v88, %v396
  %v398 = vpop.f32.mrb[0].mxu0
  %399 = vmatprep.mubr.bf16.mxu0 %v180
  %400 = vmatmul.mubr.bf16.gmra.mrb[0].mxu0 %v179
  %v401 = vpop.f32.mrb[0].mxu0
  %v402 = vadd.f32 %v88, %v401
  %v403 = vpop.f32.mrb[0].mxu0
  %v404 = vpop.f32.mrb[0].mxu0
  %v405 = vadd.f32 %v88, %v404
  %v406 = vpop.f32.mrb[0].mxu0
  %407 = vmatprep.mubr.bf16.mxu0 %v183
  %408 = vmatmul.mubr.bf16.gmra.mrb[0].mxu0 %v182
  %v409 = vpop.f32.mrb[0].mxu0
  %v410 = vadd.f32 %v88, %v409
  %v411 = vpop.f32.mrb[0].mxu0
  %v412 = vpop.f32.mrb[0].mxu0
  %v413 = vadd.f32 %v88, %v412
  %v414 = vpop.f32.mrb[0].mxu0
  %415 = vmatprep.mubr.bf16.mxu0 %v186
  %416 = vmatmul.mubr.bf16.gmra.mrb[0].mxu0 %v185
  %v417 = vpop.f32.mrb[0].mxu0
  %v418 = vadd.f32 %v88, %v417
  %v419 = vpop.f32.mrb[0].mxu0
  %v420 = vpop.f32.mrb[0].mxu0
  %v421 = vadd.f32 %v88, %v420
  %v422 = vpop.f32.mrb[0].mxu0
  %423 = vmatprep.mubr.bf16.mxu0 %v189
  %424 = vmatmul.mubr.bf16.gmra.mrb[0].mxu0 %v188
  %v425 = vpop.f32.mrb[0].mxu0
  %v426 = vadd.f32 %v88, %v425
  %v427 = vpop.f32.mrb[0].mxu0
  %v428 = vpop.f32.mrb[0].mxu0
  %v429 = vadd.f32 %v88, %v428
  %v430 = vpop.f32.mrb[0].mxu0
  %431 = vmatprep.mubr.bf16.mxu0 %v192
  %432 = vmatmul.mubr.bf16.gmra.mrb[0].mxu0 %v191
  %v433 = vpop.f32.mrb[0].mxu0
  %v434 = vadd.f32 %v88, %v433
  %v435 = vpop.f32.mrb[0].mxu0
  %v436 = vpop.f32.mrb[0].mxu0
  %v437 = vadd.f32 %v88, %v436
  %v438 = vpop.f32.mrb[0].mxu0
  %439 = vdwg.mxu0
  %440 = vmatprep.subr.bf16.mxu0 0
  %441 = vmatpush1.bf16.msra.mxu0 %v298
  %442 = vmatprep.subr.bf16.mxu0 0
  %443 = vmatpush1.bf16.msra.mxu0 %v299
  %444 = vmatprep.subr.bf16.mxu0 0
  %445 = vmatpush1.bf16.msra.mxu0 0
  %446 = vmatprep.subr.bf16.mxu0 0
  %447 = vmatpush1.bf16.msra.mxu0 0
  %448 = vmatprep.subr.bf16.mxu0 0
  %449 = vmatpush1.bf16.msra.mxu0 0
  %450 = vmatprep.subr.bf16.mxu0 0
  %451 = vmatpush1.bf16.msra.mxu0 0
  %452 = vmatprep.subr.bf16.mxu0 0
  %453 = vmatpush1.bf16.msra.mxu0 0
  %454 = vmatprep.subr.bf16.mxu0 0
  %455 = vmatpush1.bf16.msra.mxu0 0
  %456 = vmatprep.subr.bf16.mxu0 0
  %457 = vmatpush1.bf16.msra.mxu0 0
  %458 = vmatprep.subr.bf16.mxu0 0
  %459 = vmatpush1.bf16.msra.mxu0 0
  %460 = vmatprep.subr.bf16.mxu0 0
  %461 = vmatpush1.bf16.msra.mxu0 0
  %462 = vmatprep.subr.bf16.mxu0 0
  %463 = vmatpush1.bf16.msra.mxu0 0
  %464 = vmatprep.subr.bf16.mxu0 0
  %465 = vmatpush1.bf16.msra.mxu0 0
  %466 = vmatprep.subr.bf16.mxu0 0
  %467 = vmatpush1.bf16.msra.mxu0 0
  %468 = vmatprep.subr.bf16.mxu0 0
  %469 = vmatpush1.bf16.msra.mxu0 0
  %470 = vmatprep.subr.bf16.mxu0 0
  %471 = vmatpush1.bf16.msra.mxu0 0
  %472 = vmatprep.mubr.bf16.mxu0 0
  %473 = vmatmul.mubr.bf16.gmra.mrb[0].mxu0 %v320
  %v474 = vpop.f32.mrb[0].mxu0
  %v475 = vadd.f32 %v378, %v474
  %v476 = vpop.f32.mrb[0].mxu0
  %v477 = vpop.f32.mrb[0].mxu0
  %v478 = vadd.f32 %v381, %v477
  %v479 = vpop.f32.mrb[0].mxu0
  %480 = vmatprep.mubr.bf16.mxu0 0
  %481 = vmatmul.mubr.bf16.gmra.mrb[0].mxu0 %v323
  %v482 = vpop.f32.mrb[0].mxu0
  %v483 = vadd.f32 %v386, %v482
  %v484 = vpop.f32.mrb[0].mxu0
  %v485 = vpop.f32.mrb[0].mxu0
  %v486 = vadd.f32 %v389, %v485
  %v487 = vpop.f32.mrb[0].mxu0
  %488 = vmatprep.mubr.bf16.mxu0 0
  %489 = vmatmul.mubr.bf16.gmra.mrb[0].mxu0 %v326
  %v490 = vpop.f32.mrb[0].mxu0
  %v491 = vadd.f32 %v394, %v490
  %v492 = vpop.f32.mrb[0].mxu0
  %v493 = vpop.f32.mrb[0].mxu0
  %v494 = vadd.f32 %v397, %v493
  %v495 = vpop.f32.mrb[0].mxu0
  %496 = vmatprep.mubr.bf16.mxu0 0
  %497 = vmatmul.mubr.bf16.gmra.mrb[0].mxu0 %v329
  %v498 = vpop.f32.mrb[0].mxu0
  %v499 = vadd.f32 %v402, %v498
  %v500 = vpop.f32.mrb[0].mxu0
  %v501 = vpop.f32.mrb[0].mxu0
  %v502 = vadd.f32 %v405, %v501
  %v503 = vpop.f32.mrb[0].mxu0
  %504 = vmatprep.mubr.bf16.mxu0 0
  %505 = vmatmul.mubr.bf16.gmra.mrb[0].mxu0 %v332
  %v506 = vpop.f32.mrb[0].mxu0
  %v507 = vadd.f32 %v410, %v506
  %v508 = vpop.f32.mrb[0].mxu0
  %v509 = vpop.f32.mrb[0].mxu0
  %v510 = vadd.f32 %v413, %v509
  %v511 = vpop.f32.mrb[0].mxu0
  %512 = vmatprep.mubr.bf16.mxu0 0
  %513 = vmatmul.mubr.bf16.gmra.mrb[0].mxu0 %v335
  %v514 = vpop.f32.mrb[0].mxu0
  %v515 = vadd.f32 %v418, %v514
  %v516 = vpop.f32.mrb[0].mxu0
  %v517 = vpop.f32.mrb[0].mxu0
  %v518 = vadd.f32 %v421, %v517
  %v519 = vpop.f32.mrb[0].mxu0
  %520 = vmatprep.mubr.bf16.mxu0 0
  %521 = vmatmul.mubr.bf16.gmra.mrb[0].mxu0 %v338
  %v522 = vpop.f32.mrb[0].mxu0
  %v523 = vadd.f32 %v426, %v522
  %v524 = vpop.f32.mrb[0].mxu0
  %v525 = vpop.f32.mrb[0].mxu0
  %v526 = vadd.f32 %v429, %v525
  %v527 = vpop.f32.mrb[0].mxu0
  %528 = vmatprep.mubr.bf16.mxu0 0
  %529 = vmatmul.mubr.bf16.gmra.mrb[0].mxu0 %v341
  %v530 = vpop.f32.mrb[0].mxu0
  %v531 = vadd.f32 %v434, %v530
  %v532 = vpop.f32.mrb[0].mxu0
  %v533 = vpop.f32.mrb[0].mxu0
  %v534 = vadd.f32 %v437, %v533
  %v535 = vpop.f32.mrb[0].mxu0
  %536 = vdwg.mxu0
  %v537 = vmax.f32 %v475, 0.0
  %v538 = vmax.f32 %v478, 0.0
  %v539 = vmax.f32 %v483, 0.0
  %v540 = vmax.f32 %v486, 0.0
  %v541 = vmax.f32 %v491, 0.0
  %v542 = vmax.f32 %v494, 0.0
  %v543 = vmax.f32 %v499, 0.0
  %v544 = vmax.f32 %v502, 0.0
  %v545 = vmax.f32 %v507, 0.0
  %v546 = vmax.f32 %v510, 0.0
  %v547 = vmax.f32 %v515, 0.0
  %v548 = vmax.f32 %v518, 0.0
  %v549 = vmax.f32 %v523, 0.0
  %v550 = vmax.f32 %v526, 0.0
  %v551 = vmax.f32 %v531, 0.0
  %v552 = vmax.f32 %v534, 0.0
  %v553 = vpack.c.bf16 %v538, %v537
  %v554 = vpack.c.bf16 %v540, %v539
  %v555 = vpack.c.bf16 %v542, %v541
  %v556 = vpack.c.bf16 %v544, %v543
  %v557 = vpack.c.bf16 %v546, %v545
  %v558 = vpack.c.bf16 %v548, %v547
  %v559 = vpack.c.bf16 %v550, %v549
  %v560 = vpack.c.bf16 %v552, %v551
  %v569 = vunpack.c.l.b16 %v553
  %v570 = vunpack.c.h.b16 %v553
  %v571 = vunpack.c.l.b16 %v554
  %v572 = vunpack.c.h.b16 %v554
  %v573 = vunpack.c.l.b16 %v555
  %v574 = vunpack.c.h.b16 %v555
  %v575 = vunpack.c.l.b16 %v556
  %v576 = vunpack.c.h.b16 %v556
  %v577 = vunpack.c.l.b16 %v557
  %v578 = vunpack.c.h.b16 %v557
  %v579 = vunpack.c.l.b16 %v558
  %v580 = vunpack.c.h.b16 %v558
  %v581 = vunpack.c.l.b16 %v559
  %v582 = vunpack.c.h.b16 %v559
  %v583 = vunpack.c.l.b16 %v560
  %v584 = vunpack.c.h.b16 %v560
  %v585 = vpack.c.b16 %v569, %v569
  %v586 = vpack.c.b16 %v570, %v570
  %v587 = vpack.c.b16 %v571, %v571
  %v588 = vpack.c.b16 %v572, %v572
  %v589 = vpack.c.b16 %v573, %v573
  %v590 = vpack.c.b16 %v574, %v574
  %v591 = vpack.c.b16 %v575, %v575
  %v592 = vpack.c.b16 %v576, %v576
  %v593 = vpack.c.b16 %v577, %v577
  %v594 = vpack.c.b16 %v578, %v578
  %v595 = vpack.c.b16 %v579, %v579
  %v596 = vpack.c.b16 %v580, %v580
  %v597 = vpack.c.b16 %v581, %v581
  %v598 = vpack.c.b16 %v582, %v582
  %v599 = vpack.c.b16 %v583, %v583
  %v600 = vpack.c.b16 %v584, %v584
  %617 = vst [vmem:[%s3] sm:$0xf] %v585
  %618 = vst [vmem:[%s3 + $0x4] sm:$0xf] %v586
  %619 = vst [vmem:[%s3 + $0x8] sm:$0xf] %v587
  %620 = vst [vmem:[%s3 + $0xc] sm:$0xf] %v588
  %621 = vst [vmem:[%s3 + $0x10] sm:$0xf] %v589
  %622 = vst [vmem:[%s3 + $0x14] sm:$0xf] %v590
  %623 = vst [vmem:[%s3 + $0x18] sm:$0xf] %v591
  %624 = vst [vmem:[%s3 + $0x1c] sm:$0xf] %v592
  %625 = vst [vmem:[%s3 + $0x20] sm:$0xf] %v593
  %626 = vst [vmem:[%s3 + $0x24] sm:$0xf] %v594
  %627 = vst [vmem:[%s3 + $0x28] sm:$0xf] %v595
  %628 = vst [vmem:[%s3 + $0x2c] sm:$0xf] %v596
  %629 = vst [vmem:[%s3 + $0x30] sm:$0xf] %v597
  %630 = vst [vmem:[%s3 + $0x34] sm:$0xf] %v598
  %631 = vst [vmem:[%s3 + $0x38] sm:$0xf] %v599
  %632 = vst [vmem:[%s3 + $0x3c] sm:$0xf] %v600
  // Predicated region
  $region14: #{autoencoder_forward.6} parent=0 // pred_check
    _
  $region15: #{autoencoder_forward.6} parent=0 // pred_check_branch
    %634 = sbr.rel (0) target = $region17
  $region16: #{autoencoder_forward.6} parent=0 // pred_region
    _
  $region17: #{autoencoder_forward.6} parent=0 // pred_fallthru
    _
  // Predicated region
  $region18: #{autoencoder_forward.6} parent=0 // pred_check
    _
  $region19: #{autoencoder_forward.6} parent=0 // pred_check_branch
    %636 = sbr.rel (0) target = $region21
  $region20: #{autoencoder_forward.6} parent=0 // pred_region
    _
  $region21: #{autoencoder_forward.6} parent=0 // pred_fallthru
    _

// kernel: autoencoder_forward.9
$region0: #{autoencoder_forward.9}
  #allocation0 [shape = 'u32[]', space=smem, size = 0x4, offset = 0x4, fixed_abs, tag = 'smem constant byte address 0x4 - core index']
  #allocation1 [shape = 'u32[144,128]{1,0:T(1,128)}', space=vmem, size = 0x12000, scoped, tag = 'internal scratch']
  %s0 = inlined_call_operand.vmem [shape: bf16[8,4096], index: 0, kind: input, shape index: {}]
  %s1 = inlined_call_operand.vmem [shape: bf16[4096,128], index: 1, kind: input, shape index: {}]
  %s2 = inlined_call_operand.vmem [shape: f32[1,128], index: 2, kind: input, shape index: {}]
  %s3 = inlined_call_operand.vmem [shape: bf16[128,128], index: 3, kind: input, shape index: {}]
  %s4 = inlined_call_operand.vmem [shape: f32[1,128], index: 4, kind: input, shape index: {}]
  %s5 = inlined_call_operand.vmem [shape: f32[8,128], index: 5, kind: output, shape index: {}]
  %s6 = sld [smem:[#allocation0]]
  $region30: #{autoencoder_forward.9} parent=0
    _
  %s8 = ssub.s32 1, %s6
  %s9 = scalar_select 0, %s8, %s6
  // Predicated region
  $region2: #{autoencoder_forward.9} parent=0 // pred_check
    _
  $region3: #{autoencoder_forward.9} parent=0 // pred_check_branch
    %11 = sbr.rel (0) target = $region5
  $region4: #{autoencoder_forward.9} parent=0 // pred_region
    _
  $region5: #{autoencoder_forward.9} parent=0 // pred_fallthru
    _
  // Predicated region
  $region6: #{autoencoder_forward.9} parent=0 // pred_check
    _
  $region7: #{autoencoder_forward.9} parent=0 // pred_check_branch
    %13 = sbr.rel (0) target = $region9
  $region8: #{autoencoder_forward.9} parent=0 // pred_region
    _
  $region9: #{autoencoder_forward.9} parent=0 // pred_fallthru
    _
  // Predicated region
  $region10: #{autoencoder_forward.9} parent=0 // pred_check
    _
  $region11: #{autoencoder_forward.9} parent=0 // pred_check_branch
    %15 = sbr.rel (0) target = $region13
  $region12: #{autoencoder_forward.9} parent=0 // pred_region
    _
  $region13: #{autoencoder_forward.9} parent=0 // pred_fallthru
    _
  // Predicated region
  $region14: #{autoencoder_forward.9} parent=0 // pred_check
    _
  $region15: #{autoencoder_forward.9} parent=0 // pred_check_branch
    %17 = sbr.rel (0) target = $region17
  $region16: #{autoencoder_forward.9} parent=0 // pred_region
    _
  $region17: #{autoencoder_forward.9} parent=0 // pred_fallthru
    _
  // Predicated region
  $region18: #{autoencoder_forward.9} parent=0 // pred_check
    _
  $region19: #{autoencoder_forward.9} parent=0 // pred_check_branch
    %19 = sbr.rel (0) target = $region21
  $region20: #{autoencoder_forward.9} parent=0 // pred_region
    _
  $region21: #{autoencoder_forward.9} parent=0 // pred_fallthru
    _
  %v21 = vld [vmem:[%s0] sm:$0xff]
  %v22 = vld [vmem:[%s0 + $0x8] sm:$0xff]
  %v23 = vld [vmem:[%s0 + $0x10] sm:$0xff]
  %v24 = vld [vmem:[%s0 + $0x18] sm:$0xff]
  %v25 = vld [vmem:[%s0 + $0x20] sm:$0xff]
  %v26 = vld [vmem:[%s0 + $0x28] sm:$0xff]
  %v27 = vld [vmem:[%s0 + $0x30] sm:$0xff]
  %v28 = vld [vmem:[%s0 + $0x38] sm:$0xff]
  %v29 = vld [vmem:[%s0 + $0x40] sm:$0xff]
  %v30 = vld [vmem:[%s0 + $0x48] sm:$0xff]
  %v31 = vld [vmem:[%s0 + $0x50] sm:$0xff]
  %v32 = vld [vmem:[%s0 + $0x58] sm:$0xff]
  %v33 = vld [vmem:[%s0 + $0x60] sm:$0xff]
  %v34 = vld [vmem:[%s0 + $0x68] sm:$0xff]
  %v35 = vld [vmem:[%s0 + $0x70] sm:$0xff]
  %v36 = vld [vmem:[%s0 + $0x78] sm:$0xff]
  %v37 = vld [vmem:[%s1] sm:$0xf]
  %v38 = vld [vmem:[%s1 + $0x4] sm:$0xf]
  %v39 = vld [vmem:[%s1 + $0x8] sm:$0xf]
  %v40 = vld [vmem:[%s1 + $0xc] sm:$0xf]
  %v41 = vld [vmem:[%s1 + $0x10] sm:$0xf]
  %v42 = vld [vmem:[%s1 + $0x14] sm:$0xf]
  %v43 = vld [vmem:[%s1 + $0x18] sm:$0xf]
  %v44 = vld [vmem:[%s1 + $0x1c] sm:$0xf]
  %v45 = vld [vmem:[%s1 + $0x20] sm:$0xf]
  %v46 = vld [vmem:[%s1 + $0x24] sm:$0xf]
  %v47 = vld [vmem:[%s1 + $0x28] sm:$0xf]
  %v48 = vld [vmem:[%s1 + $0x2c] sm:$0xf]
  %v49 = vld [vmem:[%s1 + $0x30] sm:$0xf]
  %v50 = vld [vmem:[%s1 + $0x34] sm:$0xf]
  %v51 = vld [vmem:[%s1 + $0x38] sm:$0xf]
  %v52 = vld [vmem:[%s1 + $0x3c] sm:$0xf]
  %v53 = vld [vmem:[%s1 + $0x40] sm:$0xf]
  %v54 = vld [vmem:[%s1 + $0x44] sm:$0xf]
  %v55 = vld [vmem:[%s1 + $0x48] sm:$0xf]
  %v56 = vld [vmem:[%s1 + $0x4c] sm:$0xf]
  %v57 = vld [vmem:[%s1 + $0x50] sm:$0xf]
  %v58 = vld [vmem:[%s1 + $0x54] sm:$0xf]
  %v59 = vld [vmem:[%s1 + $0x58] sm:$0xf]
  %v60 = vld [vmem:[%s1 + $0x5c] sm:$0xf]
  %v61 = vld [vmem:[%s1 + $0x60] sm:$0xf]
  %v62 = vld [vmem:[%s1 + $0x64] sm:$0xf]
  %v63 = vld [vmem:[%s1 + $0x68] sm:$0xf]
  %v64 = vld [vmem:[%s1 + $0x6c] sm:$0xf]
  %v65 = vld [vmem:[%s1 + $0x70] sm:$0xf]
  %v66 = vld [vmem:[%s1 + $0x74] sm:$0xf]
  %v67 = vld [vmem:[%s1 + $0x78] sm:$0xf]
  %v68 = vld [vmem:[%s1 + $0x7c] sm:$0xf]
  %v69 = vld [vmem:[%s1 + $0x80] sm:$0xf]
  %v70 = vld [vmem:[%s1 + $0x84] sm:$0xf]
  %v71 = vld [vmem:[%s1 + $0x88] sm:$0xf]
  %v72 = vld [vmem:[%s1 + $0x8c] sm:$0xf]
  %v73 = vld [vmem:[%s1 + $0x90] sm:$0xf]
  %v74 = vld [vmem:[%s1 + $0x94] sm:$0xf]
  %v75 = vld [vmem:[%s1 + $0x98] sm:$0xf]
  %v76 = vld [vmem:[%s1 + $0x9c] sm:$0xf]
  %v77 = vld [vmem:[%s1 + $0xa0] sm:$0xf]
  %v78 = vld [vmem:[%s1 + $0xa4] sm:$0xf]
  %v79 = vld [vmem:[%s1 + $0xa8] sm:$0xf]
  %v80 = vld [vmem:[%s1 + $0xac] sm:$0xf]
  %v81 = vld [vmem:[%s1 + $0xb0] sm:$0xf]
  %v82 = vld [vmem:[%s1 + $0xb4] sm:$0xf]
  %v83 = vld [vmem:[%s1 + $0xb8] sm:$0xf]
  %v84 = vld [vmem:[%s1 + $0xbc] sm:$0xf]
  %v85 = vld [vmem:[%s1 + $0xc0] sm:$0xf]
  %v86 = vld [vmem:[%s1 + $0xc4] sm:$0xf]
  %v87 = vld [vmem:[%s1 + $0xc8] sm:$0xf]
  %v88 = vld [vmem:[%s1 + $0xcc] sm:$0xf]
  %v89 = vld [vmem:[%s1 + $0xd0] sm:$0xf]
  %v90 = vld [vmem:[%s1 + $0xd4] sm:$0xf]
  %v91 = vld [vmem:[%s1 + $0xd8] sm:$0xf]
  %v92 = vld [vmem:[%s1 + $0xdc] sm:$0xf]
  %v93 = vld [vmem:[%s1 + $0xe0] sm:$0xf]
  %v94 = vld [vmem:[%s1 + $0xe4] sm:$0xf]
  %v95 = vld [vmem:[%s1 + $0xe8] sm:$0xf]
  %v96 = vld [vmem:[%s1 + $0xec] sm:$0xf]
  %v97 = vld [vmem:[%s1 + $0xf0] sm:$0xf]
  %v98 = vld [vmem:[%s1 + $0xf4] sm:$0xf]
  %v99 = vld [vmem:[%s1 + $0xf8] sm:$0xf]
  %v100 = vld [vmem:[%s1 + $0xfc] sm:$0xf]
  %v101 = vld [vmem:[%s1 + $0x100] sm:$0xf]
  %v102 = vld [vmem:[%s1 + $0x104] sm:$0xf]
  %v103 = vld [vmem:[%s1 + $0x108] sm:$0xf]
  %v104 = vld [vmem:[%s1 + $0x10c] sm:$0xf]
  %v105 = vld [vmem:[%s1 + $0x110] sm:$0xf]
  %v106 = vld [vmem:[%s1 + $0x114] sm:$0xf]
  %v107 = vld [vmem:[%s1 + $0x118] sm:$0xf]
  %v108 = vld [vmem:[%s1 + $0x11c] sm:$0xf]
  %v109 = vld [vmem:[%s1 + $0x120] sm:$0xf]
  %v110 = vld [vmem:[%s1 + $0x124] sm:$0xf]
  %v111 = vld [vmem:[%s1 + $0x128] sm:$0xf]
  %v112 = vld [vmem:[%s1 + $0x12c] sm:$0xf]
  %v113 = vld [vmem:[%s1 + $0x130] sm:$0xf]
  %v114 = vld [vmem:[%s1 + $0x134] sm:$0xf]
  %v115 = vld [vmem:[%s1 + $0x138] sm:$0xf]
  %v116 = vld [vmem:[%s1 + $0x13c] sm:$0xf]
  %v117 = vld [vmem:[%s1 + $0x140] sm:$0xf]
  %v118 = vld [vmem:[%s1 + $0x144] sm:$0xf]
  %v119 = vld [vmem:[%s1 + $0x148] sm:$0xf]
  %v120 = vld [vmem:[%s1 + $0x14c] sm:$0xf]
  %v121 = vld [vmem:[%s1 + $0x150] sm:$0xf]
  %v122 = vld [vmem:[%s1 + $0x154] sm:$0xf]
  %v123 = vld [vmem:[%s1 + $0x158] sm:$0xf]
  %v124 = vld [vmem:[%s1 + $0x15c] sm:$0xf]
  %v125 = vld [vmem:[%s1 + $0x160] sm:$0xf]
  %v126 = vld [vmem:[%s1 + $0x164] sm:$0xf]
  %v127 = vld [vmem:[%s1 + $0x168] sm:$0xf]
  %v128 = vld [vmem:[%s1 + $0x16c] sm:$0xf]
  %v129 = vld [vmem:[%s1 + $0x170] sm:$0xf]
  %v130 = vld [vmem:[%s1 + $0x174] sm:$0xf]
  %v131 = vld [vmem:[%s1 + $0x178] sm:$0xf]
  %v132 = vld [vmem:[%s1 + $0x17c] sm:$0xf]
  %v133 = vld [vmem:[%s1 + $0x180] sm:$0xf]
  %v134 = vld [vmem:[%s1 + $0x184] sm:$0xf]
  %v135 = vld [vmem:[%s1 + $0x188] sm:$0xf]
  %v136 = vld [vmem:[%s1 + $0x18c] sm:$0xf]
  %v137 = vld [vmem:[%s1 + $0x190] sm:$0xf]
  %v138 = vld [vmem:[%s1 + $0x194] sm:$0xf]
  %v139 = vld [vmem:[%s1 + $0x198] sm:$0xf]
  %v140 = vld [vmem:[%s1 + $0x19c] sm:$0xf]
  %v141 = vld [vmem:[%s1 + $0x1a0] sm:$0xf]
  %v142 = vld [vmem:[%s1 + $0x1a4] sm:$0xf]
  %v143 = vld [vmem:[%s1 + $0x1a8] sm:$0xf]
  %v144 = vld [vmem:[%s1 + $0x1ac] sm:$0xf]
  %v145 = vld [vmem:[%s1 + $0x1b0] sm:$0xf]
  %v146 = vld [vmem:[%s1 + $0x1b4] sm:$0xf]
  %v147 = vld [vmem:[%s1 + $0x1b8] sm:$0xf]
  %v148 = vld [vmem:[%s1 + $0x1bc] sm:$0xf]
  %v149 = vld [vmem:[%s1 + $0x1c0] sm:$0xf]
  %v150 = vld [vmem:[%s1 + $0x1c4] sm:$0xf]
  %v151 = vld [vmem:[%s1 + $0x1c8] sm:$0xf]
  %v152 = vld [vmem:[%s1 + $0x1cc] sm:$0xf]
  %v153 = vld [vmem:[%s1 + $0x1d0] sm:$0xf]
  %v154 = vld [vmem:[%s1 + $0x1d4] sm:$0xf]
  %v155 = vld [vmem:[%s1 + $0x1d8] sm:$0xf]
  %v156 = vld [vmem:[%s1 + $0x1dc] sm:$0xf]
  %v157 = vld [vmem:[%s1 + $0x1e0] sm:$0xf]
  %v158 = vld [vmem:[%s1 + $0x1e4] sm:$0xf]
  %v159 = vld [vmem:[%s1 + $0x1e8] sm:$0xf]
  %v160 = vld [vmem:[%s1 + $0x1ec] sm:$0xf]
  %v161 = vld [vmem:[%s1 + $0x1f0] sm:$0xf]
  %v162 = vld [vmem:[%s1 + $0x1f4] sm:$0xf]
  %v163 = vld [vmem:[%s1 + $0x1f8] sm:$0xf]
  %v164 = vld [vmem:[%s1 + $0x1fc] sm:$0xf]
  %v165 = vld [vmem:[%s1 + $0x200] sm:$0xf]
  %v166 = vld [vmem:[%s1 + $0x204] sm:$0xf]
  %v167 = vld [vmem:[%s1 + $0x208] sm:$0xf]
  %v168 = vld [vmem:[%s1 + $0x20c] sm:$0xf]
  %v169 = vld [vmem:[%s1 + $0x210] sm:$0xf]
  %v170 = vld [vmem:[%s1 + $0x214] sm:$0xf]
  %v171 = vld [vmem:[%s1 + $0x218] sm:$0xf]
  %v172 = vld [vmem:[%s1 + $0x21c] sm:$0xf]
  %v173 = vld [vmem:[%s1 + $0x220] sm:$0xf]
  %v174 = vld [vmem:[%s1 + $0x224] sm:$0xf]
  %v175 = vld [vmem:[%s1 + $0x228] sm:$0xf]
  %v176 = vld [vmem:[%s1 + $0x22c] sm:$0xf]
  %v177 = vld [vmem:[%s1 + $0x230] sm:$0xf]
  %v178 = vld [vmem:[%s1 + $0x234] sm:$0xf]
  %v179 = vld [vmem:[%s1 + $0x238] sm:$0xf]
  %v180 = vld [vmem:[%s1 + $0x23c] sm:$0xf]
  %v181 = vld [vmem:[%s1 + $0x240] sm:$0xf]
  %v182 = vld [vmem:[%s1 + $0x244] sm:$0xf]
  %v183 = vld [vmem:[%s1 + $0x248] sm:$0xf]
  %v184 = vld [vmem:[%s1 + $0x24c] sm:$0xf]
  %v185 = vld [vmem:[%s1 + $0x250] sm:$0xf]
  %v186 = vld [vmem:[%s1 + $0x254] sm:$0xf]
  %v187 = vld [vmem:[%s1 + $0x258] sm:$0xf]
  %v188 = vld [vmem:[%s1 + $0x25c] sm:$0xf]
  %v189 = vld [vmem:[%s1 + $0x260] sm:$0xf]
  %v190 = vld [vmem:[%s1 + $0x264] sm:$0xf]
  %v191 = vld [vmem:[%s1 + $0x268] sm:$0xf]
  %v192 = vld [vmem:[%s1 + $0x26c] sm:$0xf]
  %v193 = vld [vmem:[%s1 + $0x270] sm:$0xf]
  %v194 = vld [vmem:[%s1 + $0x274] sm:$0xf]
  %v195 = vld [vmem:[%s1 + $0x278] sm:$0xf]
  %v196 = vld [vmem:[%s1 + $0x27c] sm:$0xf]
  %v197 = vld [vmem:[%s1 + $0x280] sm:$0xf]
  %v198 = vld [vmem:[%s1 + $0x284] sm:$0xf]
  %v199 = vld [vmem:[%s1 + $0x288] sm:$0xf]
  %v200 = vld [vmem:[%s1 + $0x28c] sm:$0xf]
  %v201 = vld [vmem:[%s1 + $0x290] sm:$0xf]
  %v202 = vld [vmem:[%s1 + $0x294] sm:$0xf]
  %v203 = vld [vmem:[%s1 + $0x298] sm:$0xf]
  %v204 = vld [vmem:[%s1 + $0x29c] sm:$0xf]
  %v205 = vld [vmem:[%s1 + $0x2a0] sm:$0xf]
  %v206 = vld [vmem:[%s1 + $0x2a4] sm:$0xf]
  %v207 = vld [vmem:[%s1 + $0x2a8] sm:$0xf]
  %v208 = vld [vmem:[%s1 + $0x2ac] sm:$0xf]
  %v209 = vld [vmem:[%s1 + $0x2b0] sm:$0xf]
  %v210 = vld [vmem:[%s1 + $0x2b4] sm:$0xf]
  %v211 = vld [vmem:[%s1 + $0x2b8] sm:$0xf]
  %v212 = vld [vmem:[%s1 + $0x2bc] sm:$0xf]
  %v213 = vld [vmem:[%s1 + $0x2c0] sm:$0xf]
  %v214 = vld [vmem:[%s1 + $0x2c4] sm:$0xf]
  %v215 = vld [vmem:[%s1 + $0x2c8] sm:$0xf]
  %v216 = vld [vmem:[%s1 + $0x2cc] sm:$0xf]
  %v217 = vld [vmem:[%s1 + $0x2d0] sm:$0xf]
  %v218 = vld [vmem:[%s1 + $0x2d4] sm:$0xf]
  %v219 = vld [vmem:[%s1 + $0x2d8] sm:$0xf]
  %v220 = vld [vmem:[%s1 + $0x2dc] sm:$0xf]
  %v221 = vld [vmem:[%s1 + $0x2e0] sm:$0xf]
  %v222 = vld [vmem:[%s1 + $0x2e4] sm:$0xf]
  %v223 = vld [vmem:[%s1 + $0x2e8] sm:$0xf]
  %v224 = vld [vmem:[%s1 + $0x2ec] sm:$0xf]
  %v225 = vld [vmem:[%s1 + $0x2f0] sm:$0xf]
  %v226 = vld [vmem:[%s1 + $0x2f4] sm:$0xf]
  %v227 = vld [vmem:[%s1 + $0x2f8] sm:$0xf]
  %v228 = vld [vmem:[%s1 + $0x2fc] sm:$0xf]
  %v229 = vld [vmem:[%s1 + $0x300] sm:$0xf]
  %v230 = vld [vmem:[%s1 + $0x304] sm:$0xf]
  %v231 = vld [vmem:[%s1 + $0x308] sm:$0xf]
  %v232 = vld [vmem:[%s1 + $0x30c] sm:$0xf]
  %v233 = vld [vmem:[%s1 + $0x310] sm:$0xf]
  %v234 = vld [vmem:[%s1 + $0x314] sm:$0xf]
  %v235 = vld [vmem:[%s1 + $0x318] sm:$0xf]
  %v236 = vld [vmem:[%s1 + $0x31c] sm:$0xf]
  %v237 = vld [vmem:[%s1 + $0x320] sm:$0xf]
  %v238 = vld [vmem:[%s1 + $0x324] sm:$0xf]
  %v239 = vld [vmem:[%s1 + $0x328] sm:$0xf]
  %v240 = vld [vmem:[%s1 + $0x32c] sm:$0xf]
  %v241 = vld [vmem:[%s1 + $0x330] sm:$0xf]
  %v242 = vld [vmem:[%s1 + $0x334] sm:$0xf]
  %v243 = vld [vmem:[%s1 + $0x338] sm:$0xf]
  %v244 = vld [vmem:[%s1 + $0x33c] sm:$0xf]
  %v245 = vld [vmem:[%s1 + $0x340] sm:$0xf]
  %v246 = vld [vmem:[%s1 + $0x344] sm:$0xf]
  %v247 = vld [vmem:[%s1 + $0x348] sm:$0xf]
  %v248 = vld [vmem:[%s1 + $0x34c] sm:$0xf]
  %v249 = vld [vmem:[%s1 + $0x350] sm:$0xf]
  %v250 = vld [vmem:[%s1 + $0x354] sm:$0xf]
  %v251 = vld [vmem:[%s1 + $0x358] sm:$0xf]
  %v252 = vld [vmem:[%s1 + $0x35c] sm:$0xf]
  %v253 = vld [vmem:[%s1 + $0x360] sm:$0xf]
  %v254 = vld [vmem:[%s1 + $0x364] sm:$0xf]
  %v255 = vld [vmem:[%s1 + $0x368] sm:$0xf]
  %v256 = vld [vmem:[%s1 + $0x36c] sm:$0xf]
  %v257 = vld [vmem:[%s1 + $0x370] sm:$0xf]
  %v258 = vld [vmem:[%s1 + $0x374] sm:$0xf]
  %v259 = vld [vmem:[%s1 + $0x378] sm:$0xf]
  %v260 = vld [vmem:[%s1 + $0x37c] sm:$0xf]
  %v261 = vld [vmem:[%s1 + $0x380] sm:$0xf]
  %v262 = vld [vmem:[%s1 + $0x384] sm:$0xf]
  %v263 = vld [vmem:[%s1 + $0x388] sm:$0xf]
  %v264 = vld [vmem:[%s1 + $0x38c] sm:$0xf]
  %v265 = vld [vmem:[%s1 + $0x390] sm:$0xf]
  %v266 = vld [vmem:[%s1 + $0x394] sm:$0xf]
  %v267 = vld [vmem:[%s1 + $0x398] sm:$0xf]
  %v268 = vld [vmem:[%s1 + $0x39c] sm:$0xf]
  %v269 = vld [vmem:[%s1 + $0x3a0] sm:$0xf]
  %v270 = vld [vmem:[%s1 + $0x3a4] sm:$0xf]
  %v271 = vld [vmem:[%s1 + $0x3a8] sm:$0xf]
  %v272 = vld [vmem:[%s1 + $0x3ac] sm:$0xf]
  %v273 = vld [vmem:[%s1 + $0x3b0] sm:$0xf]
  %v274 = vld [vmem:[%s1 + $0x3b4] sm:$0xf]
  %v275 = vld [vmem:[%s1 + $0x3b8] sm:$0xf]
  %v276 = vld [vmem:[%s1 + $0x3bc] sm:$0xf]
  %v277 = vld [vmem:[%s1 + $0x3c0] sm:$0xf]
  %v278 = vld [vmem:[%s1 + $0x3c4] sm:$0xf]
  %v279 = vld [vmem:[%s1 + $0x3c8] sm:$0xf]
  %v280 = vld [vmem:[%s1 + $0x3cc] sm:$0xf]
  %v281 = vld [vmem:[%s1 + $0x3d0] sm:$0xf]
  %v282 = vld [vmem:[%s1 + $0x3d4] sm:$0xf]
  %v283 = vld [vmem:[%s1 + $0x3d8] sm:$0xf]
  %v284 = vld [vmem:[%s1 + $0x3dc] sm:$0xf]
  %v285 = vld [vmem:[%s1 + $0x3e0] sm:$0xf]
  %v286 = vld [vmem:[%s1 + $0x3e4] sm:$0xf]
  %v287 = vld [vmem:[%s1 + $0x3e8] sm:$0xf]
  %v288 = vld [vmem:[%s1 + $0x3ec] sm:$0xf]
  %v289 = vld [vmem:[%s1 + $0x3f0] sm:$0xf]
  %v290 = vld [vmem:[%s1 + $0x3f4] sm:$0xf]
  %v291 = vld [vmem:[%s1 + $0x3f8] sm:$0xf]
  %v292 = vld [vmem:[%s1 + $0x3fc] sm:$0xf]
  %v293 = vld [vmem:[%s1 + $0x400] sm:$0xf]
  %v294 = vld [vmem:[%s1 + $0x404] sm:$0xf]
  %v295 = vld [vmem:[%s1 + $0x408] sm:$0xf]
  %v296 = vld [vmem:[%s1 + $0x40c] sm:$0xf]
  %v297 = vld [vmem:[%s1 + $0x410] sm:$0xf]
  %v298 = vld [vmem:[%s1 + $0x414] sm:$0xf]
  %v299 = vld [vmem:[%s1 + $0x418] sm:$0xf]
  %v300 = vld [vmem:[%s1 + $0x41c] sm:$0xf]
  %v301 = vld [vmem:[%s1 + $0x420] sm:$0xf]
  %v302 = vld [vmem:[%s1 + $0x424] sm:$0xf]
  %v303 = vld [vmem:[%s1 + $0x428] sm:$0xf]
  %v304 = vld [vmem:[%s1 + $0x42c] sm:$0xf]
  %v305 = vld [vmem:[%s1 + $0x430] sm:$0xf]
  %v306 = vld [vmem:[%s1 + $0x434] sm:$0xf]
  %v307 = vld [vmem:[%s1 + $0x438] sm:$0xf]
  %v308 = vld [vmem:[%s1 + $0x43c] sm:$0xf]
  %v309 = vld [vmem:[%s1 + $0x440] sm:$0xf]
  %v310 = vld [vmem:[%s1 + $0x444] sm:$0xf]
  %v311 = vld [vmem:[%s1 + $0x448] sm:$0xf]
  %v312 = vld [vmem:[%s1 + $0x44c] sm:$0xf]
  %v313 = vld [vmem:[%s1 + $0x450] sm:$0xf]
  %v314 = vld [vmem:[%s1 + $0x454] sm:$0xf]
  %v315 = vld [vmem:[%s1 + $0x458] sm:$0xf]
  %v316 = vld [vmem:[%s1 + $0x45c] sm:$0xf]
  %v317 = vld [vmem:[%s1 + $0x460] sm:$0xf]
  %v318 = vld [vmem:[%s1 + $0x464] sm:$0xf]
  %v319 = vld [vmem:[%s1 + $0x468] sm:$0xf]
  %v320 = vld [vmem:[%s1 + $0x46c] sm:$0xf]
  %v321 = vld [vmem:[%s1 + $0x470] sm:$0xf]
  %v322 = vld [vmem:[%s1 + $0x474] sm:$0xf]
  %v323 = vld [vmem:[%s1 + $0x478] sm:$0xf]
  %v324 = vld [vmem:[%s1 + $0x47c] sm:$0xf]
  %v325 = vld [vmem:[%s1 + $0x480] sm:$0xf]
  %v326 = vld [vmem:[%s1 + $0x484] sm:$0xf]
  %v327 = vld [vmem:[%s1 + $0x488] sm:$0xf]
  %v328 = vld [vmem:[%s1 + $0x48c] sm:$0xf]
  %v329 = vld [vmem:[%s1 + $0x490] sm:$0xf]
  %v330 = vld [vmem:[%s1 + $0x494] sm:$0xf]
  %v331 = vld [vmem:[%s1 + $0x498] sm:$0xf]
  %v332 = vld [vmem:[%s1 + $0x49c] sm:$0xf]
  %v333 = vld [vmem:[%s1 + $0x4a0] sm:$0xf]
  %v334 = vld [vmem:[%s1 + $0x4a4] sm:$0xf]
  %v335 = vld [vmem:[%s1 + $0x4a8] sm:$0xf]
  %v336 = vld [vmem:[%s1 + $0x4ac] sm:$0xf]
  %v337 = vld [vmem:[%s1 + $0x4b0] sm:$0xf]
  %v338 = vld [vmem:[%s1 + $0x4b4] sm:$0xf]
  %v339 = vld [vmem:[%s1 + $0x4b8] sm:$0xf]
  %v340 = vld [vmem:[%s1 + $0x4bc] sm:$0xf]
  %v341 = vld [vmem:[%s1 + $0x4c0] sm:$0xf]
  %v342 = vld [vmem:[%s1 + $0x4c4] sm:$0xf]
  %v343 = vld [vmem:[%s1 + $0x4c8] sm:$0xf]
  %v344 = vld [vmem:[%s1 + $0x4cc] sm:$0xf]
  %v345 = vld [vmem:[%s1 + $0x4d0] sm:$0xf]
  %v346 = vld [vmem:[%s1 + $0x4d4] sm:$0xf]
  %v347 = vld [vmem:[%s1 + $0x4d8] sm:$0xf]
  %v348 = vld [vmem:[%s1 + $0x4dc] sm:$0xf]
  %v349 = vld [vmem:[%s1 + $0x4e0] sm:$0xf]
  %v350 = vld [vmem:[%s1 + $0x4e4] sm:$0xf]
  %v351 = vld [vmem:[%s1 + $0x4e8] sm:$0xf]
  %v352 = vld [vmem:[%s1 + $0x4ec] sm:$0xf]
  %v353 = vld [vmem:[%s1 + $0x4f0] sm:$0xf]
  %v354 = vld [vmem:[%s1 + $0x4f4] sm:$0xf]
  %v355 = vld [vmem:[%s1 + $0x4f8] sm:$0xf]
  %v356 = vld [vmem:[%s1 + $0x4fc] sm:$0xf]
  %v357 = vld [vmem:[%s1 + $0x500] sm:$0xf]
  %v358 = vld [vmem:[%s1 + $0x504] sm:$0xf]
  %v359 = vld [vmem:[%s1 + $0x508] sm:$0xf]
  %v360 = vld [vmem:[%s1 + $0x50c] sm:$0xf]
  %v361 = vld [vmem:[%s1 + $0x510] sm:$0xf]
  %v362 = vld [vmem:[%s1 + $0x514] sm:$0xf]
  %v363 = vld [vmem:[%s1 + $0x518] sm:$0xf]
  %v364 = vld [vmem:[%s1 + $0x51c] sm:$0xf]
  %v365 = vld [vmem:[%s1 + $0x520] sm:$0xf]
  %v366 = vld [vmem:[%s1 + $0x524] sm:$0xf]
  %v367 = vld [vmem:[%s1 + $0x528] sm:$0xf]
  %v368 = vld [vmem:[%s1 + $0x52c] sm:$0xf]
  %v369 = vld [vmem:[%s1 + $0x530] sm:$0xf]
  %v370 = vld [vmem:[%s1 + $0x534] sm:$0xf]
  %v371 = vld [vmem:[%s1 + $0x538] sm:$0xf]
  %v372 = vld [vmem:[%s1 + $0x53c] sm:$0xf]
  %v373 = vld [vmem:[%s1 + $0x540] sm:$0xf]
  %v374 = vld [vmem:[%s1 + $0x544] sm:$0xf]
  %v375 = vld [vmem:[%s1 + $0x548] sm:$0xf]
  %v376 = vld [vmem:[%s1 + $0x54c] sm:$0xf]
  %v377 = vld [vmem:[%s1 + $0x550] sm:$0xf]
  %v378 = vld [vmem:[%s1 + $0x554] sm:$0xf]
  %v379 = vld [vmem:[%s1 + $0x558] sm:$0xf]
  %v380 = vld [vmem:[%s1 + $0x55c] sm:$0xf]
  %v381 = vld [vmem:[%s1 + $0x560] sm:$0xf]
  %v382 = vld [vmem:[%s1 + $0x564] sm:$0xf]
  %v383 = vld [vmem:[%s1 + $0x568] sm:$0xf]
  %v384 = vld [vmem:[%s1 + $0x56c] sm:$0xf]
  %v385 = vld [vmem:[%s1 + $0x570] sm:$0xf]
  %v386 = vld [vmem:[%s1 + $0x574] sm:$0xf]
  %v387 = vld [vmem:[%s1 + $0x578] sm:$0xf]
  %v388 = vld [vmem:[%s1 + $0x57c] sm:$0xf]
  %v389 = vld [vmem:[%s1 + $0x580] sm:$0xf]
  %v390 = vld [vmem:[%s1 + $0x584] sm:$0xf]
  %v391 = vld [vmem:[%s1 + $0x588] sm:$0xf]
  %v392 = vld [vmem:[%s1 + $0x58c] sm:$0xf]
  %v393 = vld [vmem:[%s1 + $0x590] sm:$0xf]
  %v394 = vld [vmem:[%s1 + $0x594] sm:$0xf]
  %v395 = vld [vmem:[%s1 + $0x598] sm:$0xf]
  %v396 = vld [vmem:[%s1 + $0x59c] sm:$0xf]
  %v397 = vld [vmem:[%s1 + $0x5a0] sm:$0xf]
  %v398 = vld [vmem:[%s1 + $0x5a4] sm:$0xf]
  %v399 = vld [vmem:[%s1 + $0x5a8] sm:$0xf]
  %v400 = vld [vmem:[%s1 + $0x5ac] sm:$0xf]
  %v401 = vld [vmem:[%s1 + $0x5b0] sm:$0xf]
  %v402 = vld [vmem:[%s1 + $0x5b4] sm:$0xf]
  %v403 = vld [vmem:[%s1 + $0x5b8] sm:$0xf]
  %v404 = vld [vmem:[%s1 + $0x5bc] sm:$0xf]
  %v405 = vld [vmem:[%s1 + $0x5c0] sm:$0xf]
  %v406 = vld [vmem:[%s1 + $0x5c4] sm:$0xf]
  %v407 = vld [vmem:[%s1 + $0x5c8] sm:$0xf]
  %v408 = vld [vmem:[%s1 + $0x5cc] sm:$0xf]
  %v409 = vld [vmem:[%s1 + $0x5d0] sm:$0xf]
  %v410 = vld [vmem:[%s1 + $0x5d4] sm:$0xf]
  %v411 = vld [vmem:[%s1 + $0x5d8] sm:$0xf]
  %v412 = vld [vmem:[%s1 + $0x5dc] sm:$0xf]
  %v413 = vld [vmem:[%s1 + $0x5e0] sm:$0xf]
  %v414 = vld [vmem:[%s1 + $0x5e4] sm:$0xf]
  %v415 = vld [vmem:[%s1 + $0x5e8] sm:$0xf]
  %v416 = vld [vmem:[%s1 + $0x5ec] sm:$0xf]
  %v417 = vld [vmem:[%s1 + $0x5f0] sm:$0xf]
  %v418 = vld [vmem:[%s1 + $0x5f4] sm:$0xf]
  %v419 = vld [vmem:[%s1 + $0x5f8] sm:$0xf]
  %v420 = vld [vmem:[%s1 + $0x5fc] sm:$0xf]
  %v421 = vld [vmem:[%s1 + $0x600] sm:$0xf]
  %v422 = vld [vmem:[%s1 + $0x604] sm:$0xf]
  %v423 = vld [vmem:[%s1 + $0x608] sm:$0xf]
  %v424 = vld [vmem:[%s1 + $0x60c] sm:$0xf]
  %v425 = vld [vmem:[%s1 + $0x610] sm:$0xf]
  %v426 = vld [vmem:[%s1 + $0x614] sm:$0xf]
  %v427 = vld [vmem:[%s1 + $0x618] sm:$0xf]
  %v428 = vld [vmem:[%s1 + $0x61c] sm:$0xf]
  %v429 = vld [vmem:[%s1 + $0x620] sm:$0xf]
  %v430 = vld [vmem:[%s1 + $0x624] sm:$0xf]
  %v431 = vld [vmem:[%s1 + $0x628] sm:$0xf]
  %v432 = vld [vmem:[%s1 + $0x62c] sm:$0xf]
  %v433 = vld [vmem:[%s1 + $0x630] sm:$0xf]
  %v434 = vld [vmem:[%s1 + $0x634] sm:$0xf]
  %v435 = vld [vmem:[%s1 + $0x638] sm:$0xf]
  %v436 = vld [vmem:[%s1 + $0x63c] sm:$0xf]
  %v437 = vld [vmem:[%s1 + $0x640] sm:$0xf]
  %v438 = vld [vmem:[%s1 + $0x644] sm:$0xf]
  %v439 = vld [vmem:[%s1 + $0x648] sm:$0xf]
  %v440 = vld [vmem:[%s1 + $0x64c] sm:$0xf]
  %v441 = vld [vmem:[%s1 + $0x650] sm:$0xf]
  %v442 = vld [vmem:[%s1 + $0x654] sm:$0xf]
  %v443 = vld [vmem:[%s1 + $0x658] sm:$0xf]
  %v444 = vld [vmem:[%s1 + $0x65c] sm:$0xf]
  %v445 = vld [vmem:[%s1 + $0x660] sm:$0xf]
  %v446 = vld [vmem:[%s1 + $0x664] sm:$0xf]
  %v447 = vld [vmem:[%s1 + $0x668] sm:$0xf]
  %v448 = vld [vmem:[%s1 + $0x66c] sm:$0xf]
  %v449 = vld [vmem:[%s1 + $0x670] sm:$0xf]
  %v450 = vld [vmem:[%s1 + $0x674] sm:$0xf]
  %v451 = vld [vmem:[%s1 + $0x678] sm:$0xf]
  %v452 = vld [vmem:[%s1 + $0x67c] sm:$0xf]
  %v453 = vld [vmem:[%s1 + $0x680] sm:$0xf]
  %v454 = vld [vmem:[%s1 + $0x684] sm:$0xf]
  %v455 = vld [vmem:[%s1 + $0x688] sm:$0xf]
  %v456 = vld [vmem:[%s1 + $0x68c] sm:$0xf]
  %v457 = vld [vmem:[%s1 + $0x690] sm:$0xf]
  %v458 = vld [vmem:[%s1 + $0x694] sm:$0xf]
  %v459 = vld [vmem:[%s1 + $0x698] sm:$0xf]
  %v460 = vld [vmem:[%s1 + $0x69c] sm:$0xf]
  %v461 = vld [vmem:[%s1 + $0x6a0] sm:$0xf]
  %v462 = vld [vmem:[%s1 + $0x6a4] sm:$0xf]
  %v463 = vld [vmem:[%s1 + $0x6a8] sm:$0xf]
  %v464 = vld [vmem:[%s1 + $0x6ac] sm:$0xf]
  %v465 = vld [vmem:[%s1 + $0x6b0] sm:$0xf]
  %v466 = vld [vmem:[%s1 + $0x6b4] sm:$0xf]
  %v467 = vld [vmem:[%s1 + $0x6b8] sm:$0xf]
  %v468 = vld [vmem:[%s1 + $0x6bc] sm:$0xf]
  %v469 = vld [vmem:[%s1 + $0x6c0] sm:$0xf]
  %v470 = vld [vmem:[%s1 + $0x6c4] sm:$0xf]
  %v471 = vld [vmem:[%s1 + $0x6c8] sm:$0xf]
  %v472 = vld [vmem:[%s1 + $0x6cc] sm:$0xf]
  %v473 = vld [vmem:[%s1 + $0x6d0] sm:$0xf]
  %v474 = vld [vmem:[%s1 + $0x6d4] sm:$0xf]
  %v475 = vld [vmem:[%s1 + $0x6d8] sm:$0xf]
  %v476 = vld [vmem:[%s1 + $0x6dc] sm:$0xf]
  %v477 = vld [vmem:[%s1 + $0x6e0] sm:$0xf]
  %v478 = vld [vmem:[%s1 + $0x6e4] sm:$0xf]
  %v479 = vld [vmem:[%s1 + $0x6e8] sm:$0xf]
  %v480 = vld [vmem:[%s1 + $0x6ec] sm:$0xf]
  %v481 = vld [vmem:[%s1 + $0x6f0] sm:$0xf]
  %v482 = vld [vmem:[%s1 + $0x6f4] sm:$0xf]
  %v483 = vld [vmem:[%s1 + $0x6f8] sm:$0xf]
  %v484 = vld [vmem:[%s1 + $0x6fc] sm:$0xf]
  %v485 = vld [vmem:[%s1 + $0x700] sm:$0xf]
  %v486 = vld [vmem:[%s1 + $0x704] sm:$0xf]
  %v487 = vld [vmem:[%s1 + $0x708] sm:$0xf]
  %v488 = vld [vmem:[%s1 + $0x70c] sm:$0xf]
  %v489 = vld [vmem:[%s1 + $0x710] sm:$0xf]
  %v490 = vld [vmem:[%s1 + $0x714] sm:$0xf]
  %v491 = vld [vmem:[%s1 + $0x718] sm:$0xf]
  %v492 = vld [vmem:[%s1 + $0x71c] sm:$0xf]
  %v493 = vld [vmem:[%s1 + $0x720] sm:$0xf]
  %v494 = vld [vmem:[%s1 + $0x724] sm:$0xf]
  %v495 = vld [vmem:[%s1 + $0x728] sm:$0xf]
  %v496 = vld [vmem:[%s1 + $0x72c] sm:$0xf]
  %v497 = vld [vmem:[%s1 + $0x730] sm:$0xf]
  %v498 = vld [vmem:[%s1 + $0x734] sm:$0xf]
  %v499 = vld [vmem:[%s1 + $0x738] sm:$0xf]
  %v500 = vld [vmem:[%s1 + $0x73c] sm:$0xf]
  %v501 = vld [vmem:[%s1 + $0x740] sm:$0xf]
  %v502 = vld [vmem:[%s1 + $0x744] sm:$0xf]
  %v503 = vld [vmem:[%s1 + $0x748] sm:$0xf]
  %v504 = vld [vmem:[%s1 + $0x74c] sm:$0xf]
  %v505 = vld [vmem:[%s1 + $0x750] sm:$0xf]
  %v506 = vld [vmem:[%s1 + $0x754] sm:$0xf]
  %v507 = vld [vmem:[%s1 + $0x758] sm:$0xf]
  %v508 = vld [vmem:[%s1 + $0x75c] sm:$0xf]
  %v509 = vld [vmem:[%s1 + $0x760] sm:$0xf]
  %v510 = vld [vmem:[%s1 + $0x764] sm:$0xf]
  %v511 = vld [vmem:[%s1 + $0x768] sm:$0xf]
  %v512 = vld [vmem:[%s1 + $0x76c] sm:$0xf]
  %v513 = vld [vmem:[%s1 + $0x770] sm:$0xf]
  %v514 = vld [vmem:[%s1 + $0x774] sm:$0xf]
  %v515 = vld [vmem:[%s1 + $0x778] sm:$0xf]
  %v516 = vld [vmem:[%s1 + $0x77c] sm:$0xf]
  %v517 = vld [vmem:[%s1 + $0x780] sm:$0xf]
  %v518 = vld [vmem:[%s1 + $0x784] sm:$0xf]
  %v519 = vld [vmem:[%s1 + $0x788] sm:$0xf]
  %v520 = vld [vmem:[%s1 + $0x78c] sm:$0xf]
  %v521 = vld [vmem:[%s1 + $0x790] sm:$0xf]
  %v522 = vld [vmem:[%s1 + $0x794] sm:$0xf]
  %v523 = vld [vmem:[%s1 + $0x798] sm:$0xf]
  %v524 = vld [vmem:[%s1 + $0x79c] sm:$0xf]
  %v525 = vld [vmem:[%s1 + $0x7a0] sm:$0xf]
  %v526 = vld [vmem:[%s1 + $0x7a4] sm:$0xf]
  %v527 = vld [vmem:[%s1 + $0x7a8] sm:$0xf]
  %v528 = vld [vmem:[%s1 + $0x7ac] sm:$0xf]
  %v529 = vld [vmem:[%s1 + $0x7b0] sm:$0xf]
  %v530 = vld [vmem:[%s1 + $0x7b4] sm:$0xf]
  %v531 = vld [vmem:[%s1 + $0x7b8] sm:$0xf]
  %v532 = vld [vmem:[%s1 + $0x7bc] sm:$0xf]
  %v533 = vld [vmem:[%s1 + $0x7c0] sm:$0xf]
  %v534 = vld [vmem:[%s1 + $0x7c4] sm:$0xf]
  %v535 = vld [vmem:[%s1 + $0x7c8] sm:$0xf]
  %v536 = vld [vmem:[%s1 + $0x7cc] sm:$0xf]
  %v537 = vld [vmem:[%s1 + $0x7d0] sm:$0xf]
  %v538 = vld [vmem:[%s1 + $0x7d4] sm:$0xf]
  %v539 = vld [vmem:[%s1 + $0x7d8] sm:$0xf]
  %v540 = vld [vmem:[%s1 + $0x7dc] sm:$0xf]
  %v541 = vld [vmem:[%s1 + $0x7e0] sm:$0xf]
  %v542 = vld [vmem:[%s1 + $0x7e4] sm:$0xf]
  %v543 = vld [vmem:[%s1 + $0x7e8] sm:$0xf]
  %v544 = vld [vmem:[%s1 + $0x7ec] sm:$0xf]
  %v545 = vld [vmem:[%s1 + $0x7f0] sm:$0xf]
  %v546 = vld [vmem:[%s1 + $0x7f4] sm:$0xf]
  %v547 = vld [vmem:[%s1 + $0x7f8] sm:$0xf]
  %v548 = vld [vmem:[%s1 + $0x7fc] sm:$0xf]
  %v549 = vld [vmem:[%s2] sm:$0x1]
  %v551 = vlaneseq
  %v552 = vshrl.u32 %v551, 7
  %v553 = vsub.s32 0, %v552
  %v554 = vrot.slane %v549, %v553
  %v572 = vunpack.c.l.b16 %v21
  %v573 = vunpack.c.h.b16 %v21
  %v574 = vunpack.c.l.b16 %v22
  %v575 = vunpack.c.h.b16 %v22
  %v576 = vunpack.c.l.b16 %v23
  %v577 = vunpack.c.h.b16 %v23
  %v578 = vunpack.c.l.b16 %v24
  %v579 = vunpack.c.h.b16 %v24
  %v580 = vunpack.c.l.b16 %v25
  %v581 = vunpack.c.h.b16 %v25
  %v582 = vunpack.c.l.b16 %v26
  %v583 = vunpack.c.h.b16 %v26
  %v584 = vunpack.c.l.b16 %v27
  %v585 = vunpack.c.h.b16 %v27
  %v586 = vunpack.c.l.b16 %v28
  %v587 = vunpack.c.h.b16 %v28
  %v588 = vunpack.c.l.b16 %v29
  %v589 = vunpack.c.h.b16 %v29
  %v590 = vunpack.c.l.b16 %v30
  %v591 = vunpack.c.h.b16 %v30
  %v592 = vunpack.c.l.b16 %v31
  %v593 = vunpack.c.h.b16 %v31
  %v594 = vunpack.c.l.b16 %v32
  %v595 = vunpack.c.h.b16 %v32
  %v596 = vunpack.c.l.b16 %v33
  %v597 = vunpack.c.h.b16 %v33
  %v598 = vunpack.c.l.b16 %v34
  %v599 = vunpack.c.h.b16 %v34
  %v600 = vunpack.c.l.b16 %v35
  %v601 = vunpack.c.h.b16 %v35
  %v602 = vunpack.c.l.b16 %v36
  %v603 = vunpack.c.h.b16 %v36
  %v604 = vpack.c.b16 %v572, %v572
  %v605 = vpack.c.b16 %v573, %v573
  %v606 = vpack.c.b16 %v574, %v574
  %v607 = vpack.c.b16 %v575, %v575
  %v608 = vpack.c.b16 %v576, %v576
  %v609 = vpack.c.b16 %v577, %v577
  %v610 = vpack.c.b16 %v578, %v578
  %v611 = vpack.c.b16 %v579, %v579
  %v612 = vpack.c.b16 %v580, %v580
  %v613 = vpack.c.b16 %v581, %v581
  %v614 = vpack.c.b16 %v582, %v582
  %v615 = vpack.c.b16 %v583, %v583
  %v616 = vpack.c.b16 %v584, %v584
  %v617 = vpack.c.b16 %v585, %v585
  %v618 = vpack.c.b16 %v586, %v586
  %v619 = vpack.c.b16 %v587, %v587
  %v620 = vpack.c.b16 %v588, %v588
  %v621 = vpack.c.b16 %v589, %v589
  %v622 = vpack.c.b16 %v590, %v590
  %v623 = vpack.c.b16 %v591, %v591
  %v624 = vpack.c.b16 %v592, %v592
  %v625 = vpack.c.b16 %v593, %v593
  %v626 = vpack.c.b16 %v594, %v594
  %v627 = vpack.c.b16 %v595, %v595
  %v628 = vpack.c.b16 %v596, %v596
  %v629 = vpack.c.b16 %v597, %v597
  %v630 = vpack.c.b16 %v598, %v598
  %v631 = vpack.c.b16 %v599, %v599
  %v632 = vpack.c.b16 %v600, %v600
  %v633 = vpack.c.b16 %v601, %v601
  %v634 = vpack.c.b16 %v602, %v602
  %v635 = vpack.c.b16 %v603, %v603
  %v1180 = vunpack.c.l.b16 %v37
  %v1181 = vunpack.c.l.b16 %v38
  %v1182 = vunpack.c.l.b16 %v39
  %v1183 = vunpack.c.l.b16 %v40
  %v1184 = vunpack.c.l.b16 %v41
  %v1185 = vunpack.c.l.b16 %v42
  %v1186 = vunpack.c.l.b16 %v43
  %v1187 = vunpack.c.l.b16 %v44
  %v1188 = vunpack.c.l.b16 %v45
  %v1189 = vunpack.c.l.b16 %v46
  %v1190 = vunpack.c.l.b16 %v47
  %v1191 = vunpack.c.l.b16 %v48
  %v1192 = vunpack.c.l.b16 %v49
  %v1193 = vunpack.c.l.b16 %v50
  %v1194 = vunpack.c.l.b16 %v51
  %v1195 = vunpack.c.l.b16 %v52
  %v1196 = vunpack.c.l.b16 %v53
  %v1197 = vunpack.c.l.b16 %v54
  %v1198 = vunpack.c.l.b16 %v55
  %v1199 = vunpack.c.l.b16 %v56
  %v1200 = vunpack.c.l.b16 %v57
  %v1201 = vunpack.c.l.b16 %v58
  %v1202 = vunpack.c.l.b16 %v59
  %v1203 = vunpack.c.l.b16 %v60
  %v1204 = vunpack.c.l.b16 %v61
  %v1205 = vunpack.c.l.b16 %v62
  %v1206 = vunpack.c.l.b16 %v63
  %v1207 = vunpack.c.l.b16 %v64
  %v1208 = vunpack.c.l.b16 %v65
  %v1209 = vunpack.c.l.b16 %v66
  %v1210 = vunpack.c.l.b16 %v67
  %v1211 = vunpack.c.l.b16 %v68
  %v1212 = vunpack.c.l.b16 %v69
  %v1213 = vunpack.c.l.b16 %v70
  %v1214 = vunpack.c.l.b16 %v71
  %v1215 = vunpack.c.l.b16 %v72
  %v1216 = vunpack.c.l.b16 %v73
  %v1217 = vunpack.c.l.b16 %v74
  %v1218 = vunpack.c.l.b16 %v75
  %v1219 = vunpack.c.l.b16 %v76
  %v1220 = vunpack.c.l.b16 %v77
  %v1221 = vunpack.c.l.b16 %v78
  %v1222 = vunpack.c.l.b16 %v79
  %v1223 = vunpack.c.l.b16 %v80
  %v1224 = vunpack.c.l.b16 %v81
  %v1225 = vunpack.c.l.b16 %v82
  %v1226 = vunpack.c.l.b16 %v83
  %v1227 = vunpack.c.l.b16 %v84
  %v1228 = vunpack.c.l.b16 %v85
  %v1229 = vunpack.c.l.b16 %v86
  %v1230 = vunpack.c.l.b16 %v87
  %v1231 = vunpack.c.l.b16 %v88
  %v1232 = vunpack.c.l.b16 %v89
  %v1233 = vunpack.c.l.b16 %v90
  %v1234 = vunpack.c.l.b16 %v91
  %v1235 = vunpack.c.l.b16 %v92
  %v1236 = vunpack.c.l.b16 %v93
  %v1237 = vunpack.c.l.b16 %v94
  %v1238 = vunpack.c.l.b16 %v95
  %v1239 = vunpack.c.l.b16 %v96
  %v1240 = vunpack.c.l.b16 %v97
  %v1241 = vunpack.c.l.b16 %v98
  %v1242 = vunpack.c.l.b16 %v99
  %v1243 = vunpack.c.l.b16 %v100
  %v1244 = vunpack.c.l.b16 %v101
  %v1245 = vunpack.c.l.b16 %v102
  %v1246 = vunpack.c.l.b16 %v103
  %v1247 = vunpack.c.l.b16 %v104
  %v1248 = vunpack.c.l.b16 %v105
  %v1249 = vunpack.c.l.b16 %v106
  %v1250 = vunpack.c.l.b16 %v107
  %v1251 = vunpack.c.l.b16 %v108
  %v1252 = vunpack.c.l.b16 %v109
  %v1253 = vunpack.c.l.b16 %v110
  %v1254 = vunpack.c.l.b16 %v111
  %v1255 = vunpack.c.l.b16 %v112
  %v1256 = vunpack.c.l.b16 %v113
  %v1257 = vunpack.c.l.b16 %v114
  %v1258 = vunpack.c.l.b16 %v115
  %v1259 = vunpack.c.l.b16 %v116
  %v1260 = vunpack.c.l.b16 %v117
  %v1261 = vunpack.c.l.b16 %v118
  %v1262 = vunpack.c.l.b16 %v119
  %v1263 = vunpack.c.l.b16 %v120
  %v1264 = vunpack.c.l.b16 %v121
  %v1265 = vunpack.c.l.b16 %v122
  %v1266 = vunpack.c.l.b16 %v123
  %v1267 = vunpack.c.l.b16 %v124
  %v1268 = vunpack.c.l.b16 %v125
  %v1269 = vunpack.c.l.b16 %v126
  %v1270 = vunpack.c.l.b16 %v127
  %v1271 = vunpack.c.l.b16 %v128
  %v1272 = vunpack.c.l.b16 %v129
  %v1273 = vunpack.c.l.b16 %v130
  %v1274 = vunpack.c.l.b16 %v131
  %v1275 = vunpack.c.l.b16 %v132
  %v1276 = vunpack.c.l.b16 %v133
  %v1277 = vunpack.c.l.b16 %v134
  %v1278 = vunpack.c.l.b16 %v135
  %v1279 = vunpack.c.l.b16 %v136
  %v1280 = vunpack.c.l.b16 %v137
  %v1281 = vunpack.c.l.b16 %v138
  %v1282 = vunpack.c.l.b16 %v139
  %v1283 = vunpack.c.l.b16 %v140
  %v1284 = vunpack.c.l.b16 %v141
  %v1285 = vunpack.c.l.b16 %v142
  %v1286 = vunpack.c.l.b16 %v143
  %v1287 = vunpack.c.l.b16 %v144
  %v1288 = vunpack.c.l.b16 %v145
  %v1289 = vunpack.c.l.b16 %v146
  %v1290 = vunpack.c.l.b16 %v147
  %v1291 = vunpack.c.l.b16 %v148
  %v1292 = vunpack.c.l.b16 %v149
  %v1293 = vunpack.c.l.b16 %v150
  %v1294 = vunpack.c.l.b16 %v151
  %v1295 = vunpack.c.l.b16 %v152
  %v1296 = vunpack.c.l.b16 %v153
  %v1297 = vunpack.c.l.b16 %v154
  %v1298 = vunpack.c.l.b16 %v155
  %v1299 = vunpack.c.l.b16 %v156
  %v1300 = vunpack.c.l.b16 %v157
  %v1301 = vunpack.c.l.b16 %v158
  %v1302 = vunpack.c.l.b16 %v159
  %v1303 = vunpack.c.l.b16 %v160
  %v1304 = vunpack.c.l.b16 %v161
  %v1305 = vunpack.c.l.b16 %v162
  %v1306 = vunpack.c.l.b16 %v163
  %v1307 = vunpack.c.l.b16 %v164
  %v1308 = vunpack.c.l.b16 %v165
  %v1309 = vunpack.c.l.b16 %v166
  %v1310 = vunpack.c.l.b16 %v167
  %v1311 = vunpack.c.l.b16 %v168
  %v1312 = vunpack.c.l.b16 %v169
  %v1313 = vunpack.c.l.b16 %v170
  %v1314 = vunpack.c.l.b16 %v171
  %v1315 = vunpack.c.l.b16 %v172
  %v1316 = vunpack.c.l.b16 %v173
  %v1317 = vunpack.c.l.b16 %v174
  %v1318 = vunpack.c.l.b16 %v175
  %v1319 = vunpack.c.l.b16 %v176
  %v1320 = vunpack.c.l.b16 %v177
  %v1321 = vunpack.c.l.b16 %v178
  %v1322 = vunpack.c.l.b16 %v179
  %v1323 = vunpack.c.l.b16 %v180
  %v1324 = vunpack.c.l.b16 %v181
  %v1325 = vunpack.c.l.b16 %v182
  %v1326 = vunpack.c.l.b16 %v183
  %v1327 = vunpack.c.l.b16 %v184
  %v1328 = vunpack.c.l.b16 %v185
  %v1329 = vunpack.c.l.b16 %v186
  %v1330 = vunpack.c.l.b16 %v187
  %v1331 = vunpack.c.l.b16 %v188
  %v1332 = vunpack.c.l.b16 %v189
  %v1333 = vunpack.c.l.b16 %v190
  %v1334 = vunpack.c.l.b16 %v191
  %v1335 = vunpack.c.l.b16 %v192
  %v1336 = vunpack.c.l.b16 %v193
  %v1337 = vunpack.c.l.b16 %v194
  %v1338 = vunpack.c.l.b16 %v195
  %v1339 = vunpack.c.l.b16 %v196
  %v1340 = vunpack.c.l.b16 %v197
  %v1341 = vunpack.c.l.b16 %v198
  %v1342 = vunpack.c.l.b16 %v199
  %v1343 = vunpack.c.l.b16 %v200
  %v1344 = vunpack.c.l.b16 %v201
  %v1345 = vunpack.c.l.b16 %v202
  %v1346 = vunpack.c.l.b16 %v203
  %v1347 = vunpack.c.l.b16 %v204
  %v1348 = vunpack.c.l.b16 %v205
  %v1349 = vunpack.c.l.b16 %v206
  %v1350 = vunpack.c.l.b16 %v207
  %v1351 = vunpack.c.l.b16 %v208
  %v1352 = vunpack.c.l.b16 %v209
  %v1353 = vunpack.c.l.b16 %v210
  %v1354 = vunpack.c.l.b16 %v211
  %v1355 = vunpack.c.l.b16 %v212
  %v1356 = vunpack.c.l.b16 %v213
  %v1357 = vunpack.c.l.b16 %v214
  %v1358 = vunpack.c.l.b16 %v215
  %v1359 = vunpack.c.l.b16 %v216
  %v1360 = vunpack.c.l.b16 %v217
  %v1361 = vunpack.c.l.b16 %v218
  %v1362 = vunpack.c.l.b16 %v219
  %v1363 = vunpack.c.l.b16 %v220
  %v1364 = vunpack.c.l.b16 %v221
  %v1365 = vunpack.c.l.b16 %v222
  %v1366 = vunpack.c.l.b16 %v223
  %v1367 = vunpack.c.l.b16 %v224
  %v1368 = vunpack.c.l.b16 %v225
  %v1369 = vunpack.c.l.b16 %v226
  %v1370 = vunpack.c.l.b16 %v227
  %v1371 = vunpack.c.l.b16 %v228
  %v1372 = vunpack.c.l.b16 %v229
  %v1373 = vunpack.c.l.b16 %v230
  %v1374 = vunpack.c.l.b16 %v231
  %v1375 = vunpack.c.l.b16 %v232
  %v1376 = vunpack.c.l.b16 %v233
  %v1377 = vunpack.c.l.b16 %v234
  %v1378 = vunpack.c.l.b16 %v235
  %v1379 = vunpack.c.l.b16 %v236
  %v1380 = vunpack.c.l.b16 %v237
  %v1381 = vunpack.c.l.b16 %v238
  %v1382 = vunpack.c.l.b16 %v239
  %v1383 = vunpack.c.l.b16 %v240
  %v1384 = vunpack.c.l.b16 %v241
  %v1385 = vunpack.c.l.b16 %v242
  %v1386 = vunpack.c.l.b16 %v243
  %v1387 = vunpack.c.l.b16 %v244
  %v1388 = vunpack.c.l.b16 %v245
  %v1389 = vunpack.c.l.b16 %v246
  %v1390 = vunpack.c.l.b16 %v247
  %v1391 = vunpack.c.l.b16 %v248
  %v1392 = vunpack.c.l.b16 %v249
  %v1393 = vunpack.c.l.b16 %v250
  %v1394 = vunpack.c.l.b16 %v251
  %v1395 = vunpack.c.l.b16 %v252
  %v1396 = vunpack.c.l.b16 %v253
  %v1397 = vunpack.c.l.b16 %v254
  %v1398 = vunpack.c.l.b16 %v255
  %v1399 = vunpack.c.l.b16 %v256
  %v1400 = vunpack.c.l.b16 %v257
  %v1401 = vunpack.c.l.b16 %v258
  %v1402 = vunpack.c.l.b16 %v259
  %v1403 = vunpack.c.l.b16 %v260
  %v1404 = vunpack.c.l.b16 %v261
  %v1405 = vunpack.c.l.b16 %v262
  %v1406 = vunpack.c.l.b16 %v263
  %v1407 = vunpack.c.l.b16 %v264
  %v1408 = vunpack.c.l.b16 %v265
  %v1409 = vunpack.c.l.b16 %v266
  %v1410 = vunpack.c.l.b16 %v267
  %v1411 = vunpack.c.l.b16 %v268
  %v1412 = vunpack.c.l.b16 %v269
  %v1413 = vunpack.c.l.b16 %v270
  %v1414 = vunpack.c.l.b16 %v271
  %v1415 = vunpack.c.l.b16 %v272
  %v1416 = vunpack.c.l.b16 %v273
  %v1417 = vunpack.c.l.b16 %v274
  %v1418 = vunpack.c.l.b16 %v275
  %v1419 = vunpack.c.l.b16 %v276
  %v1420 = vunpack.c.l.b16 %v277
  %v1421 = vunpack.c.l.b16 %v278
  %v1422 = vunpack.c.l.b16 %v279
  %v1423 = vunpack.c.l.b16 %v280
  %v1424 = vunpack.c.l.b16 %v281
  %v1425 = vunpack.c.l.b16 %v282
  %v1426 = vunpack.c.l.b16 %v283
  %v1427 = vunpack.c.l.b16 %v284
  %v1428 = vunpack.c.l.b16 %v285
  %v1429 = vunpack.c.l.b16 %v286
  %v1430 = vunpack.c.l.b16 %v287
  %v1431 = vunpack.c.l.b16 %v288
  %v1432 = vunpack.c.l.b16 %v289
  %v1433 = vunpack.c.l.b16 %v290
  %v1434 = vunpack.c.l.b16 %v291
  %v1435 = vunpack.c.l.b16 %v292
  %v1436 = vunpack.c.l.b16 %v293
  %v1437 = vunpack.c.l.b16 %v294
  %v1438 = vunpack.c.l.b16 %v295
  %v1439 = vunpack.c.l.b16 %v296
  %v1440 = vunpack.c.l.b16 %v297
  %v1441 = vunpack.c.l.b16 %v298
  %v1442 = vunpack.c.l.b16 %v299
  %v1443 = vunpack.c.l.b16 %v300
  %v1444 = vunpack.c.l.b16 %v301
  %v1445 = vunpack.c.l.b16 %v302
  %v1446 = vunpack.c.l.b16 %v303
  %v1447 = vunpack.c.l.b16 %v304
  %v1448 = vunpack.c.l.b16 %v305
  %v1449 = vunpack.c.l.b16 %v306
  %v1450 = vunpack.c.l.b16 %v307
  %v1451 = vunpack.c.l.b16 %v308
  %v1452 = vunpack.c.l.b16 %v309
  %v1453 = vunpack.c.l.b16 %v310
  %v1454 = vunpack.c.l.b16 %v311
  %v1455 = vunpack.c.l.b16 %v312
  %v1456 = vunpack.c.l.b16 %v313
  %v1457 = vunpack.c.l.b16 %v314
  %v1458 = vunpack.c.l.b16 %v315
  %v1459 = vunpack.c.l.b16 %v316
  %v1460 = vunpack.c.l.b16 %v317
  %v1461 = vunpack.c.l.b16 %v318
  %v1462 = vunpack.c.l.b16 %v319
  %v1463 = vunpack.c.l.b16 %v320
  %v1464 = vunpack.c.l.b16 %v321
  %v1465 = vunpack.c.l.b16 %v322
  %v1466 = vunpack.c.l.b16 %v323
  %v1467 = vunpack.c.l.b16 %v324
  %v1468 = vunpack.c.l.b16 %v325
  %v1469 = vunpack.c.l.b16 %v326
  %v1470 = vunpack.c.l.b16 %v327
  %v1471 = vunpack.c.l.b16 %v328
  %v1472 = vunpack.c.l.b16 %v329
  %v1473 = vunpack.c.l.b16 %v330
  %v1474 = vunpack.c.l.b16 %v331
  %v1475 = vunpack.c.l.b16 %v332
  %v1476 = vunpack.c.l.b16 %v333
  %v1477 = vunpack.c.l.b16 %v334
  %v1478 = vunpack.c.l.b16 %v335
  %v1479 = vunpack.c.l.b16 %v336
  %v1480 = vunpack.c.l.b16 %v337
  %v1481 = vunpack.c.l.b16 %v338
  %v1482 = vunpack.c.l.b16 %v339
  %v1483 = vunpack.c.l.b16 %v340
  %v1484 = vunpack.c.l.b16 %v341
  %v1485 = vunpack.c.l.b16 %v342
  %v1486 = vunpack.c.l.b16 %v343
  %v1487 = vunpack.c.l.b16 %v344
  %v1488 = vunpack.c.l.b16 %v345
  %v1489 = vunpack.c.l.b16 %v346
  %v1490 = vunpack.c.l.b16 %v347
  %v1491 = vunpack.c.l.b16 %v348
  %v1492 = vunpack.c.l.b16 %v349
  %v1493 = vunpack.c.l.b16 %v350
  %v1494 = vunpack.c.l.b16 %v351
  %v1495 = vunpack.c.l.b16 %v352
  %v1496 = vunpack.c.l.b16 %v353
  %v1497 = vunpack.c.l.b16 %v354
  %v1498 = vunpack.c.l.b16 %v355
  %v1499 = vunpack.c.l.b16 %v356
  %v1500 = vunpack.c.l.b16 %v357
  %v1501 = vunpack.c.l.b16 %v358
  %v1502 = vunpack.c.l.b16 %v359
  %v1503 = vunpack.c.l.b16 %v360
  %v1504 = vunpack.c.l.b16 %v361
  %v1505 = vunpack.c.l.b16 %v362
  %v1506 = vunpack.c.l.b16 %v363
  %v1507 = vunpack.c.l.b16 %v364
  %v1508 = vunpack.c.l.b16 %v365
  %v1509 = vunpack.c.l.b16 %v366
  %v1510 = vunpack.c.l.b16 %v367
  %v1511 = vunpack.c.l.b16 %v368
  %v1512 = vunpack.c.l.b16 %v369
  %v1513 = vunpack.c.l.b16 %v370
  %v1514 = vunpack.c.l.b16 %v371
  %v1515 = vunpack.c.l.b16 %v372
  %v1516 = vunpack.c.l.b16 %v373
  %v1517 = vunpack.c.l.b16 %v374
  %v1518 = vunpack.c.l.b16 %v375
  %v1519 = vunpack.c.l.b16 %v376
  %v1520 = vunpack.c.l.b16 %v377
  %v1521 = vunpack.c.l.b16 %v378
  %v1522 = vunpack.c.l.b16 %v379
  %v1523 = vunpack.c.l.b16 %v380
  %v1524 = vunpack.c.l.b16 %v381
  %v1525 = vunpack.c.l.b16 %v382
  %v1526 = vunpack.c.l.b16 %v383
  %v1527 = vunpack.c.l.b16 %v384
  %v1528 = vunpack.c.l.b16 %v385
  %v1529 = vunpack.c.l.b16 %v386
  %v1530 = vunpack.c.l.b16 %v387
  %v1531 = vunpack.c.l.b16 %v388
  %v1532 = vunpack.c.l.b16 %v389
  %v1533 = vunpack.c.l.b16 %v390
  %v1534 = vunpack.c.l.b16 %v391
  %v1535 = vunpack.c.l.b16 %v392
  %v1536 = vunpack.c.l.b16 %v393
  %v1537 = vunpack.c.l.b16 %v394
  %v1538 = vunpack.c.l.b16 %v395
  %v1539 = vunpack.c.l.b16 %v396
  %v1540 = vunpack.c.l.b16 %v397
  %v1541 = vunpack.c.l.b16 %v398
  %v1542 = vunpack.c.l.b16 %v399
  %v1543 = vunpack.c.l.b16 %v400
  %v1544 = vunpack.c.l.b16 %v401
  %v1545 = vunpack.c.l.b16 %v402
  %v1546 = vunpack.c.l.b16 %v403
  %v1547 = vunpack.c.l.b16 %v404
  %v1548 = vunpack.c.l.b16 %v405
  %v1549 = vunpack.c.l.b16 %v406
  %v1550 = vunpack.c.l.b16 %v407
  %v1551 = vunpack.c.l.b16 %v408
  %v1552 = vunpack.c.l.b16 %v409
  %v1553 = vunpack.c.l.b16 %v410
  %v1554 = vunpack.c.l.b16 %v411
  %v1555 = vunpack.c.l.b16 %v412
  %v1556 = vunpack.c.l.b16 %v413
  %v1557 = vunpack.c.l.b16 %v414
  %v1558 = vunpack.c.l.b16 %v415
  %v1559 = vunpack.c.l.b16 %v416
  %v1560 = vunpack.c.l.b16 %v417
  %v1561 = vunpack.c.l.b16 %v418
  %v1562 = vunpack.c.l.b16 %v419
  %v1563 = vunpack.c.l.b16 %v420
  %v1564 = vunpack.c.l.b16 %v421
  %v1565 = vunpack.c.l.b16 %v422
  %v1566 = vunpack.c.l.b16 %v423
  %v1567 = vunpack.c.l.b16 %v424
  %v1568 = vunpack.c.l.b16 %v425
  %v1569 = vunpack.c.l.b16 %v426
  %v1570 = vunpack.c.l.b16 %v427
  %v1571 = vunpack.c.l.b16 %v428
  %v1572 = vunpack.c.l.b16 %v429
  %v1573 = vunpack.c.l.b16 %v430
  %v1574 = vunpack.c.l.b16 %v431
  %v1575 = vunpack.c.l.b16 %v432
  %v1576 = vunpack.c.l.b16 %v433
  %v1577 = vunpack.c.l.b16 %v434
  %v1578 = vunpack.c.l.b16 %v435
  %v1579 = vunpack.c.l.b16 %v436
  %v1580 = vunpack.c.l.b16 %v437
  %v1581 = vunpack.c.l.b16 %v438
  %v1582 = vunpack.c.l.b16 %v439
  %v1583 = vunpack.c.l.b16 %v440
  %v1584 = vunpack.c.l.b16 %v441
  %v1585 = vunpack.c.l.b16 %v442
  %v1586 = vunpack.c.l.b16 %v443
  %v1587 = vunpack.c.l.b16 %v444
  %v1588 = vunpack.c.l.b16 %v445
  %v1589 = vunpack.c.l.b16 %v446
  %v1590 = vunpack.c.l.b16 %v447
  %v1591 = vunpack.c.l.b16 %v448
  %v1592 = vunpack.c.l.b16 %v449
  %v1593 = vunpack.c.l.b16 %v450
  %v1594 = vunpack.c.l.b16 %v451
  %v1595 = vunpack.c.l.b16 %v452
  %v1596 = vunpack.c.l.b16 %v453
  %v1597 = vunpack.c.l.b16 %v454
  %v1598 = vunpack.c.l.b16 %v455
  %v1599 = vunpack.c.l.b16 %v456
  %v1600 = vunpack.c.l.b16 %v457
  %v1601 = vunpack.c.l.b16 %v458
  %v1602 = vunpack.c.l.b16 %v459
  %v1603 = vunpack.c.l.b16 %v460
  %v1604 = vunpack.c.l.b16 %v461
  %v1605 = vunpack.c.l.b16 %v462
  %v1606 = vunpack.c.l.b16 %v463
  %v1607 = vunpack.c.l.b16 %v464
  %v1608 = vunpack.c.l.b16 %v465
  %v1609 = vunpack.c.l.b16 %v466
  %v1610 = vunpack.c.l.b16 %v467
  %v1611 = vunpack.c.l.b16 %v468
  %v1612 = vunpack.c.l.b16 %v469
  %v1613 = vunpack.c.l.b16 %v470
  %v1614 = vunpack.c.l.b16 %v471
  %v1615 = vunpack.c.l.b16 %v472
  %v1616 = vunpack.c.l.b16 %v473
  %v1617 = vunpack.c.l.b16 %v474
  %v1618 = vunpack.c.l.b16 %v475
  %v1619 = vunpack.c.l.b16 %v476
  %v1620 = vunpack.c.l.b16 %v477
  %v1621 = vunpack.c.l.b16 %v478
  %v1622 = vunpack.c.l.b16 %v479
  %v1623 = vunpack.c.l.b16 %v480
  %v1624 = vunpack.c.l.b16 %v481
  %v1625 = vunpack.c.l.b16 %v482
  %v1626 = vunpack.c.l.b16 %v483
  %v1627 = vunpack.c.l.b16 %v484
  %v1628 = vunpack.c.l.b16 %v485
  %v1629 = vunpack.c.l.b16 %v486
  %v1630 = vunpack.c.l.b16 %v487
  %v1631 = vunpack.c.l.b16 %v488
  %v1632 = vunpack.c.l.b16 %v489
  %v1633 = vunpack.c.l.b16 %v490
  %v1634 = vunpack.c.l.b16 %v491
  %v1635 = vunpack.c.l.b16 %v492
  %v1636 = vunpack.c.l.b16 %v493
  %v1637 = vunpack.c.l.b16 %v494
  %v1638 = vunpack.c.l.b16 %v495
  %v1639 = vunpack.c.l.b16 %v496
  %v1640 = vunpack.c.l.b16 %v497
  %v1641 = vunpack.c.l.b16 %v498
  %v1642 = vunpack.c.l.b16 %v499
  %v1643 = vunpack.c.l.b16 %v500
  %v1644 = vunpack.c.l.b16 %v501
  %v1645 = vunpack.c.l.b16 %v502
  %v1646 = vunpack.c.l.b16 %v503
  %v1647 = vunpack.c.l.b16 %v504
  %v1648 = vunpack.c.l.b16 %v505
  %v1649 = vunpack.c.l.b16 %v506
  %v1650 = vunpack.c.l.b16 %v507
  %v1651 = vunpack.c.l.b16 %v508
  %v1652 = vunpack.c.l.b16 %v509
  %v1653 = vunpack.c.l.b16 %v510
  %v1654 = vunpack.c.l.b16 %v511
  %v1655 = vunpack.c.l.b16 %v512
  %v1656 = vunpack.c.l.b16 %v513
  %v1657 = vunpack.c.l.b16 %v514
  %v1658 = vunpack.c.l.b16 %v515
  %v1659 = vunpack.c.l.b16 %v516
  %v1660 = vunpack.c.l.b16 %v517
  %v1661 = vunpack.c.l.b16 %v518
  %v1662 = vunpack.c.l.b16 %v519
  %v1663 = vunpack.c.l.b16 %v520
  %v1664 = vunpack.c.l.b16 %v521
  %v1665 = vunpack.c.l.b16 %v522
  %v1666 = vunpack.c.l.b16 %v523
  %v1667 = vunpack.c.l.b16 %v524
  %v1668 = vunpack.c.l.b16 %v525
  %v1669 = vunpack.c.l.b16 %v526
  %v1670 = vunpack.c.l.b16 %v527
  %v1671 = vunpack.c.l.b16 %v528
  %v1672 = vunpack.c.l.b16 %v529
  %v1673 = vunpack.c.l.b16 %v530
  %v1674 = vunpack.c.l.b16 %v531
  %v1675 = vunpack.c.l.b16 %v532
  %v1676 = vunpack.c.l.b16 %v533
  %v1677 = vunpack.c.l.b16 %v534
  %v1678 = vunpack.c.l.b16 %v535
  %v1679 = vunpack.c.l.b16 %v536
  %v1680 = vunpack.c.l.b16 %v537
  %v1681 = vunpack.c.l.b16 %v538
  %v1682 = vunpack.c.l.b16 %v539
  %v1683 = vunpack.c.l.b16 %v540
  %v1684 = vunpack.c.l.b16 %v541
  %v1685 = vunpack.c.l.b16 %v542
  %v1686 = vunpack.c.l.b16 %v543
  %v1687 = vunpack.c.l.b16 %v544
  %v1688 = vunpack.c.l.b16 %v545
  %v1689 = vunpack.c.l.b16 %v546
  %v1690 = vunpack.c.l.b16 %v547
  %v1691 = vunpack.c.l.b16 %v548
  %v1692 = vpack.c.b16 %v1181, %v1180
  %v1693 = vpack.c.b16 %v1183, %v1182
  %v1694 = vpack.c.b16 %v1185, %v1184
  %v1695 = vpack.c.b16 %v1187, %v1186
  %v1696 = vpack.c.b16 %v1189, %v1188
  %v1697 = vpack.c.b16 %v1191, %v1190
  %v1698 = vpack.c.b16 %v1193, %v1192
  %v1699 = vpack.c.b16 %v1195, %v1194
  %v1700 = vpack.c.b16 %v1197, %v1196
  %v1701 = vpack.c.b16 %v1199, %v1198
  %v1702 = vpack.c.b16 %v1201, %v1200
  %v1703 = vpack.c.b16 %v1203, %v1202
  %v1704 = vpack.c.b16 %v1205, %v1204
  %v1705 = vpack.c.b16 %v1207, %v1206
  %v1706 = vpack.c.b16 %v1209, %v1208
  %v1707 = vpack.c.b16 %v1211, %v1210
  %v1708 = vpack.c.b16 %v1213, %v1212
  %v1709 = vpack.c.b16 %v1215, %v1214
  %v1710 = vpack.c.b16 %v1217, %v1216
  %v1711 = vpack.c.b16 %v1219, %v1218
  %v1712 = vpack.c.b16 %v1221, %v1220
  %v1713 = vpack.c.b16 %v1223, %v1222
  %v1714 = vpack.c.b16 %v1225, %v1224
  %v1715 = vpack.c.b16 %v1227, %v1226
  %v1716 = vpack.c.b16 %v1229, %v1228
  %v1717 = vpack.c.b16 %v1231, %v1230
  %v1718 = vpack.c.b16 %v1233, %v1232
  %v1719 = vpack.c.b16 %v1235, %v1234
  %v1720 = vpack.c.b16 %v1237, %v1236
  %v1721 = vpack.c.b16 %v1239, %v1238
  %v1722 = vpack.c.b16 %v1241, %v1240
  %v1723 = vpack.c.b16 %v1243, %v1242
  %v1724 = vpack.c.b16 %v1245, %v1244
  %v1725 = vpack.c.b16 %v1247, %v1246
  %v1726 = vpack.c.b16 %v1249, %v1248
  %v1727 = vpack.c.b16 %v1251, %v1250
  %v1728 = vpack.c.b16 %v1253, %v1252
  %v1729 = vpack.c.b16 %v1255, %v1254
  %v1730 = vpack.c.b16 %v1257, %v1256
  %v1731 = vpack.c.b16 %v1259, %v1258
  %v1732 = vpack.c.b16 %v1261, %v1260
  %v1733 = vpack.c.b16 %v1263, %v1262
  %v1734 = vpack.c.b16 %v1265, %v1264
  %v1735 = vpack.c.b16 %v1267, %v1266
  %v1736 = vpack.c.b16 %v1269, %v1268
  %v1737 = vpack.c.b16 %v1271, %v1270
  %v1738 = vpack.c.b16 %v1273, %v1272
  %v1739 = vpack.c.b16 %v1275, %v1274
  %v1740 = vpack.c.b16 %v1277, %v1276
  %v1741 = vpack.c.b16 %v1279, %v1278
  %v1742 = vpack.c.b16 %v1281, %v1280
  %v1743 = vpack.c.b16 %v1283, %v1282
  %v1744 = vpack.c.b16 %v1285, %v1284
  %v1745 = vpack.c.b16 %v1287, %v1286
  %v1746 = vpack.c.b16 %v1289, %v1288
  %v1747 = vpack.c.b16 %v1291, %v1290
  %v1748 = vpack.c.b16 %v1293, %v1292
  %v1749 = vpack.c.b16 %v1295, %v1294
  %v1750 = vpack.c.b16 %v1297, %v1296
  %v1751 = vpack.c.b16 %v1299, %v1298
  %v1752 = vpack.c.b16 %v1301, %v1300
  %v1753 = vpack.c.b16 %v1303, %v1302
  %v1754 = vpack.c.b16 %v1305, %v1304
  %v1755 = vpack.c.b16 %v1307, %v1306
  %v1756 = vpack.c.b16 %v1309, %v1308
  %v1757 = vpack.c.b16 %v1311, %v1310
  %v1758 = vpack.c.b16 %v1313, %v1312
  %v1759 = vpack.c.b16 %v1315, %v1314
  %v1760 = vpack.c.b16 %v1317, %v1316
  %v1761 = vpack.c.b16 %v1319, %v1318
  %v1762 = vpack.c.b16 %v1321, %v1320
  %v1763 = vpack.c.b16 %v1323, %v1322
  %v1764 = vpack.c.b16 %v1325, %v1324
  %v1765 = vpack.c.b16 %v1327, %v1326
  %v1766 = vpack.c.b16 %v1329, %v1328
  %v1767 = vpack.c.b16 %v1331, %v1330
  %v1768 = vpack.c.b16 %v1333, %v1332
  %v1769 = vpack.c.b16 %v1335, %v1334
  %v1770 = vpack.c.b16 %v1337, %v1336
  %v1771 = vpack.c.b16 %v1339, %v1338
  %v1772 = vpack.c.b16 %v1341, %v1340
  %v1773 = vpack.c.b16 %v1343, %v1342
  %v1774 = vpack.c.b16 %v1345, %v1344
  %v1775 = vpack.c.b16 %v1347, %v1346
  %v1776 = vpack.c.b16 %v1349, %v1348
  %v1777 = vpack.c.b16 %v1351, %v1350
  %v1778 = vpack.c.b16 %v1353, %v1352
  %v1779 = vpack.c.b16 %v1355, %v1354
  %v1780 = vpack.c.b16 %v1357, %v1356
  %v1781 = vpack.c.b16 %v1359, %v1358
  %v1782 = vpack.c.b16 %v1361, %v1360
  %v1783 = vpack.c.b16 %v1363, %v1362
  %v1784 = vpack.c.b16 %v1365, %v1364
  %v1785 = vpack.c.b16 %v1367, %v1366
  %v1786 = vpack.c.b16 %v1369, %v1368
  %v1787 = vpack.c.b16 %v1371, %v1370
  %v1788 = vpack.c.b16 %v1373, %v1372
  %v1789 = vpack.c.b16 %v1375, %v1374
  %v1790 = vpack.c.b16 %v1377, %v1376
  %v1791 = vpack.c.b16 %v1379, %v1378
  %v1792 = vpack.c.b16 %v1381, %v1380
  %v1793 = vpack.c.b16 %v1383, %v1382
  %v1794 = vpack.c.b16 %v1385, %v1384
  %v1795 = vpack.c.b16 %v1387, %v1386
  %v1796 = vpack.c.b16 %v1389, %v1388
  %v1797 = vpack.c.b16 %v1391, %v1390
  %v1798 = vpack.c.b16 %v1393, %v1392
  %v1799 = vpack.c.b16 %v1395, %v1394
  %v1800 = vpack.c.b16 %v1397, %v1396
  %v1801 = vpack.c.b16 %v1399, %v1398
  %v1802 = vpack.c.b16 %v1401, %v1400
  %v1803 = vpack.c.b16 %v1403, %v1402
  %v1804 = vpack.c.b16 %v1405, %v1404
  %v1805 = vpack.c.b16 %v1407, %v1406
  %v1806 = vpack.c.b16 %v1409, %v1408
  %v1807 = vpack.c.b16 %v1411, %v1410
  %v1808 = vpack.c.b16 %v1413, %v1412
  %v1809 = vpack.c.b16 %v1415, %v1414
  %v1810 = vpack.c.b16 %v1417, %v1416
  %v1811 = vpack.c.b16 %v1419, %v1418
  %v1812 = vpack.c.b16 %v1421, %v1420
  %v1813 = vpack.c.b16 %v1423, %v1422
  %v1814 = vpack.c.b16 %v1425, %v1424
  %v1815 = vpack.c.b16 %v1427, %v1426
  %v1816 = vpack.c.b16 %v1429, %v1428
  %v1817 = vpack.c.b16 %v1431, %v1430
  %v1818 = vpack.c.b16 %v1433, %v1432
  %v1819 = vpack.c.b16 %v1435, %v1434
  %v1820 = vpack.c.b16 %v1437, %v1436
  %v1821 = vpack.c.b16 %v1439, %v1438
  %v1822 = vpack.c.b16 %v1441, %v1440
  %v1823 = vpack.c.b16 %v1443, %v1442
  %v1824 = vpack.c.b16 %v1445, %v1444
  %v1825 = vpack.c.b16 %v1447, %v1446
  %v1826 = vpack.c.b16 %v1449, %v1448
  %v1827 = vpack.c.b16 %v1451, %v1450
  %v1828 = vpack.c.b16 %v1453, %v1452
  %v1829 = vpack.c.b16 %v1455, %v1454
  %v1830 = vpack.c.b16 %v1457, %v1456
  %v1831 = vpack.c.b16 %v1459, %v1458
  %v1832 = vpack.c.b16 %v1461, %v1460
  %v1833 = vpack.c.b16 %v1463, %v1462
  %v1834 = vpack.c.b16 %v1465, %v1464
  %v1835 = vpack.c.b16 %v1467, %v1466
  %v1836 = vpack.c.b16 %v1469, %v1468
  %v1837 = vpack.c.b16 %v1471, %v1470
  %v1838 = vpack.c.b16 %v1473, %v1472
  %v1839 = vpack.c.b16 %v1475, %v1474
  %v1840 = vpack.c.b16 %v1477, %v1476
  %v1841 = vpack.c.b16 %v1479, %v1478
  %v1842 = vpack.c.b16 %v1481, %v1480
  %v1843 = vpack.c.b16 %v1483, %v1482
  %v1844 = vpack.c.b16 %v1485, %v1484
  %v1845 = vpack.c.b16 %v1487, %v1486
  %v1846 = vpack.c.b16 %v1489, %v1488
  %v1847 = vpack.c.b16 %v1491, %v1490
  %v1848 = vpack.c.b16 %v1493, %v1492
  %v1849 = vpack.c.b16 %v1495, %v1494
  %v1850 = vpack.c.b16 %v1497, %v1496
  %v1851 = vpack.c.b16 %v1499, %v1498
  %v1852 = vpack.c.b16 %v1501, %v1500
  %v1853 = vpack.c.b16 %v1503, %v1502
  %v1854 = vpack.c.b16 %v1505, %v1504
  %v1855 = vpack.c.b16 %v1507, %v1506
  %v1856 = vpack.c.b16 %v1509, %v1508
  %v1857 = vpack.c.b16 %v1511, %v1510
  %v1858 = vpack.c.b16 %v1513, %v1512
  %v1859 = vpack.c.b16 %v1515, %v1514
  %v1860 = vpack.c.b16 %v1517, %v1516
  %v1861 = vpack.c.b16 %v1519, %v1518
  %v1862 = vpack.c.b16 %v1521, %v1520
  %v1863 = vpack.c.b16 %v1523, %v1522
  %v1864 = vpack.c.b16 %v1525, %v1524
  %v1865 = vpack.c.b16 %v1527, %v1526
  %v1866 = vpack.c.b16 %v1529, %v1528
  %v1867 = vpack.c.b16 %v1531, %v1530
  %v1868 = vpack.c.b16 %v1533, %v1532
  %v1869 = vpack.c.b16 %v1535, %v1534
  %v1870 = vpack.c.b16 %v1537, %v1536
  %v1871 = vpack.c.b16 %v1539, %v1538
  %v1872 = vpack.c.b16 %v1541, %v1540
  %v1873 = vpack.c.b16 %v1543, %v1542
  %v1874 = vpack.c.b16 %v1545, %v1544
  %v1875 = vpack.c.b16 %v1547, %v1546
  %v1876 = vpack.c.b16 %v1549, %v1548
  %v1877 = vpack.c.b16 %v1551, %v1550
  %v1878 = vpack.c.b16 %v1553, %v1552
  %v1879 = vpack.c.b16 %v1555, %v1554
  %v1880 = vpack.c.b16 %v1557, %v1556
  %v1881 = vpack.c.b16 %v1559, %v1558
  %v1882 = vpack.c.b16 %v1561, %v1560
  %v1883 = vpack.c.b16 %v1563, %v1562
  %v1884 = vpack.c.b16 %v1565, %v1564
  %v1885 = vpack.c.b16 %v1567, %v1566
  %v1886 = vpack.c.b16 %v1569, %v1568
  %v1887 = vpack.c.b16 %v1571, %v1570
  %v1888 = vpack.c.b16 %v1573, %v1572
  %v1889 = vpack.c.b16 %v1575, %v1574
  %v1890 = vpack.c.b16 %v1577, %v1576
  %v1891 = vpack.c.b16 %v1579, %v1578
  %v1892 = vpack.c.b16 %v1581, %v1580
  %v1893 = vpack.c.b16 %v1583, %v1582
  %v1894 = vpack.c.b16 %v1585, %v1584
  %v1895 = vpack.c.b16 %v1587, %v1586
  %v1896 = vpack.c.b16 %v1589, %v1588
  %v1897 = vpack.c.b16 %v1591, %v1590
  %v1898 = vpack.c.b16 %v1593, %v1592
  %v1899 = vpack.c.b16 %v1595, %v1594
  %v1900 = vpack.c.b16 %v1597, %v1596
  %v1901 = vpack.c.b16 %v1599, %v1598
  %v1902 = vpack.c.b16 %v1601, %v1600
  %v1903 = vpack.c.b16 %v1603, %v1602
  %v1904 = vpack.c.b16 %v1605, %v1604
  %v1905 = vpack.c.b16 %v1607, %v1606
  %v1906 = vpack.c.b16 %v1609, %v1608
  %v1907 = vpack.c.b16 %v1611, %v1610
  %v1908 = vpack.c.b16 %v1613, %v1612
  %v1909 = vpack.c.b16 %v1615, %v1614
  %v1910 = vpack.c.b16 %v1617, %v1616
  %v1911 = vpack.c.b16 %v1619, %v1618
  %v1912 = vpack.c.b16 %v1621, %v1620
  %v1913 = vpack.c.b16 %v1623, %v1622
  %v1914 = vpack.c.b16 %v1625, %v1624
  %v1915 = vpack.c.b16 %v1627, %v1626
  %v1916 = vpack.c.b16 %v1629, %v1628
  %v1917 = vpack.c.b16 %v1631, %v1630
  %v1918 = vpack.c.b16 %v1633, %v1632
  %v1919 = vpack.c.b16 %v1635, %v1634
  %v1920 = vpack.c.b16 %v1637, %v1636
  %v1921 = vpack.c.b16 %v1639, %v1638
  %v1922 = vpack.c.b16 %v1641, %v1640
  %v1923 = vpack.c.b16 %v1643, %v1642
  %v1924 = vpack.c.b16 %v1645, %v1644
  %v1925 = vpack.c.b16 %v1647, %v1646
  %v1926 = vpack.c.b16 %v1649, %v1648
  %v1927 = vpack.c.b16 %v1651, %v1650
  %v1928 = vpack.c.b16 %v1653, %v1652
  %v1929 = vpack.c.b16 %v1655, %v1654
  %v1930 = vpack.c.b16 %v1657, %v1656
  %v1931 = vpack.c.b16 %v1659, %v1658
  %v1932 = vpack.c.b16 %v1661, %v1660
  %v1933 = vpack.c.b16 %v1663, %v1662
  %v1934 = vpack.c.b16 %v1665, %v1664
  %v1935 = vpack.c.b16 %v1667, %v1666
  %v1936 = vpack.c.b16 %v1669, %v1668
  %v1937 = vpack.c.b16 %v1671, %v1670
  %v1938 = vpack.c.b16 %v1673, %v1672
  %v1939 = vpack.c.b16 %v1675, %v1674
  %v1940 = vpack.c.b16 %v1677, %v1676
  %v1941 = vpack.c.b16 %v1679, %v1678
  %v1942 = vpack.c.b16 %v1681, %v1680
  %v1943 = vpack.c.b16 %v1683, %v1682
  %v1944 = vpack.c.b16 %v1685, %v1684
  %v1945 = vpack.c.b16 %v1687, %v1686
  %v1946 = vpack.c.b16 %v1689, %v1688
  %v1947 = vpack.c.b16 %v1691, %v1690
  %2204 = vmatprep.subr.bf16.mxu0 0
  %2205 = vmatpush1.bf16.msra.mxu0 %v1692
  %2206 = vmatprep.subr.bf16.mxu0 0
  %2207 = vmatpush1.bf16.msra.mxu0 %v1693
  %2208 = vmatprep.subr.bf16.mxu0 0
  %2209 = vmatpush1.bf16.msra.mxu0 %v1694
  %2210 = vmatprep.subr.bf16.mxu0 0
  %2211 = vmatpush1.bf16.msra.mxu0 %v1695
  %2212 = vmatprep.subr.bf16.mxu0 0
  %2213 = vmatpush1.bf16.msra.mxu0 %v1696
  %2214 = vmatprep.subr.bf16.mxu0 0
  %2215 = vmatpush1.bf16.msra.mxu0 %v1697
  %2216 = vmatprep.subr.bf16.mxu0 0
  %2217 = vmatpush1.bf16.msra.mxu0 %v1698
  %2218 = vmatprep.subr.bf16.mxu0 0
  %2219 = vmatpush1.bf16.msra.mxu0 %v1699
  %2220 = vmatprep.subr.bf16.mxu0 0
  %2221 = vmatpush1.bf16.msra.mxu0 %v1700
  %2222 = vmatprep.subr.bf16.mxu0 0
  %2223 = vmatpush1.bf16.msra.mxu0 %v1701
  %2224 = vmatprep.subr.bf16.mxu0 0
  %2225 = vmatpush1.bf16.msra.mxu0 %v1702
  %2226 = vmatprep.subr.bf16.mxu0 0
  %2227 = vmatpush1.bf16.msra.mxu0 %v1703
  %2228 = vmatprep.subr.bf16.mxu0 0
  %2229 = vmatpush1.bf16.msra.mxu0 %v1704
  %2230 = vmatprep.subr.bf16.mxu0 0
  %2231 = vmatpush1.bf16.msra.mxu0 %v1705
  %2232 = vmatprep.subr.bf16.mxu0 0
  %2233 = vmatpush1.bf16.msra.mxu0 %v1706
  %2234 = vmatprep.subr.bf16.mxu0 0
  %2235 = vmatpush1.bf16.msra.mxu0 %v1707
  %2236 = vmatprep.mubr.bf16.mxu0 %v605
  %2237 = vmatmul.mubr.bf16.gmra.mrb[0].mxu0 %v604
  %v2238 = vpop.f32.mrb[0].mxu0
  %v2239 = vadd.f32 %v554, %v2238
  %v2240 = vpop.f32.mrb[0].mxu0
  %v2241 = vpop.f32.mrb[0].mxu0
  %v2242 = vpop.f32.mrb[0].mxu0
  %2243 = vdwg.mxu0
  %2244 = vmatprep.subr.bf16.mxu0 0
  %2245 = vmatpush1.bf16.msra.mxu0 %v1708
  %2246 = vmatprep.subr.bf16.mxu0 0
  %2247 = vmatpush1.bf16.msra.mxu0 %v1709
  %2248 = vmatprep.subr.bf16.mxu0 0
  %2249 = vmatpush1.bf16.msra.mxu0 %v1710
  %2250 = vmatprep.subr.bf16.mxu0 0
  %2251 = vmatpush1.bf16.msra.mxu0 %v1711
  %2252 = vmatprep.subr.bf16.mxu0 0
  %2253 = vmatpush1.bf16.msra.mxu0 %v1712
  %2254 = vmatprep.subr.bf16.mxu0 0
  %2255 = vmatpush1.bf16.msra.mxu0 %v1713
  %2256 = vmatprep.subr.bf16.mxu0 0
  %2257 = vmatpush1.bf16.msra.mxu0 %v1714
  %2258 = vmatprep.subr.bf16.mxu0 0
  %2259 = vmatpush1.bf16.msra.mxu0 %v1715
  %2260 = vmatprep.subr.bf16.mxu0 0
  %2261 = vmatpush1.bf16.msra.mxu0 %v1716
  %2262 = vmatprep.subr.bf16.mxu0 0
  %2263 = vmatpush1.bf16.msra.mxu0 %v1717
  %2264 = vmatprep.subr.bf16.mxu0 0
  %2265 = vmatpush1.bf16.msra.mxu0 %v1718
  %2266 = vmatprep.subr.bf16.mxu0 0
  %2267 = vmatpush1.bf16.msra.mxu0 %v1719
  %2268 = vmatprep.subr.bf16.mxu0 0
  %2269 = vmatpush1.bf16.msra.mxu0 %v1720
  %2270 = vmatprep.subr.bf16.mxu0 0
  %2271 = vmatpush1.bf16.msra.mxu0 %v1721
  %2272 = vmatprep.subr.bf16.mxu0 0
  %2273 = vmatpush1.bf16.msra.mxu0 %v1722
  %2274 = vmatprep.subr.bf16.mxu0 0
  %2275 = vmatpush1.bf16.msra.mxu0 %v1723
  %2276 = vmatprep.mubr.bf16.mxu0 %v607
  %2277 = vmatmul.mubr.bf16.gmra.mrb[0].mxu0 %v606
  %v2278 = vpop.f32.mrb[0].mxu0
  %v2279 = vadd.f32 %v2239, %v2278
  %v2280 = vpop.f32.mrb[0].mxu0
  %v2281 = vpop.f32.mrb[0].mxu0
  %v2282 = vpop.f32.mrb[0].mxu0
  %2283 = vdwg.mxu0
  %2284 = vmatprep.subr.bf16.mxu0 0
  %2285 = vmatpush1.bf16.msra.mxu0 %v1724
  %2286 = vmatprep.subr.bf16.mxu0 0
  %2287 = vmatpush1.bf16.msra.mxu0 %v1725
  %2288 = vmatprep.subr.bf16.mxu0 0
  %2289 = vmatpush1.bf16.msra.mxu0 %v1726
  %2290 = vmatprep.subr.bf16.mxu0 0
  %2291 = vmatpush1.bf16.msra.mxu0 %v1727
  %2292 = vmatprep.subr.bf16.mxu0 0
  %2293 = vmatpush1.bf16.msra.mxu0 %v1728
  %2294 = vmatprep.subr.bf16.mxu0 0
  %2295 = vmatpush1.bf16.msra.mxu0 %v1729
  %2296 = vmatprep.subr.bf16.mxu0 0
  %2297 = vmatpush1.bf16.msra.mxu0 %v1730
  %2298 = vmatprep.subr.bf16.mxu0 0
  %2299 = vmatpush1.bf16.msra.mxu0 %v1731
  %2300 = vmatprep.subr.bf16.mxu0 0
  %2301 = vmatpush1.bf16.msra.mxu0 %v1732
  %2302 = vmatprep.subr.bf16.mxu0 0
  %2303 = vmatpush1.bf16.msra.mxu0 %v1733
  %2304 = vmatprep.subr.bf16.mxu0 0
  %2305 = vmatpush1.bf16.msra.mxu0 %v1734
  %2306 = vmatprep.subr.bf16.mxu0 0
  %2307 = vmatpush1.bf16.msra.mxu0 %v1735
  %2308 = vmatprep.subr.bf16.mxu0 0
  %2309 = vmatpush1.bf16.msra.mxu0 %v1736
  %2310 = vmatprep.subr.bf16.mxu0 0
  %2311 = vmatpush1.bf16.msra.mxu0 %v1737
  %2312 = vmatprep.subr.bf16.mxu0 0
  %2313 = vmatpush1.bf16.msra.mxu0 %v1738
  %2314 = vmatprep.subr.bf16.mxu0 0
  %2315 = vmatpush1.bf16.msra.mxu0 %v1739
  %2316 = vmatprep.mubr.bf16.mxu0 %v609
  %2317 = vmatmul.mubr.bf16.gmra.mrb[0].mxu0 %v608
  %v2318 = vpop.f32.mrb[0].mxu0
  %v2319 = vadd.f32 %v2279, %v2318
  %v2320 = vpop.f32.mrb[0].mxu0
  %v2321 = vpop.f32.mrb[0].mxu0
  %v2322 = vpop.f32.mrb[0].mxu0
  %2323 = vdwg.mxu0
  %2324 = vmatprep.subr.bf16.mxu0 0
  %2325 = vmatpush1.bf16.msra.mxu0 %v1740
  %2326 = vmatprep.subr.bf16.mxu0 0
  %2327 = vmatpush1.bf16.msra.mxu0 %v1741
  %2328 = vmatprep.subr.bf16.mxu0 0
  %2329 = vmatpush1.bf16.msra.mxu0 %v1742
  %2330 = vmatprep.subr.bf16.mxu0 0
  %2331 = vmatpush1.bf16.msra.mxu0 %v1743
  %2332 = vmatprep.subr.bf16.mxu0 0
  %2333 = vmatpush1.bf16.msra.mxu0 %v1744
  %2334 = vmatprep.subr.bf16.mxu0 0
  %2335 = vmatpush1.bf16.msra.mxu0 %v1745
  %2336 = vmatprep.subr.bf16.mxu0 0
  %2337 = vmatpush1.bf16.msra.mxu0 %v1746
  %2338 = vmatprep.subr.bf16.mxu0 0
  %2339 = vmatpush1.bf16.msra.mxu0 %v1747
  %2340 = vmatprep.subr.bf16.mxu0 0
  %2341 = vmatpush1.bf16.msra.mxu0 %v1748
  %2342 = vmatprep.subr.bf16.mxu0 0
  %2343 = vmatpush1.bf16.msra.mxu0 %v1749
  %2344 = vmatprep.subr.bf16.mxu0 0
  %2345 = vmatpush1.bf16.msra.mxu0 %v1750
  %2346 = vmatprep.subr.bf16.mxu0 0
  %2347 = vmatpush1.bf16.msra.mxu0 %v1751
  %2348 = vmatprep.subr.bf16.mxu0 0
  %2349 = vmatpush1.bf16.msra.mxu0 %v1752
  %2350 = vmatprep.subr.bf16.mxu0 0
  %2351 = vmatpush1.bf16.msra.mxu0 %v1753
  %2352 = vmatprep.subr.bf16.mxu0 0
  %2353 = vmatpush1.bf16.msra.mxu0 %v1754
  %2354 = vmatprep.subr.bf16.mxu0 0
  %2355 = vmatpush1.bf16.msra.mxu0 %v1755
  %2356 = vmatprep.mubr.bf16.mxu0 %v611
  %2357 = vmatmul.mubr.bf16.gmra.mrb[0].mxu0 %v610
  %v2358 = vpop.f32.mrb[0].mxu0
  %v2359 = vadd.f32 %v2319, %v2358
  %v2360 = vpop.f32.mrb[0].mxu0
  %v2361 = vpop.f32.mrb[0].mxu0
  %v2362 = vpop.f32.mrb[0].mxu0
  %2363 = vdwg.mxu0
  %2364 = vmatprep.subr.bf16.mxu0 0
  %2365 = vmatpush1.bf16.msra.mxu0 %v1756
  %2366 = vmatprep.subr.bf16.mxu0 0
  %2367 = vmatpush1.bf16.msra.mxu0 %v1757
  %2368 = vmatprep.subr.bf16.mxu0 0
  %2369 = vmatpush1.bf16.msra.mxu0 %v1758
  %2370 = vmatprep.subr.bf16.mxu0 0
  %2371 = vmatpush1.bf16.msra.mxu0 %v1759
  %2372 = vmatprep.subr.bf16.mxu0 0
  %2373 = vmatpush1.bf16.msra.mxu0 %v1760
  %2374 = vmatprep.subr.bf16.mxu0 0
  %2375 = vmatpush1.bf16.msra.mxu0 %v1761
  %2376 = vmatprep.subr.bf16.mxu0 0
  %2377 = vmatpush1.bf16.msra.mxu0 %v1762
  %2378 = vmatprep.subr.bf16.mxu0 0
  %2379 = vmatpush1.bf16.msra.mxu0 %v1763
  %2380 = vmatprep.subr.bf16.mxu0 0
  %2381 = vmatpush1.bf16.msra.mxu0 %v1764
  %2382 = vmatprep.subr.bf16.mxu0 0
  %2383 = vmatpush1.bf16.msra.mxu0 %v1765
  %2384 = vmatprep.subr.bf16.mxu0 0
  %2385 = vmatpush1.bf16.msra.mxu0 %v1766
  %2386 = vmatprep.subr.bf16.mxu0 0
  %2387 = vmatpush1.bf16.msra.mxu0 %v1767
  %2388 = vmatprep.subr.bf16.mxu0 0
  %2389 = vmatpush1.bf16.msra.mxu0 %v1768
  %2390 = vmatprep.subr.bf16.mxu0 0
  %2391 = vmatpush1.bf16.msra.mxu0 %v1769
  %2392 = vmatprep.subr.bf16.mxu0 0
  %2393 = vmatpush1.bf16.msra.mxu0 %v1770
  %2394 = vmatprep.subr.bf16.mxu0 0
  %2395 = vmatpush1.bf16.msra.mxu0 %v1771
  %2396 = vmatprep.mubr.bf16.mxu0 %v613
  %2397 = vmatmul.mubr.bf16.gmra.mrb[0].mxu0 %v612
  %v2398 = vpop.f32.mrb[0].mxu0
  %v2399 = vadd.f32 %v2359, %v2398
  %v2400 = vpop.f32.mrb[0].mxu0
  %v2401 = vpop.f32.mrb[0].mxu0
  %v2402 = vpop.f32.mrb[0].mxu0
  %2403 = vdwg.mxu0
  %2404 = vmatprep.subr.bf16.mxu0 0
  %2405 = vmatpush1.bf16.msra.mxu0 %v1772
  %2406 = vmatprep.subr.bf16.mxu0 0
  %2407 = vmatpush1.bf16.msra.mxu0 %v1773
  %2408 = vmatprep.subr.bf16.mxu0 0
  %2409 = vmatpush1.bf16.msra.mxu0 %v1774
  %2410 = vmatprep.subr.bf16.mxu0 0
  %2411 = vmatpush1.bf16.msra.mxu0 %v1775
  %2412 = vmatprep.subr.bf16.mxu0 0
  %2413 = vmatpush1.bf16.msra.mxu0 %v1776
  %2414 = vmatprep.subr.bf16.mxu0 0
  %2415 = vmatpush1.bf16.msra.mxu0 %v1777
  %2416 = vmatprep.subr.bf16.mxu0 0
  %2417 = vmatpush1.bf16.msra.mxu0 %v1778
  %2418 = vmatprep.subr.bf16.mxu0 0
  %2419 = vmatpush1.bf16.msra.mxu0 %v1779
  %2420 = vmatprep.subr.bf16.mxu0 0
  %2421 = vmatpush1.bf16.msra.mxu0 %v1780
  %2422 = vmatprep.subr.bf16.mxu0 0
  %2423 = vmatpush1.bf16.msra.mxu0 %v1781
  %2424 = vmatprep.subr.bf16.mxu0 0
  %2425 = vmatpush1.bf16.msra.mxu0 %v1782
  %2426 = vmatprep.subr.bf16.mxu0 0
  %2427 = vmatpush1.bf16.msra.mxu0 %v1783
  %2428 = vmatprep.subr.bf16.mxu0 0
  %2429 = vmatpush1.bf16.msra.mxu0 %v1784
  %2430 = vmatprep.subr.bf16.mxu0 0
  %2431 = vmatpush1.bf16.msra.mxu0 %v1785
  %2432 = vmatprep.subr.bf16.mxu0 0
  %2433 = vmatpush1.bf16.msra.mxu0 %v1786
  %2434 = vmatprep.subr.bf16.mxu0 0
  %2435 = vmatpush1.bf16.msra.mxu0 %v1787
  %2436 = vmatprep.mubr.bf16.mxu0 %v615
  %2437 = vmatmul.mubr.bf16.gmra.mrb[0].mxu0 %v614
  %v2438 = vpop.f32.mrb[0].mxu0
  %v2439 = vadd.f32 %v2399, %v2438
  %v2440 = vpop.f32.mrb[0].mxu0
  %v2441 = vpop.f32.mrb[0].mxu0
  %v2442 = vpop.f32.mrb[0].mxu0
  %2443 = vdwg.mxu0
  %2444 = vmatprep.subr.bf16.mxu0 0
  %2445 = vmatpush1.bf16.msra.mxu0 %v1788
  %2446 = vmatprep.subr.bf16.mxu0 0
  %2447 = vmatpush1.bf16.msra.mxu0 %v1789
  %2448 = vmatprep.subr.bf16.mxu0 0
  %2449 = vmatpush1.bf16.msra.mxu0 %v1790
  %2450 = vmatprep.subr.bf16.mxu0 0
  %2451 = vmatpush1.bf16.msra.mxu0 %v1791
  %2452 = vmatprep.subr.bf16.mxu0 0
  %2453 = vmatpush1.bf16.msra.mxu0 %v1792
  %2454 = vmatprep.subr.bf16.mxu0 0
  %2455 = vmatpush1.bf16.msra.mxu0 %v1793
  %2456 = vmatprep.subr.bf16.mxu0 0
  %2457 = vmatpush1.bf16.msra.mxu0 %v1794
  %2458 = vmatprep.subr.bf16.mxu0 0
  %2459 = vmatpush1.bf16.msra.mxu0 %v1795
  %2460 = vmatprep.subr.bf16.mxu0 0
  %2461 = vmatpush1.bf16.msra.mxu0 %v1796
  %2462 = vmatprep.subr.bf16.mxu0 0
  %2463 = vmatpush1.bf16.msra.mxu0 %v1797
  %2464 = vmatprep.subr.bf16.mxu0 0
  %2465 = vmatpush1.bf16.msra.mxu0 %v1798
  %2466 = vmatprep.subr.bf16.mxu0 0
  %2467 = vmatpush1.bf16.msra.mxu0 %v1799
  %2468 = vmatprep.subr.bf16.mxu0 0
  %2469 = vmatpush1.bf16.msra.mxu0 %v1800
  %2470 = vmatprep.subr.bf16.mxu0 0
  %2471 = vmatpush1.bf16.msra.mxu0 %v1801
  %2472 = vmatprep.subr.bf16.mxu0 0
  %2473 = vmatpush1.bf16.msra.mxu0 %v1802
  %2474 = vmatprep.subr.bf16.mxu0 0
  %2475 = vmatpush1.bf16.msra.mxu0 %v1803
  %2476 = vmatprep.mubr.bf16.mxu0 %v617
  %2477 = vmatmul.mubr.bf16.gmra.mrb[0].mxu0 %v616
  %v2478 = vpop.f32.mrb[0].mxu0
  %v2479 = vadd.f32 %v2439, %v2478
  %v2480 = vpop.f32.mrb[0].mxu0
  %v2481 = vpop.f32.mrb[0].mxu0
  %v2482 = vpop.f32.mrb[0].mxu0
  %2483 = vdwg.mxu0
  %2484 = vmatprep.subr.bf16.mxu0 0
  %2485 = vmatpush1.bf16.msra.mxu0 %v1804
  %2486 = vmatprep.subr.bf16.mxu0 0
  %2487 = vmatpush1.bf16.msra.mxu0 %v1805
  %2488 = vmatprep.subr.bf16.mxu0 0
  %2489 = vmatpush1.bf16.msra.mxu0 %v1806
  %2490 = vmatprep.subr.bf16.mxu0 0
  %2491 = vmatpush1.bf16.msra.mxu0 %v1807
  %2492 = vmatprep.subr.bf16.mxu0 0
  %2493 = vmatpush1.bf16.msra.mxu0 %v1808
  %2494 = vmatprep.subr.bf16.mxu0 0
  %2495 = vmatpush1.bf16.msra.mxu0 %v1809
  %2496 = vmatprep.subr.bf16.mxu0 0
  %2497 = vmatpush1.bf16.msra.mxu0 %v1810
  %2498 = vmatprep.subr.bf16.mxu0 0
  %2499 = vmatpush1.bf16.msra.mxu0 %v1811
  %2500 = vmatprep.subr.bf16.mxu0 0
  %2501 = vmatpush1.bf16.msra.mxu0 %v1812
  %2502 = vmatprep.subr.bf16.mxu0 0
  %2503 = vmatpush1.bf16.msra.mxu0 %v1813
  %2504 = vmatprep.subr.bf16.mxu0 0
  %2505 = vmatpush1.bf16.msra.mxu0 %v1814
  %2506 = vmatprep.subr.bf16.mxu0 0
  %2507 = vmatpush1.bf16.msra.mxu0 %v1815
  %2508 = vmatprep.subr.bf16.mxu0 0
  %2509 = vmatpush1.bf16.msra.mxu0 %v1816
  %2510 = vmatprep.subr.bf16.mxu0 0
  %2511 = vmatpush1.bf16.msra.mxu0 %v1817
  %2512 = vmatprep.subr.bf16.mxu0 0
  %2513 = vmatpush1.bf16.msra.mxu0 %v1818
  %2514 = vmatprep.subr.bf16.mxu0 0
  %2515 = vmatpush1.bf16.msra.mxu0 %v1819
  %2516 = vmatprep.mubr.bf16.mxu0 %v619
  %2517 = vmatmul.mubr.bf16.gmra.mrb[0].mxu0 %v618
  %v2518 = vpop.f32.mrb[0].mxu0
  %v2519 = vadd.f32 %v2479, %v2518
  %v2520 = vpop.f32.mrb[0].mxu0
  %v2521 = vpop.f32.mrb[0].mxu0
  %v2522 = vpop.f32.mrb[0].mxu0
  %2523 = vdwg.mxu0
  %2524 = vmatprep.subr.bf16.mxu0 0
  %2525 = vmatpush1.bf16.msra.mxu0 %v1820
  %2526 = vmatprep.subr.bf16.mxu0 0
  %2527 = vmatpush1.bf16.msra.mxu0 %v1821
  %2528 = vmatprep.subr.bf16.mxu0 0
  %2529 = vmatpush1.bf16.msra.mxu0 %v1822
  %2530 = vmatprep.subr.bf16.mxu0 0
  %2531 = vmatpush1.bf16.msra.mxu0 %v1823
  %2532 = vmatprep.subr.bf16.mxu0 0
  %2533 = vmatpush1.bf16.msra.mxu0 %v1824
  %2534 = vmatprep.subr.bf16.mxu0 0
  %2535 = vmatpush1.bf16.msra.mxu0 %v1825
  %2536 = vmatprep.subr.bf16.mxu0 0
  %2537 = vmatpush1.bf16.msra.mxu0 %v1826
  %2538 = vmatprep.subr.bf16.mxu0 0
  %2539 = vmatpush1.bf16.msra.mxu0 %v1827
  %2540 = vmatprep.subr.bf16.mxu0 0
  %2541 = vmatpush1.bf16.msra.mxu0 %v1828
  %2542 = vmatprep.subr.bf16.mxu0 0
  %2543 = vmatpush1.bf16.msra.mxu0 %v1829
  %2544 = vmatprep.subr.bf16.mxu0 0
  %2545 = vmatpush1.bf16.msra.mxu0 %v1830
  %2546 = vmatprep.subr.bf16.mxu0 0
  %2547 = vmatpush1.bf16.msra.mxu0 %v1831
  %2548 = vmatprep.subr.bf16.mxu0 0
  %2549 = vmatpush1.bf16.msra.mxu0 %v1832
  %2550 = vmatprep.subr.bf16.mxu0 0
  %2551 = vmatpush1.bf16.msra.mxu0 %v1833
  %2552 = vmatprep.subr.bf16.mxu0 0
  %2553 = vmatpush1.bf16.msra.mxu0 %v1834
  %2554 = vmatprep.subr.bf16.mxu0 0
  %2555 = vmatpush1.bf16.msra.mxu0 %v1835
  %2556 = vmatprep.mubr.bf16.mxu0 %v621
  %2557 = vmatmul.mubr.bf16.gmra.mrb[0].mxu0 %v620
  %v2558 = vpop.f32.mrb[0].mxu0
  %v2559 = vadd.f32 %v2519, %v2558
  %v2560 = vpop.f32.mrb[0].mxu0
  %v2561 = vpop.f32.mrb[0].mxu0
  %v2562 = vpop.f32.mrb[0].mxu0
  %2563 = vdwg.mxu0
  %2564 = vmatprep.subr.bf16.mxu0 0
  %2565 = vmatpush1.bf16.msra.mxu0 %v1836
  %2566 = vmatprep.subr.bf16.mxu0 0
  %2567 = vmatpush1.bf16.msra.mxu0 %v1837
  %2568 = vmatprep.subr.bf16.mxu0 0
  %2569 = vmatpush1.bf16.msra.mxu0 %v1838
  %2570 = vmatprep.subr.bf16.mxu0 0
  %2571 = vmatpush1.bf16.msra.mxu0 %v1839
  %2572 = vmatprep.subr.bf16.mxu0 0
  %2573 = vmatpush1.bf16.msra.mxu0 %v1840
  %2574 = vmatprep.subr.bf16.mxu0 0
  %2575 = vmatpush1.bf16.msra.mxu0 %v1841
  %2576 = vmatprep.subr.bf16.mxu0 0
  %2577 = vmatpush1.bf16.msra.mxu0 %v1842
  %2578 = vmatprep.subr.bf16.mxu0 0
  %2579 = vmatpush1.bf16.msra.mxu0 %v1843
  %2580 = vmatprep.subr.bf16.mxu0 0
  %2581 = vmatpush1.bf16.msra.mxu0 %v1844
  %2582 = vmatprep.subr.bf16.mxu0 0
  %2583 = vmatpush1.bf16.msra.mxu0 %v1845
  %2584 = vmatprep.subr.bf16.mxu0 0
  %2585 = vmatpush1.bf16.msra.mxu0 %v1846
  %2586 = vmatprep.subr.bf16.mxu0 0
  %2587 = vmatpush1.bf16.msra.mxu0 %v1847
  %2588 = vmatprep.subr.bf16.mxu0 0
  %2589 = vmatpush1.bf16.msra.mxu0 %v1848
  %2590 = vmatprep.subr.bf16.mxu0 0
  %2591 = vmatpush1.bf16.msra.mxu0 %v1849
  %2592 = vmatprep.subr.bf16.mxu0 0
  %2593 = vmatpush1.bf16.msra.mxu0 %v1850
  %2594 = vmatprep.subr.bf16.mxu0 0
  %2595 = vmatpush1.bf16.msra.mxu0 %v1851
  %2596 = vmatprep.mubr.bf16.mxu0 %v623
  %2597 = vmatmul.mubr.bf16.gmra.mrb[0].mxu0 %v622
  %v2598 = vpop.f32.mrb[0].mxu0
  %v2599 = vadd.f32 %v2559, %v2598
  %v2600 = vpop.f32.mrb[0].mxu0
  %v2601 = vpop.f32.mrb[0].mxu0
  %v2602 = vpop.f32.mrb[0].mxu0
  %2603 = vdwg.mxu0
  %2604 = vmatprep.subr.bf16.mxu0 0
  %2605 = vmatpush1.bf16.msra.mxu0 %v1852
  %2606 = vmatprep.subr.bf16.mxu0 0
  %2607 = vmatpush1.bf16.msra.mxu0 %v1853
  %2608 = vmatprep.subr.bf16.mxu0 0
  %2609 = vmatpush1.bf16.msra.mxu0 %v1854
  %2610 = vmatprep.subr.bf16.mxu0 0
  %2611 = vmatpush1.bf16.msra.mxu0 %v1855
  %2612 = vmatprep.subr.bf16.mxu0 0
  %2613 = vmatpush1.bf16.msra.mxu0 %v1856
  %2614 = vmatprep.subr.bf16.mxu0 0
  %2615 = vmatpush1.bf16.msra.mxu0 %v1857
  %2616 = vmatprep.subr.bf16.mxu0 0
  %2617 = vmatpush1.bf16.msra.mxu0 %v1858
  %2618 = vmatprep.subr.bf16.mxu0 0
  %2619 = vmatpush1.bf16.msra.mxu0 %v1859
  %2620 = vmatprep.subr.bf16.mxu0 0
  %2621 = vmatpush1.bf16.msra.mxu0 %v1860
  %2622 = vmatprep.subr.bf16.mxu0 0
  %2623 = vmatpush1.bf16.msra.mxu0 %v1861
  %2624 = vmatprep.subr.bf16.mxu0 0
  %2625 = vmatpush1.bf16.msra.mxu0 %v1862
  %2626 = vmatprep.subr.bf16.mxu0 0
  %2627 = vmatpush1.bf16.msra.mxu0 %v1863
  %2628 = vmatprep.subr.bf16.mxu0 0
  %2629 = vmatpush1.bf16.msra.mxu0 %v1864
  %2630 = vmatprep.subr.bf16.mxu0 0
  %2631 = vmatpush1.bf16.msra.mxu0 %v1865
  %2632 = vmatprep.subr.bf16.mxu0 0
  %2633 = vmatpush1.bf16.msra.mxu0 %v1866
  %2634 = vmatprep.subr.bf16.mxu0 0
  %2635 = vmatpush1.bf16.msra.mxu0 %v1867
  %2636 = vmatprep.mubr.bf16.mxu0 %v625
  %2637 = vmatmul.mubr.bf16.gmra.mrb[0].mxu0 %v624
  %v2638 = vpop.f32.mrb[0].mxu0
  %v2639 = vadd.f32 %v2599, %v2638
  %v2640 = vpop.f32.mrb[0].mxu0
  %v2641 = vpop.f32.mrb[0].mxu0
  %v2642 = vpop.f32.mrb[0].mxu0
  %2643 = vdwg.mxu0
  %2644 = vmatprep.subr.bf16.mxu0 0
  %2645 = vmatpush1.bf16.msra.mxu0 %v1868
  %2646 = vmatprep.subr.bf16.mxu0 0
  %2647 = vmatpush1.bf16.msra.mxu0 %v1869
  %2648 = vmatprep.subr.bf16.mxu0 0
  %2649 = vmatpush1.bf16.msra.mxu0 %v1870
  %2650 = vmatprep.subr.bf16.mxu0 0
  %2651 = vmatpush1.bf16.msra.mxu0 %v1871
  %2652 = vmatprep.subr.bf16.mxu0 0
  %2653 = vmatpush1.bf16.msra.mxu0 %v1872
  %2654 = vmatprep.subr.bf16.mxu0 0
  %2655 = vmatpush1.bf16.msra.mxu0 %v1873
  %2656 = vmatprep.subr.bf16.mxu0 0
  %2657 = vmatpush1.bf16.msra.mxu0 %v1874
  %2658 = vmatprep.subr.bf16.mxu0 0
  %2659 = vmatpush1.bf16.msra.mxu0 %v1875
  %2660 = vmatprep.subr.bf16.mxu0 0
  %2661 = vmatpush1.bf16.msra.mxu0 %v1876
  %2662 = vmatprep.subr.bf16.mxu0 0
  %2663 = vmatpush1.bf16.msra.mxu0 %v1877
  %2664 = vmatprep.subr.bf16.mxu0 0
  %2665 = vmatpush1.bf16.msra.mxu0 %v1878
  %2666 = vmatprep.subr.bf16.mxu0 0
  %2667 = vmatpush1.bf16.msra.mxu0 %v1879
  %2668 = vmatprep.subr.bf16.mxu0 0
  %2669 = vmatpush1.bf16.msra.mxu0 %v1880
  %2670 = vmatprep.subr.bf16.mxu0 0
  %2671 = vmatpush1.bf16.msra.mxu0 %v1881
  %2672 = vmatprep.subr.bf16.mxu0 0
  %2673 = vmatpush1.bf16.msra.mxu0 %v1882
  %2674 = vmatprep.subr.bf16.mxu0 0
  %2675 = vmatpush1.bf16.msra.mxu0 %v1883
  %2676 = vmatprep.mubr.bf16.mxu0 %v627
  %2677 = vmatmul.mubr.bf16.gmra.mrb[0].mxu0 %v626
  %v2678 = vpop.f32.mrb[0].mxu0
  %v2679 = vadd.f32 %v2639, %v2678
  %v2680 = vpop.f32.mrb[0].mxu0
  %v2681 = vpop.f32.mrb[0].mxu0
  %v2682 = vpop.f32.mrb[0].mxu0
  %2683 = vdwg.mxu0
  %2684 = vmatprep.subr.bf16.mxu0 0
  %2685 = vmatpush1.bf16.msra.mxu0 %v1884
  %2686 = vmatprep.subr.bf16.mxu0 0
  %2687 = vmatpush1.bf16.msra.mxu0 %v1885
  %2688 = vmatprep.subr.bf16.mxu0 0
  %2689 = vmatpush1.bf16.msra.mxu0 %v1886
  %2690 = vmatprep.subr.bf16.mxu0 0
  %2691 = vmatpush1.bf16.msra.mxu0 %v1887
  %2692 = vmatprep.subr.bf16.mxu0 0
  %2693 = vmatpush1.bf16.msra.mxu0 %v1888
  %2694 = vmatprep.subr.bf16.mxu0 0
  %2695 = vmatpush1.bf16.msra.mxu0 %v1889
  %2696 = vmatprep.subr.bf16.mxu0 0
  %2697 = vmatpush1.bf16.msra.mxu0 %v1890
  %2698 = vmatprep.subr.bf16.mxu0 0
  %2699 = vmatpush1.bf16.msra.mxu0 %v1891
  %2700 = vmatprep.subr.bf16.mxu0 0
  %2701 = vmatpush1.bf16.msra.mxu0 %v1892
  %2702 = vmatprep.subr.bf16.mxu0 0
  %2703 = vmatpush1.bf16.msra.mxu0 %v1893
  %2704 = vmatprep.subr.bf16.mxu0 0
  %2705 = vmatpush1.bf16.msra.mxu0 %v1894
  %2706 = vmatprep.subr.bf16.mxu0 0
  %2707 = vmatpush1.bf16.msra.mxu0 %v1895
  %2708 = vmatprep.subr.bf16.mxu0 0
  %2709 = vmatpush1.bf16.msra.mxu0 %v1896
  %2710 = vmatprep.subr.bf16.mxu0 0
  %2711 = vmatpush1.bf16.msra.mxu0 %v1897
  %2712 = vmatprep.subr.bf16.mxu0 0
  %2713 = vmatpush1.bf16.msra.mxu0 %v1898
  %2714 = vmatprep.subr.bf16.mxu0 0
  %2715 = vmatpush1.bf16.msra.mxu0 %v1899
  %2716 = vmatprep.mubr.bf16.mxu0 %v629
  %2717 = vmatmul.mubr.bf16.gmra.mrb[0].mxu0 %v628
  %v2718 = vpop.f32.mrb[0].mxu0
  %v2719 = vadd.f32 %v2679, %v2718
  %v2720 = vpop.f32.mrb[0].mxu0
  %v2721 = vpop.f32.mrb[0].mxu0
  %v2722 = vpop.f32.mrb[0].mxu0
  %2723 = vdwg.mxu0
  %2724 = vmatprep.subr.bf16.mxu0 0
  %2725 = vmatpush1.bf16.msra.mxu0 %v1900
  %2726 = vmatprep.subr.bf16.mxu0 0
  %2727 = vmatpush1.bf16.msra.mxu0 %v1901
  %2728 = vmatprep.subr.bf16.mxu0 0
  %2729 = vmatpush1.bf16.msra.mxu0 %v1902
  %2730 = vmatprep.subr.bf16.mxu0 0
  %2731 = vmatpush1.bf16.msra.mxu0 %v1903
  %2732 = vmatprep.subr.bf16.mxu0 0
  %2733 = vmatpush1.bf16.msra.mxu0 %v1904
  %2734 = vmatprep.subr.bf16.mxu0 0
  %2735 = vmatpush1.bf16.msra.mxu0 %v1905
  %2736 = vmatprep.subr.bf16.mxu0 0
  %2737 = vmatpush1.bf16.msra.mxu0 %v1906
  %2738 = vmatprep.subr.bf16.mxu0 0
  %2739 = vmatpush1.bf16.msra.mxu0 %v1907
  %2740 = vmatprep.subr.bf16.mxu0 0
  %2741 = vmatpush1.bf16.msra.mxu0 %v1908
  %2742 = vmatprep.subr.bf16.mxu0 0
  %2743 = vmatpush1.bf16.msra.mxu0 %v1909
  %2744 = vmatprep.subr.bf16.mxu0 0
  %2745 = vmatpush1.bf16.msra.mxu0 %v1910
  %2746 = vmatprep.subr.bf16.mxu0 0
  %2747 = vmatpush1.bf16.msra.mxu0 %v1911
  %2748 = vmatprep.subr.bf16.mxu0 0
  %2749 = vmatpush1.bf16.msra.mxu0 %v1912
  %2750 = vmatprep.subr.bf16.mxu0 0
  %2751 = vmatpush1.bf16.msra.mxu0 %v1913
  %2752 = vmatprep.subr.bf16.mxu0 0
  %2753 = vmatpush1.bf16.msra.mxu0 %v1914
  %2754 = vmatprep.subr.bf16.mxu0 0
  %2755 = vmatpush1.bf16.msra.mxu0 %v1915
  %2756 = vmatprep.mubr.bf16.mxu0 %v631
  %2757 = vmatmul.mubr.bf16.gmra.mrb[0].mxu0 %v630
  %v2758 = vpop.f32.mrb[0].mxu0
  %v2759 = vadd.f32 %v2719, %v2758
  %v2760 = vpop.f32.mrb[0].mxu0
  %v2761 = vpop.f32.mrb[0].mxu0
  %v2762 = vpop.f32.mrb[0].mxu0
  %2763 = vdwg.mxu0
  %2764 = vmatprep.subr.bf16.mxu0 0
  %2765 = vmatpush1.bf16.msra.mxu0 %v1916
  %2766 = vmatprep.subr.bf16.mxu0 0
  %2767 = vmatpush1.bf16.msra.mxu0 %v1917
  %2768 = vmatprep.subr.bf16.mxu0 0
  %2769 = vmatpush1.bf16.msra.mxu0 %v1918
  %2770 = vmatprep.subr.bf16.mxu0 0
  %2771 = vmatpush1.bf16.msra.mxu0 %v1919
  %2772 = vmatprep.subr.bf16.mxu0 0
  %2773 = vmatpush1.bf16.msra.mxu0 %v1920
  %2774 = vmatprep.subr.bf16.mxu0 0
  %2775 = vmatpush1.bf16.msra.mxu0 %v1921
  %2776 = vmatprep.subr.bf16.mxu0 0
  %2777 = vmatpush1.bf16.msra.mxu0 %v1922
  %2778 = vmatprep.subr.bf16.mxu0 0
  %2779 = vmatpush1.bf16.msra.mxu0 %v1923
  %2780 = vmatprep.subr.bf16.mxu0 0
  %2781 = vmatpush1.bf16.msra.mxu0 %v1924
  %2782 = vmatprep.subr.bf16.mxu0 0
  %2783 = vmatpush1.bf16.msra.mxu0 %v1925
  %2784 = vmatprep.subr.bf16.mxu0 0
  %2785 = vmatpush1.bf16.msra.mxu0 %v1926
  %2786 = vmatprep.subr.bf16.mxu0 0
  %2787 = vmatpush1.bf16.msra.mxu0 %v1927
  %2788 = vmatprep.subr.bf16.mxu0 0
  %2789 = vmatpush1.bf16.msra.mxu0 %v1928
  %2790 = vmatprep.subr.bf16.mxu0 0
  %2791 = vmatpush1.bf16.msra.mxu0 %v1929
  %2792 = vmatprep.subr.bf16.mxu0 0
  %2793 = vmatpush1.bf16.msra.mxu0 %v1930
  %2794 = vmatprep.subr.bf16.mxu0 0
  %2795 = vmatpush1.bf16.msra.mxu0 %v1931
  %2796 = vmatprep.mubr.bf16.mxu0 %v633
  %2797 = vmatmul.mubr.bf16.gmra.mrb[0].mxu0 %v632
  %v2798 = vpop.f32.mrb[0].mxu0
  %v2799 = vadd.f32 %v2759, %v2798
  %v2800 = vpop.f32.mrb[0].mxu0
  %v2801 = vpop.f32.mrb[0].mxu0
  %v2802 = vpop.f32.mrb[0].mxu0
  %2803 = vdwg.mxu0
  %2804 = vmatprep.subr.bf16.mxu0 0
  %2805 = vmatpush1.bf16.msra.mxu0 %v1932
  %2806 = vmatprep.subr.bf16.mxu0 0
  %2807 = vmatpush1.bf16.msra.mxu0 %v1933
  %2808 = vmatprep.subr.bf16.mxu0 0
  %2809 = vmatpush1.bf16.msra.mxu0 %v1934
  %2810 = vmatprep.subr.bf16.mxu0 0
  %2811 = vmatpush1.bf16.msra.mxu0 %v1935
  %2812 = vmatprep.subr.bf16.mxu0 0
  %2813 = vmatpush1.bf16.msra.mxu0 %v1936
  %2814 = vmatprep.subr.bf16.mxu0 0
  %2815 = vmatpush1.bf16.msra.mxu0 %v1937
  %2816 = vmatprep.subr.bf16.mxu0 0
  %2817 = vmatpush1.bf16.msra.mxu0 %v1938
  %2818 = vmatprep.subr.bf16.mxu0 0
  %2819 = vmatpush1.bf16.msra.mxu0 %v1939
  %2820 = vmatprep.subr.bf16.mxu0 0
  %2821 = vmatpush1.bf16.msra.mxu0 %v1940
  %2822 = vmatprep.subr.bf16.mxu0 0
  %2823 = vmatpush1.bf16.msra.mxu0 %v1941
  %2824 = vmatprep.subr.bf16.mxu0 0
  %2825 = vmatpush1.bf16.msra.mxu0 %v1942
  %2826 = vmatprep.subr.bf16.mxu0 0
  %2827 = vmatpush1.bf16.msra.mxu0 %v1943
  %2828 = vmatprep.subr.bf16.mxu0 0
  %2829 = vmatpush1.bf16.msra.mxu0 %v1944
  %2830 = vmatprep.subr.bf16.mxu0 0
  %2831 = vmatpush1.bf16.msra.mxu0 %v1945
  %2832 = vmatprep.subr.bf16.mxu0 0
  %2833 = vmatpush1.bf16.msra.mxu0 %v1946
  %2834 = vmatprep.subr.bf16.mxu0 0
  %2835 = vmatpush1.bf16.msra.mxu0 %v1947
  %2836 = vmatprep.mubr.bf16.mxu0 %v635
  %2837 = vmatmul.mubr.bf16.gmra.mrb[0].mxu0 %v634
  %v2838 = vpop.f32.mrb[0].mxu0
  %v2839 = vadd.f32 %v2799, %v2838
  %v2840 = vpop.f32.mrb[0].mxu0
  %v2841 = vpop.f32.mrb[0].mxu0
  %v2842 = vpop.f32.mrb[0].mxu0
  %2843 = vdwg.mxu0
  %v2844 = vmax.f32 %v2839, 0.0
  %v2845 = vpack.c.bf16 %v2844, %v2844
  %v2846 = vld [vmem:[%s3] sm:$0xf]
  %v2847 = vld [vmem:[%s3 + $0x4] sm:$0xf]
  %v2848 = vld [vmem:[%s3 + $0x8] sm:$0xf]
  %v2849 = vld [vmem:[%s3 + $0xc] sm:$0xf]
  %v2850 = vld [vmem:[%s3 + $0x10] sm:$0xf]
  %v2851 = vld [vmem:[%s3 + $0x14] sm:$0xf]
  %v2852 = vld [vmem:[%s3 + $0x18] sm:$0xf]
  %v2853 = vld [vmem:[%s3 + $0x1c] sm:$0xf]
  %v2854 = vld [vmem:[%s3 + $0x20] sm:$0xf]
  %v2855 = vld [vmem:[%s3 + $0x24] sm:$0xf]
  %v2856 = vld [vmem:[%s3 + $0x28] sm:$0xf]
  %v2857 = vld [vmem:[%s3 + $0x2c] sm:$0xf]
  %v2858 = vld [vmem:[%s3 + $0x30] sm:$0xf]
  %v2859 = vld [vmem:[%s3 + $0x34] sm:$0xf]
  %v2860 = vld [vmem:[%s3 + $0x38] sm:$0xf]
  %v2861 = vld [vmem:[%s3 + $0x3c] sm:$0xf]
  %v2862 = vld [vmem:[%s4] sm:$0x1]
  %v2864 = vlaneseq
  %v2865 = vshrl.u32 %v2864, 7
  %v2866 = vsub.s32 0, %v2865
  %v2867 = vrot.slane %v2862, %v2866
  %v2885 = vunpack.c.l.b16 %v2846
  %v2886 = vunpack.c.l.b16 %v2847
  %v2887 = vunpack.c.l.b16 %v2848
  %v2888 = vunpack.c.l.b16 %v2849
  %v2889 = vunpack.c.l.b16 %v2850
  %v2890 = vunpack.c.l.b16 %v2851
  %v2891 = vunpack.c.l.b16 %v2852
  %v2892 = vunpack.c.l.b16 %v2853
  %v2893 = vunpack.c.l.b16 %v2854
  %v2894 = vunpack.c.l.b16 %v2855
  %v2895 = vunpack.c.l.b16 %v2856
  %v2896 = vunpack.c.l.b16 %v2857
  %v2897 = vunpack.c.l.b16 %v2858
  %v2898 = vunpack.c.l.b16 %v2859
  %v2899 = vunpack.c.l.b16 %v2860
  %v2900 = vunpack.c.l.b16 %v2861
  %v2901 = vpack.c.b16 %v2886, %v2885
  %v2902 = vpack.c.b16 %v2888, %v2887
  %v2903 = vpack.c.b16 %v2890, %v2889
  %v2904 = vpack.c.b16 %v2892, %v2891
  %v2905 = vpack.c.b16 %v2894, %v2893
  %v2906 = vpack.c.b16 %v2896, %v2895
  %v2907 = vpack.c.b16 %v2898, %v2897
  %v2908 = vpack.c.b16 %v2900, %v2899
  %2917 = vmatprep.subr.bf16.mxu0 0
  %2918 = vmatpush1.bf16.msra.mxu0 %v2901
  %2919 = vmatprep.subr.bf16.mxu0 0
  %2920 = vmatpush1.bf16.msra.mxu0 %v2902
  %2921 = vmatprep.subr.bf16.mxu0 0
  %2922 = vmatpush1.bf16.msra.mxu0 %v2903
  %2923 = vmatprep.subr.bf16.mxu0 0
  %2924 = vmatpush1.bf16.msra.mxu0 %v2904
  %2925 = vmatprep.subr.bf16.mxu0 0
  %2926 = vmatpush1.bf16.msra.mxu0 %v2905
  %2927 = vmatprep.subr.bf16.mxu0 0
  %2928 = vmatpush1.bf16.msra.mxu0 %v2906
  %2929 = vmatprep.subr.bf16.mxu0 0
  %2930 = vmatpush1.bf16.msra.mxu0 %v2907
  %2931 = vmatprep.subr.bf16.mxu0 0
  %2932 = vmatpush1.bf16.msra.mxu0 %v2908
  %2933 = vmatprep.subr.bf16.mxu0 0
  %2934 = vmatpush1.bf16.msra.mxu0 0
  %2935 = vmatprep.subr.bf16.mxu0 0
  %2936 = vmatpush1.bf16.msra.mxu0 0
  %2937 = vmatprep.subr.bf16.mxu0 0
  %2938 = vmatpush1.bf16.msra.mxu0 0
  %2939 = vmatprep.subr.bf16.mxu0 0
  %2940 = vmatpush1.bf16.msra.mxu0 0
  %2941 = vmatprep.subr.bf16.mxu0 0
  %2942 = vmatpush1.bf16.msra.mxu0 0
  %2943 = vmatprep.subr.bf16.mxu0 0
  %2944 = vmatpush1.bf16.msra.mxu0 0
  %2945 = vmatprep.subr.bf16.mxu0 0
  %2946 = vmatpush1.bf16.msra.mxu0 0
  %2947 = vmatprep.subr.bf16.mxu0 0
  %2948 = vmatpush1.bf16.msra.mxu0 0
  %2949 = vmatprep.mubr.bf16.mxu0 0
  %2950 = vmatmul.mubr.bf16.gmra.mrb[0].mxu0 %v2845
  %v2951 = vpop.f32.mrb[0].mxu0
  %v2952 = vadd.f32 %v2867, %v2951
  %v2953 = vpop.f32.mrb[0].mxu0
  %v2954 = vpop.f32.mrb[0].mxu0
  %v2955 = vpop.f32.mrb[0].mxu0
  %2956 = vdwg.mxu0
  %2957 = vst [vmem:[%s5] sm:$0xff] %v2952
  // Predicated region
  $region22: #{autoencoder_forward.9} parent=0 // pred_check
    _
  $region23: #{autoencoder_forward.9} parent=0 // pred_check_branch
    %2959 = sbr.rel (0) target = $region25
  $region24: #{autoencoder_forward.9} parent=0 // pred_region
    _
  $region25: #{autoencoder_forward.9} parent=0 // pred_fallthru
    _
  // Predicated region
  $region26: #{autoencoder_forward.9} parent=0 // pred_check
    _
  $region27: #{autoencoder_forward.9} parent=0 // pred_check_branch
    %2961 = sbr.rel (0) target = $region29
  $region28: #{autoencoder_forward.9} parent=0 // pred_region
    _
  $region29: #{autoencoder_forward.9} parent=0 // pred_fallthru
    _

// kernel: autoencoder_forward.7
$region0: #{autoencoder_forward.7}
  #allocation0 [shape = 'u32[]', space=smem, size = 0x4, offset = 0x4, fixed_abs, tag = 'smem constant byte address 0x4 - core index']
  #allocation1 [shape = 'u32[144,128]{1,0:T(1,128)}', space=vmem, size = 0x12000, scoped, tag = 'internal scratch']
  %s0 = inlined_call_operand.vmem [shape: bf16[512,576], index: 0, kind: input, shape index: {}]
  %s1 = inlined_call_operand.vmem [shape: bf16[576,128], index: 1, kind: input, shape index: {}]
  %s2 = inlined_call_operand.vmem [shape: f32[1,128], index: 2, kind: input, shape index: {}]
  %s3 = inlined_call_operand.vmem [shape: bf16[512,128], index: 3, kind: output, shape index: {}]
  %s4 = sld [smem:[#allocation0]]
  $region22: #{autoencoder_forward.7} parent=0
    _
  %s6 = ssub.s32 1, %s4
  %s7 = scalar_select 0, %s6, %s4
  // Predicated region
  $region2: #{autoencoder_forward.7} parent=0 // pred_check
    _
  $region3: #{autoencoder_forward.7} parent=0 // pred_check_branch
    %9 = sbr.rel (0) target = $region5
  $region4: #{autoencoder_forward.7} parent=0 // pred_region
    _
  $region5: #{autoencoder_forward.7} parent=0 // pred_fallthru
    _
  // Predicated region
  $region6: #{autoencoder_forward.7} parent=0 // pred_check
    _
  $region7: #{autoencoder_forward.7} parent=0 // pred_check_branch
    %11 = sbr.rel (0) target = $region9
  $region8: #{autoencoder_forward.7} parent=0 // pred_region
    _
  $region9: #{autoencoder_forward.7} parent=0 // pred_fallthru
    _
  // Predicated region
  $region10: #{autoencoder_forward.7} parent=0 // pred_check
    _
  $region11: #{autoencoder_forward.7} parent=0 // pred_check_branch
    %13 = sbr.rel (0) target = $region13
  $region12: #{autoencoder_forward.7} parent=0 // pred_region
    _
  $region13: #{autoencoder_forward.7} parent=0 // pred_fallthru
    _
  %v15 = vld [vmem:[%s0] sm:$0xff]
  %v16 = vld [vmem:[%s0 + $0x8] sm:$0xff]
  %v17 = vld [vmem:[%s0 + $0x10] sm:$0xf]
  %v18 = vld [vmem:[%s0 + $0x14] sm:$0xff]
  %v19 = vld [vmem:[%s0 + $0x1c] sm:$0xff]
  %v20 = vld [vmem:[%s0 + $0x24] sm:$0xf]
  %v21 = vld [vmem:[%s0 + $0x28] sm:$0xff]
  %v22 = vld [vmem:[%s0 + $0x30] sm:$0xff]
  %v23 = vld [vmem:[%s0 + $0x38] sm:$0xf]
  %v24 = vld [vmem:[%s0 + $0x3c] sm:$0xff]
  %v25 = vld [vmem:[%s0 + $0x44] sm:$0xff]
  %v26 = vld [vmem:[%s0 + $0x4c] sm:$0xf]
  %v27 = vld [vmem:[%s0 + $0x50] sm:$0xff]
  %v28 = vld [vmem:[%s0 + $0x58] sm:$0xff]
  %v29 = vld [vmem:[%s0 + $0x60] sm:$0xf]
  %v30 = vld [vmem:[%s0 + $0x64] sm:$0xff]
  %v31 = vld [vmem:[%s0 + $0x6c] sm:$0xff]
  %v32 = vld [vmem:[%s0 + $0x74] sm:$0xf]
  %v33 = vld [vmem:[%s0 + $0x78] sm:$0xff]
  %v34 = vld [vmem:[%s0 + $0x80] sm:$0xff]
  %v35 = vld [vmem:[%s0 + $0x88] sm:$0xf]
  %v36 = vld [vmem:[%s0 + $0x8c] sm:$0xff]
  %v37 = vld [vmem:[%s0 + $0x94] sm:$0xff]
  %v38 = vld [vmem:[%s0 + $0x9c] sm:$0xf]
  %v39 = vld [vmem:[%s0 + $0xa0] sm:$0xff]
  %v40 = vld [vmem:[%s0 + $0xa8] sm:$0xff]
  %v41 = vld [vmem:[%s0 + $0xb0] sm:$0xf]
  %v42 = vld [vmem:[%s0 + $0xb4] sm:$0xff]
  %v43 = vld [vmem:[%s0 + $0xbc] sm:$0xff]
  %v44 = vld [vmem:[%s0 + $0xc4] sm:$0xf]
  %v45 = vld [vmem:[%s0 + $0xc8] sm:$0xff]
  %v46 = vld [vmem:[%s0 + $0xd0] sm:$0xff]
  %v47 = vld [vmem:[%s0 + $0xd8] sm:$0xf]
  %v48 = vld [vmem:[%s0 + $0xdc] sm:$0xff]
  %v49 = vld [vmem:[%s0 + $0xe4] sm:$0xff]
  %v50 = vld [vmem:[%s0 + $0xec] sm:$0xf]
  %v51 = vld [vmem:[%s0 + $0xf0] sm:$0xff]
  %v52 = vld [vmem:[%s0 + $0xf8] sm:$0xff]
  %v53 = vld [vmem:[%s0 + $0x100] sm:$0xf]
  %v54 = vld [vmem:[%s0 + $0x104] sm:$0xff]
  %v55 = vld [vmem:[%s0 + $0x10c] sm:$0xff]
  %v56 = vld [vmem:[%s0 + $0x114] sm:$0xf]
  %v57 = vld [vmem:[%s0 + $0x118] sm:$0xff]
  %v58 = vld [vmem:[%s0 + $0x120] sm:$0xff]
  %v59 = vld [vmem:[%s0 + $0x128] sm:$0xf]
  %v60 = vld [vmem:[%s0 + $0x12c] sm:$0xff]
  %v61 = vld [vmem:[%s0 + $0x134] sm:$0xff]
  %v62 = vld [vmem:[%s0 + $0x13c] sm:$0xf]
  %v63 = vld [vmem:[%s0 + $0x140] sm:$0xff]
  %v64 = vld [vmem:[%s0 + $0x148] sm:$0xff]
  %v65 = vld [vmem:[%s0 + $0x150] sm:$0xf]
  %v66 = vld [vmem:[%s0 + $0x154] sm:$0xff]
  %v67 = vld [vmem:[%s0 + $0x15c] sm:$0xff]
  %v68 = vld [vmem:[%s0 + $0x164] sm:$0xf]
  %v69 = vld [vmem:[%s0 + $0x168] sm:$0xff]
  %v70 = vld [vmem:[%s0 + $0x170] sm:$0xff]
  %v71 = vld [vmem:[%s0 + $0x178] sm:$0xf]
  %v72 = vld [vmem:[%s0 + $0x17c] sm:$0xff]
  %v73 = vld [vmem:[%s0 + $0x184] sm:$0xff]
  %v74 = vld [vmem:[%s0 + $0x18c] sm:$0xf]
  %v75 = vld [vmem:[%s0 + $0x190] sm:$0xff]
  %v76 = vld [vmem:[%s0 + $0x198] sm:$0xff]
  %v77 = vld [vmem:[%s0 + $0x1a0] sm:$0xf]
  %v78 = vld [vmem:[%s0 + $0x1a4] sm:$0xff]
  %v79 = vld [vmem:[%s0 + $0x1ac] sm:$0xff]
  %v80 = vld [vmem:[%s0 + $0x1b4] sm:$0xf]
  %v81 = vld [vmem:[%s0 + $0x1b8] sm:$0xff]
  %v82 = vld [vmem:[%s0 + $0x1c0] sm:$0xff]
  %v83 = vld [vmem:[%s0 + $0x1c8] sm:$0xf]
  %v84 = vld [vmem:[%s0 + $0x1cc] sm:$0xff]
  %v85 = vld [vmem:[%s0 + $0x1d4] sm:$0xff]
  %v86 = vld [vmem:[%s0 + $0x1dc] sm:$0xf]
  %v87 = vld [vmem:[%s0 + $0x1e0] sm:$0xff]
  %v88 = vld [vmem:[%s0 + $0x1e8] sm:$0xff]
  %v89 = vld [vmem:[%s0 + $0x1f0] sm:$0xf]
  %v90 = vld [vmem:[%s0 + $0x1f4] sm:$0xff]
  %v91 = vld [vmem:[%s0 + $0x1fc] sm:$0xff]
  %v92 = vld [vmem:[%s0 + $0x204] sm:$0xf]
  %v93 = vld [vmem:[%s0 + $0x208] sm:$0xff]
  %v94 = vld [vmem:[%s0 + $0x210] sm:$0xff]
  %v95 = vld [vmem:[%s0 + $0x218] sm:$0xf]
  %v96 = vld [vmem:[%s0 + $0x21c] sm:$0xff]
  %v97 = vld [vmem:[%s0 + $0x224] sm:$0xff]
  %v98 = vld [vmem:[%s0 + $0x22c] sm:$0xf]
  %v99 = vld [vmem:[%s0 + $0x230] sm:$0xff]
  %v100 = vld [vmem:[%s0 + $0x238] sm:$0xff]
  %v101 = vld [vmem:[%s0 + $0x240] sm:$0xf]
  %v102 = vld [vmem:[%s0 + $0x244] sm:$0xff]
  %v103 = vld [vmem:[%s0 + $0x24c] sm:$0xff]
  %v104 = vld [vmem:[%s0 + $0x254] sm:$0xf]
  %v105 = vld [vmem:[%s0 + $0x258] sm:$0xff]
  %v106 = vld [vmem:[%s0 + $0x260] sm:$0xff]
  %v107 = vld [vmem:[%s0 + $0x268] sm:$0xf]
  %v108 = vld [vmem:[%s0 + $0x26c] sm:$0xff]
  %v109 = vld [vmem:[%s0 + $0x274] sm:$0xff]
  %v110 = vld [vmem:[%s0 + $0x27c] sm:$0xf]
  %v111 = vld [vmem:[%s0 + $0x280] sm:$0xff]
  %v112 = vld [vmem:[%s0 + $0x288] sm:$0xff]
  %v113 = vld [vmem:[%s0 + $0x290] sm:$0xf]
  %v114 = vld [vmem:[%s0 + $0x294] sm:$0xff]
  %v115 = vld [vmem:[%s0 + $0x29c] sm:$0xff]
  %v116 = vld [vmem:[%s0 + $0x2a4] sm:$0xf]
  %v117 = vld [vmem:[%s0 + $0x2a8] sm:$0xff]
  %v118 = vld [vmem:[%s0 + $0x2b0] sm:$0xff]
  %v119 = vld [vmem:[%s0 + $0x2b8] sm:$0xf]
  %v120 = vld [vmem:[%s0 + $0x2bc] sm:$0xff]
  %v121 = vld [vmem:[%s0 + $0x2c4] sm:$0xff]
  %v122 = vld [vmem:[%s0 + $0x2cc] sm:$0xf]
  %v123 = vld [vmem:[%s0 + $0x2d0] sm:$0xff]
  %v124 = vld [vmem:[%s0 + $0x2d8] sm:$0xff]
  %v125 = vld [vmem:[%s0 + $0x2e0] sm:$0xf]
  %v126 = vld [vmem:[%s0 + $0x2e4] sm:$0xff]
  %v127 = vld [vmem:[%s0 + $0x2ec] sm:$0xff]
  %v128 = vld [vmem:[%s0 + $0x2f4] sm:$0xf]
  %v129 = vld [vmem:[%s0 + $0x2f8] sm:$0xff]
  %v130 = vld [vmem:[%s0 + $0x300] sm:$0xff]
  %v131 = vld [vmem:[%s0 + $0x308] sm:$0xf]
  %v132 = vld [vmem:[%s0 + $0x30c] sm:$0xff]
  %v133 = vld [vmem:[%s0 + $0x314] sm:$0xff]
  %v134 = vld [vmem:[%s0 + $0x31c] sm:$0xf]
  %v135 = vld [vmem:[%s0 + $0x320] sm:$0xff]
  %v136 = vld [vmem:[%s0 + $0x328] sm:$0xff]
  %v137 = vld [vmem:[%s0 + $0x330] sm:$0xf]
  %v138 = vld [vmem:[%s0 + $0x334] sm:$0xff]
  %v139 = vld [vmem:[%s0 + $0x33c] sm:$0xff]
  %v140 = vld [vmem:[%s0 + $0x344] sm:$0xf]
  %v141 = vld [vmem:[%s0 + $0x348] sm:$0xff]
  %v142 = vld [vmem:[%s0 + $0x350] sm:$0xff]
  %v143 = vld [vmem:[%s0 + $0x358] sm:$0xf]
  %v144 = vld [vmem:[%s0 + $0x35c] sm:$0xff]
  %v145 = vld [vmem:[%s0 + $0x364] sm:$0xff]
  %v146 = vld [vmem:[%s0 + $0x36c] sm:$0xf]
  %v147 = vld [vmem:[%s0 + $0x370] sm:$0xff]
  %v148 = vld [vmem:[%s0 + $0x378] sm:$0xff]
  %v149 = vld [vmem:[%s0 + $0x380] sm:$0xf]
  %v150 = vld [vmem:[%s0 + $0x384] sm:$0xff]
  %v151 = vld [vmem:[%s0 + $0x38c] sm:$0xff]
  %v152 = vld [vmem:[%s0 + $0x394] sm:$0xf]
  %v153 = vld [vmem:[%s0 + $0x398] sm:$0xff]
  %v154 = vld [vmem:[%s0 + $0x3a0] sm:$0xff]
  %v155 = vld [vmem:[%s0 + $0x3a8] sm:$0xf]
  %v156 = vld [vmem:[%s0 + $0x3ac] sm:$0xff]
  %v157 = vld [vmem:[%s0 + $0x3b4] sm:$0xff]
  %v158 = vld [vmem:[%s0 + $0x3bc] sm:$0xf]
  %v159 = vld [vmem:[%s0 + $0x3c0] sm:$0xff]
  %v160 = vld [vmem:[%s0 + $0x3c8] sm:$0xff]
  %v161 = vld [vmem:[%s0 + $0x3d0] sm:$0xf]
  %v162 = vld [vmem:[%s0 + $0x3d4] sm:$0xff]
  %v163 = vld [vmem:[%s0 + $0x3dc] sm:$0xff]
  %v164 = vld [vmem:[%s0 + $0x3e4] sm:$0xf]
  %v165 = vld [vmem:[%s0 + $0x3e8] sm:$0xff]
  %v166 = vld [vmem:[%s0 + $0x3f0] sm:$0xff]
  %v167 = vld [vmem:[%s0 + $0x3f8] sm:$0xf]
  %v168 = vld [vmem:[%s0 + $0x3fc] sm:$0xff]
  %v169 = vld [vmem:[%s0 + $0x404] sm:$0xff]
  %v170 = vld [vmem:[%s0 + $0x40c] sm:$0xf]
  %v171 = vld [vmem:[%s0 + $0x410] sm:$0xff]
  %v172 = vld [vmem:[%s0 + $0x418] sm:$0xff]
  %v173 = vld [vmem:[%s0 + $0x420] sm:$0xf]
  %v174 = vld [vmem:[%s0 + $0x424] sm:$0xff]
  %v175 = vld [vmem:[%s0 + $0x42c] sm:$0xff]
  %v176 = vld [vmem:[%s0 + $0x434] sm:$0xf]
  %v177 = vld [vmem:[%s0 + $0x438] sm:$0xff]
  %v178 = vld [vmem:[%s0 + $0x440] sm:$0xff]
  %v179 = vld [vmem:[%s0 + $0x448] sm:$0xf]
  %v180 = vld [vmem:[%s0 + $0x44c] sm:$0xff]
  %v181 = vld [vmem:[%s0 + $0x454] sm:$0xff]
  %v182 = vld [vmem:[%s0 + $0x45c] sm:$0xf]
  %v183 = vld [vmem:[%s0 + $0x460] sm:$0xff]
  %v184 = vld [vmem:[%s0 + $0x468] sm:$0xff]
  %v185 = vld [vmem:[%s0 + $0x470] sm:$0xf]
  %v186 = vld [vmem:[%s0 + $0x474] sm:$0xff]
  %v187 = vld [vmem:[%s0 + $0x47c] sm:$0xff]
  %v188 = vld [vmem:[%s0 + $0x484] sm:$0xf]
  %v189 = vld [vmem:[%s0 + $0x488] sm:$0xff]
  %v190 = vld [vmem:[%s0 + $0x490] sm:$0xff]
  %v191 = vld [vmem:[%s0 + $0x498] sm:$0xf]
  %v192 = vld [vmem:[%s0 + $0x49c] sm:$0xff]
  %v193 = vld [vmem:[%s0 + $0x4a4] sm:$0xff]
  %v194 = vld [vmem:[%s0 + $0x4ac] sm:$0xf]
  %v195 = vld [vmem:[%s0 + $0x4b0] sm:$0xff]
  %v196 = vld [vmem:[%s0 + $0x4b8] sm:$0xff]
  %v197 = vld [vmem:[%s0 + $0x4c0] sm:$0xf]
  %v198 = vld [vmem:[%s0 + $0x4c4] sm:$0xff]
  %v199 = vld [vmem:[%s0 + $0x4cc] sm:$0xff]
  %v200 = vld [vmem:[%s0 + $0x4d4] sm:$0xf]
  %v201 = vld [vmem:[%s0 + $0x4d8] sm:$0xff]
  %v202 = vld [vmem:[%s0 + $0x4e0] sm:$0xff]
  %v203 = vld [vmem:[%s0 + $0x4e8] sm:$0xf]
  %v204 = vld [vmem:[%s0 + $0x4ec] sm:$0xff]
  %v205 = vld [vmem:[%s0 + $0x4f4] sm:$0xff]
  %v206 = vld [vmem:[%s0 + $0x4fc] sm:$0xf]
  %v207 = vld [vmem:[%s1] sm:$0xf]
  %v208 = vld [vmem:[%s1 + $0x4] sm:$0xf]
  %v209 = vld [vmem:[%s1 + $0x8] sm:$0xf]
  %v210 = vld [vmem:[%s1 + $0xc] sm:$0xf]
  %v211 = vld [vmem:[%s1 + $0x10] sm:$0xf]
  %v212 = vld [vmem:[%s1 + $0x14] sm:$0xf]
  %v213 = vld [vmem:[%s1 + $0x18] sm:$0xf]
  %v214 = vld [vmem:[%s1 + $0x1c] sm:$0xf]
  %v215 = vld [vmem:[%s1 + $0x20] sm:$0xf]
  %v216 = vld [vmem:[%s1 + $0x24] sm:$0xf]
  %v217 = vld [vmem:[%s1 + $0x28] sm:$0xf]
  %v218 = vld [vmem:[%s1 + $0x2c] sm:$0xf]
  %v219 = vld [vmem:[%s1 + $0x30] sm:$0xf]
  %v220 = vld [vmem:[%s1 + $0x34] sm:$0xf]
  %v221 = vld [vmem:[%s1 + $0x38] sm:$0xf]
  %v222 = vld [vmem:[%s1 + $0x3c] sm:$0xf]
  %v223 = vld [vmem:[%s1 + $0x40] sm:$0xf]
  %v224 = vld [vmem:[%s1 + $0x44] sm:$0xf]
  %v225 = vld [vmem:[%s1 + $0x48] sm:$0xf]
  %v226 = vld [vmem:[%s1 + $0x4c] sm:$0xf]
  %v227 = vld [vmem:[%s1 + $0x50] sm:$0xf]
  %v228 = vld [vmem:[%s1 + $0x54] sm:$0xf]
  %v229 = vld [vmem:[%s1 + $0x58] sm:$0xf]
  %v230 = vld [vmem:[%s1 + $0x5c] sm:$0xf]
  %v231 = vld [vmem:[%s1 + $0x60] sm:$0xf]
  %v232 = vld [vmem:[%s1 + $0x64] sm:$0xf]
  %v233 = vld [vmem:[%s1 + $0x68] sm:$0xf]
  %v234 = vld [vmem:[%s1 + $0x6c] sm:$0xf]
  %v235 = vld [vmem:[%s1 + $0x70] sm:$0xf]
  %v236 = vld [vmem:[%s1 + $0x74] sm:$0xf]
  %v237 = vld [vmem:[%s1 + $0x78] sm:$0xf]
  %v238 = vld [vmem:[%s1 + $0x7c] sm:$0xf]
  %v239 = vld [vmem:[%s1 + $0x80] sm:$0xf]
  %v240 = vld [vmem:[%s1 + $0x84] sm:$0xf]
  %v241 = vld [vmem:[%s1 + $0x88] sm:$0xf]
  %v242 = vld [vmem:[%s1 + $0x8c] sm:$0xf]
  %v243 = vld [vmem:[%s1 + $0x90] sm:$0xf]
  %v244 = vld [vmem:[%s1 + $0x94] sm:$0xf]
  %v245 = vld [vmem:[%s1 + $0x98] sm:$0xf]
  %v246 = vld [vmem:[%s1 + $0x9c] sm:$0xf]
  %v247 = vld [vmem:[%s1 + $0xa0] sm:$0xf]
  %v248 = vld [vmem:[%s1 + $0xa4] sm:$0xf]
  %v249 = vld [vmem:[%s1 + $0xa8] sm:$0xf]
  %v250 = vld [vmem:[%s1 + $0xac] sm:$0xf]
  %v251 = vld [vmem:[%s1 + $0xb0] sm:$0xf]
  %v252 = vld [vmem:[%s1 + $0xb4] sm:$0xf]
  %v253 = vld [vmem:[%s1 + $0xb8] sm:$0xf]
  %v254 = vld [vmem:[%s1 + $0xbc] sm:$0xf]
  %v255 = vld [vmem:[%s1 + $0xc0] sm:$0xf]
  %v256 = vld [vmem:[%s1 + $0xc4] sm:$0xf]
  %v257 = vld [vmem:[%s1 + $0xc8] sm:$0xf]
  %v258 = vld [vmem:[%s1 + $0xcc] sm:$0xf]
  %v259 = vld [vmem:[%s1 + $0xd0] sm:$0xf]
  %v260 = vld [vmem:[%s1 + $0xd4] sm:$0xf]
  %v261 = vld [vmem:[%s1 + $0xd8] sm:$0xf]
  %v262 = vld [vmem:[%s1 + $0xdc] sm:$0xf]
  %v263 = vld [vmem:[%s1 + $0xe0] sm:$0xf]
  %v264 = vld [vmem:[%s1 + $0xe4] sm:$0xf]
  %v265 = vld [vmem:[%s1 + $0xe8] sm:$0xf]
  %v266 = vld [vmem:[%s1 + $0xec] sm:$0xf]
  %v267 = vld [vmem:[%s1 + $0xf0] sm:$0xf]
  %v268 = vld [vmem:[%s1 + $0xf4] sm:$0xf]
  %v269 = vld [vmem:[%s1 + $0xf8] sm:$0xf]
  %v270 = vld [vmem:[%s1 + $0xfc] sm:$0xf]
  %v271 = vld [vmem:[%s1 + $0x100] sm:$0xf]
  %v272 = vld [vmem:[%s1 + $0x104] sm:$0xf]
  %v273 = vld [vmem:[%s1 + $0x108] sm:$0xf]
  %v274 = vld [vmem:[%s1 + $0x10c] sm:$0xf]
  %v275 = vld [vmem:[%s1 + $0x110] sm:$0xf]
  %v276 = vld [vmem:[%s1 + $0x114] sm:$0xf]
  %v277 = vld [vmem:[%s1 + $0x118] sm:$0xf]
  %v278 = vld [vmem:[%s1 + $0x11c] sm:$0xf]
  %v279 = vld [vmem:[%s2] sm:$0x1]
  %v281 = vlaneseq
  %v282 = vshrl.u32 %v281, 7
  %v283 = vsub.s32 0, %v282
  %v284 = vrot.slane %v279, %v283
  %v478 = vunpack.c.l.b16 %v15
  %v479 = vunpack.c.h.b16 %v15
  %v480 = vunpack.c.l.b16 %v16
  %v481 = vunpack.c.h.b16 %v16
  %v482 = vunpack.c.l.b16 %v17
  %v483 = vunpack.c.l.b16 %v18
  %v484 = vunpack.c.h.b16 %v18
  %v485 = vunpack.c.l.b16 %v19
  %v486 = vunpack.c.h.b16 %v19
  %v487 = vunpack.c.l.b16 %v20
  %v488 = vunpack.c.l.b16 %v21
  %v489 = vunpack.c.h.b16 %v21
  %v490 = vunpack.c.l.b16 %v22
  %v491 = vunpack.c.h.b16 %v22
  %v492 = vunpack.c.l.b16 %v23
  %v493 = vunpack.c.l.b16 %v24
  %v494 = vunpack.c.h.b16 %v24
  %v495 = vunpack.c.l.b16 %v25
  %v496 = vunpack.c.h.b16 %v25
  %v497 = vunpack.c.l.b16 %v26
  %v498 = vunpack.c.l.b16 %v27
  %v499 = vunpack.c.h.b16 %v27
  %v500 = vunpack.c.l.b16 %v28
  %v501 = vunpack.c.h.b16 %v28
  %v502 = vunpack.c.l.b16 %v29
  %v503 = vunpack.c.l.b16 %v30
  %v504 = vunpack.c.h.b16 %v30
  %v505 = vunpack.c.l.b16 %v31
  %v506 = vunpack.c.h.b16 %v31
  %v507 = vunpack.c.l.b16 %v32
  %v508 = vunpack.c.l.b16 %v33
  %v509 = vunpack.c.h.b16 %v33
  %v510 = vunpack.c.l.b16 %v34
  %v511 = vunpack.c.h.b16 %v34
  %v512 = vunpack.c.l.b16 %v35
  %v513 = vunpack.c.l.b16 %v36
  %v514 = vunpack.c.h.b16 %v36
  %v515 = vunpack.c.l.b16 %v37
  %v516 = vunpack.c.h.b16 %v37
  %v517 = vunpack.c.l.b16 %v38
  %v518 = vunpack.c.l.b16 %v39
  %v519 = vunpack.c.h.b16 %v39
  %v520 = vunpack.c.l.b16 %v40
  %v521 = vunpack.c.h.b16 %v40
  %v522 = vunpack.c.l.b16 %v41
  %v523 = vunpack.c.l.b16 %v42
  %v524 = vunpack.c.h.b16 %v42
  %v525 = vunpack.c.l.b16 %v43
  %v526 = vunpack.c.h.b16 %v43
  %v527 = vunpack.c.l.b16 %v44
  %v528 = vunpack.c.l.b16 %v45
  %v529 = vunpack.c.h.b16 %v45
  %v530 = vunpack.c.l.b16 %v46
  %v531 = vunpack.c.h.b16 %v46
  %v532 = vunpack.c.l.b16 %v47
  %v533 = vunpack.c.l.b16 %v48
  %v534 = vunpack.c.h.b16 %v48
  %v535 = vunpack.c.l.b16 %v49
  %v536 = vunpack.c.h.b16 %v49
  %v537 = vunpack.c.l.b16 %v50
  %v538 = vunpack.c.l.b16 %v51
  %v539 = vunpack.c.h.b16 %v51
  %v540 = vunpack.c.l.b16 %v52
  %v541 = vunpack.c.h.b16 %v52
  %v542 = vunpack.c.l.b16 %v53
  %v543 = vunpack.c.l.b16 %v54
  %v544 = vunpack.c.h.b16 %v54
  %v545 = vunpack.c.l.b16 %v55
  %v546 = vunpack.c.h.b16 %v55
  %v547 = vunpack.c.l.b16 %v56
  %v548 = vunpack.c.l.b16 %v57
  %v549 = vunpack.c.h.b16 %v57
  %v550 = vunpack.c.l.b16 %v58
  %v551 = vunpack.c.h.b16 %v58
  %v552 = vunpack.c.l.b16 %v59
  %v553 = vunpack.c.l.b16 %v60
  %v554 = vunpack.c.h.b16 %v60
  %v555 = vunpack.c.l.b16 %v61
  %v556 = vunpack.c.h.b16 %v61
  %v557 = vunpack.c.l.b16 %v62
  %v558 = vunpack.c.l.b16 %v63
  %v559 = vunpack.c.h.b16 %v63
  %v560 = vunpack.c.l.b16 %v64
  %v561 = vunpack.c.h.b16 %v64
  %v562 = vunpack.c.l.b16 %v65
  %v563 = vunpack.c.l.b16 %v66
  %v564 = vunpack.c.h.b16 %v66
  %v565 = vunpack.c.l.b16 %v67
  %v566 = vunpack.c.h.b16 %v67
  %v567 = vunpack.c.l.b16 %v68
  %v568 = vunpack.c.l.b16 %v69
  %v569 = vunpack.c.h.b16 %v69
  %v570 = vunpack.c.l.b16 %v70
  %v571 = vunpack.c.h.b16 %v70
  %v572 = vunpack.c.l.b16 %v71
  %v573 = vunpack.c.l.b16 %v72
  %v574 = vunpack.c.h.b16 %v72
  %v575 = vunpack.c.l.b16 %v73
  %v576 = vunpack.c.h.b16 %v73
  %v577 = vunpack.c.l.b16 %v74
  %v578 = vunpack.c.l.b16 %v75
  %v579 = vunpack.c.h.b16 %v75
  %v580 = vunpack.c.l.b16 %v76
  %v581 = vunpack.c.h.b16 %v76
  %v582 = vunpack.c.l.b16 %v77
  %v583 = vunpack.c.l.b16 %v78
  %v584 = vunpack.c.h.b16 %v78
  %v585 = vunpack.c.l.b16 %v79
  %v586 = vunpack.c.h.b16 %v79
  %v587 = vunpack.c.l.b16 %v80
  %v588 = vunpack.c.l.b16 %v81
  %v589 = vunpack.c.h.b16 %v81
  %v590 = vunpack.c.l.b16 %v82
  %v591 = vunpack.c.h.b16 %v82
  %v592 = vunpack.c.l.b16 %v83
  %v593 = vunpack.c.l.b16 %v84
  %v594 = vunpack.c.h.b16 %v84
  %v595 = vunpack.c.l.b16 %v85
  %v596 = vunpack.c.h.b16 %v85
  %v597 = vunpack.c.l.b16 %v86
  %v598 = vunpack.c.l.b16 %v87
  %v599 = vunpack.c.h.b16 %v87
  %v600 = vunpack.c.l.b16 %v88
  %v601 = vunpack.c.h.b16 %v88
  %v602 = vunpack.c.l.b16 %v89
  %v603 = vunpack.c.l.b16 %v90
  %v604 = vunpack.c.h.b16 %v90
  %v605 = vunpack.c.l.b16 %v91
  %v606 = vunpack.c.h.b16 %v91
  %v607 = vunpack.c.l.b16 %v92
  %v608 = vunpack.c.l.b16 %v93
  %v609 = vunpack.c.h.b16 %v93
  %v610 = vunpack.c.l.b16 %v94
  %v611 = vunpack.c.h.b16 %v94
  %v612 = vunpack.c.l.b16 %v95
  %v613 = vunpack.c.l.b16 %v96
  %v614 = vunpack.c.h.b16 %v96
  %v615 = vunpack.c.l.b16 %v97
  %v616 = vunpack.c.h.b16 %v97
  %v617 = vunpack.c.l.b16 %v98
  %v618 = vunpack.c.l.b16 %v99
  %v619 = vunpack.c.h.b16 %v99
  %v620 = vunpack.c.l.b16 %v100
  %v621 = vunpack.c.h.b16 %v100
  %v622 = vunpack.c.l.b16 %v101
  %v623 = vunpack.c.l.b16 %v102
  %v624 = vunpack.c.h.b16 %v102
  %v625 = vunpack.c.l.b16 %v103
  %v626 = vunpack.c.h.b16 %v103
  %v627 = vunpack.c.l.b16 %v104
  %v628 = vunpack.c.l.b16 %v105
  %v629 = vunpack.c.h.b16 %v105
  %v630 = vunpack.c.l.b16 %v106
  %v631 = vunpack.c.h.b16 %v106
  %v632 = vunpack.c.l.b16 %v107
  %v633 = vunpack.c.l.b16 %v108
  %v634 = vunpack.c.h.b16 %v108
  %v635 = vunpack.c.l.b16 %v109
  %v636 = vunpack.c.h.b16 %v109
  %v637 = vunpack.c.l.b16 %v110
  %v638 = vunpack.c.l.b16 %v111
  %v639 = vunpack.c.h.b16 %v111
  %v640 = vunpack.c.l.b16 %v112
  %v641 = vunpack.c.h.b16 %v112
  %v642 = vunpack.c.l.b16 %v113
  %v643 = vunpack.c.l.b16 %v114
  %v644 = vunpack.c.h.b16 %v114
  %v645 = vunpack.c.l.b16 %v115
  %v646 = vunpack.c.h.b16 %v115
  %v647 = vunpack.c.l.b16 %v116
  %v648 = vunpack.c.l.b16 %v117
  %v649 = vunpack.c.h.b16 %v117
  %v650 = vunpack.c.l.b16 %v118
  %v651 = vunpack.c.h.b16 %v118
  %v652 = vunpack.c.l.b16 %v119
  %v653 = vunpack.c.l.b16 %v120
  %v654 = vunpack.c.h.b16 %v120
  %v655 = vunpack.c.l.b16 %v121
  %v656 = vunpack.c.h.b16 %v121
  %v657 = vunpack.c.l.b16 %v122
  %v658 = vunpack.c.l.b16 %v123
  %v659 = vunpack.c.h.b16 %v123
  %v660 = vunpack.c.l.b16 %v124
  %v661 = vunpack.c.h.b16 %v124
  %v662 = vunpack.c.l.b16 %v125
  %v663 = vunpack.c.l.b16 %v126
  %v664 = vunpack.c.h.b16 %v126
  %v665 = vunpack.c.l.b16 %v127
  %v666 = vunpack.c.h.b16 %v127
  %v667 = vunpack.c.l.b16 %v128
  %v668 = vunpack.c.l.b16 %v129
  %v669 = vunpack.c.h.b16 %v129
  %v670 = vunpack.c.l.b16 %v130
  %v671 = vunpack.c.h.b16 %v130
  %v672 = vunpack.c.l.b16 %v131
  %v673 = vunpack.c.l.b16 %v132
  %v674 = vunpack.c.h.b16 %v132
  %v675 = vunpack.c.l.b16 %v133
  %v676 = vunpack.c.h.b16 %v133
  %v677 = vunpack.c.l.b16 %v134
  %v678 = vunpack.c.l.b16 %v135
  %v679 = vunpack.c.h.b16 %v135
  %v680 = vunpack.c.l.b16 %v136
  %v681 = vunpack.c.h.b16 %v136
  %v682 = vunpack.c.l.b16 %v137
  %v683 = vunpack.c.l.b16 %v138
  %v684 = vunpack.c.h.b16 %v138
  %v685 = vunpack.c.l.b16 %v139
  %v686 = vunpack.c.h.b16 %v139
  %v687 = vunpack.c.l.b16 %v140
  %v688 = vunpack.c.l.b16 %v141
  %v689 = vunpack.c.h.b16 %v141
  %v690 = vunpack.c.l.b16 %v142
  %v691 = vunpack.c.h.b16 %v142
  %v692 = vunpack.c.l.b16 %v143
  %v693 = vunpack.c.l.b16 %v144
  %v694 = vunpack.c.h.b16 %v144
  %v695 = vunpack.c.l.b16 %v145
  %v696 = vunpack.c.h.b16 %v145
  %v697 = vunpack.c.l.b16 %v146
  %v698 = vunpack.c.l.b16 %v147
  %v699 = vunpack.c.h.b16 %v147
  %v700 = vunpack.c.l.b16 %v148
  %v701 = vunpack.c.h.b16 %v148
  %v702 = vunpack.c.l.b16 %v149
  %v703 = vunpack.c.l.b16 %v150
  %v704 = vunpack.c.h.b16 %v150
  %v705 = vunpack.c.l.b16 %v151
  %v706 = vunpack.c.h.b16 %v151
  %v707 = vunpack.c.l.b16 %v152
  %v708 = vunpack.c.l.b16 %v153
  %v709 = vunpack.c.h.b16 %v153
  %v710 = vunpack.c.l.b16 %v154
  %v711 = vunpack.c.h.b16 %v154
  %v712 = vunpack.c.l.b16 %v155
  %v713 = vunpack.c.l.b16 %v156
  %v714 = vunpack.c.h.b16 %v156
  %v715 = vunpack.c.l.b16 %v157
  %v716 = vunpack.c.h.b16 %v157
  %v717 = vunpack.c.l.b16 %v158
  %v718 = vunpack.c.l.b16 %v159
  %v719 = vunpack.c.h.b16 %v159
  %v720 = vunpack.c.l.b16 %v160
  %v721 = vunpack.c.h.b16 %v160
  %v722 = vunpack.c.l.b16 %v161
  %v723 = vunpack.c.l.b16 %v162
  %v724 = vunpack.c.h.b16 %v162
  %v725 = vunpack.c.l.b16 %v163
  %v726 = vunpack.c.h.b16 %v163
  %v727 = vunpack.c.l.b16 %v164
  %v728 = vunpack.c.l.b16 %v165
  %v729 = vunpack.c.h.b16 %v165
  %v730 = vunpack.c.l.b16 %v166
  %v731 = vunpack.c.h.b16 %v166
  %v732 = vunpack.c.l.b16 %v167
  %v733 = vunpack.c.l.b16 %v168
  %v734 = vunpack.c.h.b16 %v168
  %v735 = vunpack.c.l.b16 %v169
  %v736 = vunpack.c.h.b16 %v169
  %v737 = vunpack.c.l.b16 %v170
  %v738 = vunpack.c.l.b16 %v171
  %v739 = vunpack.c.h.b16 %v171
  %v740 = vunpack.c.l.b16 %v172
  %v741 = vunpack.c.h.b16 %v172
  %v742 = vunpack.c.l.b16 %v173
  %v743 = vunpack.c.l.b16 %v174
  %v744 = vunpack.c.h.b16 %v174
  %v745 = vunpack.c.l.b16 %v175
  %v746 = vunpack.c.h.b16 %v175
  %v747 = vunpack.c.l.b16 %v176
  %v748 = vunpack.c.l.b16 %v177
  %v749 = vunpack.c.h.b16 %v177
  %v750 = vunpack.c.l.b16 %v178
  %v751 = vunpack.c.h.b16 %v178
  %v752 = vunpack.c.l.b16 %v179
  %v753 = vunpack.c.l.b16 %v180
  %v754 = vunpack.c.h.b16 %v180
  %v755 = vunpack.c.l.b16 %v181
  %v756 = vunpack.c.h.b16 %v181
  %v757 = vunpack.c.l.b16 %v182
  %v758 = vunpack.c.l.b16 %v183
  %v759 = vunpack.c.h.b16 %v183
  %v760 = vunpack.c.l.b16 %v184
  %v761 = vunpack.c.h.b16 %v184
  %v762 = vunpack.c.l.b16 %v185
  %v763 = vunpack.c.l.b16 %v186
  %v764 = vunpack.c.h.b16 %v186
  %v765 = vunpack.c.l.b16 %v187
  %v766 = vunpack.c.h.b16 %v187
  %v767 = vunpack.c.l.b16 %v188
  %v768 = vunpack.c.l.b16 %v189
  %v769 = vunpack.c.h.b16 %v189
  %v770 = vunpack.c.l.b16 %v190
  %v771 = vunpack.c.h.b16 %v190
  %v772 = vunpack.c.l.b16 %v191
  %v773 = vunpack.c.l.b16 %v192
  %v774 = vunpack.c.h.b16 %v192
  %v775 = vunpack.c.l.b16 %v193
  %v776 = vunpack.c.h.b16 %v193
  %v777 = vunpack.c.l.b16 %v194
  %v778 = vunpack.c.l.b16 %v195
  %v779 = vunpack.c.h.b16 %v195
  %v780 = vunpack.c.l.b16 %v196
  %v781 = vunpack.c.h.b16 %v196
  %v782 = vunpack.c.l.b16 %v197
  %v783 = vunpack.c.l.b16 %v198
  %v784 = vunpack.c.h.b16 %v198
  %v785 = vunpack.c.l.b16 %v199
  %v786 = vunpack.c.h.b16 %v199
  %v787 = vunpack.c.l.b16 %v200
  %v788 = vunpack.c.l.b16 %v201
  %v789 = vunpack.c.h.b16 %v201
  %v790 = vunpack.c.l.b16 %v202
  %v791 = vunpack.c.h.b16 %v202
  %v792 = vunpack.c.l.b16 %v203
  %v793 = vunpack.c.l.b16 %v204
  %v794 = vunpack.c.h.b16 %v204
  %v795 = vunpack.c.l.b16 %v205
  %v796 = vunpack.c.h.b16 %v205
  %v797 = vunpack.c.l.b16 %v206
  %v798 = vpack.c.b16 %v483, %v478
  %v799 = vpack.c.b16 %v484, %v479
  %v800 = vpack.c.b16 %v485, %v480
  %v801 = vpack.c.b16 %v486, %v481
  %v802 = vpack.c.b16 %v487, %v482
  %v803 = vpack.c.b16 %v493, %v488
  %v804 = vpack.c.b16 %v494, %v489
  %v805 = vpack.c.b16 %v495, %v490
  %v806 = vpack.c.b16 %v496, %v491
  %v807 = vpack.c.b16 %v497, %v492
  %v808 = vpack.c.b16 %v503, %v498
  %v809 = vpack.c.b16 %v504, %v499
  %v810 = vpack.c.b16 %v505, %v500
  %v811 = vpack.c.b16 %v506, %v501
  %v812 = vpack.c.b16 %v507, %v502
  %v813 = vpack.c.b16 %v513, %v508
  %v814 = vpack.c.b16 %v514, %v509
  %v815 = vpack.c.b16 %v515, %v510
  %v816 = vpack.c.b16 %v516, %v511
  %v817 = vpack.c.b16 %v517, %v512
  %v818 = vpack.c.b16 %v523, %v518
  %v819 = vpack.c.b16 %v524, %v519
  %v820 = vpack.c.b16 %v525, %v520
  %v821 = vpack.c.b16 %v526, %v521
  %v822 = vpack.c.b16 %v527, %v522
  %v823 = vpack.c.b16 %v533, %v528
  %v824 = vpack.c.b16 %v534, %v529
  %v825 = vpack.c.b16 %v535, %v530
  %v826 = vpack.c.b16 %v536, %v531
  %v827 = vpack.c.b16 %v537, %v532
  %v828 = vpack.c.b16 %v543, %v538
  %v829 = vpack.c.b16 %v544, %v539
  %v830 = vpack.c.b16 %v545, %v540
  %v831 = vpack.c.b16 %v546, %v541
  %v832 = vpack.c.b16 %v547, %v542
  %v833 = vpack.c.b16 %v553, %v548
  %v834 = vpack.c.b16 %v554, %v549
  %v835 = vpack.c.b16 %v555, %v550
  %v836 = vpack.c.b16 %v556, %v551
  %v837 = vpack.c.b16 %v557, %v552
  %v838 = vpack.c.b16 %v563, %v558
  %v839 = vpack.c.b16 %v564, %v559
  %v840 = vpack.c.b16 %v565, %v560
  %v841 = vpack.c.b16 %v566, %v561
  %v842 = vpack.c.b16 %v567, %v562
  %v843 = vpack.c.b16 %v573, %v568
  %v844 = vpack.c.b16 %v574, %v569
  %v845 = vpack.c.b16 %v575, %v570
  %v846 = vpack.c.b16 %v576, %v571
  %v847 = vpack.c.b16 %v577, %v572
  %v848 = vpack.c.b16 %v583, %v578
  %v849 = vpack.c.b16 %v584, %v579
  %v850 = vpack.c.b16 %v585, %v580
  %v851 = vpack.c.b16 %v586, %v581
  %v852 = vpack.c.b16 %v587, %v582
  %v853 = vpack.c.b16 %v593, %v588
  %v854 = vpack.c.b16 %v594, %v589
  %v855 = vpack.c.b16 %v595, %v590
  %v856 = vpack.c.b16 %v596, %v591
  %v857 = vpack.c.b16 %v597, %v592
  %v858 = vpack.c.b16 %v603, %v598
  %v859 = vpack.c.b16 %v604, %v599
  %v860 = vpack.c.b16 %v605, %v600
  %v861 = vpack.c.b16 %v606, %v601
  %v862 = vpack.c.b16 %v607, %v602
  %v863 = vpack.c.b16 %v613, %v608
  %v864 = vpack.c.b16 %v614, %v609
  %v865 = vpack.c.b16 %v615, %v610
  %v866 = vpack.c.b16 %v616, %v611
  %v867 = vpack.c.b16 %v617, %v612
  %v868 = vpack.c.b16 %v623, %v618
  %v869 = vpack.c.b16 %v624, %v619
  %v870 = vpack.c.b16 %v625, %v620
  %v871 = vpack.c.b16 %v626, %v621
  %v872 = vpack.c.b16 %v627, %v622
  %v873 = vpack.c.b16 %v633, %v628
  %v874 = vpack.c.b16 %v634, %v629
  %v875 = vpack.c.b16 %v635, %v630
  %v876 = vpack.c.b16 %v636, %v631
  %v877 = vpack.c.b16 %v637, %v632
  %v878 = vpack.c.b16 %v643, %v638
  %v879 = vpack.c.b16 %v644, %v639
  %v880 = vpack.c.b16 %v645, %v640
  %v881 = vpack.c.b16 %v646, %v641
  %v882 = vpack.c.b16 %v647, %v642
  %v883 = vpack.c.b16 %v653, %v648
  %v884 = vpack.c.b16 %v654, %v649
  %v885 = vpack.c.b16 %v655, %v650
  %v886 = vpack.c.b16 %v656, %v651
  %v887 = vpack.c.b16 %v657, %v652
  %v888 = vpack.c.b16 %v663, %v658
  %v889 = vpack.c.b16 %v664, %v659
  %v890 = vpack.c.b16 %v665, %v660
  %v891 = vpack.c.b16 %v666, %v661
  %v892 = vpack.c.b16 %v667, %v662
  %v893 = vpack.c.b16 %v673, %v668
  %v894 = vpack.c.b16 %v674, %v669
  %v895 = vpack.c.b16 %v675, %v670
  %v896 = vpack.c.b16 %v676, %v671
  %v897 = vpack.c.b16 %v677, %v672
  %v898 = vpack.c.b16 %v683, %v678
  %v899 = vpack.c.b16 %v684, %v679
  %v900 = vpack.c.b16 %v685, %v680
  %v901 = vpack.c.b16 %v686, %v681
  %v902 = vpack.c.b16 %v687, %v682
  %v903 = vpack.c.b16 %v693, %v688
  %v904 = vpack.c.b16 %v694, %v689
  %v905 = vpack.c.b16 %v695, %v690
  %v906 = vpack.c.b16 %v696, %v691
  %v907 = vpack.c.b16 %v697, %v692
  %v908 = vpack.c.b16 %v703, %v698
  %v909 = vpack.c.b16 %v704, %v699
  %v910 = vpack.c.b16 %v705, %v700
  %v911 = vpack.c.b16 %v706, %v701
  %v912 = vpack.c.b16 %v707, %v702
  %v913 = vpack.c.b16 %v713, %v708
  %v914 = vpack.c.b16 %v714, %v709
  %v915 = vpack.c.b16 %v715, %v710
  %v916 = vpack.c.b16 %v716, %v711
  %v917 = vpack.c.b16 %v717, %v712
  %v918 = vpack.c.b16 %v723, %v718
  %v919 = vpack.c.b16 %v724, %v719
  %v920 = vpack.c.b16 %v725, %v720
  %v921 = vpack.c.b16 %v726, %v721
  %v922 = vpack.c.b16 %v727, %v722
  %v923 = vpack.c.b16 %v733, %v728
  %v924 = vpack.c.b16 %v734, %v729
  %v925 = vpack.c.b16 %v735, %v730
  %v926 = vpack.c.b16 %v736, %v731
  %v927 = vpack.c.b16 %v737, %v732
  %v928 = vpack.c.b16 %v743, %v738
  %v929 = vpack.c.b16 %v744, %v739
  %v930 = vpack.c.b16 %v745, %v740
  %v931 = vpack.c.b16 %v746, %v741
  %v932 = vpack.c.b16 %v747, %v742
  %v933 = vpack.c.b16 %v753, %v748
  %v934 = vpack.c.b16 %v754, %v749
  %v935 = vpack.c.b16 %v755, %v750
  %v936 = vpack.c.b16 %v756, %v751
  %v937 = vpack.c.b16 %v757, %v752
  %v938 = vpack.c.b16 %v763, %v758
  %v939 = vpack.c.b16 %v764, %v759
  %v940 = vpack.c.b16 %v765, %v760
  %v941 = vpack.c.b16 %v766, %v761
  %v942 = vpack.c.b16 %v767, %v762
  %v943 = vpack.c.b16 %v773, %v768
  %v944 = vpack.c.b16 %v774, %v769
  %v945 = vpack.c.b16 %v775, %v770
  %v946 = vpack.c.b16 %v776, %v771
  %v947 = vpack.c.b16 %v777, %v772
  %v948 = vpack.c.b16 %v783, %v778
  %v949 = vpack.c.b16 %v784, %v779
  %v950 = vpack.c.b16 %v785, %v780
  %v951 = vpack.c.b16 %v786, %v781
  %v952 = vpack.c.b16 %v787, %v782
  %v953 = vpack.c.b16 %v793, %v788
  %v954 = vpack.c.b16 %v794, %v789
  %v955 = vpack.c.b16 %v795, %v790
  %v956 = vpack.c.b16 %v796, %v791
  %v957 = vpack.c.b16 %v797, %v792
  %v1158 = vunpack.c.l.b16 %v207
  %v1159 = vunpack.c.l.b16 %v208
  %v1160 = vunpack.c.l.b16 %v209
  %v1161 = vunpack.c.l.b16 %v210
  %v1162 = vunpack.c.l.b16 %v211
  %v1163 = vunpack.c.l.b16 %v212
  %v1164 = vunpack.c.l.b16 %v213
  %v1165 = vunpack.c.l.b16 %v214
  %v1166 = vunpack.c.l.b16 %v215
  %v1167 = vunpack.c.l.b16 %v216
  %v1168 = vunpack.c.l.b16 %v217
  %v1169 = vunpack.c.l.b16 %v218
  %v1170 = vunpack.c.l.b16 %v219
  %v1171 = vunpack.c.l.b16 %v220
  %v1172 = vunpack.c.l.b16 %v221
  %v1173 = vunpack.c.l.b16 %v222
  %v1174 = vunpack.c.l.b16 %v223
  %v1175 = vunpack.c.l.b16 %v224
  %v1176 = vunpack.c.l.b16 %v225
  %v1177 = vunpack.c.l.b16 %v226
  %v1178 = vunpack.c.l.b16 %v227
  %v1179 = vunpack.c.l.b16 %v228
  %v1180 = vunpack.c.l.b16 %v229
  %v1181 = vunpack.c.l.b16 %v230
  %v1182 = vunpack.c.l.b16 %v231
  %v1183 = vunpack.c.l.b16 %v232
  %v1184 = vunpack.c.l.b16 %v233
  %v1185 = vunpack.c.l.b16 %v234
  %v1186 = vunpack.c.l.b16 %v235
  %v1187 = vunpack.c.l.b16 %v236
  %v1188 = vunpack.c.l.b16 %v237
  %v1189 = vunpack.c.l.b16 %v238
  %v1190 = vunpack.c.l.b16 %v239
  %v1191 = vunpack.c.l.b16 %v240
  %v1192 = vunpack.c.l.b16 %v241
  %v1193 = vunpack.c.l.b16 %v242
  %v1194 = vunpack.c.l.b16 %v243
  %v1195 = vunpack.c.l.b16 %v244
  %v1196 = vunpack.c.l.b16 %v245
  %v1197 = vunpack.c.l.b16 %v246
  %v1198 = vunpack.c.l.b16 %v247
  %v1199 = vunpack.c.l.b16 %v248
  %v1200 = vunpack.c.l.b16 %v249
  %v1201 = vunpack.c.l.b16 %v250
  %v1202 = vunpack.c.l.b16 %v251
  %v1203 = vunpack.c.l.b16 %v252
  %v1204 = vunpack.c.l.b16 %v253
  %v1205 = vunpack.c.l.b16 %v254
  %v1206 = vunpack.c.l.b16 %v255
  %v1207 = vunpack.c.l.b16 %v256
  %v1208 = vunpack.c.l.b16 %v257
  %v1209 = vunpack.c.l.b16 %v258
  %v1210 = vunpack.c.l.b16 %v259
  %v1211 = vunpack.c.l.b16 %v260
  %v1212 = vunpack.c.l.b16 %v261
  %v1213 = vunpack.c.l.b16 %v262
  %v1214 = vunpack.c.l.b16 %v263
  %v1215 = vunpack.c.l.b16 %v264
  %v1216 = vunpack.c.l.b16 %v265
  %v1217 = vunpack.c.l.b16 %v266
  %v1218 = vunpack.c.l.b16 %v267
  %v1219 = vunpack.c.l.b16 %v268
  %v1220 = vunpack.c.l.b16 %v269
  %v1221 = vunpack.c.l.b16 %v270
  %v1222 = vunpack.c.l.b16 %v271
  %v1223 = vunpack.c.l.b16 %v272
  %v1224 = vunpack.c.l.b16 %v273
  %v1225 = vunpack.c.l.b16 %v274
  %v1226 = vunpack.c.l.b16 %v275
  %v1227 = vunpack.c.l.b16 %v276
  %v1228 = vunpack.c.l.b16 %v277
  %v1229 = vunpack.c.l.b16 %v278
  %v1230 = vpack.c.b16 %v1159, %v1158
  %v1231 = vpack.c.b16 %v1161, %v1160
  %v1232 = vpack.c.b16 %v1163, %v1162
  %v1233 = vpack.c.b16 %v1165, %v1164
  %v1234 = vpack.c.b16 %v1167, %v1166
  %v1235 = vpack.c.b16 %v1169, %v1168
  %v1236 = vpack.c.b16 %v1171, %v1170
  %v1237 = vpack.c.b16 %v1173, %v1172
  %v1238 = vpack.c.b16 %v1175, %v1174
  %v1239 = vpack.c.b16 %v1177, %v1176
  %v1240 = vpack.c.b16 %v1179, %v1178
  %v1241 = vpack.c.b16 %v1181, %v1180
  %v1242 = vpack.c.b16 %v1183, %v1182
  %v1243 = vpack.c.b16 %v1185, %v1184
  %v1244 = vpack.c.b16 %v1187, %v1186
  %v1245 = vpack.c.b16 %v1189, %v1188
  %v1246 = vpack.c.b16 %v1191, %v1190
  %v1247 = vpack.c.b16 %v1193, %v1192
  %v1248 = vpack.c.b16 %v1195, %v1194
  %v1249 = vpack.c.b16 %v1197, %v1196
  %v1250 = vpack.c.b16 %v1199, %v1198
  %v1251 = vpack.c.b16 %v1201, %v1200
  %v1252 = vpack.c.b16 %v1203, %v1202
  %v1253 = vpack.c.b16 %v1205, %v1204
  %v1254 = vpack.c.b16 %v1207, %v1206
  %v1255 = vpack.c.b16 %v1209, %v1208
  %v1256 = vpack.c.b16 %v1211, %v1210
  %v1257 = vpack.c.b16 %v1213, %v1212
  %v1258 = vpack.c.b16 %v1215, %v1214
  %v1259 = vpack.c.b16 %v1217, %v1216
  %v1260 = vpack.c.b16 %v1219, %v1218
  %v1261 = vpack.c.b16 %v1221, %v1220
  %v1262 = vpack.c.b16 %v1223, %v1222
  %v1263 = vpack.c.b16 %v1225, %v1224
  %v1264 = vpack.c.b16 %v1227, %v1226
  %v1265 = vpack.c.b16 %v1229, %v1228
  %vm1302 = vcmask 523264
  %v1304 = vsel %vm1302, %v802, 0
  %v1307 = vsel %vm1302, %v807, 0
  %v1310 = vsel %vm1302, %v812, 0
  %v1313 = vsel %vm1302, %v817, 0
  %v1316 = vsel %vm1302, %v822, 0
  %v1319 = vsel %vm1302, %v827, 0
  %v1322 = vsel %vm1302, %v832, 0
  %v1325 = vsel %vm1302, %v837, 0
  %v1328 = vsel %vm1302, %v842, 0
  %v1331 = vsel %vm1302, %v847, 0
  %v1334 = vsel %vm1302, %v852, 0
  %v1337 = vsel %vm1302, %v857, 0
  %v1340 = vsel %vm1302, %v862, 0
  %v1343 = vsel %vm1302, %v867, 0
  %v1346 = vsel %vm1302, %v872, 0
  %v1349 = vsel %vm1302, %v877, 0
  %v1352 = vsel %vm1302, %v882, 0
  %v1355 = vsel %vm1302, %v887, 0
  %v1358 = vsel %vm1302, %v892, 0
  %v1361 = vsel %vm1302, %v897, 0
  %v1364 = vsel %vm1302, %v902, 0
  %v1367 = vsel %vm1302, %v907, 0
  %v1370 = vsel %vm1302, %v912, 0
  %v1373 = vsel %vm1302, %v917, 0
  %v1376 = vsel %vm1302, %v922, 0
  %v1379 = vsel %vm1302, %v927, 0
  %v1382 = vsel %vm1302, %v932, 0
  %v1385 = vsel %vm1302, %v937, 0
  %v1388 = vsel %vm1302, %v942, 0
  %v1391 = vsel %vm1302, %v947, 0
  %v1394 = vsel %vm1302, %v952, 0
  %v1397 = vsel %vm1302, %v957, 0
  %1399 = vmatprep.subr.bf16.mxu0 0
  %1400 = vmatpush1.bf16.msra.mxu0 %v1230
  %1401 = vmatprep.subr.bf16.mxu0 0
  %1402 = vmatpush1.bf16.msra.mxu0 %v1231
  %1403 = vmatprep.subr.bf16.mxu0 0
  %1404 = vmatpush1.bf16.msra.mxu0 %v1232
  %1405 = vmatprep.subr.bf16.mxu0 0
  %1406 = vmatpush1.bf16.msra.mxu0 %v1233
  %1407 = vmatprep.subr.bf16.mxu0 0
  %1408 = vmatpush1.bf16.msra.mxu0 %v1234
  %1409 = vmatprep.subr.bf16.mxu0 0
  %1410 = vmatpush1.bf16.msra.mxu0 %v1235
  %1411 = vmatprep.subr.bf16.mxu0 0
  %1412 = vmatpush1.bf16.msra.mxu0 %v1236
  %1413 = vmatprep.subr.bf16.mxu0 0
  %1414 = vmatpush1.bf16.msra.mxu0 %v1237
  %1415 = vmatprep.subr.bf16.mxu0 0
  %1416 = vmatpush1.bf16.msra.mxu0 %v1238
  %1417 = vmatprep.subr.bf16.mxu0 0
  %1418 = vmatpush1.bf16.msra.mxu0 %v1239
  %1419 = vmatprep.subr.bf16.mxu0 0
  %1420 = vmatpush1.bf16.msra.mxu0 %v1240
  %1421 = vmatprep.subr.bf16.mxu0 0
  %1422 = vmatpush1.bf16.msra.mxu0 %v1241
  %1423 = vmatprep.subr.bf16.mxu0 0
  %1424 = vmatpush1.bf16.msra.mxu0 %v1242
  %1425 = vmatprep.subr.bf16.mxu0 0
  %1426 = vmatpush1.bf16.msra.mxu0 %v1243
  %1427 = vmatprep.subr.bf16.mxu0 0
  %1428 = vmatpush1.bf16.msra.mxu0 %v1244
  %1429 = vmatprep.subr.bf16.mxu0 0
  %1430 = vmatpush1.bf16.msra.mxu0 %v1245
  %1431 = vmatprep.mubr.bf16.mxu0 %v799
  %1432 = vmatmul.mubr.bf16.gmra.mrb[0].mxu0 %v798
  %v1433 = vpop.f32.mrb[0].mxu0
  %v1434 = vadd.f32 %v284, %v1433
  %v1435 = vpop.f32.mrb[0].mxu0
  %v1436 = vpop.f32.mrb[0].mxu0
  %v1437 = vadd.f32 %v284, %v1436
  %v1438 = vpop.f32.mrb[0].mxu0
  %1439 = vmatprep.mubr.bf16.mxu0 %v804
  %1440 = vmatmul.mubr.bf16.gmra.mrb[0].mxu0 %v803
  %v1441 = vpop.f32.mrb[0].mxu0
  %v1442 = vadd.f32 %v284, %v1441
  %v1443 = vpop.f32.mrb[0].mxu0
  %v1444 = vpop.f32.mrb[0].mxu0
  %v1445 = vadd.f32 %v284, %v1444
  %v1446 = vpop.f32.mrb[0].mxu0
  %1447 = vmatprep.mubr.bf16.mxu0 %v809
  %1448 = vmatmul.mubr.bf16.gmra.mrb[0].mxu0 %v808
  %v1449 = vpop.f32.mrb[0].mxu0
  %v1450 = vadd.f32 %v284, %v1449
  %v1451 = vpop.f32.mrb[0].mxu0
  %v1452 = vpop.f32.mrb[0].mxu0
  %v1453 = vadd.f32 %v284, %v1452
  %v1454 = vpop.f32.mrb[0].mxu0
  %1455 = vmatprep.mubr.bf16.mxu0 %v814
  %1456 = vmatmul.mubr.bf16.gmra.mrb[0].mxu0 %v813
  %v1457 = vpop.f32.mrb[0].mxu0
  %v1458 = vadd.f32 %v284, %v1457
  %v1459 = vpop.f32.mrb[0].mxu0
  %v1460 = vpop.f32.mrb[0].mxu0
  %v1461 = vadd.f32 %v284, %v1460
  %v1462 = vpop.f32.mrb[0].mxu0
  %1463 = vmatprep.mubr.bf16.mxu0 %v819
  %1464 = vmatmul.mubr.bf16.gmra.mrb[0].mxu0 %v818
  %v1465 = vpop.f32.mrb[0].mxu0
  %v1466 = vadd.f32 %v284, %v1465
  %v1467 = vpop.f32.mrb[0].mxu0
  %v1468 = vpop.f32.mrb[0].mxu0
  %v1469 = vadd.f32 %v284, %v1468
  %v1470 = vpop.f32.mrb[0].mxu0
  %1471 = vmatprep.mubr.bf16.mxu0 %v824
  %1472 = vmatmul.mubr.bf16.gmra.mrb[0].mxu0 %v823
  %v1473 = vpop.f32.mrb[0].mxu0
  %v1474 = vadd.f32 %v284, %v1473
  %v1475 = vpop.f32.mrb[0].mxu0
  %v1476 = vpop.f32.mrb[0].mxu0
  %v1477 = vadd.f32 %v284, %v1476
  %v1478 = vpop.f32.mrb[0].mxu0
  %1479 = vmatprep.mubr.bf16.mxu0 %v829
  %1480 = vmatmul.mubr.bf16.gmra.mrb[0].mxu0 %v828
  %v1481 = vpop.f32.mrb[0].mxu0
  %v1482 = vadd.f32 %v284, %v1481
  %v1483 = vpop.f32.mrb[0].mxu0
  %v1484 = vpop.f32.mrb[0].mxu0
  %v1485 = vadd.f32 %v284, %v1484
  %v1486 = vpop.f32.mrb[0].mxu0
  %1487 = vmatprep.mubr.bf16.mxu0 %v834
  %1488 = vmatmul.mubr.bf16.gmra.mrb[0].mxu0 %v833
  %v1489 = vpop.f32.mrb[0].mxu0
  %v1490 = vadd.f32 %v284, %v1489
  %v1491 = vpop.f32.mrb[0].mxu0
  %v1492 = vpop.f32.mrb[0].mxu0
  %v1493 = vadd.f32 %v284, %v1492
  %v1494 = vpop.f32.mrb[0].mxu0
  %1495 = vmatprep.mubr.bf16.mxu0 %v839
  %1496 = vmatmul.mubr.bf16.gmra.mrb[0].mxu0 %v838
  %v1497 = vpop.f32.mrb[0].mxu0
  %v1498 = vadd.f32 %v284, %v1497
  %v1499 = vpop.f32.mrb[0].mxu0
  %v1500 = vpop.f32.mrb[0].mxu0
  %v1501 = vadd.f32 %v284, %v1500
  %v1502 = vpop.f32.mrb[0].mxu0
  %1503 = vmatprep.mubr.bf16.mxu0 %v844
  %1504 = vmatmul.mubr.bf16.gmra.mrb[0].mxu0 %v843
  %v1505 = vpop.f32.mrb[0].mxu0
  %v1506 = vadd.f32 %v284, %v1505
  %v1507 = vpop.f32.mrb[0].mxu0
  %v1508 = vpop.f32.mrb[0].mxu0
  %v1509 = vadd.f32 %v284, %v1508
  %v1510 = vpop.f32.mrb[0].mxu0
  %1511 = vmatprep.mubr.bf16.mxu0 %v849
  %1512 = vmatmul.mubr.bf16.gmra.mrb[0].mxu0 %v848
  %v1513 = vpop.f32.mrb[0].mxu0
  %v1514 = vadd.f32 %v284, %v1513
  %v1515 = vpop.f32.mrb[0].mxu0
  %v1516 = vpop.f32.mrb[0].mxu0
  %v1517 = vadd.f32 %v284, %v1516
  %v1518 = vpop.f32.mrb[0].mxu0
  %1519 = vmatprep.mubr.bf16.mxu0 %v854
  %1520 = vmatmul.mubr.bf16.gmra.mrb[0].mxu0 %v853
  %v1521 = vpop.f32.mrb[0].mxu0
  %v1522 = vadd.f32 %v284, %v1521
  %v1523 = vpop.f32.mrb[0].mxu0
  %v1524 = vpop.f32.mrb[0].mxu0
  %v1525 = vadd.f32 %v284, %v1524
  %v1526 = vpop.f32.mrb[0].mxu0
  %1527 = vmatprep.mubr.bf16.mxu0 %v859
  %1528 = vmatmul.mubr.bf16.gmra.mrb[0].mxu0 %v858
  %v1529 = vpop.f32.mrb[0].mxu0
  %v1530 = vadd.f32 %v284, %v1529
  %v1531 = vpop.f32.mrb[0].mxu0
  %v1532 = vpop.f32.mrb[0].mxu0
  %v1533 = vadd.f32 %v284, %v1532
  %v1534 = vpop.f32.mrb[0].mxu0
  %1535 = vmatprep.mubr.bf16.mxu0 %v864
  %1536 = vmatmul.mubr.bf16.gmra.mrb[0].mxu0 %v863
  %v1537 = vpop.f32.mrb[0].mxu0
  %v1538 = vadd.f32 %v284, %v1537
  %v1539 = vpop.f32.mrb[0].mxu0
  %v1540 = vpop.f32.mrb[0].mxu0
  %v1541 = vadd.f32 %v284, %v1540
  %v1542 = vpop.f32.mrb[0].mxu0
  %1543 = vmatprep.mubr.bf16.mxu0 %v869
  %1544 = vmatmul.mubr.bf16.gmra.mrb[0].mxu0 %v868
  %v1545 = vpop.f32.mrb[0].mxu0
  %v1546 = vadd.f32 %v284, %v1545
  %v1547 = vpop.f32.mrb[0].mxu0
  %v1548 = vpop.f32.mrb[0].mxu0
  %v1549 = vadd.f32 %v284, %v1548
  %v1550 = vpop.f32.mrb[0].mxu0
  %1551 = vmatprep.mubr.bf16.mxu0 %v874
  %1552 = vmatmul.mubr.bf16.gmra.mrb[0].mxu0 %v873
  %v1553 = vpop.f32.mrb[0].mxu0
  %v1554 = vadd.f32 %v284, %v1553
  %v1555 = vpop.f32.mrb[0].mxu0
  %v1556 = vpop.f32.mrb[0].mxu0
  %v1557 = vadd.f32 %v284, %v1556
  %v1558 = vpop.f32.mrb[0].mxu0
  %1559 = vmatprep.mubr.bf16.mxu0 %v879
  %1560 = vmatmul.mubr.bf16.gmra.mrb[0].mxu0 %v878
  %v1561 = vpop.f32.mrb[0].mxu0
  %v1562 = vadd.f32 %v284, %v1561
  %v1563 = vpop.f32.mrb[0].mxu0
  %v1564 = vpop.f32.mrb[0].mxu0
  %v1565 = vadd.f32 %v284, %v1564
  %v1566 = vpop.f32.mrb[0].mxu0
  %1567 = vmatprep.mubr.bf16.mxu0 %v884
  %1568 = vmatmul.mubr.bf16.gmra.mrb[0].mxu0 %v883
  %v1569 = vpop.f32.mrb[0].mxu0
  %v1570 = vadd.f32 %v284, %v1569
  %v1571 = vpop.f32.mrb[0].mxu0
  %v1572 = vpop.f32.mrb[0].mxu0
  %v1573 = vadd.f32 %v284, %v1572
  %v1574 = vpop.f32.mrb[0].mxu0
  %1575 = vmatprep.mubr.bf16.mxu0 %v889
  %1576 = vmatmul.mubr.bf16.gmra.mrb[0].mxu0 %v888
  %v1577 = vpop.f32.mrb[0].mxu0
  %v1578 = vadd.f32 %v284, %v1577
  %v1579 = vpop.f32.mrb[0].mxu0
  %v1580 = vpop.f32.mrb[0].mxu0
  %v1581 = vadd.f32 %v284, %v1580
  %v1582 = vpop.f32.mrb[0].mxu0
  %1583 = vmatprep.mubr.bf16.mxu0 %v894
  %1584 = vmatmul.mubr.bf16.gmra.mrb[0].mxu0 %v893
  %v1585 = vpop.f32.mrb[0].mxu0
  %v1586 = vadd.f32 %v284, %v1585
  %v1587 = vpop.f32.mrb[0].mxu0
  %v1588 = vpop.f32.mrb[0].mxu0
  %v1589 = vadd.f32 %v284, %v1588
  %v1590 = vpop.f32.mrb[0].mxu0
  %1591 = vmatprep.mubr.bf16.mxu0 %v899
  %1592 = vmatmul.mubr.bf16.gmra.mrb[0].mxu0 %v898
  %v1593 = vpop.f32.mrb[0].mxu0
  %v1594 = vadd.f32 %v284, %v1593
  %v1595 = vpop.f32.mrb[0].mxu0
  %v1596 = vpop.f32.mrb[0].mxu0
  %v1597 = vadd.f32 %v284, %v1596
  %v1598 = vpop.f32.mrb[0].mxu0
  %1599 = vmatprep.mubr.bf16.mxu0 %v904
  %1600 = vmatmul.mubr.bf16.gmra.mrb[0].mxu0 %v903
  %v1601 = vpop.f32.mrb[0].mxu0
  %v1602 = vadd.f32 %v284, %v1601
  %v1603 = vpop.f32.mrb[0].mxu0
  %v1604 = vpop.f32.mrb[0].mxu0
  %v1605 = vadd.f32 %v284, %v1604
  %v1606 = vpop.f32.mrb[0].mxu0
  %1607 = vmatprep.mubr.bf16.mxu0 %v909
  %1608 = vmatmul.mubr.bf16.gmra.mrb[0].mxu0 %v908
  %v1609 = vpop.f32.mrb[0].mxu0
  %v1610 = vadd.f32 %v284, %v1609
  %v1611 = vpop.f32.mrb[0].mxu0
  %v1612 = vpop.f32.mrb[0].mxu0
  %v1613 = vadd.f32 %v284, %v1612
  %v1614 = vpop.f32.mrb[0].mxu0
  %1615 = vmatprep.mubr.bf16.mxu0 %v914
  %1616 = vmatmul.mubr.bf16.gmra.mrb[0].mxu0 %v913
  %v1617 = vpop.f32.mrb[0].mxu0
  %v1618 = vadd.f32 %v284, %v1617
  %v1619 = vpop.f32.mrb[0].mxu0
  %v1620 = vpop.f32.mrb[0].mxu0
  %v1621 = vadd.f32 %v284, %v1620
  %v1622 = vpop.f32.mrb[0].mxu0
  %1623 = vmatprep.mubr.bf16.mxu0 %v919
  %1624 = vmatmul.mubr.bf16.gmra.mrb[0].mxu0 %v918
  %v1625 = vpop.f32.mrb[0].mxu0
  %v1626 = vadd.f32 %v284, %v1625
  %v1627 = vpop.f32.mrb[0].mxu0
  %v1628 = vpop.f32.mrb[0].mxu0
  %v1629 = vadd.f32 %v284, %v1628
  %v1630 = vpop.f32.mrb[0].mxu0
  %1631 = vmatprep.mubr.bf16.mxu0 %v924
  %1632 = vmatmul.mubr.bf16.gmra.mrb[0].mxu0 %v923
  %v1633 = vpop.f32.mrb[0].mxu0
  %v1634 = vadd.f32 %v284, %v1633
  %v1635 = vpop.f32.mrb[0].mxu0
  %v1636 = vpop.f32.mrb[0].mxu0
  %v1637 = vadd.f32 %v284, %v1636
  %v1638 = vpop.f32.mrb[0].mxu0
  %1639 = vmatprep.mubr.bf16.mxu0 %v929
  %1640 = vmatmul.mubr.bf16.gmra.mrb[0].mxu0 %v928
  %v1641 = vpop.f32.mrb[0].mxu0
  %v1642 = vadd.f32 %v284, %v1641
  %v1643 = vpop.f32.mrb[0].mxu0
  %v1644 = vpop.f32.mrb[0].mxu0
  %v1645 = vadd.f32 %v284, %v1644
  %v1646 = vpop.f32.mrb[0].mxu0
  %1647 = vmatprep.mubr.bf16.mxu0 %v934
  %1648 = vmatmul.mubr.bf16.gmra.mrb[0].mxu0 %v933
  %v1649 = vpop.f32.mrb[0].mxu0
  %v1650 = vadd.f32 %v284, %v1649
  %v1651 = vpop.f32.mrb[0].mxu0
  %v1652 = vpop.f32.mrb[0].mxu0
  %v1653 = vadd.f32 %v284, %v1652
  %v1654 = vpop.f32.mrb[0].mxu0
  %1655 = vmatprep.mubr.bf16.mxu0 %v939
  %1656 = vmatmul.mubr.bf16.gmra.mrb[0].mxu0 %v938
  %v1657 = vpop.f32.mrb[0].mxu0
  %v1658 = vadd.f32 %v284, %v1657
  %v1659 = vpop.f32.mrb[0].mxu0
  %v1660 = vpop.f32.mrb[0].mxu0
  %v1661 = vadd.f32 %v284, %v1660
  %v1662 = vpop.f32.mrb[0].mxu0
  %1663 = vmatprep.mubr.bf16.mxu0 %v944
  %1664 = vmatmul.mubr.bf16.gmra.mrb[0].mxu0 %v943
  %v1665 = vpop.f32.mrb[0].mxu0
  %v1666 = vadd.f32 %v284, %v1665
  %v1667 = vpop.f32.mrb[0].mxu0
  %v1668 = vpop.f32.mrb[0].mxu0
  %v1669 = vadd.f32 %v284, %v1668
  %v1670 = vpop.f32.mrb[0].mxu0
  %1671 = vmatprep.mubr.bf16.mxu0 %v949
  %1672 = vmatmul.mubr.bf16.gmra.mrb[0].mxu0 %v948
  %v1673 = vpop.f32.mrb[0].mxu0
  %v1674 = vadd.f32 %v284, %v1673
  %v1675 = vpop.f32.mrb[0].mxu0
  %v1676 = vpop.f32.mrb[0].mxu0
  %v1677 = vadd.f32 %v284, %v1676
  %v1678 = vpop.f32.mrb[0].mxu0
  %1679 = vmatprep.mubr.bf16.mxu0 %v954
  %1680 = vmatmul.mubr.bf16.gmra.mrb[0].mxu0 %v953
  %v1681 = vpop.f32.mrb[0].mxu0
  %v1682 = vadd.f32 %v284, %v1681
  %v1683 = vpop.f32.mrb[0].mxu0
  %v1684 = vpop.f32.mrb[0].mxu0
  %v1685 = vadd.f32 %v284, %v1684
  %v1686 = vpop.f32.mrb[0].mxu0
  %1687 = vdwg.mxu0
  %1688 = vmatprep.subr.bf16.mxu0 0
  %1689 = vmatpush1.bf16.msra.mxu0 %v1246
  %1690 = vmatprep.subr.bf16.mxu0 0
  %1691 = vmatpush1.bf16.msra.mxu0 %v1247
  %1692 = vmatprep.subr.bf16.mxu0 0
  %1693 = vmatpush1.bf16.msra.mxu0 %v1248
  %1694 = vmatprep.subr.bf16.mxu0 0
  %1695 = vmatpush1.bf16.msra.mxu0 %v1249
  %1696 = vmatprep.subr.bf16.mxu0 0
  %1697 = vmatpush1.bf16.msra.mxu0 %v1250
  %1698 = vmatprep.subr.bf16.mxu0 0
  %1699 = vmatpush1.bf16.msra.mxu0 %v1251
  %1700 = vmatprep.subr.bf16.mxu0 0
  %1701 = vmatpush1.bf16.msra.mxu0 %v1252
  %1702 = vmatprep.subr.bf16.mxu0 0
  %1703 = vmatpush1.bf16.msra.mxu0 %v1253
  %1704 = vmatprep.subr.bf16.mxu0 0
  %1705 = vmatpush1.bf16.msra.mxu0 %v1254
  %1706 = vmatprep.subr.bf16.mxu0 0
  %1707 = vmatpush1.bf16.msra.mxu0 %v1255
  %1708 = vmatprep.subr.bf16.mxu0 0
  %1709 = vmatpush1.bf16.msra.mxu0 %v1256
  %1710 = vmatprep.subr.bf16.mxu0 0
  %1711 = vmatpush1.bf16.msra.mxu0 %v1257
  %1712 = vmatprep.subr.bf16.mxu0 0
  %1713 = vmatpush1.bf16.msra.mxu0 %v1258
  %1714 = vmatprep.subr.bf16.mxu0 0
  %1715 = vmatpush1.bf16.msra.mxu0 %v1259
  %1716 = vmatprep.subr.bf16.mxu0 0
  %1717 = vmatpush1.bf16.msra.mxu0 %v1260
  %1718 = vmatprep.subr.bf16.mxu0 0
  %1719 = vmatpush1.bf16.msra.mxu0 %v1261
  %1720 = vmatprep.mubr.bf16.mxu0 %v801
  %1721 = vmatmul.mubr.bf16.gmra.mrb[0].mxu0 %v800
  %v1722 = vpop.f32.mrb[0].mxu0
  %v1723 = vadd.f32 %v1434, %v1722
  %v1724 = vpop.f32.mrb[0].mxu0
  %v1725 = vpop.f32.mrb[0].mxu0
  %v1726 = vadd.f32 %v1437, %v1725
  %v1727 = vpop.f32.mrb[0].mxu0
  %1728 = vmatprep.mubr.bf16.mxu0 %v806
  %1729 = vmatmul.mubr.bf16.gmra.mrb[0].mxu0 %v805
  %v1730 = vpop.f32.mrb[0].mxu0
  %v1731 = vadd.f32 %v1442, %v1730
  %v1732 = vpop.f32.mrb[0].mxu0
  %v1733 = vpop.f32.mrb[0].mxu0
  %v1734 = vadd.f32 %v1445, %v1733
  %v1735 = vpop.f32.mrb[0].mxu0
  %1736 = vmatprep.mubr.bf16.mxu0 %v811
  %1737 = vmatmul.mubr.bf16.gmra.mrb[0].mxu0 %v810
  %v1738 = vpop.f32.mrb[0].mxu0
  %v1739 = vadd.f32 %v1450, %v1738
  %v1740 = vpop.f32.mrb[0].mxu0
  %v1741 = vpop.f32.mrb[0].mxu0
  %v1742 = vadd.f32 %v1453, %v1741
  %v1743 = vpop.f32.mrb[0].mxu0
  %1744 = vmatprep.mubr.bf16.mxu0 %v816
  %1745 = vmatmul.mubr.bf16.gmra.mrb[0].mxu0 %v815
  %v1746 = vpop.f32.mrb[0].mxu0
  %v1747 = vadd.f32 %v1458, %v1746
  %v1748 = vpop.f32.mrb[0].mxu0
  %v1749 = vpop.f32.mrb[0].mxu0
  %v1750 = vadd.f32 %v1461, %v1749
  %v1751 = vpop.f32.mrb[0].mxu0
  %1752 = vmatprep.mubr.bf16.mxu0 %v821
  %1753 = vmatmul.mubr.bf16.gmra.mrb[0].mxu0 %v820
  %v1754 = vpop.f32.mrb[0].mxu0
  %v1755 = vadd.f32 %v1466, %v1754
  %v1756 = vpop.f32.mrb[0].mxu0
  %v1757 = vpop.f32.mrb[0].mxu0
  %v1758 = vadd.f32 %v1469, %v1757
  %v1759 = vpop.f32.mrb[0].mxu0
  %1760 = vmatprep.mubr.bf16.mxu0 %v826
  %1761 = vmatmul.mubr.bf16.gmra.mrb[0].mxu0 %v825
  %v1762 = vpop.f32.mrb[0].mxu0
  %v1763 = vadd.f32 %v1474, %v1762
  %v1764 = vpop.f32.mrb[0].mxu0
  %v1765 = vpop.f32.mrb[0].mxu0
  %v1766 = vadd.f32 %v1477, %v1765
  %v1767 = vpop.f32.mrb[0].mxu0
  %1768 = vmatprep.mubr.bf16.mxu0 %v831
  %1769 = vmatmul.mubr.bf16.gmra.mrb[0].mxu0 %v830
  %v1770 = vpop.f32.mrb[0].mxu0
  %v1771 = vadd.f32 %v1482, %v1770
  %v1772 = vpop.f32.mrb[0].mxu0
  %v1773 = vpop.f32.mrb[0].mxu0
  %v1774 = vadd.f32 %v1485, %v1773
  %v1775 = vpop.f32.mrb[0].mxu0
  %1776 = vmatprep.mubr.bf16.mxu0 %v836
  %1777 = vmatmul.mubr.bf16.gmra.mrb[0].mxu0 %v835
  %v1778 = vpop.f32.mrb[0].mxu0
  %v1779 = vadd.f32 %v1490, %v1778
  %v1780 = vpop.f32.mrb[0].mxu0
  %v1781 = vpop.f32.mrb[0].mxu0
  %v1782 = vadd.f32 %v1493, %v1781
  %v1783 = vpop.f32.mrb[0].mxu0
  %1784 = vmatprep.mubr.bf16.mxu0 %v841
  %1785 = vmatmul.mubr.bf16.gmra.mrb[0].mxu0 %v840
  %v1786 = vpop.f32.mrb[0].mxu0
  %v1787 = vadd.f32 %v1498, %v1786
  %v1788 = vpop.f32.mrb[0].mxu0
  %v1789 = vpop.f32.mrb[0].mxu0
  %v1790 = vadd.f32 %v1501, %v1789
  %v1791 = vpop.f32.mrb[0].mxu0
  %1792 = vmatprep.mubr.bf16.mxu0 %v846
  %1793 = vmatmul.mubr.bf16.gmra.mrb[0].mxu0 %v845
  %v1794 = vpop.f32.mrb[0].mxu0
  %v1795 = vadd.f32 %v1506, %v1794
  %v1796 = vpop.f32.mrb[0].mxu0
  %v1797 = vpop.f32.mrb[0].mxu0
  %v1798 = vadd.f32 %v1509, %v1797
  %v1799 = vpop.f32.mrb[0].mxu0
  %1800 = vmatprep.mubr.bf16.mxu0 %v851
  %1801 = vmatmul.mubr.bf16.gmra.mrb[0].mxu0 %v850
  %v1802 = vpop.f32.mrb[0].mxu0
  %v1803 = vadd.f32 %v1514, %v1802
  %v1804 = vpop.f32.mrb[0].mxu0
  %v1805 = vpop.f32.mrb[0].mxu0
  %v1806 = vadd.f32 %v1517, %v1805
  %v1807 = vpop.f32.mrb[0].mxu0
  %1808 = vmatprep.mubr.bf16.mxu0 %v856
  %1809 = vmatmul.mubr.bf16.gmra.mrb[0].mxu0 %v855
  %v1810 = vpop.f32.mrb[0].mxu0
  %v1811 = vadd.f32 %v1522, %v1810
  %v1812 = vpop.f32.mrb[0].mxu0
  %v1813 = vpop.f32.mrb[0].mxu0
  %v1814 = vadd.f32 %v1525, %v1813
  %v1815 = vpop.f32.mrb[0].mxu0
  %1816 = vmatprep.mubr.bf16.mxu0 %v861
  %1817 = vmatmul.mubr.bf16.gmra.mrb[0].mxu0 %v860
  %v1818 = vpop.f32.mrb[0].mxu0
  %v1819 = vadd.f32 %v1530, %v1818
  %v1820 = vpop.f32.mrb[0].mxu0
  %v1821 = vpop.f32.mrb[0].mxu0
  %v1822 = vadd.f32 %v1533, %v1821
  %v1823 = vpop.f32.mrb[0].mxu0
  %1824 = vmatprep.mubr.bf16.mxu0 %v866
  %1825 = vmatmul.mubr.bf16.gmra.mrb[0].mxu0 %v865
  %v1826 = vpop.f32.mrb[0].mxu0
  %v1827 = vadd.f32 %v1538, %v1826
  %v1828 = vpop.f32.mrb[0].mxu0
  %v1829 = vpop.f32.mrb[0].mxu0
  %v1830 = vadd.f32 %v1541, %v1829
  %v1831 = vpop.f32.mrb[0].mxu0
  %1832 = vmatprep.mubr.bf16.mxu0 %v871
  %1833 = vmatmul.mubr.bf16.gmra.mrb[0].mxu0 %v870
  %v1834 = vpop.f32.mrb[0].mxu0
  %v1835 = vadd.f32 %v1546, %v1834
  %v1836 = vpop.f32.mrb[0].mxu0
  %v1837 = vpop.f32.mrb[0].mxu0
  %v1838 = vadd.f32 %v1549, %v1837
  %v1839 = vpop.f32.mrb[0].mxu0
  %1840 = vmatprep.mubr.bf16.mxu0 %v876
  %1841 = vmatmul.mubr.bf16.gmra.mrb[0].mxu0 %v875
  %v1842 = vpop.f32.mrb[0].mxu0
  %v1843 = vadd.f32 %v1554, %v1842
  %v1844 = vpop.f32.mrb[0].mxu0
  %v1845 = vpop.f32.mrb[0].mxu0
  %v1846 = vadd.f32 %v1557, %v1845
  %v1847 = vpop.f32.mrb[0].mxu0
  %1848 = vmatprep.mubr.bf16.mxu0 %v881
  %1849 = vmatmul.mubr.bf16.gmra.mrb[0].mxu0 %v880
  %v1850 = vpop.f32.mrb[0].mxu0
  %v1851 = vadd.f32 %v1562, %v1850
  %v1852 = vpop.f32.mrb[0].mxu0
  %v1853 = vpop.f32.mrb[0].mxu0
  %v1854 = vadd.f32 %v1565, %v1853
  %v1855 = vpop.f32.mrb[0].mxu0
  %1856 = vmatprep.mubr.bf16.mxu0 %v886
  %1857 = vmatmul.mubr.bf16.gmra.mrb[0].mxu0 %v885
  %v1858 = vpop.f32.mrb[0].mxu0
  %v1859 = vadd.f32 %v1570, %v1858
  %v1860 = vpop.f32.mrb[0].mxu0
  %v1861 = vpop.f32.mrb[0].mxu0
  %v1862 = vadd.f32 %v1573, %v1861
  %v1863 = vpop.f32.mrb[0].mxu0
  %1864 = vmatprep.mubr.bf16.mxu0 %v891
  %1865 = vmatmul.mubr.bf16.gmra.mrb[0].mxu0 %v890
  %v1866 = vpop.f32.mrb[0].mxu0
  %v1867 = vadd.f32 %v1578, %v1866
  %v1868 = vpop.f32.mrb[0].mxu0
  %v1869 = vpop.f32.mrb[0].mxu0
  %v1870 = vadd.f32 %v1581, %v1869
  %v1871 = vpop.f32.mrb[0].mxu0
  %1872 = vmatprep.mubr.bf16.mxu0 %v896
  %1873 = vmatmul.mubr.bf16.gmra.mrb[0].mxu0 %v895
  %v1874 = vpop.f32.mrb[0].mxu0
  %v1875 = vadd.f32 %v1586, %v1874
  %v1876 = vpop.f32.mrb[0].mxu0
  %v1877 = vpop.f32.mrb[0].mxu0
  %v1878 = vadd.f32 %v1589, %v1877
  %v1879 = vpop.f32.mrb[0].mxu0
  %1880 = vmatprep.mubr.bf16.mxu0 %v901
  %1881 = vmatmul.mubr.bf16.gmra.mrb[0].mxu0 %v900
  %v1882 = vpop.f32.mrb[0].mxu0
  %v1883 = vadd.f32 %v1594, %v1882
  %v1884 = vpop.f32.mrb[0].mxu0
  %v1885 = vpop.f32.mrb[0].mxu0
  %v1886 = vadd.f32 %v1597, %v1885
  %v1887 = vpop.f32.mrb[0].mxu0
  %1888 = vmatprep.mubr.bf16.mxu0 %v906
  %1889 = vmatmul.mubr.bf16.gmra.mrb[0].mxu0 %v905
  %v1890 = vpop.f32.mrb[0].mxu0
  %v1891 = vadd.f32 %v1602, %v1890
  %v1892 = vpop.f32.mrb[0].mxu0
  %v1893 = vpop.f32.mrb[0].mxu0
  %v1894 = vadd.f32 %v1605, %v1893
  %v1895 = vpop.f32.mrb[0].mxu0
  %1896 = vmatprep.mubr.bf16.mxu0 %v911
  %1897 = vmatmul.mubr.bf16.gmra.mrb[0].mxu0 %v910
  %v1898 = vpop.f32.mrb[0].mxu0
  %v1899 = vadd.f32 %v1610, %v1898
  %v1900 = vpop.f32.mrb[0].mxu0
  %v1901 = vpop.f32.mrb[0].mxu0
  %v1902 = vadd.f32 %v1613, %v1901
  %v1903 = vpop.f32.mrb[0].mxu0
  %1904 = vmatprep.mubr.bf16.mxu0 %v916
  %1905 = vmatmul.mubr.bf16.gmra.mrb[0].mxu0 %v915
  %v1906 = vpop.f32.mrb[0].mxu0
  %v1907 = vadd.f32 %v1618, %v1906
  %v1908 = vpop.f32.mrb[0].mxu0
  %v1909 = vpop.f32.mrb[0].mxu0
  %v1910 = vadd.f32 %v1621, %v1909
  %v1911 = vpop.f32.mrb[0].mxu0
  %1912 = vmatprep.mubr.bf16.mxu0 %v921
  %1913 = vmatmul.mubr.bf16.gmra.mrb[0].mxu0 %v920
  %v1914 = vpop.f32.mrb[0].mxu0
  %v1915 = vadd.f32 %v1626, %v1914
  %v1916 = vpop.f32.mrb[0].mxu0
  %v1917 = vpop.f32.mrb[0].mxu0
  %v1918 = vadd.f32 %v1629, %v1917
  %v1919 = vpop.f32.mrb[0].mxu0
  %1920 = vmatprep.mubr.bf16.mxu0 %v926
  %1921 = vmatmul.mubr.bf16.gmra.mrb[0].mxu0 %v925
  %v1922 = vpop.f32.mrb[0].mxu0
  %v1923 = vadd.f32 %v1634, %v1922
  %v1924 = vpop.f32.mrb[0].mxu0
  %v1925 = vpop.f32.mrb[0].mxu0
  %v1926 = vadd.f32 %v1637, %v1925
  %v1927 = vpop.f32.mrb[0].mxu0
  %1928 = vmatprep.mubr.bf16.mxu0 %v931
  %1929 = vmatmul.mubr.bf16.gmra.mrb[0].mxu0 %v930
  %v1930 = vpop.f32.mrb[0].mxu0
  %v1931 = vadd.f32 %v1642, %v1930
  %v1932 = vpop.f32.mrb[0].mxu0
  %v1933 = vpop.f32.mrb[0].mxu0
  %v1934 = vadd.f32 %v1645, %v1933
  %v1935 = vpop.f32.mrb[0].mxu0
  %1936 = vmatprep.mubr.bf16.mxu0 %v936
  %1937 = vmatmul.mubr.bf16.gmra.mrb[0].mxu0 %v935
  %v1938 = vpop.f32.mrb[0].mxu0
  %v1939 = vadd.f32 %v1650, %v1938
  %v1940 = vpop.f32.mrb[0].mxu0
  %v1941 = vpop.f32.mrb[0].mxu0
  %v1942 = vadd.f32 %v1653, %v1941
  %v1943 = vpop.f32.mrb[0].mxu0
  %1944 = vmatprep.mubr.bf16.mxu0 %v941
  %1945 = vmatmul.mubr.bf16.gmra.mrb[0].mxu0 %v940
  %v1946 = vpop.f32.mrb[0].mxu0
  %v1947 = vadd.f32 %v1658, %v1946
  %v1948 = vpop.f32.mrb[0].mxu0
  %v1949 = vpop.f32.mrb[0].mxu0
  %v1950 = vadd.f32 %v1661, %v1949
  %v1951 = vpop.f32.mrb[0].mxu0
  %1952 = vmatprep.mubr.bf16.mxu0 %v946
  %1953 = vmatmul.mubr.bf16.gmra.mrb[0].mxu0 %v945
  %v1954 = vpop.f32.mrb[0].mxu0
  %v1955 = vadd.f32 %v1666, %v1954
  %v1956 = vpop.f32.mrb[0].mxu0
  %v1957 = vpop.f32.mrb[0].mxu0
  %v1958 = vadd.f32 %v1669, %v1957
  %v1959 = vpop.f32.mrb[0].mxu0
  %1960 = vmatprep.mubr.bf16.mxu0 %v951
  %1961 = vmatmul.mubr.bf16.gmra.mrb[0].mxu0 %v950
  %v1962 = vpop.f32.mrb[0].mxu0
  %v1963 = vadd.f32 %v1674, %v1962
  %v1964 = vpop.f32.mrb[0].mxu0
  %v1965 = vpop.f32.mrb[0].mxu0
  %v1966 = vadd.f32 %v1677, %v1965
  %v1967 = vpop.f32.mrb[0].mxu0
  %1968 = vmatprep.mubr.bf16.mxu0 %v956
  %1969 = vmatmul.mubr.bf16.gmra.mrb[0].mxu0 %v955
  %v1970 = vpop.f32.mrb[0].mxu0
  %v1971 = vadd.f32 %v1682, %v1970
  %v1972 = vpop.f32.mrb[0].mxu0
  %v1973 = vpop.f32.mrb[0].mxu0
  %v1974 = vadd.f32 %v1685, %v1973
  %v1975 = vpop.f32.mrb[0].mxu0
  %1976 = vdwg.mxu0
  %1977 = vmatprep.subr.bf16.mxu0 0
  %1978 = vmatpush1.bf16.msra.mxu0 %v1262
  %1979 = vmatprep.subr.bf16.mxu0 0
  %1980 = vmatpush1.bf16.msra.mxu0 %v1263
  %1981 = vmatprep.subr.bf16.mxu0 0
  %1982 = vmatpush1.bf16.msra.mxu0 %v1264
  %1983 = vmatprep.subr.bf16.mxu0 0
  %1984 = vmatpush1.bf16.msra.mxu0 %v1265
  %1985 = vmatprep.subr.bf16.mxu0 0
  %1986 = vmatpush1.bf16.msra.mxu0 0
  %1987 = vmatprep.subr.bf16.mxu0 0
  %1988 = vmatpush1.bf16.msra.mxu0 0
  %1989 = vmatprep.subr.bf16.mxu0 0
  %1990 = vmatpush1.bf16.msra.mxu0 0
  %1991 = vmatprep.subr.bf16.mxu0 0
  %1992 = vmatpush1.bf16.msra.mxu0 0
  %1993 = vmatprep.subr.bf16.mxu0 0
  %1994 = vmatpush1.bf16.msra.mxu0 0
  %1995 = vmatprep.subr.bf16.mxu0 0
  %1996 = vmatpush1.bf16.msra.mxu0 0
  %1997 = vmatprep.subr.bf16.mxu0 0
  %1998 = vmatpush1.bf16.msra.mxu0 0
  %1999 = vmatprep.subr.bf16.mxu0 0
  %2000 = vmatpush1.bf16.msra.mxu0 0
  %2001 = vmatprep.subr.bf16.mxu0 0
  %2002 = vmatpush1.bf16.msra.mxu0 0
  %2003 = vmatprep.subr.bf16.mxu0 0
  %2004 = vmatpush1.bf16.msra.mxu0 0
  %2005 = vmatprep.subr.bf16.mxu0 0
  %2006 = vmatpush1.bf16.msra.mxu0 0
  %2007 = vmatprep.subr.bf16.mxu0 0
  %2008 = vmatpush1.bf16.msra.mxu0 0
  %2009 = vmatprep.mubr.bf16.mxu0 0
  %2010 = vmatmul.mubr.bf16.gmra.mrb[0].mxu0 %v1304
  %v2011 = vpop.f32.mrb[0].mxu0
  %v2012 = vadd.f32 %v1723, %v2011
  %v2013 = vpop.f32.mrb[0].mxu0
  %v2014 = vpop.f32.mrb[0].mxu0
  %v2015 = vadd.f32 %v1726, %v2014
  %v2016 = vpop.f32.mrb[0].mxu0
  %2017 = vmatprep.mubr.bf16.mxu0 0
  %2018 = vmatmul.mubr.bf16.gmra.mrb[0].mxu0 %v1307
  %v2019 = vpop.f32.mrb[0].mxu0
  %v2020 = vadd.f32 %v1731, %v2019
  %v2021 = vpop.f32.mrb[0].mxu0
  %v2022 = vpop.f32.mrb[0].mxu0
  %v2023 = vadd.f32 %v1734, %v2022
  %v2024 = vpop.f32.mrb[0].mxu0
  %2025 = vmatprep.mubr.bf16.mxu0 0
  %2026 = vmatmul.mubr.bf16.gmra.mrb[0].mxu0 %v1310
  %v2027 = vpop.f32.mrb[0].mxu0
  %v2028 = vadd.f32 %v1739, %v2027
  %v2029 = vpop.f32.mrb[0].mxu0
  %v2030 = vpop.f32.mrb[0].mxu0
  %v2031 = vadd.f32 %v1742, %v2030
  %v2032 = vpop.f32.mrb[0].mxu0
  %2033 = vmatprep.mubr.bf16.mxu0 0
  %2034 = vmatmul.mubr.bf16.gmra.mrb[0].mxu0 %v1313
  %v2035 = vpop.f32.mrb[0].mxu0
  %v2036 = vadd.f32 %v1747, %v2035
  %v2037 = vpop.f32.mrb[0].mxu0
  %v2038 = vpop.f32.mrb[0].mxu0
  %v2039 = vadd.f32 %v1750, %v2038
  %v2040 = vpop.f32.mrb[0].mxu0
  %2041 = vmatprep.mubr.bf16.mxu0 0
  %2042 = vmatmul.mubr.bf16.gmra.mrb[0].mxu0 %v1316
  %v2043 = vpop.f32.mrb[0].mxu0
  %v2044 = vadd.f32 %v1755, %v2043
  %v2045 = vpop.f32.mrb[0].mxu0
  %v2046 = vpop.f32.mrb[0].mxu0
  %v2047 = vadd.f32 %v1758, %v2046
  %v2048 = vpop.f32.mrb[0].mxu0
  %2049 = vmatprep.mubr.bf16.mxu0 0
  %2050 = vmatmul.mubr.bf16.gmra.mrb[0].mxu0 %v1319
  %v2051 = vpop.f32.mrb[0].mxu0
  %v2052 = vadd.f32 %v1763, %v2051
  %v2053 = vpop.f32.mrb[0].mxu0
  %v2054 = vpop.f32.mrb[0].mxu0
  %v2055 = vadd.f32 %v1766, %v2054
  %v2056 = vpop.f32.mrb[0].mxu0
  %2057 = vmatprep.mubr.bf16.mxu0 0
  %2058 = vmatmul.mubr.bf16.gmra.mrb[0].mxu0 %v1322
  %v2059 = vpop.f32.mrb[0].mxu0
  %v2060 = vadd.f32 %v1771, %v2059
  %v2061 = vpop.f32.mrb[0].mxu0
  %v2062 = vpop.f32.mrb[0].mxu0
  %v2063 = vadd.f32 %v1774, %v2062
  %v2064 = vpop.f32.mrb[0].mxu0
  %2065 = vmatprep.mubr.bf16.mxu0 0
  %2066 = vmatmul.mubr.bf16.gmra.mrb[0].mxu0 %v1325
  %v2067 = vpop.f32.mrb[0].mxu0
  %v2068 = vadd.f32 %v1779, %v2067
  %v2069 = vpop.f32.mrb[0].mxu0
  %v2070 = vpop.f32.mrb[0].mxu0
  %v2071 = vadd.f32 %v1782, %v2070
  %v2072 = vpop.f32.mrb[0].mxu0
  %2073 = vmatprep.mubr.bf16.mxu0 0
  %2074 = vmatmul.mubr.bf16.gmra.mrb[0].mxu0 %v1328
  %v2075 = vpop.f32.mrb[0].mxu0
  %v2076 = vadd.f32 %v1787, %v2075
  %v2077 = vpop.f32.mrb[0].mxu0
  %v2078 = vpop.f32.mrb[0].mxu0
  %v2079 = vadd.f32 %v1790, %v2078
  %v2080 = vpop.f32.mrb[0].mxu0
  %2081 = vmatprep.mubr.bf16.mxu0 0
  %2082 = vmatmul.mubr.bf16.gmra.mrb[0].mxu0 %v1331
  %v2083 = vpop.f32.mrb[0].mxu0
  %v2084 = vadd.f32 %v1795, %v2083
  %v2085 = vpop.f32.mrb[0].mxu0
  %v2086 = vpop.f32.mrb[0].mxu0
  %v2087 = vadd.f32 %v1798, %v2086
  %v2088 = vpop.f32.mrb[0].mxu0
  %2089 = vmatprep.mubr.bf16.mxu0 0
  %2090 = vmatmul.mubr.bf16.gmra.mrb[0].mxu0 %v1334
  %v2091 = vpop.f32.mrb[0].mxu0
  %v2092 = vadd.f32 %v1803, %v2091
  %v2093 = vpop.f32.mrb[0].mxu0
  %v2094 = vpop.f32.mrb[0].mxu0
  %v2095 = vadd.f32 %v1806, %v2094
  %v2096 = vpop.f32.mrb[0].mxu0
  %2097 = vmatprep.mubr.bf16.mxu0 0
  %2098 = vmatmul.mubr.bf16.gmra.mrb[0].mxu0 %v1337
  %v2099 = vpop.f32.mrb[0].mxu0
  %v2100 = vadd.f32 %v1811, %v2099
  %v2101 = vpop.f32.mrb[0].mxu0
  %v2102 = vpop.f32.mrb[0].mxu0
  %v2103 = vadd.f32 %v1814, %v2102
  %v2104 = vpop.f32.mrb[0].mxu0
  %2105 = vmatprep.mubr.bf16.mxu0 0
  %2106 = vmatmul.mubr.bf16.gmra.mrb[0].mxu0 %v1340
  %v2107 = vpop.f32.mrb[0].mxu0
  %v2108 = vadd.f32 %v1819, %v2107
  %v2109 = vpop.f32.mrb[0].mxu0
  %v2110 = vpop.f32.mrb[0].mxu0
  %v2111 = vadd.f32 %v1822, %v2110
  %v2112 = vpop.f32.mrb[0].mxu0
  %2113 = vmatprep.mubr.bf16.mxu0 0
  %2114 = vmatmul.mubr.bf16.gmra.mrb[0].mxu0 %v1343
  %v2115 = vpop.f32.mrb[0].mxu0
  %v2116 = vadd.f32 %v1827, %v2115
  %v2117 = vpop.f32.mrb[0].mxu0
  %v2118 = vpop.f32.mrb[0].mxu0
  %v2119 = vadd.f32 %v1830, %v2118
  %v2120 = vpop.f32.mrb[0].mxu0
  %2121 = vmatprep.mubr.bf16.mxu0 0
  %2122 = vmatmul.mubr.bf16.gmra.mrb[0].mxu0 %v1346
  %v2123 = vpop.f32.mrb[0].mxu0
  %v2124 = vadd.f32 %v1835, %v2123
  %v2125 = vpop.f32.mrb[0].mxu0
  %v2126 = vpop.f32.mrb[0].mxu0
  %v2127 = vadd.f32 %v1838, %v2126
  %v2128 = vpop.f32.mrb[0].mxu0
  %2129 = vmatprep.mubr.bf16.mxu0 0
  %2130 = vmatmul.mubr.bf16.gmra.mrb[0].mxu0 %v1349
  %v2131 = vpop.f32.mrb[0].mxu0
  %v2132 = vadd.f32 %v1843, %v2131
  %v2133 = vpop.f32.mrb[0].mxu0
  %v2134 = vpop.f32.mrb[0].mxu0
  %v2135 = vadd.f32 %v1846, %v2134
  %v2136 = vpop.f32.mrb[0].mxu0
  %2137 = vmatprep.mubr.bf16.mxu0 0
  %2138 = vmatmul.mubr.bf16.gmra.mrb[0].mxu0 %v1352
  %v2139 = vpop.f32.mrb[0].mxu0
  %v2140 = vadd.f32 %v1851, %v2139
  %v2141 = vpop.f32.mrb[0].mxu0
  %v2142 = vpop.f32.mrb[0].mxu0
  %v2143 = vadd.f32 %v1854, %v2142
  %v2144 = vpop.f32.mrb[0].mxu0
  %2145 = vmatprep.mubr.bf16.mxu0 0
  %2146 = vmatmul.mubr.bf16.gmra.mrb[0].mxu0 %v1355
  %v2147 = vpop.f32.mrb[0].mxu0
  %v2148 = vadd.f32 %v1859, %v2147
  %v2149 = vpop.f32.mrb[0].mxu0
  %v2150 = vpop.f32.mrb[0].mxu0
  %v2151 = vadd.f32 %v1862, %v2150
  %v2152 = vpop.f32.mrb[0].mxu0
  %2153 = vmatprep.mubr.bf16.mxu0 0
  %2154 = vmatmul.mubr.bf16.gmra.mrb[0].mxu0 %v1358
  %v2155 = vpop.f32.mrb[0].mxu0
  %v2156 = vadd.f32 %v1867, %v2155
  %v2157 = vpop.f32.mrb[0].mxu0
  %v2158 = vpop.f32.mrb[0].mxu0
  %v2159 = vadd.f32 %v1870, %v2158
  %v2160 = vpop.f32.mrb[0].mxu0
  %2161 = vmatprep.mubr.bf16.mxu0 0
  %2162 = vmatmul.mubr.bf16.gmra.mrb[0].mxu0 %v1361
  %v2163 = vpop.f32.mrb[0].mxu0
  %v2164 = vadd.f32 %v1875, %v2163
  %v2165 = vpop.f32.mrb[0].mxu0
  %v2166 = vpop.f32.mrb[0].mxu0
  %v2167 = vadd.f32 %v1878, %v2166
  %v2168 = vpop.f32.mrb[0].mxu0
  %2169 = vmatprep.mubr.bf16.mxu0 0
  %2170 = vmatmul.mubr.bf16.gmra.mrb[0].mxu0 %v1364
  %v2171 = vpop.f32.mrb[0].mxu0
  %v2172 = vadd.f32 %v1883, %v2171
  %v2173 = vpop.f32.mrb[0].mxu0
  %v2174 = vpop.f32.mrb[0].mxu0
  %v2175 = vadd.f32 %v1886, %v2174
  %v2176 = vpop.f32.mrb[0].mxu0
  %2177 = vmatprep.mubr.bf16.mxu0 0
  %2178 = vmatmul.mubr.bf16.gmra.mrb[0].mxu0 %v1367
  %v2179 = vpop.f32.mrb[0].mxu0
  %v2180 = vadd.f32 %v1891, %v2179
  %v2181 = vpop.f32.mrb[0].mxu0
  %v2182 = vpop.f32.mrb[0].mxu0
  %v2183 = vadd.f32 %v1894, %v2182
  %v2184 = vpop.f32.mrb[0].mxu0
  %2185 = vmatprep.mubr.bf16.mxu0 0
  %2186 = vmatmul.mubr.bf16.gmra.mrb[0].mxu0 %v1370
  %v2187 = vpop.f32.mrb[0].mxu0
  %v2188 = vadd.f32 %v1899, %v2187
  %v2189 = vpop.f32.mrb[0].mxu0
  %v2190 = vpop.f32.mrb[0].mxu0
  %v2191 = vadd.f32 %v1902, %v2190
  %v2192 = vpop.f32.mrb[0].mxu0
  %2193 = vmatprep.mubr.bf16.mxu0 0
  %2194 = vmatmul.mubr.bf16.gmra.mrb[0].mxu0 %v1373
  %v2195 = vpop.f32.mrb[0].mxu0
  %v2196 = vadd.f32 %v1907, %v2195
  %v2197 = vpop.f32.mrb[0].mxu0
  %v2198 = vpop.f32.mrb[0].mxu0
  %v2199 = vadd.f32 %v1910, %v2198
  %v2200 = vpop.f32.mrb[0].mxu0
  %2201 = vmatprep.mubr.bf16.mxu0 0
  %2202 = vmatmul.mubr.bf16.gmra.mrb[0].mxu0 %v1376
  %v2203 = vpop.f32.mrb[0].mxu0
  %v2204 = vadd.f32 %v1915, %v2203
  %v2205 = vpop.f32.mrb[0].mxu0
  %v2206 = vpop.f32.mrb[0].mxu0
  %v2207 = vadd.f32 %v1918, %v2206
  %v2208 = vpop.f32.mrb[0].mxu0
  %2209 = vmatprep.mubr.bf16.mxu0 0
  %2210 = vmatmul.mubr.bf16.gmra.mrb[0].mxu0 %v1379
  %v2211 = vpop.f32.mrb[0].mxu0
  %v2212 = vadd.f32 %v1923, %v2211
  %v2213 = vpop.f32.mrb[0].mxu0
  %v2214 = vpop.f32.mrb[0].mxu0
  %v2215 = vadd.f32 %v1926, %v2214
  %v2216 = vpop.f32.mrb[0].mxu0
  %2217 = vmatprep.mubr.bf16.mxu0 0
  %2218 = vmatmul.mubr.bf16.gmra.mrb[0].mxu0 %v1382
  %v2219 = vpop.f32.mrb[0].mxu0
  %v2220 = vadd.f32 %v1931, %v2219
  %v2221 = vpop.f32.mrb[0].mxu0
  %v2222 = vpop.f32.mrb[0].mxu0
  %v2223 = vadd.f32 %v1934, %v2222
  %v2224 = vpop.f32.mrb[0].mxu0
  %2225 = vmatprep.mubr.bf16.mxu0 0
  %2226 = vmatmul.mubr.bf16.gmra.mrb[0].mxu0 %v1385
  %v2227 = vpop.f32.mrb[0].mxu0
  %v2228 = vadd.f32 %v1939, %v2227
  %v2229 = vpop.f32.mrb[0].mxu0
  %v2230 = vpop.f32.mrb[0].mxu0
  %v2231 = vadd.f32 %v1942, %v2230
  %v2232 = vpop.f32.mrb[0].mxu0
  %2233 = vmatprep.mubr.bf16.mxu0 0
  %2234 = vmatmul.mubr.bf16.gmra.mrb[0].mxu0 %v1388
  %v2235 = vpop.f32.mrb[0].mxu0
  %v2236 = vadd.f32 %v1947, %v2235
  %v2237 = vpop.f32.mrb[0].mxu0
  %v2238 = vpop.f32.mrb[0].mxu0
  %v2239 = vadd.f32 %v1950, %v2238
  %v2240 = vpop.f32.mrb[0].mxu0
  %2241 = vmatprep.mubr.bf16.mxu0 0
  %2242 = vmatmul.mubr.bf16.gmra.mrb[0].mxu0 %v1391
  %v2243 = vpop.f32.mrb[0].mxu0
  %v2244 = vadd.f32 %v1955, %v2243
  %v2245 = vpop.f32.mrb[0].mxu0
  %v2246 = vpop.f32.mrb[0].mxu0
  %v2247 = vadd.f32 %v1958, %v2246
  %v2248 = vpop.f32.mrb[0].mxu0
  %2249 = vmatprep.mubr.bf16.mxu0 0
  %2250 = vmatmul.mubr.bf16.gmra.mrb[0].mxu0 %v1394
  %v2251 = vpop.f32.mrb[0].mxu0
  %v2252 = vadd.f32 %v1963, %v2251
  %v2253 = vpop.f32.mrb[0].mxu0
  %v2254 = vpop.f32.mrb[0].mxu0
  %v2255 = vadd.f32 %v1966, %v2254
  %v2256 = vpop.f32.mrb[0].mxu0
  %2257 = vmatprep.mubr.bf16.mxu0 0
  %2258 = vmatmul.mubr.bf16.gmra.mrb[0].mxu0 %v1397
  %v2259 = vpop.f32.mrb[0].mxu0
  %v2260 = vadd.f32 %v1971, %v2259
  %v2261 = vpop.f32.mrb[0].mxu0
  %v2262 = vpop.f32.mrb[0].mxu0
  %v2263 = vadd.f32 %v1974, %v2262
  %v2264 = vpop.f32.mrb[0].mxu0
  %2265 = vdwg.mxu0
  %v2266 = vmax.f32 %v2012, 0.0
  %v2267 = vmax.f32 %v2015, 0.0
  %v2268 = vmax.f32 %v2020, 0.0
  %v2269 = vmax.f32 %v2023, 0.0
  %v2270 = vmax.f32 %v2028, 0.0
  %v2271 = vmax.f32 %v2031, 0.0
  %v2272 = vmax.f32 %v2036, 0.0
  %v2273 = vmax.f32 %v2039, 0.0
  %v2274 = vmax.f32 %v2044, 0.0
  %v2275 = vmax.f32 %v2047, 0.0
  %v2276 = vmax.f32 %v2052, 0.0
  %v2277 = vmax.f32 %v2055, 0.0
  %v2278 = vmax.f32 %v2060, 0.0
  %v2279 = vmax.f32 %v2063, 0.0
  %v2280 = vmax.f32 %v2068, 0.0
  %v2281 = vmax.f32 %v2071, 0.0
  %v2282 = vmax.f32 %v2076, 0.0
  %v2283 = vmax.f32 %v2079, 0.0
  %v2284 = vmax.f32 %v2084, 0.0
  %v2285 = vmax.f32 %v2087, 0.0
  %v2286 = vmax.f32 %v2092, 0.0
  %v2287 = vmax.f32 %v2095, 0.0
  %v2288 = vmax.f32 %v2100, 0.0
  %v2289 = vmax.f32 %v2103, 0.0
  %v2290 = vmax.f32 %v2108, 0.0
  %v2291 = vmax.f32 %v2111, 0.0
  %v2292 = vmax.f32 %v2116, 0.0
  %v2293 = vmax.f32 %v2119, 0.0
  %v2294 = vmax.f32 %v2124, 0.0
  %v2295 = vmax.f32 %v2127, 0.0
  %v2296 = vmax.f32 %v2132, 0.0
  %v2297 = vmax.f32 %v2135, 0.0
  %v2298 = vmax.f32 %v2140, 0.0
  %v2299 = vmax.f32 %v2143, 0.0
  %v2300 = vmax.f32 %v2148, 0.0
  %v2301 = vmax.f32 %v2151, 0.0
  %v2302 = vmax.f32 %v2156, 0.0
  %v2303 = vmax.f32 %v2159, 0.0
  %v2304 = vmax.f32 %v2164, 0.0
  %v2305 = vmax.f32 %v2167, 0.0
  %v2306 = vmax.f32 %v2172, 0.0
  %v2307 = vmax.f32 %v2175, 0.0
  %v2308 = vmax.f32 %v2180, 0.0
  %v2309 = vmax.f32 %v2183, 0.0
  %v2310 = vmax.f32 %v2188, 0.0
  %v2311 = vmax.f32 %v2191, 0.0
  %v2312 = vmax.f32 %v2196, 0.0
  %v2313 = vmax.f32 %v2199, 0.0
  %v2314 = vmax.f32 %v2204, 0.0
  %v2315 = vmax.f32 %v2207, 0.0
  %v2316 = vmax.f32 %v2212, 0.0
  %v2317 = vmax.f32 %v2215, 0.0
  %v2318 = vmax.f32 %v2220, 0.0
  %v2319 = vmax.f32 %v2223, 0.0
  %v2320 = vmax.f32 %v2228, 0.0
  %v2321 = vmax.f32 %v2231, 0.0
  %v2322 = vmax.f32 %v2236, 0.0
  %v2323 = vmax.f32 %v2239, 0.0
  %v2324 = vmax.f32 %v2244, 0.0
  %v2325 = vmax.f32 %v2247, 0.0
  %v2326 = vmax.f32 %v2252, 0.0
  %v2327 = vmax.f32 %v2255, 0.0
  %v2328 = vmax.f32 %v2260, 0.0
  %v2329 = vmax.f32 %v2263, 0.0
  %v2330 = vpack.c.bf16 %v2267, %v2266
  %v2331 = vpack.c.bf16 %v2269, %v2268
  %v2332 = vpack.c.bf16 %v2271, %v2270
  %v2333 = vpack.c.bf16 %v2273, %v2272
  %v2334 = vpack.c.bf16 %v2275, %v2274
  %v2335 = vpack.c.bf16 %v2277, %v2276
  %v2336 = vpack.c.bf16 %v2279, %v2278
  %v2337 = vpack.c.bf16 %v2281, %v2280
  %v2338 = vpack.c.bf16 %v2283, %v2282
  %v2339 = vpack.c.bf16 %v2285, %v2284
  %v2340 = vpack.c.bf16 %v2287, %v2286
  %v2341 = vpack.c.bf16 %v2289, %v2288
  %v2342 = vpack.c.bf16 %v2291, %v2290
  %v2343 = vpack.c.bf16 %v2293, %v2292
  %v2344 = vpack.c.bf16 %v2295, %v2294
  %v2345 = vpack.c.bf16 %v2297, %v2296
  %v2346 = vpack.c.bf16 %v2299, %v2298
  %v2347 = vpack.c.bf16 %v2301, %v2300
  %v2348 = vpack.c.bf16 %v2303, %v2302
  %v2349 = vpack.c.bf16 %v2305, %v2304
  %v2350 = vpack.c.bf16 %v2307, %v2306
  %v2351 = vpack.c.bf16 %v2309, %v2308
  %v2352 = vpack.c.bf16 %v2311, %v2310
  %v2353 = vpack.c.bf16 %v2313, %v2312
  %v2354 = vpack.c.bf16 %v2315, %v2314
  %v2355 = vpack.c.bf16 %v2317, %v2316
  %v2356 = vpack.c.bf16 %v2319, %v2318
  %v2357 = vpack.c.bf16 %v2321, %v2320
  %v2358 = vpack.c.bf16 %v2323, %v2322
  %v2359 = vpack.c.bf16 %v2325, %v2324
  %v2360 = vpack.c.bf16 %v2327, %v2326
  %v2361 = vpack.c.bf16 %v2329, %v2328
  %v2394 = vunpack.c.l.b16 %v2330
  %v2395 = vunpack.c.h.b16 %v2330
  %v2396 = vunpack.c.l.b16 %v2331
  %v2397 = vunpack.c.h.b16 %v2331
  %v2398 = vunpack.c.l.b16 %v2332
  %v2399 = vunpack.c.h.b16 %v2332
  %v2400 = vunpack.c.l.b16 %v2333
  %v2401 = vunpack.c.h.b16 %v2333
  %v2402 = vunpack.c.l.b16 %v2334
  %v2403 = vunpack.c.h.b16 %v2334
  %v2404 = vunpack.c.l.b16 %v2335
  %v2405 = vunpack.c.h.b16 %v2335
  %v2406 = vunpack.c.l.b16 %v2336
  %v2407 = vunpack.c.h.b16 %v2336
  %v2408 = vunpack.c.l.b16 %v2337
  %v2409 = vunpack.c.h.b16 %v2337
  %v2410 = vunpack.c.l.b16 %v2338
  %v2411 = vunpack.c.h.b16 %v2338
  %v2412 = vunpack.c.l.b16 %v2339
  %v2413 = vunpack.c.h.b16 %v2339
  %v2414 = vunpack.c.l.b16 %v2340
  %v2415 = vunpack.c.h.b16 %v2340
  %v2416 = vunpack.c.l.b16 %v2341
  %v2417 = vunpack.c.h.b16 %v2341
  %v2418 = vunpack.c.l.b16 %v2342
  %v2419 = vunpack.c.h.b16 %v2342
  %v2420 = vunpack.c.l.b16 %v2343
  %v2421 = vunpack.c.h.b16 %v2343
  %v2422 = vunpack.c.l.b16 %v2344
  %v2423 = vunpack.c.h.b16 %v2344
  %v2424 = vunpack.c.l.b16 %v2345
  %v2425 = vunpack.c.h.b16 %v2345
  %v2426 = vunpack.c.l.b16 %v2346
  %v2427 = vunpack.c.h.b16 %v2346
  %v2428 = vunpack.c.l.b16 %v2347
  %v2429 = vunpack.c.h.b16 %v2347
  %v2430 = vunpack.c.l.b16 %v2348
  %v2431 = vunpack.c.h.b16 %v2348
  %v2432 = vunpack.c.l.b16 %v2349
  %v2433 = vunpack.c.h.b16 %v2349
  %v2434 = vunpack.c.l.b16 %v2350
  %v2435 = vunpack.c.h.b16 %v2350
  %v2436 = vunpack.c.l.b16 %v2351
  %v2437 = vunpack.c.h.b16 %v2351
  %v2438 = vunpack.c.l.b16 %v2352
  %v2439 = vunpack.c.h.b16 %v2352
  %v2440 = vunpack.c.l.b16 %v2353
  %v2441 = vunpack.c.h.b16 %v2353
  %v2442 = vunpack.c.l.b16 %v2354
  %v2443 = vunpack.c.h.b16 %v2354
  %v2444 = vunpack.c.l.b16 %v2355
  %v2445 = vunpack.c.h.b16 %v2355
  %v2446 = vunpack.c.l.b16 %v2356
  %v2447 = vunpack.c.h.b16 %v2356
  %v2448 = vunpack.c.l.b16 %v2357
  %v2449 = vunpack.c.h.b16 %v2357
  %v2450 = vunpack.c.l.b16 %v2358
  %v2451 = vunpack.c.h.b16 %v2358
  %v2452 = vunpack.c.l.b16 %v2359
  %v2453 = vunpack.c.h.b16 %v2359
  %v2454 = vunpack.c.l.b16 %v2360
  %v2455 = vunpack.c.h.b16 %v2360
  %v2456 = vunpack.c.l.b16 %v2361
  %v2457 = vunpack.c.h.b16 %v2361
  %v2458 = vpack.c.b16 %v2394, %v2394
  %v2459 = vpack.c.b16 %v2395, %v2395
  %v2460 = vpack.c.b16 %v2396, %v2396
  %v2461 = vpack.c.b16 %v2397, %v2397
  %v2462 = vpack.c.b16 %v2398, %v2398
  %v2463 = vpack.c.b16 %v2399, %v2399
  %v2464 = vpack.c.b16 %v2400, %v2400
  %v2465 = vpack.c.b16 %v2401, %v2401
  %v2466 = vpack.c.b16 %v2402, %v2402
  %v2467 = vpack.c.b16 %v2403, %v2403
  %v2468 = vpack.c.b16 %v2404, %v2404
  %v2469 = vpack.c.b16 %v2405, %v2405
  %v2470 = vpack.c.b16 %v2406, %v2406
  %v2471 = vpack.c.b16 %v2407, %v2407
  %v2472 = vpack.c.b16 %v2408, %v2408
  %v2473 = vpack.c.b16 %v2409, %v2409
  %v2474 = vpack.c.b16 %v2410, %v2410
  %v2475 = vpack.c.b16 %v2411, %v2411
  %v2476 = vpack.c.b16 %v2412, %v2412
  %v2477 = vpack.c.b16 %v2413, %v2413
  %v2478 = vpack.c.b16 %v2414, %v2414
  %v2479 = vpack.c.b16 %v2415, %v2415
  %v2480 = vpack.c.b16 %v2416, %v2416
  %v2481 = vpack.c.b16 %v2417, %v2417
  %v2482 = vpack.c.b16 %v2418, %v2418
  %v2483 = vpack.c.b16 %v2419, %v2419
  %v2484 = vpack.c.b16 %v2420, %v2420
  %v2485 = vpack.c.b16 %v2421, %v2421
  %v2486 = vpack.c.b16 %v2422, %v2422
  %v2487 = vpack.c.b16 %v2423, %v2423
  %v2488 = vpack.c.b16 %v2424, %v2424
  %v2489 = vpack.c.b16 %v2425, %v2425
  %v2490 = vpack.c.b16 %v2426, %v2426
  %v2491 = vpack.c.b16 %v2427, %v2427
  %v2492 = vpack.c.b16 %v2428, %v2428
  %v2493 = vpack.c.b16 %v2429, %v2429
  %v2494 = vpack.c.b16 %v2430, %v2430
  %v2495 = vpack.c.b16 %v2431, %v2431
  %v2496 = vpack.c.b16 %v2432, %v2432
  %v2497 = vpack.c.b16 %v2433, %v2433
  %v2498 = vpack.c.b16 %v2434, %v2434
  %v2499 = vpack.c.b16 %v2435, %v2435
  %v2500 = vpack.c.b16 %v2436, %v2436
  %v2501 = vpack.c.b16 %v2437, %v2437
  %v2502 = vpack.c.b16 %v2438, %v2438
  %v2503 = vpack.c.b16 %v2439, %v2439
  %v2504 = vpack.c.b16 %v2440, %v2440
  %v2505 = vpack.c.b16 %v2441, %v2441
  %v2506 = vpack.c.b16 %v2442, %v2442
  %v2507 = vpack.c.b16 %v2443, %v2443
  %v2508 = vpack.c.b16 %v2444, %v2444
  %v2509 = vpack.c.b16 %v2445, %v2445
  %v2510 = vpack.c.b16 %v2446, %v2446
  %v2511 = vpack.c.b16 %v2447, %v2447
  %v2512 = vpack.c.b16 %v2448, %v2448
  %v2513 = vpack.c.b16 %v2449, %v2449
  %v2514 = vpack.c.b16 %v2450, %v2450
  %v2515 = vpack.c.b16 %v2451, %v2451
  %v2516 = vpack.c.b16 %v2452, %v2452
  %v2517 = vpack.c.b16 %v2453, %v2453
  %v2518 = vpack.c.b16 %v2454, %v2454
  %v2519 = vpack.c.b16 %v2455, %v2455
  %v2520 = vpack.c.b16 %v2456, %v2456
  %v2521 = vpack.c.b16 %v2457, %v2457
  %2586 = vst [vmem:[%s3] sm:$0xf] %v2458
  %2587 = vst [vmem:[%s3 + $0x4] sm:$0xf] %v2459
  %2588 = vst [vmem:[%s3 + $0x8] sm:$0xf] %v2460
  %2589 = vst [vmem:[%s3 + $0xc] sm:$0xf] %v2461
  %2590 = vst [vmem:[%s3 + $0x10] sm:$0xf] %v2462
  %2591 = vst [vmem:[%s3 + $0x14] sm:$0xf] %v2463
  %2592 = vst [vmem:[%s3 + $0x18] sm:$0xf] %v2464
  %2593 = vst [vmem:[%s3 + $0x1c] sm:$0xf] %v2465
  %2594 = vst [vmem:[%s3 + $0x20] sm:$0xf] %v2466
  %2595 = vst [vmem:[%s3 + $0x24] sm:$0xf] %v2467
  %2596 = vst [vmem:[%s3 + $0x28] sm:$0xf] %v2468
  %2597 = vst [vmem:[%s3 + $0x2c] sm:$0xf] %v2469
  %2598 = vst [vmem:[%s3 + $0x30] sm:$0xf] %v2470
  %2599 = vst [vmem:[%s3 + $0x34] sm:$0xf] %v2471
  %2600 = vst [vmem:[%s3 + $0x38] sm:$0xf] %v2472
  %2601 = vst [vmem:[%s3 + $0x3c] sm:$0xf] %v2473
  %2602 = vst [vmem:[%s3 + $0x40] sm:$0xf] %v2474
  %2603 = vst [vmem:[%s3 + $0x44] sm:$0xf] %v2475
  %2604 = vst [vmem:[%s3 + $0x48] sm:$0xf] %v2476
  %2605 = vst [vmem:[%s3 + $0x4c] sm:$0xf] %v2477
  %2606 = vst [vmem:[%s3 + $0x50] sm:$0xf] %v2478
  %2607 = vst [vmem:[%s3 + $0x54] sm:$0xf] %v2479
  %2608 = vst [vmem:[%s3 + $0x58] sm:$0xf] %v2480
  %2609 = vst [vmem:[%s3 + $0x5c] sm:$0xf] %v2481
  %2610 = vst [vmem:[%s3 + $0x60] sm:$0xf] %v2482
  %2611 = vst [vmem:[%s3 + $0x64] sm:$0xf] %v2483
  %2612 = vst [vmem:[%s3 + $0x68] sm:$0xf] %v2484
  %2613 = vst [vmem:[%s3 + $0x6c] sm:$0xf] %v2485
  %2614 = vst [vmem:[%s3 + $0x70] sm:$0xf] %v2486
  %2615 = vst [vmem:[%s3 + $0x74] sm:$0xf] %v2487
  %2616 = vst [vmem:[%s3 + $0x78] sm:$0xf] %v2488
  %2617 = vst [vmem:[%s3 + $0x7c] sm:$0xf] %v2489
  %2618 = vst [vmem:[%s3 + $0x80] sm:$0xf] %v2490
  %2619 = vst [vmem:[%s3 + $0x84] sm:$0xf] %v2491
  %2620 = vst [vmem:[%s3 + $0x88] sm:$0xf] %v2492
  %2621 = vst [vmem:[%s3 + $0x8c] sm:$0xf] %v2493
  %2622 = vst [vmem:[%s3 + $0x90] sm:$0xf] %v2494
  %2623 = vst [vmem:[%s3 + $0x94] sm:$0xf] %v2495
  %2624 = vst [vmem:[%s3 + $0x98] sm:$0xf] %v2496
  %2625 = vst [vmem:[%s3 + $0x9c] sm:$0xf] %v2497
  %2626 = vst [vmem:[%s3 + $0xa0] sm:$0xf] %v2498
  %2627 = vst [vmem:[%s3 + $0xa4] sm:$0xf] %v2499
  %2628 = vst [vmem:[%s3 + $0xa8] sm:$0xf] %v2500
  %2629 = vst [vmem:[%s3 + $0xac] sm:$0xf] %v2501
  %2630 = vst [vmem:[%s3 + $0xb0] sm:$0xf] %v2502
  %2631 = vst [vmem:[%s3 + $0xb4] sm:$0xf] %v2503
  %2632 = vst [vmem:[%s3 + $0xb8] sm:$0xf] %v2504
  %2633 = vst [vmem:[%s3 + $0xbc] sm:$0xf] %v2505
  %2634 = vst [vmem:[%s3 + $0xc0] sm:$0xf] %v2506
  %2635 = vst [vmem:[%s3 + $0xc4] sm:$0xf] %v2507
  %2636 = vst [vmem:[%s3 + $0xc8] sm:$0xf] %v2508
  %2637 = vst [vmem:[%s3 + $0xcc] sm:$0xf] %v2509
  %2638 = vst [vmem:[%s3 + $0xd0] sm:$0xf] %v2510
  %2639 = vst [vmem:[%s3 + $0xd4] sm:$0xf] %v2511
  %2640 = vst [vmem:[%s3 + $0xd8] sm:$0xf] %v2512
  %2641 = vst [vmem:[%s3 + $0xdc] sm:$0xf] %v2513
  %2642 = vst [vmem:[%s3 + $0xe0] sm:$0xf] %v2514
  %2643 = vst [vmem:[%s3 + $0xe4] sm:$0xf] %v2515
  %2644 = vst [vmem:[%s3 + $0xe8] sm:$0xf] %v2516
  %2645 = vst [vmem:[%s3 + $0xec] sm:$0xf] %v2517
  %2646 = vst [vmem:[%s3 + $0xf0] sm:$0xf] %v2518
  %2647 = vst [vmem:[%s3 + $0xf4] sm:$0xf] %v2519
  %2648 = vst [vmem:[%s3 + $0xf8] sm:$0xf] %v2520
  %2649 = vst [vmem:[%s3 + $0xfc] sm:$0xf] %v2521
  // Predicated region
  $region14: #{autoencoder_forward.7} parent=0 // pred_check
    _
  $region15: #{autoencoder_forward.7} parent=0 // pred_check_branch
    %2651 = sbr.rel (0) target = $region17
  $region16: #{autoencoder_forward.7} parent=0 // pred_region
    _
  $region17: #{autoencoder_forward.7} parent=0 // pred_fallthru
    _
  // Predicated region
  $region18: #{autoencoder_forward.7} parent=0 // pred_check
    _
  $region19: #{autoencoder_forward.7} parent=0 // pred_check_branch
    %2653 = sbr.rel (0) target = $region21
  $region20: #{autoencoder_forward.7} parent=0 // pred_region
    _
  $region21: #{autoencoder_forward.7} parent=0 // pred_fallthru
    _

// kernel: autoencoder_forward.8
$region0: #{autoencoder_forward.8}
  #allocation0 [shape = 'u32[]', space=smem, size = 0x4, offset = 0x4, fixed_abs, tag = 'smem constant byte address 0x4 - core index']
  #allocation1 [shape = 'u32[144,128]{1,0:T(1,128)}', space=vmem, size = 0x12000, scoped, tag = 'internal scratch']
  %s0 = inlined_call_operand.vmem [shape: bf16[2048,288], index: 0, kind: input, shape index: {}]
  %s1 = inlined_call_operand.vmem [shape: bf16[288,128], index: 1, kind: input, shape index: {}]
  %s2 = inlined_call_operand.vmem [shape: f32[1,128], index: 2, kind: input, shape index: {}]
  %s3 = inlined_call_operand.vmem [shape: bf16[2048,128], index: 3, kind: output, shape index: {}]
  %s4 = sld [smem:[#allocation0]]
  $region45: #{autoencoder_forward.8} parent=0
    _
  %s6 = ssub.s32 1, %s4
  %s7 = scalar_select 0, %s6, %s4
  loop: start=0, step=1, limit=4
  $region2: #{autoencoder_forward.8} parent=0 // loop_pre_header
    _
  $region3: #{autoencoder_forward.8} parent=0 // loop_header
    %s9 = sphi 0, %s13
    %p10 = scmp.ge.s32.totalorder %s9, 4
    %s19 = sphi 0, %s21
    %s22 = sphi 0, %s19
    %s23 = sphi 0, %s22
    %s39 = sphi 0, %s23
    %s43 = sphi 0, %s43
    %s45 = sphi 0, %s43
    %s46 = sphi 0, %s45
    %s60 = sphi 0, %s46
    %s64 = sphi 0, %s64
    %s66 = sphi 0, %s64
    %s67 = sphi 0, %s66
    %s81 = sphi 0, %s67
    %s87 = sphi 0, %s89
    %s90 = sphi 0, %s87
    %s91 = sphi 0, %s90
    %s107 = sphi 0, %s91
  $region4: #{autoencoder_forward.8} parent=0 // loop_header_branch
    %12 = sbr.rel (%p10) target = $region8
  $region5: #{autoencoder_forward.8} parent=0 // loop_body
    %s14 = ssub.s32 %s9, 1
    %s15 = ssub.s32 %s9, 2
    %s16 = sadd.s32 %s9, 1
    %s17 = ssub.s32 %s9, %s16
    %p18 = scmp.eq.s32.totalorder %s17, 0
    %s20 = sadd.s32 %s19, 1
    %s21 = scalar_select %p18, %s19, %s20
    %p24 = pneg %p18
    %p25 = scmp.eq.s32.totalorder %s9, 1
    %p26 = por %p24, %p25
    %p27 = scmp.ne.s32.totalorder %s19, %s22
    %p28 = scmp.eq.s32.totalorder %s9, 0
    %p29 = por %p27, %p28
    %p30 = scmp.ne.s32.totalorder %s19, %s22
    %p31 = scmp.eq.s32.totalorder %s14, 1
    %p32 = por %p30, %p31
    %p33 = scmp.ne.s32.totalorder %s22, %s23
    %p34 = scmp.eq.s32.totalorder %s14, 0
    %p35 = por %p33, %p34
    %p36 = scmp.ne.s32.totalorder %s22, %s23
    %p37 = scmp.eq.s32.totalorder %s15, 1
    %p38 = por %p36, %p37
    %p40 = scmp.ne.s32.totalorder %s23, %s39
    %p41 = scmp.eq.s32.totalorder %s15, 0
    %p42 = por %p40, %p41
    %s44 = sadd.s32 %s43, 1
    %p47 = scmp.eq.s32.totalorder %s9, 1
    %p48 = scmp.ne.s32.totalorder %s43, %s45
    %p49 = scmp.eq.s32.totalorder %s9, 0
    %p50 = por %p48, %p49
    %p51 = scmp.ne.s32.totalorder %s43, %s45
    %p52 = scmp.eq.s32.totalorder %s14, 1
    %p53 = por %p51, %p52
    %p54 = scmp.ne.s32.totalorder %s45, %s46
    %p55 = scmp.eq.s32.totalorder %s14, 0
    %p56 = por %p54, %p55
    %p57 = scmp.ne.s32.totalorder %s45, %s46
    %p58 = scmp.eq.s32.totalorder %s15, 1
    %p59 = por %p57, %p58
    %p61 = scmp.ne.s32.totalorder %s46, %s60
    %p62 = scmp.eq.s32.totalorder %s15, 0
    %p63 = por %p61, %p62
    %s65 = sadd.s32 %s64, 1
    %p68 = scmp.eq.s32.totalorder %s9, 1
    %p69 = scmp.ne.s32.totalorder %s64, %s66
    %p70 = scmp.eq.s32.totalorder %s9, 0
    %p71 = por %p69, %p70
    %p72 = scmp.ne.s32.totalorder %s64, %s66
    %p73 = scmp.eq.s32.totalorder %s14, 1
    %p74 = por %p72, %p73
    %p75 = scmp.ne.s32.totalorder %s66, %s67
    %p76 = scmp.eq.s32.totalorder %s14, 0
    %p77 = por %p75, %p76
    %p78 = scmp.ne.s32.totalorder %s66, %s67
    %p79 = scmp.eq.s32.totalorder %s15, 1
    %p80 = por %p78, %p79
    %p82 = scmp.ne.s32.totalorder %s67, %s81
    %p83 = scmp.eq.s32.totalorder %s15, 0
    %p84 = por %p82, %p83
    %s85 = ssub.s32 %s9, %s16
    %p86 = scmp.eq.s32.totalorder %s85, 0
    %s88 = sadd.s32 %s87, 1
    %s89 = scalar_select %p86, %s87, %s88
    %p92 = pneg %p86
    %p93 = scmp.eq.s32.totalorder %s9, 1
    %p94 = por %p92, %p93
    %p95 = scmp.ne.s32.totalorder %s87, %s90
    %p96 = scmp.eq.s32.totalorder %s9, 0
    %p97 = por %p95, %p96
    %p98 = scmp.ne.s32.totalorder %s87, %s90
    %p99 = scmp.eq.s32.totalorder %s14, 1
    %p100 = por %p98, %p99
    %p101 = scmp.ne.s32.totalorder %s90, %s91
    %p102 = scmp.eq.s32.totalorder %s14, 0
    %p103 = por %p101, %p102
    %p104 = scmp.ne.s32.totalorder %s90, %s91
    %p105 = scmp.eq.s32.totalorder %s15, 1
    %p106 = por %p104, %p105
    %p108 = scmp.ne.s32.totalorder %s91, %s107
    %p109 = scmp.eq.s32.totalorder %s15, 0
    %p110 = por %p108, %p109
    %p111 = scmp.le.s32.totalorder 1, %s9
    %p112 = scmp.lt.s32.totalorder %s9, 3
    %p113 = pnand %p111, %p112
    %p114 = pneg %p113
    // Predicated region
    $region9: #{autoencoder_forward.8} parent=5 // pred_check
      _
    $region10: #{autoencoder_forward.8} parent=5 // pred_check_branch
      %116 = sbr.rel (%p113) target = $region12
    $region11: #{autoencoder_forward.8} parent=5 // pred_region
      %s117 = ssub.s32 %s9, 1
      // Predicated region
      $region13: #{autoencoder_forward.8} parent=11 // pred_check
        %p118 = pneg %p56
      $region14: #{autoencoder_forward.8} parent=11 // pred_check_branch
        %120 = sbr.rel (%p118) target = $region16
      $region15: #{autoencoder_forward.8} parent=11 // pred_region
        _
      $region16: #{autoencoder_forward.8} parent=11 // pred_fallthru
        _
      // Predicated region
      $region17: #{autoencoder_forward.8} parent=11 // pred_check
        %p121 = pneg %p77
      $region18: #{autoencoder_forward.8} parent=11 // pred_check_branch
        %123 = sbr.rel (%p121) target = $region20
      $region19: #{autoencoder_forward.8} parent=11 // pred_region
        _
      $region20: #{autoencoder_forward.8} parent=11 // pred_fallthru
        _
    $region12: #{autoencoder_forward.8} parent=5 // pred_fallthru
      _
    %p124 = scmp.lt.s32.totalorder %s9, 2
    // Predicated region
    $region21: #{autoencoder_forward.8} parent=5 // pred_check
      %p125 = pneg %p124
    $region22: #{autoencoder_forward.8} parent=5 // pred_check_branch
      %127 = sbr.rel (%p125) target = $region24
    $region23: #{autoencoder_forward.8} parent=5 // pred_region
      // Predicated region
      $region25: #{autoencoder_forward.8} parent=23 // pred_check
        %p128 = pneg %p29
      $region26: #{autoencoder_forward.8} parent=23 // pred_check_branch
        %130 = sbr.rel (%p128) target = $region28
      $region27: #{autoencoder_forward.8} parent=23 // pred_region
        %s131 = smul.u32 128, %s9
        %p132 = scmp.lt.s32.totalorder %s131, 255
        %s133 = scalar_select %p132, %s131, 255
        %s134 = smul.addr %s133, 3
        %s135 = smul.addr %s134, 4
        %s136 = scalar_lea.vmem %s0, %s135
        %s137 = smul.u32 128, %s9
      $region28: #{autoencoder_forward.8} parent=23 // pred_fallthru
        _
    $region24: #{autoencoder_forward.8} parent=5 // pred_fallthru
      _
    %p138 = scmp.le.s32.totalorder 1, %s9
    %p139 = scmp.lt.s32.totalorder %s9, 3
    %p140 = pnand %p138, %p139
    %p141 = pneg %p140
    // Predicated region
    $region29: #{autoencoder_forward.8} parent=5 // pred_check
      _
    $region30: #{autoencoder_forward.8} parent=5 // pred_check_branch
      %143 = sbr.rel (%p140) target = $region32
    $region31: #{autoencoder_forward.8} parent=5 // pred_region
      %s144 = ssub.s32 %s9, 1
      %s145 = smul.u32 128, %s14
      %p146 = scmp.lt.s32.totalorder %s145, 255
      %s147 = scalar_select %p146, %s145, 255
      %s148 = smul.addr %s147, 3
      %s149 = smul.addr %s148, 4
      %s150 = scalar_lea.vmem %s0, %s149
      %p151 = pneg %p35
      %p152 = pneg %p32
      %p153 = pneg %p56
      %p154 = pneg %p53
      %p155 = pneg %p77
      %p156 = pneg %p74
      %p157 = pneg %p103
      %p158 = pneg %p100
      %s159 = smul.u32 128, %s14
      %p160 = scmp.lt.s32.totalorder %s159, 255
      %s161 = scalar_select %p160, %s159, 255
      %s162 = smul.addr %s161, 4
      %s163 = scalar_lea.vmem %s3, %s162
      %s164 = smul.u32 128, %s14
      %p165 = scmp.lt.s32.totalorder %s164, 255
      %s166 = scalar_select %p165, %s164, 255
      %s167 = smul.addr %s166, 3
      %s168 = smul.addr %s167, 4
      %s169 = scalar_lea.vmem %s0, %s168
      %s170 = smul.u32 128, %s14
      %s171 = smul.u32 128, %s14
      %p172 = scmp.lt.s32.totalorder %s171, 255
      %s173 = scalar_select %p172, %s171, 255
      %s174 = smul.addr %s173, 4
      %s175 = scalar_lea.vmem %s3, %s174
      %s176 = smul.u32 128, %s14
      %v178 = vld [vmem:[%s169] sm:$0xff]
      %v179 = vld [vmem:[%s169 + $0x8] sm:$0xf]
      %v180 = vld [vmem:[%s169 + $0xc] sm:$0xff]
      %v181 = vld [vmem:[%s169 + $0x14] sm:$0xf]
      %v182 = vld [vmem:[%s169 + $0x18] sm:$0xff]
      %v183 = vld [vmem:[%s169 + $0x20] sm:$0xf]
      %v184 = vld [vmem:[%s169 + $0x24] sm:$0xff]
      %v185 = vld [vmem:[%s169 + $0x2c] sm:$0xf]
      %v186 = vld [vmem:[%s169 + $0x30] sm:$0xff]
      %v187 = vld [vmem:[%s169 + $0x38] sm:$0xf]
      %v188 = vld [vmem:[%s169 + $0x3c] sm:$0xff]
      %v189 = vld [vmem:[%s169 + $0x44] sm:$0xf]
      %v190 = vld [vmem:[%s169 + $0x48] sm:$0xff]
      %v191 = vld [vmem:[%s169 + $0x50] sm:$0xf]
      %v192 = vld [vmem:[%s169 + $0x54] sm:$0xff]
      %v193 = vld [vmem:[%s169 + $0x5c] sm:$0xf]
      %v194 = vld [vmem:[%s169 + $0x60] sm:$0xff]
      %v195 = vld [vmem:[%s169 + $0x68] sm:$0xf]
      %v196 = vld [vmem:[%s169 + $0x6c] sm:$0xff]
      %v197 = vld [vmem:[%s169 + $0x74] sm:$0xf]
      %v198 = vld [vmem:[%s169 + $0x78] sm:$0xff]
      %v199 = vld [vmem:[%s169 + $0x80] sm:$0xf]
      %v200 = vld [vmem:[%s169 + $0x84] sm:$0xff]
      %v201 = vld [vmem:[%s169 + $0x8c] sm:$0xf]
      %v202 = vld [vmem:[%s169 + $0x90] sm:$0xff]
      %v203 = vld [vmem:[%s169 + $0x98] sm:$0xf]
      %v204 = vld [vmem:[%s169 + $0x9c] sm:$0xff]
      %v205 = vld [vmem:[%s169 + $0xa4] sm:$0xf]
      %v206 = vld [vmem:[%s169 + $0xa8] sm:$0xff]
      %v207 = vld [vmem:[%s169 + $0xb0] sm:$0xf]
      %v208 = vld [vmem:[%s169 + $0xb4] sm:$0xff]
      %v209 = vld [vmem:[%s169 + $0xbc] sm:$0xf]
      %v210 = vld [vmem:[%s169 + $0xc0] sm:$0xff]
      %v211 = vld [vmem:[%s169 + $0xc8] sm:$0xf]
      %v212 = vld [vmem:[%s169 + $0xcc] sm:$0xff]
      %v213 = vld [vmem:[%s169 + $0xd4] sm:$0xf]
      %v214 = vld [vmem:[%s169 + $0xd8] sm:$0xff]
      %v215 = vld [vmem:[%s169 + $0xe0] sm:$0xf]
      %v216 = vld [vmem:[%s169 + $0xe4] sm:$0xff]
      %v217 = vld [vmem:[%s169 + $0xec] sm:$0xf]
      %v218 = vld [vmem:[%s169 + $0xf0] sm:$0xff]
      %v219 = vld [vmem:[%s169 + $0xf8] sm:$0xf]
      %v220 = vld [vmem:[%s169 + $0xfc] sm:$0xff]
      %v221 = vld [vmem:[%s169 + $0x104] sm:$0xf]
      %v222 = vld [vmem:[%s169 + $0x108] sm:$0xff]
      %v223 = vld [vmem:[%s169 + $0x110] sm:$0xf]
      %v224 = vld [vmem:[%s169 + $0x114] sm:$0xff]
      %v225 = vld [vmem:[%s169 + $0x11c] sm:$0xf]
      %v226 = vld [vmem:[%s169 + $0x120] sm:$0xff]
      %v227 = vld [vmem:[%s169 + $0x128] sm:$0xf]
      %v228 = vld [vmem:[%s169 + $0x12c] sm:$0xff]
      %v229 = vld [vmem:[%s169 + $0x134] sm:$0xf]
      %v230 = vld [vmem:[%s169 + $0x138] sm:$0xff]
      %v231 = vld [vmem:[%s169 + $0x140] sm:$0xf]
      %v232 = vld [vmem:[%s169 + $0x144] sm:$0xff]
      %v233 = vld [vmem:[%s169 + $0x14c] sm:$0xf]
      %v234 = vld [vmem:[%s169 + $0x150] sm:$0xff]
      %v235 = vld [vmem:[%s169 + $0x158] sm:$0xf]
      %v236 = vld [vmem:[%s169 + $0x15c] sm:$0xff]
      %v237 = vld [vmem:[%s169 + $0x164] sm:$0xf]
      %v238 = vld [vmem:[%s169 + $0x168] sm:$0xff]
      %v239 = vld [vmem:[%s169 + $0x170] sm:$0xf]
      %v240 = vld [vmem:[%s169 + $0x174] sm:$0xff]
      %v241 = vld [vmem:[%s169 + $0x17c] sm:$0xf]
      %v242 = vld [vmem:[%s169 + $0x180] sm:$0xff]
      %v243 = vld [vmem:[%s169 + $0x188] sm:$0xf]
      %v244 = vld [vmem:[%s169 + $0x18c] sm:$0xff]
      %v245 = vld [vmem:[%s169 + $0x194] sm:$0xf]
      %v246 = vld [vmem:[%s169 + $0x198] sm:$0xff]
      %v247 = vld [vmem:[%s169 + $0x1a0] sm:$0xf]
      %v248 = vld [vmem:[%s169 + $0x1a4] sm:$0xff]
      %v249 = vld [vmem:[%s169 + $0x1ac] sm:$0xf]
      %v250 = vld [vmem:[%s169 + $0x1b0] sm:$0xff]
      %v251 = vld [vmem:[%s169 + $0x1b8] sm:$0xf]
      %v252 = vld [vmem:[%s169 + $0x1bc] sm:$0xff]
      %v253 = vld [vmem:[%s169 + $0x1c4] sm:$0xf]
      %v254 = vld [vmem:[%s169 + $0x1c8] sm:$0xff]
      %v255 = vld [vmem:[%s169 + $0x1d0] sm:$0xf]
      %v256 = vld [vmem:[%s169 + $0x1d4] sm:$0xff]
      %v257 = vld [vmem:[%s169 + $0x1dc] sm:$0xf]
      %v258 = vld [vmem:[%s169 + $0x1e0] sm:$0xff]
      %v259 = vld [vmem:[%s169 + $0x1e8] sm:$0xf]
      %v260 = vld [vmem:[%s169 + $0x1ec] sm:$0xff]
      %v261 = vld [vmem:[%s169 + $0x1f4] sm:$0xf]
      %v262 = vld [vmem:[%s169 + $0x1f8] sm:$0xff]
      %v263 = vld [vmem:[%s169 + $0x200] sm:$0xf]
      %v264 = vld [vmem:[%s169 + $0x204] sm:$0xff]
      %v265 = vld [vmem:[%s169 + $0x20c] sm:$0xf]
      %v266 = vld [vmem:[%s169 + $0x210] sm:$0xff]
      %v267 = vld [vmem:[%s169 + $0x218] sm:$0xf]
      %v268 = vld [vmem:[%s169 + $0x21c] sm:$0xff]
      %v269 = vld [vmem:[%s169 + $0x224] sm:$0xf]
      %v270 = vld [vmem:[%s169 + $0x228] sm:$0xff]
      %v271 = vld [vmem:[%s169 + $0x230] sm:$0xf]
      %v272 = vld [vmem:[%s169 + $0x234] sm:$0xff]
      %v273 = vld [vmem:[%s169 + $0x23c] sm:$0xf]
      %v274 = vld [vmem:[%s169 + $0x240] sm:$0xff]
      %v275 = vld [vmem:[%s169 + $0x248] sm:$0xf]
      %v276 = vld [vmem:[%s169 + $0x24c] sm:$0xff]
      %v277 = vld [vmem:[%s169 + $0x254] sm:$0xf]
      %v278 = vld [vmem:[%s169 + $0x258] sm:$0xff]
      %v279 = vld [vmem:[%s169 + $0x260] sm:$0xf]
      %v280 = vld [vmem:[%s169 + $0x264] sm:$0xff]
      %v281 = vld [vmem:[%s169 + $0x26c] sm:$0xf]
      %v282 = vld [vmem:[%s169 + $0x270] sm:$0xff]
      %v283 = vld [vmem:[%s169 + $0x278] sm:$0xf]
      %v284 = vld [vmem:[%s169 + $0x27c] sm:$0xff]
      %v285 = vld [vmem:[%s169 + $0x284] sm:$0xf]
      %v286 = vld [vmem:[%s169 + $0x288] sm:$0xff]
      %v287 = vld [vmem:[%s169 + $0x290] sm:$0xf]
      %v288 = vld [vmem:[%s169 + $0x294] sm:$0xff]
      %v289 = vld [vmem:[%s169 + $0x29c] sm:$0xf]
      %v290 = vld [vmem:[%s169 + $0x2a0] sm:$0xff]
      %v291 = vld [vmem:[%s169 + $0x2a8] sm:$0xf]
      %v292 = vld [vmem:[%s169 + $0x2ac] sm:$0xff]
      %v293 = vld [vmem:[%s169 + $0x2b4] sm:$0xf]
      %v294 = vld [vmem:[%s169 + $0x2b8] sm:$0xff]
      %v295 = vld [vmem:[%s169 + $0x2c0] sm:$0xf]
      %v296 = vld [vmem:[%s169 + $0x2c4] sm:$0xff]
      %v297 = vld [vmem:[%s169 + $0x2cc] sm:$0xf]
      %v298 = vld [vmem:[%s169 + $0x2d0] sm:$0xff]
      %v299 = vld [vmem:[%s169 + $0x2d8] sm:$0xf]
      %v300 = vld [vmem:[%s169 + $0x2dc] sm:$0xff]
      %v301 = vld [vmem:[%s169 + $0x2e4] sm:$0xf]
      %v302 = vld [vmem:[%s169 + $0x2e8] sm:$0xff]
      %v303 = vld [vmem:[%s169 + $0x2f0] sm:$0xf]
      %v304 = vld [vmem:[%s169 + $0x2f4] sm:$0xff]
      %v305 = vld [vmem:[%s169 + $0x2fc] sm:$0xf]
      %v306 = vld [vmem:[%s169 + $0x300] sm:$0xff]
      %v307 = vld [vmem:[%s169 + $0x308] sm:$0xf]
      %v308 = vld [vmem:[%s169 + $0x30c] sm:$0xff]
      %v309 = vld [vmem:[%s169 + $0x314] sm:$0xf]
      %v310 = vld [vmem:[%s169 + $0x318] sm:$0xff]
      %v311 = vld [vmem:[%s169 + $0x320] sm:$0xf]
      %v312 = vld [vmem:[%s169 + $0x324] sm:$0xff]
      %v313 = vld [vmem:[%s169 + $0x32c] sm:$0xf]
      %v314 = vld [vmem:[%s169 + $0x330] sm:$0xff]
      %v315 = vld [vmem:[%s169 + $0x338] sm:$0xf]
      %v316 = vld [vmem:[%s169 + $0x33c] sm:$0xff]
      %v317 = vld [vmem:[%s169 + $0x344] sm:$0xf]
      %v318 = vld [vmem:[%s169 + $0x348] sm:$0xff]
      %v319 = vld [vmem:[%s169 + $0x350] sm:$0xf]
      %v320 = vld [vmem:[%s169 + $0x354] sm:$0xff]
      %v321 = vld [vmem:[%s169 + $0x35c] sm:$0xf]
      %v322 = vld [vmem:[%s169 + $0x360] sm:$0xff]
      %v323 = vld [vmem:[%s169 + $0x368] sm:$0xf]
      %v324 = vld [vmem:[%s169 + $0x36c] sm:$0xff]
      %v325 = vld [vmem:[%s169 + $0x374] sm:$0xf]
      %v326 = vld [vmem:[%s169 + $0x378] sm:$0xff]
      %v327 = vld [vmem:[%s169 + $0x380] sm:$0xf]
      %v328 = vld [vmem:[%s169 + $0x384] sm:$0xff]
      %v329 = vld [vmem:[%s169 + $0x38c] sm:$0xf]
      %v330 = vld [vmem:[%s169 + $0x390] sm:$0xff]
      %v331 = vld [vmem:[%s169 + $0x398] sm:$0xf]
      %v332 = vld [vmem:[%s169 + $0x39c] sm:$0xff]
      %v333 = vld [vmem:[%s169 + $0x3a4] sm:$0xf]
      %v334 = vld [vmem:[%s169 + $0x3a8] sm:$0xff]
      %v335 = vld [vmem:[%s169 + $0x3b0] sm:$0xf]
      %v336 = vld [vmem:[%s169 + $0x3b4] sm:$0xff]
      %v337 = vld [vmem:[%s169 + $0x3bc] sm:$0xf]
      %v338 = vld [vmem:[%s169 + $0x3c0] sm:$0xff]
      %v339 = vld [vmem:[%s169 + $0x3c8] sm:$0xf]
      %v340 = vld [vmem:[%s169 + $0x3cc] sm:$0xff]
      %v341 = vld [vmem:[%s169 + $0x3d4] sm:$0xf]
      %v342 = vld [vmem:[%s169 + $0x3d8] sm:$0xff]
      %v343 = vld [vmem:[%s169 + $0x3e0] sm:$0xf]
      %v344 = vld [vmem:[%s169 + $0x3e4] sm:$0xff]
      %v345 = vld [vmem:[%s169 + $0x3ec] sm:$0xf]
      %v346 = vld [vmem:[%s169 + $0x3f0] sm:$0xff]
      %v347 = vld [vmem:[%s169 + $0x3f8] sm:$0xf]
      %v348 = vld [vmem:[%s169 + $0x3fc] sm:$0xff]
      %v349 = vld [vmem:[%s169 + $0x404] sm:$0xf]
      %v350 = vld [vmem:[%s169 + $0x408] sm:$0xff]
      %v351 = vld [vmem:[%s169 + $0x410] sm:$0xf]
      %v352 = vld [vmem:[%s169 + $0x414] sm:$0xff]
      %v353 = vld [vmem:[%s169 + $0x41c] sm:$0xf]
      %v354 = vld [vmem:[%s169 + $0x420] sm:$0xff]
      %v355 = vld [vmem:[%s169 + $0x428] sm:$0xf]
      %v356 = vld [vmem:[%s169 + $0x42c] sm:$0xff]
      %v357 = vld [vmem:[%s169 + $0x434] sm:$0xf]
      %v358 = vld [vmem:[%s169 + $0x438] sm:$0xff]
      %v359 = vld [vmem:[%s169 + $0x440] sm:$0xf]
      %v360 = vld [vmem:[%s169 + $0x444] sm:$0xff]
      %v361 = vld [vmem:[%s169 + $0x44c] sm:$0xf]
      %v362 = vld [vmem:[%s169 + $0x450] sm:$0xff]
      %v363 = vld [vmem:[%s169 + $0x458] sm:$0xf]
      %v364 = vld [vmem:[%s169 + $0x45c] sm:$0xff]
      %v365 = vld [vmem:[%s169 + $0x464] sm:$0xf]
      %v366 = vld [vmem:[%s169 + $0x468] sm:$0xff]
      %v367 = vld [vmem:[%s169 + $0x470] sm:$0xf]
      %v368 = vld [vmem:[%s169 + $0x474] sm:$0xff]
      %v369 = vld [vmem:[%s169 + $0x47c] sm:$0xf]
      %v370 = vld [vmem:[%s169 + $0x480] sm:$0xff]
      %v371 = vld [vmem:[%s169 + $0x488] sm:$0xf]
      %v372 = vld [vmem:[%s169 + $0x48c] sm:$0xff]
      %v373 = vld [vmem:[%s169 + $0x494] sm:$0xf]
      %v374 = vld [vmem:[%s169 + $0x498] sm:$0xff]
      %v375 = vld [vmem:[%s169 + $0x4a0] sm:$0xf]
      %v376 = vld [vmem:[%s169 + $0x4a4] sm:$0xff]
      %v377 = vld [vmem:[%s169 + $0x4ac] sm:$0xf]
      %v378 = vld [vmem:[%s169 + $0x4b0] sm:$0xff]
      %v379 = vld [vmem:[%s169 + $0x4b8] sm:$0xf]
      %v380 = vld [vmem:[%s169 + $0x4bc] sm:$0xff]
      %v381 = vld [vmem:[%s169 + $0x4c4] sm:$0xf]
      %v382 = vld [vmem:[%s169 + $0x4c8] sm:$0xff]
      %v383 = vld [vmem:[%s169 + $0x4d0] sm:$0xf]
      %v384 = vld [vmem:[%s169 + $0x4d4] sm:$0xff]
      %v385 = vld [vmem:[%s169 + $0x4dc] sm:$0xf]
      %v386 = vld [vmem:[%s169 + $0x4e0] sm:$0xff]
      %v387 = vld [vmem:[%s169 + $0x4e8] sm:$0xf]
      %v388 = vld [vmem:[%s169 + $0x4ec] sm:$0xff]
      %v389 = vld [vmem:[%s169 + $0x4f4] sm:$0xf]
      %v390 = vld [vmem:[%s169 + $0x4f8] sm:$0xff]
      %v391 = vld [vmem:[%s169 + $0x500] sm:$0xf]
      %v392 = vld [vmem:[%s169 + $0x504] sm:$0xff]
      %v393 = vld [vmem:[%s169 + $0x50c] sm:$0xf]
      %v394 = vld [vmem:[%s169 + $0x510] sm:$0xff]
      %v395 = vld [vmem:[%s169 + $0x518] sm:$0xf]
      %v396 = vld [vmem:[%s169 + $0x51c] sm:$0xff]
      %v397 = vld [vmem:[%s169 + $0x524] sm:$0xf]
      %v398 = vld [vmem:[%s169 + $0x528] sm:$0xff]
      %v399 = vld [vmem:[%s169 + $0x530] sm:$0xf]
      %v400 = vld [vmem:[%s169 + $0x534] sm:$0xff]
      %v401 = vld [vmem:[%s169 + $0x53c] sm:$0xf]
      %v402 = vld [vmem:[%s169 + $0x540] sm:$0xff]
      %v403 = vld [vmem:[%s169 + $0x548] sm:$0xf]
      %v404 = vld [vmem:[%s169 + $0x54c] sm:$0xff]
      %v405 = vld [vmem:[%s169 + $0x554] sm:$0xf]
      %v406 = vld [vmem:[%s169 + $0x558] sm:$0xff]
      %v407 = vld [vmem:[%s169 + $0x560] sm:$0xf]
      %v408 = vld [vmem:[%s169 + $0x564] sm:$0xff]
      %v409 = vld [vmem:[%s169 + $0x56c] sm:$0xf]
      %v410 = vld [vmem:[%s169 + $0x570] sm:$0xff]
      %v411 = vld [vmem:[%s169 + $0x578] sm:$0xf]
      %v412 = vld [vmem:[%s169 + $0x57c] sm:$0xff]
      %v413 = vld [vmem:[%s169 + $0x584] sm:$0xf]
      %v414 = vld [vmem:[%s169 + $0x588] sm:$0xff]
      %v415 = vld [vmem:[%s169 + $0x590] sm:$0xf]
      %v416 = vld [vmem:[%s169 + $0x594] sm:$0xff]
      %v417 = vld [vmem:[%s169 + $0x59c] sm:$0xf]
      %v418 = vld [vmem:[%s169 + $0x5a0] sm:$0xff]
      %v419 = vld [vmem:[%s169 + $0x5a8] sm:$0xf]
      %v420 = vld [vmem:[%s169 + $0x5ac] sm:$0xff]
      %v421 = vld [vmem:[%s169 + $0x5b4] sm:$0xf]
      %v422 = vld [vmem:[%s169 + $0x5b8] sm:$0xff]
      %v423 = vld [vmem:[%s169 + $0x5c0] sm:$0xf]
      %v424 = vld [vmem:[%s169 + $0x5c4] sm:$0xff]
      %v425 = vld [vmem:[%s169 + $0x5cc] sm:$0xf]
      %v426 = vld [vmem:[%s169 + $0x5d0] sm:$0xff]
      %v427 = vld [vmem:[%s169 + $0x5d8] sm:$0xf]
      %v428 = vld [vmem:[%s169 + $0x5dc] sm:$0xff]
      %v429 = vld [vmem:[%s169 + $0x5e4] sm:$0xf]
      %v430 = vld [vmem:[%s169 + $0x5e8] sm:$0xff]
      %v431 = vld [vmem:[%s169 + $0x5f0] sm:$0xf]
      %v432 = vld [vmem:[%s169 + $0x5f4] sm:$0xff]
      %v433 = vld [vmem:[%s169 + $0x5fc] sm:$0xf]
      %v434 = vld [vmem:[%s1] sm:$0xf]
      %v435 = vld [vmem:[%s1 + $0x4] sm:$0xf]
      %v436 = vld [vmem:[%s1 + $0x8] sm:$0xf]
      %v437 = vld [vmem:[%s1 + $0xc] sm:$0xf]
      %v438 = vld [vmem:[%s1 + $0x10] sm:$0xf]
      %v439 = vld [vmem:[%s1 + $0x14] sm:$0xf]
      %v440 = vld [vmem:[%s1 + $0x18] sm:$0xf]
      %v441 = vld [vmem:[%s1 + $0x1c] sm:$0xf]
      %v442 = vld [vmem:[%s1 + $0x20] sm:$0xf]
      %v443 = vld [vmem:[%s1 + $0x24] sm:$0xf]
      %v444 = vld [vmem:[%s1 + $0x28] sm:$0xf]
      %v445 = vld [vmem:[%s1 + $0x2c] sm:$0xf]
      %v446 = vld [vmem:[%s1 + $0x30] sm:$0xf]
      %v447 = vld [vmem:[%s1 + $0x34] sm:$0xf]
      %v448 = vld [vmem:[%s1 + $0x38] sm:$0xf]
      %v449 = vld [vmem:[%s1 + $0x3c] sm:$0xf]
      %v450 = vld [vmem:[%s1 + $0x40] sm:$0xf]
      %v451 = vld [vmem:[%s1 + $0x44] sm:$0xf]
      %v452 = vld [vmem:[%s1 + $0x48] sm:$0xf]
      %v453 = vld [vmem:[%s1 + $0x4c] sm:$0xf]
      %v454 = vld [vmem:[%s1 + $0x50] sm:$0xf]
      %v455 = vld [vmem:[%s1 + $0x54] sm:$0xf]
      %v456 = vld [vmem:[%s1 + $0x58] sm:$0xf]
      %v457 = vld [vmem:[%s1 + $0x5c] sm:$0xf]
      %v458 = vld [vmem:[%s1 + $0x60] sm:$0xf]
      %v459 = vld [vmem:[%s1 + $0x64] sm:$0xf]
      %v460 = vld [vmem:[%s1 + $0x68] sm:$0xf]
      %v461 = vld [vmem:[%s1 + $0x6c] sm:$0xf]
      %v462 = vld [vmem:[%s1 + $0x70] sm:$0xf]
      %v463 = vld [vmem:[%s1 + $0x74] sm:$0xf]
      %v464 = vld [vmem:[%s1 + $0x78] sm:$0xf]
      %v465 = vld [vmem:[%s1 + $0x7c] sm:$0xf]
      %v466 = vld [vmem:[%s1 + $0x80] sm:$0xf]
      %v467 = vld [vmem:[%s1 + $0x84] sm:$0xf]
      %v468 = vld [vmem:[%s1 + $0x88] sm:$0xf]
      %v469 = vld [vmem:[%s1 + $0x8c] sm:$0xf]
      %v470 = vld [vmem:[%s2] sm:$0x1]
      %v472 = vlaneseq
      %v473 = vshrl.u32 %v472, 7
      %v474 = vsub.s32 0, %v473
      %v475 = vrot.slane %v470, %v474
      %v733 = vunpack.c.l.b16 %v178
      %v734 = vunpack.c.h.b16 %v178
      %v735 = vunpack.c.l.b16 %v179
      %v736 = vunpack.c.l.b16 %v180
      %v737 = vunpack.c.h.b16 %v180
      %v738 = vunpack.c.l.b16 %v181
      %v739 = vunpack.c.l.b16 %v182
      %v740 = vunpack.c.h.b16 %v182
      %v741 = vunpack.c.l.b16 %v183
      %v742 = vunpack.c.l.b16 %v184
      %v743 = vunpack.c.h.b16 %v184
      %v744 = vunpack.c.l.b16 %v185
      %v745 = vunpack.c.l.b16 %v186
      %v746 = vunpack.c.h.b16 %v186
      %v747 = vunpack.c.l.b16 %v187
      %v748 = vunpack.c.l.b16 %v188
      %v749 = vunpack.c.h.b16 %v188
      %v750 = vunpack.c.l.b16 %v189
      %v751 = vunpack.c.l.b16 %v190
      %v752 = vunpack.c.h.b16 %v190
      %v753 = vunpack.c.l.b16 %v191
      %v754 = vunpack.c.l.b16 %v192
      %v755 = vunpack.c.h.b16 %v192
      %v756 = vunpack.c.l.b16 %v193
      %v757 = vunpack.c.l.b16 %v194
      %v758 = vunpack.c.h.b16 %v194
      %v759 = vunpack.c.l.b16 %v195
      %v760 = vunpack.c.l.b16 %v196
      %v761 = vunpack.c.h.b16 %v196
      %v762 = vunpack.c.l.b16 %v197
      %v763 = vunpack.c.l.b16 %v198
      %v764 = vunpack.c.h.b16 %v198
      %v765 = vunpack.c.l.b16 %v199
      %v766 = vunpack.c.l.b16 %v200
      %v767 = vunpack.c.h.b16 %v200
      %v768 = vunpack.c.l.b16 %v201
      %v769 = vunpack.c.l.b16 %v202
      %v770 = vunpack.c.h.b16 %v202
      %v771 = vunpack.c.l.b16 %v203
      %v772 = vunpack.c.l.b16 %v204
      %v773 = vunpack.c.h.b16 %v204
      %v774 = vunpack.c.l.b16 %v205
      %v775 = vunpack.c.l.b16 %v206
      %v776 = vunpack.c.h.b16 %v206
      %v777 = vunpack.c.l.b16 %v207
      %v778 = vunpack.c.l.b16 %v208
      %v779 = vunpack.c.h.b16 %v208
      %v780 = vunpack.c.l.b16 %v209
      %v781 = vunpack.c.l.b16 %v210
      %v782 = vunpack.c.h.b16 %v210
      %v783 = vunpack.c.l.b16 %v211
      %v784 = vunpack.c.l.b16 %v212
      %v785 = vunpack.c.h.b16 %v212
      %v786 = vunpack.c.l.b16 %v213
      %v787 = vunpack.c.l.b16 %v214
      %v788 = vunpack.c.h.b16 %v214
      %v789 = vunpack.c.l.b16 %v215
      %v790 = vunpack.c.l.b16 %v216
      %v791 = vunpack.c.h.b16 %v216
      %v792 = vunpack.c.l.b16 %v217
      %v793 = vunpack.c.l.b16 %v218
      %v794 = vunpack.c.h.b16 %v218
      %v795 = vunpack.c.l.b16 %v219
      %v796 = vunpack.c.l.b16 %v220
      %v797 = vunpack.c.h.b16 %v220
      %v798 = vunpack.c.l.b16 %v221
      %v799 = vunpack.c.l.b16 %v222
      %v800 = vunpack.c.h.b16 %v222
      %v801 = vunpack.c.l.b16 %v223
      %v802 = vunpack.c.l.b16 %v224
      %v803 = vunpack.c.h.b16 %v224
      %v804 = vunpack.c.l.b16 %v225
      %v805 = vunpack.c.l.b16 %v226
      %v806 = vunpack.c.h.b16 %v226
      %v807 = vunpack.c.l.b16 %v227
      %v808 = vunpack.c.l.b16 %v228
      %v809 = vunpack.c.h.b16 %v228
      %v810 = vunpack.c.l.b16 %v229
      %v811 = vunpack.c.l.b16 %v230
      %v812 = vunpack.c.h.b16 %v230
      %v813 = vunpack.c.l.b16 %v231
      %v814 = vunpack.c.l.b16 %v232
      %v815 = vunpack.c.h.b16 %v232
      %v816 = vunpack.c.l.b16 %v233
      %v817 = vunpack.c.l.b16 %v234
      %v818 = vunpack.c.h.b16 %v234
      %v819 = vunpack.c.l.b16 %v235
      %v820 = vunpack.c.l.b16 %v236
      %v821 = vunpack.c.h.b16 %v236
      %v822 = vunpack.c.l.b16 %v237
      %v823 = vunpack.c.l.b16 %v238
      %v824 = vunpack.c.h.b16 %v238
      %v825 = vunpack.c.l.b16 %v239
      %v826 = vunpack.c.l.b16 %v240
      %v827 = vunpack.c.h.b16 %v240
      %v828 = vunpack.c.l.b16 %v241
      %v829 = vunpack.c.l.b16 %v242
      %v830 = vunpack.c.h.b16 %v242
      %v831 = vunpack.c.l.b16 %v243
      %v832 = vunpack.c.l.b16 %v244
      %v833 = vunpack.c.h.b16 %v244
      %v834 = vunpack.c.l.b16 %v245
      %v835 = vunpack.c.l.b16 %v246
      %v836 = vunpack.c.h.b16 %v246
      %v837 = vunpack.c.l.b16 %v247
      %v838 = vunpack.c.l.b16 %v248
      %v839 = vunpack.c.h.b16 %v248
      %v840 = vunpack.c.l.b16 %v249
      %v841 = vunpack.c.l.b16 %v250
      %v842 = vunpack.c.h.b16 %v250
      %v843 = vunpack.c.l.b16 %v251
      %v844 = vunpack.c.l.b16 %v252
      %v845 = vunpack.c.h.b16 %v252
      %v846 = vunpack.c.l.b16 %v253
      %v847 = vunpack.c.l.b16 %v254
      %v848 = vunpack.c.h.b16 %v254
      %v849 = vunpack.c.l.b16 %v255
      %v850 = vunpack.c.l.b16 %v256
      %v851 = vunpack.c.h.b16 %v256
      %v852 = vunpack.c.l.b16 %v257
      %v853 = vunpack.c.l.b16 %v258
      %v854 = vunpack.c.h.b16 %v258
      %v855 = vunpack.c.l.b16 %v259
      %v856 = vunpack.c.l.b16 %v260
      %v857 = vunpack.c.h.b16 %v260
      %v858 = vunpack.c.l.b16 %v261
      %v859 = vunpack.c.l.b16 %v262
      %v860 = vunpack.c.h.b16 %v262
      %v861 = vunpack.c.l.b16 %v263
      %v862 = vunpack.c.l.b16 %v264
      %v863 = vunpack.c.h.b16 %v264
      %v864 = vunpack.c.l.b16 %v265
      %v865 = vunpack.c.l.b16 %v266
      %v866 = vunpack.c.h.b16 %v266
      %v867 = vunpack.c.l.b16 %v267
      %v868 = vunpack.c.l.b16 %v268
      %v869 = vunpack.c.h.b16 %v268
      %v870 = vunpack.c.l.b16 %v269
      %v871 = vunpack.c.l.b16 %v270
      %v872 = vunpack.c.h.b16 %v270
      %v873 = vunpack.c.l.b16 %v271
      %v874 = vunpack.c.l.b16 %v272
      %v875 = vunpack.c.h.b16 %v272
      %v876 = vunpack.c.l.b16 %v273
      %v877 = vunpack.c.l.b16 %v274
      %v878 = vunpack.c.h.b16 %v274
      %v879 = vunpack.c.l.b16 %v275
      %v880 = vunpack.c.l.b16 %v276
      %v881 = vunpack.c.h.b16 %v276
      %v882 = vunpack.c.l.b16 %v277
      %v883 = vunpack.c.l.b16 %v278
      %v884 = vunpack.c.h.b16 %v278
      %v885 = vunpack.c.l.b16 %v279
      %v886 = vunpack.c.l.b16 %v280
      %v887 = vunpack.c.h.b16 %v280
      %v888 = vunpack.c.l.b16 %v281
      %v889 = vunpack.c.l.b16 %v282
      %v890 = vunpack.c.h.b16 %v282
      %v891 = vunpack.c.l.b16 %v283
      %v892 = vunpack.c.l.b16 %v284
      %v893 = vunpack.c.h.b16 %v284
      %v894 = vunpack.c.l.b16 %v285
      %v895 = vunpack.c.l.b16 %v286
      %v896 = vunpack.c.h.b16 %v286
      %v897 = vunpack.c.l.b16 %v287
      %v898 = vunpack.c.l.b16 %v288
      %v899 = vunpack.c.h.b16 %v288
      %v900 = vunpack.c.l.b16 %v289
      %v901 = vunpack.c.l.b16 %v290
      %v902 = vunpack.c.h.b16 %v290
      %v903 = vunpack.c.l.b16 %v291
      %v904 = vunpack.c.l.b16 %v292
      %v905 = vunpack.c.h.b16 %v292
      %v906 = vunpack.c.l.b16 %v293
      %v907 = vunpack.c.l.b16 %v294
      %v908 = vunpack.c.h.b16 %v294
      %v909 = vunpack.c.l.b16 %v295
      %v910 = vunpack.c.l.b16 %v296
      %v911 = vunpack.c.h.b16 %v296
      %v912 = vunpack.c.l.b16 %v297
      %v913 = vunpack.c.l.b16 %v298
      %v914 = vunpack.c.h.b16 %v298
      %v915 = vunpack.c.l.b16 %v299
      %v916 = vunpack.c.l.b16 %v300
      %v917 = vunpack.c.h.b16 %v300
      %v918 = vunpack.c.l.b16 %v301
      %v919 = vunpack.c.l.b16 %v302
      %v920 = vunpack.c.h.b16 %v302
      %v921 = vunpack.c.l.b16 %v303
      %v922 = vunpack.c.l.b16 %v304
      %v923 = vunpack.c.h.b16 %v304
      %v924 = vunpack.c.l.b16 %v305
      %v925 = vunpack.c.l.b16 %v306
      %v926 = vunpack.c.h.b16 %v306
      %v927 = vunpack.c.l.b16 %v307
      %v928 = vunpack.c.l.b16 %v308
      %v929 = vunpack.c.h.b16 %v308
      %v930 = vunpack.c.l.b16 %v309
      %v931 = vunpack.c.l.b16 %v310
      %v932 = vunpack.c.h.b16 %v310
      %v933 = vunpack.c.l.b16 %v311
      %v934 = vunpack.c.l.b16 %v312
      %v935 = vunpack.c.h.b16 %v312
      %v936 = vunpack.c.l.b16 %v313
      %v937 = vunpack.c.l.b16 %v314
      %v938 = vunpack.c.h.b16 %v314
      %v939 = vunpack.c.l.b16 %v315
      %v940 = vunpack.c.l.b16 %v316
      %v941 = vunpack.c.h.b16 %v316
      %v942 = vunpack.c.l.b16 %v317
      %v943 = vunpack.c.l.b16 %v318
      %v944 = vunpack.c.h.b16 %v318
      %v945 = vunpack.c.l.b16 %v319
      %v946 = vunpack.c.l.b16 %v320
      %v947 = vunpack.c.h.b16 %v320
      %v948 = vunpack.c.l.b16 %v321
      %v949 = vunpack.c.l.b16 %v322
      %v950 = vunpack.c.h.b16 %v322
      %v951 = vunpack.c.l.b16 %v323
      %v952 = vunpack.c.l.b16 %v324
      %v953 = vunpack.c.h.b16 %v324
      %v954 = vunpack.c.l.b16 %v325
      %v955 = vunpack.c.l.b16 %v326
      %v956 = vunpack.c.h.b16 %v326
      %v957 = vunpack.c.l.b16 %v327
      %v958 = vunpack.c.l.b16 %v328
      %v959 = vunpack.c.h.b16 %v328
      %v960 = vunpack.c.l.b16 %v329
      %v961 = vunpack.c.l.b16 %v330
      %v962 = vunpack.c.h.b16 %v330
      %v963 = vunpack.c.l.b16 %v331
      %v964 = vunpack.c.l.b16 %v332
      %v965 = vunpack.c.h.b16 %v332
      %v966 = vunpack.c.l.b16 %v333
      %v967 = vunpack.c.l.b16 %v334
      %v968 = vunpack.c.h.b16 %v334
      %v969 = vunpack.c.l.b16 %v335
      %v970 = vunpack.c.l.b16 %v336
      %v971 = vunpack.c.h.b16 %v336
      %v972 = vunpack.c.l.b16 %v337
      %v973 = vunpack.c.l.b16 %v338
      %v974 = vunpack.c.h.b16 %v338
      %v975 = vunpack.c.l.b16 %v339
      %v976 = vunpack.c.l.b16 %v340
      %v977 = vunpack.c.h.b16 %v340
      %v978 = vunpack.c.l.b16 %v341
      %v979 = vunpack.c.l.b16 %v342
      %v980 = vunpack.c.h.b16 %v342
      %v981 = vunpack.c.l.b16 %v343
      %v982 = vunpack.c.l.b16 %v344
      %v983 = vunpack.c.h.b16 %v344
      %v984 = vunpack.c.l.b16 %v345
      %v985 = vunpack.c.l.b16 %v346
      %v986 = vunpack.c.h.b16 %v346
      %v987 = vunpack.c.l.b16 %v347
      %v988 = vunpack.c.l.b16 %v348
      %v989 = vunpack.c.h.b16 %v348
      %v990 = vunpack.c.l.b16 %v349
      %v991 = vunpack.c.l.b16 %v350
      %v992 = vunpack.c.h.b16 %v350
      %v993 = vunpack.c.l.b16 %v351
      %v994 = vunpack.c.l.b16 %v352
      %v995 = vunpack.c.h.b16 %v352
      %v996 = vunpack.c.l.b16 %v353
      %v997 = vunpack.c.l.b16 %v354
      %v998 = vunpack.c.h.b16 %v354
      %v999 = vunpack.c.l.b16 %v355
      %v1000 = vunpack.c.l.b16 %v356
      %v1001 = vunpack.c.h.b16 %v356
      %v1002 = vunpack.c.l.b16 %v357
      %v1003 = vunpack.c.l.b16 %v358
      %v1004 = vunpack.c.h.b16 %v358
      %v1005 = vunpack.c.l.b16 %v359
      %v1006 = vunpack.c.l.b16 %v360
      %v1007 = vunpack.c.h.b16 %v360
      %v1008 = vunpack.c.l.b16 %v361
      %v1009 = vunpack.c.l.b16 %v362
      %v1010 = vunpack.c.h.b16 %v362
      %v1011 = vunpack.c.l.b16 %v363
      %v1012 = vunpack.c.l.b16 %v364
      %v1013 = vunpack.c.h.b16 %v364
      %v1014 = vunpack.c.l.b16 %v365
      %v1015 = vunpack.c.l.b16 %v366
      %v1016 = vunpack.c.h.b16 %v366
      %v1017 = vunpack.c.l.b16 %v367
      %v1018 = vunpack.c.l.b16 %v368
      %v1019 = vunpack.c.h.b16 %v368
      %v1020 = vunpack.c.l.b16 %v369
      %v1021 = vunpack.c.l.b16 %v370
      %v1022 = vunpack.c.h.b16 %v370
      %v1023 = vunpack.c.l.b16 %v371
      %v1024 = vunpack.c.l.b16 %v372
      %v1025 = vunpack.c.h.b16 %v372
      %v1026 = vunpack.c.l.b16 %v373
      %v1027 = vunpack.c.l.b16 %v374
      %v1028 = vunpack.c.h.b16 %v374
      %v1029 = vunpack.c.l.b16 %v375
      %v1030 = vunpack.c.l.b16 %v376
      %v1031 = vunpack.c.h.b16 %v376
      %v1032 = vunpack.c.l.b16 %v377
      %v1033 = vunpack.c.l.b16 %v378
      %v1034 = vunpack.c.h.b16 %v378
      %v1035 = vunpack.c.l.b16 %v379
      %v1036 = vunpack.c.l.b16 %v380
      %v1037 = vunpack.c.h.b16 %v380
      %v1038 = vunpack.c.l.b16 %v381
      %v1039 = vunpack.c.l.b16 %v382
      %v1040 = vunpack.c.h.b16 %v382
      %v1041 = vunpack.c.l.b16 %v383
      %v1042 = vunpack.c.l.b16 %v384
      %v1043 = vunpack.c.h.b16 %v384
      %v1044 = vunpack.c.l.b16 %v385
      %v1045 = vunpack.c.l.b16 %v386
      %v1046 = vunpack.c.h.b16 %v386
      %v1047 = vunpack.c.l.b16 %v387
      %v1048 = vunpack.c.l.b16 %v388
      %v1049 = vunpack.c.h.b16 %v388
      %v1050 = vunpack.c.l.b16 %v389
      %v1051 = vunpack.c.l.b16 %v390
      %v1052 = vunpack.c.h.b16 %v390
      %v1053 = vunpack.c.l.b16 %v391
      %v1054 = vunpack.c.l.b16 %v392
      %v1055 = vunpack.c.h.b16 %v392
      %v1056 = vunpack.c.l.b16 %v393
      %v1057 = vunpack.c.l.b16 %v394
      %v1058 = vunpack.c.h.b16 %v394
      %v1059 = vunpack.c.l.b16 %v395
      %v1060 = vunpack.c.l.b16 %v396
      %v1061 = vunpack.c.h.b16 %v396
      %v1062 = vunpack.c.l.b16 %v397
      %v1063 = vunpack.c.l.b16 %v398
      %v1064 = vunpack.c.h.b16 %v398
      %v1065 = vunpack.c.l.b16 %v399
      %v1066 = vunpack.c.l.b16 %v400
      %v1067 = vunpack.c.h.b16 %v400
      %v1068 = vunpack.c.l.b16 %v401
      %v1069 = vunpack.c.l.b16 %v402
      %v1070 = vunpack.c.h.b16 %v402
      %v1071 = vunpack.c.l.b16 %v403
      %v1072 = vunpack.c.l.b16 %v404
      %v1073 = vunpack.c.h.b16 %v404
      %v1074 = vunpack.c.l.b16 %v405
      %v1075 = vunpack.c.l.b16 %v406
      %v1076 = vunpack.c.h.b16 %v406
      %v1077 = vunpack.c.l.b16 %v407
      %v1078 = vunpack.c.l.b16 %v408
      %v1079 = vunpack.c.h.b16 %v408
      %v1080 = vunpack.c.l.b16 %v409
      %v1081 = vunpack.c.l.b16 %v410
      %v1082 = vunpack.c.h.b16 %v410
      %v1083 = vunpack.c.l.b16 %v411
      %v1084 = vunpack.c.l.b16 %v412
      %v1085 = vunpack.c.h.b16 %v412
      %v1086 = vunpack.c.l.b16 %v413
      %v1087 = vunpack.c.l.b16 %v414
      %v1088 = vunpack.c.h.b16 %v414
      %v1089 = vunpack.c.l.b16 %v415
      %v1090 = vunpack.c.l.b16 %v416
      %v1091 = vunpack.c.h.b16 %v416
      %v1092 = vunpack.c.l.b16 %v417
      %v1093 = vunpack.c.l.b16 %v418
      %v1094 = vunpack.c.h.b16 %v418
      %v1095 = vunpack.c.l.b16 %v419
      %v1096 = vunpack.c.l.b16 %v420
      %v1097 = vunpack.c.h.b16 %v420
      %v1098 = vunpack.c.l.b16 %v421
      %v1099 = vunpack.c.l.b16 %v422
      %v1100 = vunpack.c.h.b16 %v422
      %v1101 = vunpack.c.l.b16 %v423
      %v1102 = vunpack.c.l.b16 %v424
      %v1103 = vunpack.c.h.b16 %v424
      %v1104 = vunpack.c.l.b16 %v425
      %v1105 = vunpack.c.l.b16 %v426
      %v1106 = vunpack.c.h.b16 %v426
      %v1107 = vunpack.c.l.b16 %v427
      %v1108 = vunpack.c.l.b16 %v428
      %v1109 = vunpack.c.h.b16 %v428
      %v1110 = vunpack.c.l.b16 %v429
      %v1111 = vunpack.c.l.b16 %v430
      %v1112 = vunpack.c.h.b16 %v430
      %v1113 = vunpack.c.l.b16 %v431
      %v1114 = vunpack.c.l.b16 %v432
      %v1115 = vunpack.c.h.b16 %v432
      %v1116 = vunpack.c.l.b16 %v433
      %v1117 = vpack.c.b16 %v736, %v733
      %v1118 = vpack.c.b16 %v737, %v734
      %v1119 = vpack.c.b16 %v738, %v735
      %v1120 = vpack.c.b16 %v742, %v739
      %v1121 = vpack.c.b16 %v743, %v740
      %v1122 = vpack.c.b16 %v744, %v741
      %v1123 = vpack.c.b16 %v748, %v745
      %v1124 = vpack.c.b16 %v749, %v746
      %v1125 = vpack.c.b16 %v750, %v747
      %v1126 = vpack.c.b16 %v754, %v751
      %v1127 = vpack.c.b16 %v755, %v752
      %v1128 = vpack.c.b16 %v756, %v753
      %v1129 = vpack.c.b16 %v760, %v757
      %v1130 = vpack.c.b16 %v761, %v758
      %v1131 = vpack.c.b16 %v762, %v759
      %v1132 = vpack.c.b16 %v766, %v763
      %v1133 = vpack.c.b16 %v767, %v764
      %v1134 = vpack.c.b16 %v768, %v765
      %v1135 = vpack.c.b16 %v772, %v769
      %v1136 = vpack.c.b16 %v773, %v770
      %v1137 = vpack.c.b16 %v774, %v771
      %v1138 = vpack.c.b16 %v778, %v775
      %v1139 = vpack.c.b16 %v779, %v776
      %v1140 = vpack.c.b16 %v780, %v777
      %v1141 = vpack.c.b16 %v784, %v781
      %v1142 = vpack.c.b16 %v785, %v782
      %v1143 = vpack.c.b16 %v786, %v783
      %v1144 = vpack.c.b16 %v790, %v787
      %v1145 = vpack.c.b16 %v791, %v788
      %v1146 = vpack.c.b16 %v792, %v789
      %v1147 = vpack.c.b16 %v796, %v793
      %v1148 = vpack.c.b16 %v797, %v794
      %v1149 = vpack.c.b16 %v798, %v795
      %v1150 = vpack.c.b16 %v802, %v799
      %v1151 = vpack.c.b16 %v803, %v800
      %v1152 = vpack.c.b16 %v804, %v801
      %v1153 = vpack.c.b16 %v808, %v805
      %v1154 = vpack.c.b16 %v809, %v806
      %v1155 = vpack.c.b16 %v810, %v807
      %v1156 = vpack.c.b16 %v814, %v811
      %v1157 = vpack.c.b16 %v815, %v812
      %v1158 = vpack.c.b16 %v816, %v813
      %v1159 = vpack.c.b16 %v820, %v817
      %v1160 = vpack.c.b16 %v821, %v818
      %v1161 = vpack.c.b16 %v822, %v819
      %v1162 = vpack.c.b16 %v826, %v823
      %v1163 = vpack.c.b16 %v827, %v824
      %v1164 = vpack.c.b16 %v828, %v825
      %v1165 = vpack.c.b16 %v832, %v829
      %v1166 = vpack.c.b16 %v833, %v830
      %v1167 = vpack.c.b16 %v834, %v831
      %v1168 = vpack.c.b16 %v838, %v835
      %v1169 = vpack.c.b16 %v839, %v836
      %v1170 = vpack.c.b16 %v840, %v837
      %v1171 = vpack.c.b16 %v844, %v841
      %v1172 = vpack.c.b16 %v845, %v842
      %v1173 = vpack.c.b16 %v846, %v843
      %v1174 = vpack.c.b16 %v850, %v847
      %v1175 = vpack.c.b16 %v851, %v848
      %v1176 = vpack.c.b16 %v852, %v849
      %v1177 = vpack.c.b16 %v856, %v853
      %v1178 = vpack.c.b16 %v857, %v854
      %v1179 = vpack.c.b16 %v858, %v855
      %v1180 = vpack.c.b16 %v862, %v859
      %v1181 = vpack.c.b16 %v863, %v860
      %v1182 = vpack.c.b16 %v864, %v861
      %v1183 = vpack.c.b16 %v868, %v865
      %v1184 = vpack.c.b16 %v869, %v866
      %v1185 = vpack.c.b16 %v870, %v867
      %v1186 = vpack.c.b16 %v874, %v871
      %v1187 = vpack.c.b16 %v875, %v872
      %v1188 = vpack.c.b16 %v876, %v873
      %v1189 = vpack.c.b16 %v880, %v877
      %v1190 = vpack.c.b16 %v881, %v878
      %v1191 = vpack.c.b16 %v882, %v879
      %v1192 = vpack.c.b16 %v886, %v883
      %v1193 = vpack.c.b16 %v887, %v884
      %v1194 = vpack.c.b16 %v888, %v885
      %v1195 = vpack.c.b16 %v892, %v889
      %v1196 = vpack.c.b16 %v893, %v890
      %v1197 = vpack.c.b16 %v894, %v891
      %v1198 = vpack.c.b16 %v898, %v895
      %v1199 = vpack.c.b16 %v899, %v896
      %v1200 = vpack.c.b16 %v900, %v897
      %v1201 = vpack.c.b16 %v904, %v901
      %v1202 = vpack.c.b16 %v905, %v902
      %v1203 = vpack.c.b16 %v906, %v903
      %v1204 = vpack.c.b16 %v910, %v907
      %v1205 = vpack.c.b16 %v911, %v908
      %v1206 = vpack.c.b16 %v912, %v909
      %v1207 = vpack.c.b16 %v916, %v913
      %v1208 = vpack.c.b16 %v917, %v914
      %v1209 = vpack.c.b16 %v918, %v915
      %v1210 = vpack.c.b16 %v922, %v919
      %v1211 = vpack.c.b16 %v923, %v920
      %v1212 = vpack.c.b16 %v924, %v921
      %v1213 = vpack.c.b16 %v928, %v925
      %v1214 = vpack.c.b16 %v929, %v926
      %v1215 = vpack.c.b16 %v930, %v927
      %v1216 = vpack.c.b16 %v934, %v931
      %v1217 = vpack.c.b16 %v935, %v932
      %v1218 = vpack.c.b16 %v936, %v933
      %v1219 = vpack.c.b16 %v940, %v937
      %v1220 = vpack.c.b16 %v941, %v938
      %v1221 = vpack.c.b16 %v942, %v939
      %v1222 = vpack.c.b16 %v946, %v943
      %v1223 = vpack.c.b16 %v947, %v944
      %v1224 = vpack.c.b16 %v948, %v945
      %v1225 = vpack.c.b16 %v952, %v949
      %v1226 = vpack.c.b16 %v953, %v950
      %v1227 = vpack.c.b16 %v954, %v951
      %v1228 = vpack.c.b16 %v958, %v955
      %v1229 = vpack.c.b16 %v959, %v956
      %v1230 = vpack.c.b16 %v960, %v957
      %v1231 = vpack.c.b16 %v964, %v961
      %v1232 = vpack.c.b16 %v965, %v962
      %v1233 = vpack.c.b16 %v966, %v963
      %v1234 = vpack.c.b16 %v970, %v967
      %v1235 = vpack.c.b16 %v971, %v968
      %v1236 = vpack.c.b16 %v972, %v969
      %v1237 = vpack.c.b16 %v976, %v973
      %v1238 = vpack.c.b16 %v977, %v974
      %v1239 = vpack.c.b16 %v978, %v975
      %v1240 = vpack.c.b16 %v982, %v979
      %v1241 = vpack.c.b16 %v983, %v980
      %v1242 = vpack.c.b16 %v984, %v981
      %v1243 = vpack.c.b16 %v988, %v985
      %v1244 = vpack.c.b16 %v989, %v986
      %v1245 = vpack.c.b16 %v990, %v987
      %v1246 = vpack.c.b16 %v994, %v991
      %v1247 = vpack.c.b16 %v995, %v992
      %v1248 = vpack.c.b16 %v996, %v993
      %v1249 = vpack.c.b16 %v1000, %v997
      %v1250 = vpack.c.b16 %v1001, %v998
      %v1251 = vpack.c.b16 %v1002, %v999
      %v1252 = vpack.c.b16 %v1006, %v1003
      %v1253 = vpack.c.b16 %v1007, %v1004
      %v1254 = vpack.c.b16 %v1008, %v1005
      %v1255 = vpack.c.b16 %v1012, %v1009
      %v1256 = vpack.c.b16 %v1013, %v1010
      %v1257 = vpack.c.b16 %v1014, %v1011
      %v1258 = vpack.c.b16 %v1018, %v1015
      %v1259 = vpack.c.b16 %v1019, %v1016
      %v1260 = vpack.c.b16 %v1020, %v1017
      %v1261 = vpack.c.b16 %v1024, %v1021
      %v1262 = vpack.c.b16 %v1025, %v1022
      %v1263 = vpack.c.b16 %v1026, %v1023
      %v1264 = vpack.c.b16 %v1030, %v1027
      %v1265 = vpack.c.b16 %v1031, %v1028
      %v1266 = vpack.c.b16 %v1032, %v1029
      %v1267 = vpack.c.b16 %v1036, %v1033
      %v1268 = vpack.c.b16 %v1037, %v1034
      %v1269 = vpack.c.b16 %v1038, %v1035
      %v1270 = vpack.c.b16 %v1042, %v1039
      %v1271 = vpack.c.b16 %v1043, %v1040
      %v1272 = vpack.c.b16 %v1044, %v1041
      %v1273 = vpack.c.b16 %v1048, %v1045
      %v1274 = vpack.c.b16 %v1049, %v1046
      %v1275 = vpack.c.b16 %v1050, %v1047
      %v1276 = vpack.c.b16 %v1054, %v1051
      %v1277 = vpack.c.b16 %v1055, %v1052
      %v1278 = vpack.c.b16 %v1056, %v1053
      %v1279 = vpack.c.b16 %v1060, %v1057
      %v1280 = vpack.c.b16 %v1061, %v1058
      %v1281 = vpack.c.b16 %v1062, %v1059
      %v1282 = vpack.c.b16 %v1066, %v1063
      %v1283 = vpack.c.b16 %v1067, %v1064
      %v1284 = vpack.c.b16 %v1068, %v1065
      %v1285 = vpack.c.b16 %v1072, %v1069
      %v1286 = vpack.c.b16 %v1073, %v1070
      %v1287 = vpack.c.b16 %v1074, %v1071
      %v1288 = vpack.c.b16 %v1078, %v1075
      %v1289 = vpack.c.b16 %v1079, %v1076
      %v1290 = vpack.c.b16 %v1080, %v1077
      %v1291 = vpack.c.b16 %v1084, %v1081
      %v1292 = vpack.c.b16 %v1085, %v1082
      %v1293 = vpack.c.b16 %v1086, %v1083
      %v1294 = vpack.c.b16 %v1090, %v1087
      %v1295 = vpack.c.b16 %v1091, %v1088
      %v1296 = vpack.c.b16 %v1092, %v1089
      %v1297 = vpack.c.b16 %v1096, %v1093
      %v1298 = vpack.c.b16 %v1097, %v1094
      %v1299 = vpack.c.b16 %v1098, %v1095
      %v1300 = vpack.c.b16 %v1102, %v1099
      %v1301 = vpack.c.b16 %v1103, %v1100
      %v1302 = vpack.c.b16 %v1104, %v1101
      %v1303 = vpack.c.b16 %v1108, %v1105
      %v1304 = vpack.c.b16 %v1109, %v1106
      %v1305 = vpack.c.b16 %v1110, %v1107
      %v1306 = vpack.c.b16 %v1114, %v1111
      %v1307 = vpack.c.b16 %v1115, %v1112
      %v1308 = vpack.c.b16 %v1116, %v1113
      %v1473 = vunpack.c.l.b16 %v434
      %v1474 = vunpack.c.l.b16 %v435
      %v1475 = vunpack.c.l.b16 %v436
      %v1476 = vunpack.c.l.b16 %v437
      %v1477 = vunpack.c.l.b16 %v438
      %v1478 = vunpack.c.l.b16 %v439
      %v1479 = vunpack.c.l.b16 %v440
      %v1480 = vunpack.c.l.b16 %v441
      %v1481 = vunpack.c.l.b16 %v442
      %v1482 = vunpack.c.l.b16 %v443
      %v1483 = vunpack.c.l.b16 %v444
      %v1484 = vunpack.c.l.b16 %v445
      %v1485 = vunpack.c.l.b16 %v446
      %v1486 = vunpack.c.l.b16 %v447
      %v1487 = vunpack.c.l.b16 %v448
      %v1488 = vunpack.c.l.b16 %v449
      %v1489 = vunpack.c.l.b16 %v450
      %v1490 = vunpack.c.l.b16 %v451
      %v1491 = vunpack.c.l.b16 %v452
      %v1492 = vunpack.c.l.b16 %v453
      %v1493 = vunpack.c.l.b16 %v454
      %v1494 = vunpack.c.l.b16 %v455
      %v1495 = vunpack.c.l.b16 %v456
      %v1496 = vunpack.c.l.b16 %v457
      %v1497 = vunpack.c.l.b16 %v458
      %v1498 = vunpack.c.l.b16 %v459
      %v1499 = vunpack.c.l.b16 %v460
      %v1500 = vunpack.c.l.b16 %v461
      %v1501 = vunpack.c.l.b16 %v462
      %v1502 = vunpack.c.l.b16 %v463
      %v1503 = vunpack.c.l.b16 %v464
      %v1504 = vunpack.c.l.b16 %v465
      %v1505 = vunpack.c.l.b16 %v466
      %v1506 = vunpack.c.l.b16 %v467
      %v1507 = vunpack.c.l.b16 %v468
      %v1508 = vunpack.c.l.b16 %v469
      %v1509 = vpack.c.b16 %v1474, %v1473
      %v1510 = vpack.c.b16 %v1476, %v1475
      %v1511 = vpack.c.b16 %v1478, %v1477
      %v1512 = vpack.c.b16 %v1480, %v1479
      %v1513 = vpack.c.b16 %v1482, %v1481
      %v1514 = vpack.c.b16 %v1484, %v1483
      %v1515 = vpack.c.b16 %v1486, %v1485
      %v1516 = vpack.c.b16 %v1488, %v1487
      %v1517 = vpack.c.b16 %v1490, %v1489
      %v1518 = vpack.c.b16 %v1492, %v1491
      %v1519 = vpack.c.b16 %v1494, %v1493
      %v1520 = vpack.c.b16 %v1496, %v1495
      %v1521 = vpack.c.b16 %v1498, %v1497
      %v1522 = vpack.c.b16 %v1500, %v1499
      %v1523 = vpack.c.b16 %v1502, %v1501
      %v1524 = vpack.c.b16 %v1504, %v1503
      %v1525 = vpack.c.b16 %v1506, %v1505
      %v1526 = vpack.c.b16 %v1508, %v1507
      %vm1545 = vcmask 261120
      %v1547 = vsel %vm1545, %v1119, 0
      %v1550 = vsel %vm1545, %v1122, 0
      %v1553 = vsel %vm1545, %v1125, 0
      %v1556 = vsel %vm1545, %v1128, 0
      %v1559 = vsel %vm1545, %v1131, 0
      %v1562 = vsel %vm1545, %v1134, 0
      %v1565 = vsel %vm1545, %v1137, 0
      %v1568 = vsel %vm1545, %v1140, 0
      %v1571 = vsel %vm1545, %v1143, 0
      %v1574 = vsel %vm1545, %v1146, 0
      %v1577 = vsel %vm1545, %v1149, 0
      %v1580 = vsel %vm1545, %v1152, 0
      %v1583 = vsel %vm1545, %v1155, 0
      %v1586 = vsel %vm1545, %v1158, 0
      %v1589 = vsel %vm1545, %v1161, 0
      %v1592 = vsel %vm1545, %v1164, 0
      %v1595 = vsel %vm1545, %v1167, 0
      %v1598 = vsel %vm1545, %v1170, 0
      %v1601 = vsel %vm1545, %v1173, 0
      %v1604 = vsel %vm1545, %v1176, 0
      %v1607 = vsel %vm1545, %v1179, 0
      %v1610 = vsel %vm1545, %v1182, 0
      %v1613 = vsel %vm1545, %v1185, 0
      %v1616 = vsel %vm1545, %v1188, 0
      %v1619 = vsel %vm1545, %v1191, 0
      %v1622 = vsel %vm1545, %v1194, 0
      %v1625 = vsel %vm1545, %v1197, 0
      %v1628 = vsel %vm1545, %v1200, 0
      %v1631 = vsel %vm1545, %v1203, 0
      %v1634 = vsel %vm1545, %v1206, 0
      %v1637 = vsel %vm1545, %v1209, 0
      %v1640 = vsel %vm1545, %v1212, 0
      %v1643 = vsel %vm1545, %v1215, 0
      %v1646 = vsel %vm1545, %v1218, 0
      %v1649 = vsel %vm1545, %v1221, 0
      %v1652 = vsel %vm1545, %v1224, 0
      %v1655 = vsel %vm1545, %v1227, 0
      %v1658 = vsel %vm1545, %v1230, 0
      %v1661 = vsel %vm1545, %v1233, 0
      %v1664 = vsel %vm1545, %v1236, 0
      %v1667 = vsel %vm1545, %v1239, 0
      %v1670 = vsel %vm1545, %v1242, 0
      %v1673 = vsel %vm1545, %v1245, 0
      %v1676 = vsel %vm1545, %v1248, 0
      %v1679 = vsel %vm1545, %v1251, 0
      %v1682 = vsel %vm1545, %v1254, 0
      %v1685 = vsel %vm1545, %v1257, 0
      %v1688 = vsel %vm1545, %v1260, 0
      %v1691 = vsel %vm1545, %v1263, 0
      %v1694 = vsel %vm1545, %v1266, 0
      %v1697 = vsel %vm1545, %v1269, 0
      %v1700 = vsel %vm1545, %v1272, 0
      %v1703 = vsel %vm1545, %v1275, 0
      %v1706 = vsel %vm1545, %v1278, 0
      %v1709 = vsel %vm1545, %v1281, 0
      %v1712 = vsel %vm1545, %v1284, 0
      %v1715 = vsel %vm1545, %v1287, 0
      %v1718 = vsel %vm1545, %v1290, 0
      %v1721 = vsel %vm1545, %v1293, 0
      %v1724 = vsel %vm1545, %v1296, 0
      %v1727 = vsel %vm1545, %v1299, 0
      %v1730 = vsel %vm1545, %v1302, 0
      %v1733 = vsel %vm1545, %v1305, 0
      %v1736 = vsel %vm1545, %v1308, 0
      %1738 = vmatprep.subr.bf16.mxu0 0
      %1739 = vmatpush1.bf16.msra.mxu0 %v1509
      %1740 = vmatprep.subr.bf16.mxu0 0
      %1741 = vmatpush1.bf16.msra.mxu0 %v1510
      %1742 = vmatprep.subr.bf16.mxu0 0
      %1743 = vmatpush1.bf16.msra.mxu0 %v1511
      %1744 = vmatprep.subr.bf16.mxu0 0
      %1745 = vmatpush1.bf16.msra.mxu0 %v1512
      %1746 = vmatprep.subr.bf16.mxu0 0
      %1747 = vmatpush1.bf16.msra.mxu0 %v1513
      %1748 = vmatprep.subr.bf16.mxu0 0
      %1749 = vmatpush1.bf16.msra.mxu0 %v1514
      %1750 = vmatprep.subr.bf16.mxu0 0
      %1751 = vmatpush1.bf16.msra.mxu0 %v1515
      %1752 = vmatprep.subr.bf16.mxu0 0
      %1753 = vmatpush1.bf16.msra.mxu0 %v1516
      %1754 = vmatprep.subr.bf16.mxu0 0
      %1755 = vmatpush1.bf16.msra.mxu0 %v1517
      %1756 = vmatprep.subr.bf16.mxu0 0
      %1757 = vmatpush1.bf16.msra.mxu0 %v1518
      %1758 = vmatprep.subr.bf16.mxu0 0
      %1759 = vmatpush1.bf16.msra.mxu0 %v1519
      %1760 = vmatprep.subr.bf16.mxu0 0
      %1761 = vmatpush1.bf16.msra.mxu0 %v1520
      %1762 = vmatprep.subr.bf16.mxu0 0
      %1763 = vmatpush1.bf16.msra.mxu0 %v1521
      %1764 = vmatprep.subr.bf16.mxu0 0
      %1765 = vmatpush1.bf16.msra.mxu0 %v1522
      %1766 = vmatprep.subr.bf16.mxu0 0
      %1767 = vmatpush1.bf16.msra.mxu0 %v1523
      %1768 = vmatprep.subr.bf16.mxu0 0
      %1769 = vmatpush1.bf16.msra.mxu0 %v1524
      %1770 = vmatprep.mubr.bf16.mxu0 %v1118
      %1771 = vmatmul.mubr.bf16.gmra.mrb[0].mxu0 %v1117
      %v1772 = vpop.f32.mrb[0].mxu0
      %v1773 = vadd.f32 %v475, %v1772
      %v1774 = vpop.f32.mrb[0].mxu0
      %v1775 = vpop.f32.mrb[0].mxu0
      %v1776 = vadd.f32 %v475, %v1775
      %v1777 = vpop.f32.mrb[0].mxu0
      %1778 = vmatprep.mubr.bf16.mxu0 %v1121
      %1779 = vmatmul.mubr.bf16.gmra.mrb[0].mxu0 %v1120
      %v1780 = vpop.f32.mrb[0].mxu0
      %v1781 = vadd.f32 %v475, %v1780
      %v1782 = vpop.f32.mrb[0].mxu0
      %v1783 = vpop.f32.mrb[0].mxu0
      %v1784 = vadd.f32 %v475, %v1783
      %v1785 = vpop.f32.mrb[0].mxu0
      %1786 = vmatprep.mubr.bf16.mxu0 %v1124
      %1787 = vmatmul.mubr.bf16.gmra.mrb[0].mxu0 %v1123
      %v1788 = vpop.f32.mrb[0].mxu0
      %v1789 = vadd.f32 %v475, %v1788
      %v1790 = vpop.f32.mrb[0].mxu0
      %v1791 = vpop.f32.mrb[0].mxu0
      %v1792 = vadd.f32 %v475, %v1791
      %v1793 = vpop.f32.mrb[0].mxu0
      %1794 = vmatprep.mubr.bf16.mxu0 %v1127
      %1795 = vmatmul.mubr.bf16.gmra.mrb[0].mxu0 %v1126
      %v1796 = vpop.f32.mrb[0].mxu0
      %v1797 = vadd.f32 %v475, %v1796
      %v1798 = vpop.f32.mrb[0].mxu0
      %v1799 = vpop.f32.mrb[0].mxu0
      %v1800 = vadd.f32 %v475, %v1799
      %v1801 = vpop.f32.mrb[0].mxu0
      %1802 = vmatprep.mubr.bf16.mxu0 %v1130
      %1803 = vmatmul.mubr.bf16.gmra.mrb[0].mxu0 %v1129
      %v1804 = vpop.f32.mrb[0].mxu0
      %v1805 = vadd.f32 %v475, %v1804
      %v1806 = vpop.f32.mrb[0].mxu0
      %v1807 = vpop.f32.mrb[0].mxu0
      %v1808 = vadd.f32 %v475, %v1807
      %v1809 = vpop.f32.mrb[0].mxu0
      %1810 = vmatprep.mubr.bf16.mxu0 %v1133
      %1811 = vmatmul.mubr.bf16.gmra.mrb[0].mxu0 %v1132
      %v1812 = vpop.f32.mrb[0].mxu0
      %v1813 = vadd.f32 %v475, %v1812
      %v1814 = vpop.f32.mrb[0].mxu0
      %v1815 = vpop.f32.mrb[0].mxu0
      %v1816 = vadd.f32 %v475, %v1815
      %v1817 = vpop.f32.mrb[0].mxu0
      %1818 = vmatprep.mubr.bf16.mxu0 %v1136
      %1819 = vmatmul.mubr.bf16.gmra.mrb[0].mxu0 %v1135
      %v1820 = vpop.f32.mrb[0].mxu0
      %v1821 = vadd.f32 %v475, %v1820
      %v1822 = vpop.f32.mrb[0].mxu0
      %v1823 = vpop.f32.mrb[0].mxu0
      %v1824 = vadd.f32 %v475, %v1823
      %v1825 = vpop.f32.mrb[0].mxu0
      %1826 = vmatprep.mubr.bf16.mxu0 %v1139
      %1827 = vmatmul.mubr.bf16.gmra.mrb[0].mxu0 %v1138
      %v1828 = vpop.f32.mrb[0].mxu0
      %v1829 = vadd.f32 %v475, %v1828
      %v1830 = vpop.f32.mrb[0].mxu0
      %v1831 = vpop.f32.mrb[0].mxu0
      %v1832 = vadd.f32 %v475, %v1831
      %v1833 = vpop.f32.mrb[0].mxu0
      %1834 = vmatprep.mubr.bf16.mxu0 %v1142
      %1835 = vmatmul.mubr.bf16.gmra.mrb[0].mxu0 %v1141
      %v1836 = vpop.f32.mrb[0].mxu0
      %v1837 = vadd.f32 %v475, %v1836
      %v1838 = vpop.f32.mrb[0].mxu0
      %v1839 = vpop.f32.mrb[0].mxu0
      %v1840 = vadd.f32 %v475, %v1839
      %v1841 = vpop.f32.mrb[0].mxu0
      %1842 = vmatprep.mubr.bf16.mxu0 %v1145
      %1843 = vmatmul.mubr.bf16.gmra.mrb[0].mxu0 %v1144
      %v1844 = vpop.f32.mrb[0].mxu0
      %v1845 = vadd.f32 %v475, %v1844
      %v1846 = vpop.f32.mrb[0].mxu0
      %v1847 = vpop.f32.mrb[0].mxu0
      %v1848 = vadd.f32 %v475, %v1847
      %v1849 = vpop.f32.mrb[0].mxu0
      %1850 = vmatprep.mubr.bf16.mxu0 %v1148
      %1851 = vmatmul.mubr.bf16.gmra.mrb[0].mxu0 %v1147
      %v1852 = vpop.f32.mrb[0].mxu0
      %v1853 = vadd.f32 %v475, %v1852
      %v1854 = vpop.f32.mrb[0].mxu0
      %v1855 = vpop.f32.mrb[0].mxu0
      %v1856 = vadd.f32 %v475, %v1855
      %v1857 = vpop.f32.mrb[0].mxu0
      %1858 = vmatprep.mubr.bf16.mxu0 %v1151
      %1859 = vmatmul.mubr.bf16.gmra.mrb[0].mxu0 %v1150
      %v1860 = vpop.f32.mrb[0].mxu0
      %v1861 = vadd.f32 %v475, %v1860
      %v1862 = vpop.f32.mrb[0].mxu0
      %v1863 = vpop.f32.mrb[0].mxu0
      %v1864 = vadd.f32 %v475, %v1863
      %v1865 = vpop.f32.mrb[0].mxu0
      %1866 = vmatprep.mubr.bf16.mxu0 %v1154
      %1867 = vmatmul.mubr.bf16.gmra.mrb[0].mxu0 %v1153
      %v1868 = vpop.f32.mrb[0].mxu0
      %v1869 = vadd.f32 %v475, %v1868
      %v1870 = vpop.f32.mrb[0].mxu0
      %v1871 = vpop.f32.mrb[0].mxu0
      %v1872 = vadd.f32 %v475, %v1871
      %v1873 = vpop.f32.mrb[0].mxu0
      %1874 = vmatprep.mubr.bf16.mxu0 %v1157
      %1875 = vmatmul.mubr.bf16.gmra.mrb[0].mxu0 %v1156
      %v1876 = vpop.f32.mrb[0].mxu0
      %v1877 = vadd.f32 %v475, %v1876
      %v1878 = vpop.f32.mrb[0].mxu0
      %v1879 = vpop.f32.mrb[0].mxu0
      %v1880 = vadd.f32 %v475, %v1879
      %v1881 = vpop.f32.mrb[0].mxu0
      %1882 = vmatprep.mubr.bf16.mxu0 %v1160
      %1883 = vmatmul.mubr.bf16.gmra.mrb[0].mxu0 %v1159
      %v1884 = vpop.f32.mrb[0].mxu0
      %v1885 = vadd.f32 %v475, %v1884
      %v1886 = vpop.f32.mrb[0].mxu0
      %v1887 = vpop.f32.mrb[0].mxu0
      %v1888 = vadd.f32 %v475, %v1887
      %v1889 = vpop.f32.mrb[0].mxu0
      %1890 = vmatprep.mubr.bf16.mxu0 %v1163
      %1891 = vmatmul.mubr.bf16.gmra.mrb[0].mxu0 %v1162
      %v1892 = vpop.f32.mrb[0].mxu0
      %v1893 = vadd.f32 %v475, %v1892
      %v1894 = vpop.f32.mrb[0].mxu0
      %v1895 = vpop.f32.mrb[0].mxu0
      %v1896 = vadd.f32 %v475, %v1895
      %v1897 = vpop.f32.mrb[0].mxu0
      %1898 = vmatprep.mubr.bf16.mxu0 %v1166
      %1899 = vmatmul.mubr.bf16.gmra.mrb[0].mxu0 %v1165
      %v1900 = vpop.f32.mrb[0].mxu0
      %v1901 = vadd.f32 %v475, %v1900
      %v1902 = vpop.f32.mrb[0].mxu0
      %v1903 = vpop.f32.mrb[0].mxu0
      %v1904 = vadd.f32 %v475, %v1903
      %v1905 = vpop.f32.mrb[0].mxu0
      %1906 = vmatprep.mubr.bf16.mxu0 %v1169
      %1907 = vmatmul.mubr.bf16.gmra.mrb[0].mxu0 %v1168
      %v1908 = vpop.f32.mrb[0].mxu0
      %v1909 = vadd.f32 %v475, %v1908
      %v1910 = vpop.f32.mrb[0].mxu0
      %v1911 = vpop.f32.mrb[0].mxu0
      %v1912 = vadd.f32 %v475, %v1911
      %v1913 = vpop.f32.mrb[0].mxu0
      %1914 = vmatprep.mubr.bf16.mxu0 %v1172
      %1915 = vmatmul.mubr.bf16.gmra.mrb[0].mxu0 %v1171
      %v1916 = vpop.f32.mrb[0].mxu0
      %v1917 = vadd.f32 %v475, %v1916
      %v1918 = vpop.f32.mrb[0].mxu0
      %v1919 = vpop.f32.mrb[0].mxu0
      %v1920 = vadd.f32 %v475, %v1919
      %v1921 = vpop.f32.mrb[0].mxu0
      %1922 = vmatprep.mubr.bf16.mxu0 %v1175
      %1923 = vmatmul.mubr.bf16.gmra.mrb[0].mxu0 %v1174
      %v1924 = vpop.f32.mrb[0].mxu0
      %v1925 = vadd.f32 %v475, %v1924
      %v1926 = vpop.f32.mrb[0].mxu0
      %v1927 = vpop.f32.mrb[0].mxu0
      %v1928 = vadd.f32 %v475, %v1927
      %v1929 = vpop.f32.mrb[0].mxu0
      %1930 = vmatprep.mubr.bf16.mxu0 %v1178
      %1931 = vmatmul.mubr.bf16.gmra.mrb[0].mxu0 %v1177
      %v1932 = vpop.f32.mrb[0].mxu0
      %v1933 = vadd.f32 %v475, %v1932
      %v1934 = vpop.f32.mrb[0].mxu0
      %v1935 = vpop.f32.mrb[0].mxu0
      %v1936 = vadd.f32 %v475, %v1935
      %v1937 = vpop.f32.mrb[0].mxu0
      %1938 = vmatprep.mubr.bf16.mxu0 %v1181
      %1939 = vmatmul.mubr.bf16.gmra.mrb[0].mxu0 %v1180
      %v1940 = vpop.f32.mrb[0].mxu0
      %v1941 = vadd.f32 %v475, %v1940
      %v1942 = vpop.f32.mrb[0].mxu0
      %v1943 = vpop.f32.mrb[0].mxu0
      %v1944 = vadd.f32 %v475, %v1943
      %v1945 = vpop.f32.mrb[0].mxu0
      %1946 = vmatprep.mubr.bf16.mxu0 %v1184
      %1947 = vmatmul.mubr.bf16.gmra.mrb[0].mxu0 %v1183
      %v1948 = vpop.f32.mrb[0].mxu0
      %v1949 = vadd.f32 %v475, %v1948
      %v1950 = vpop.f32.mrb[0].mxu0
      %v1951 = vpop.f32.mrb[0].mxu0
      %v1952 = vadd.f32 %v475, %v1951
      %v1953 = vpop.f32.mrb[0].mxu0
      %1954 = vmatprep.mubr.bf16.mxu0 %v1187
      %1955 = vmatmul.mubr.bf16.gmra.mrb[0].mxu0 %v1186
      %v1956 = vpop.f32.mrb[0].mxu0
      %v1957 = vadd.f32 %v475, %v1956
      %v1958 = vpop.f32.mrb[0].mxu0
      %v1959 = vpop.f32.mrb[0].mxu0
      %v1960 = vadd.f32 %v475, %v1959
      %v1961 = vpop.f32.mrb[0].mxu0
      %1962 = vmatprep.mubr.bf16.mxu0 %v1190
      %1963 = vmatmul.mubr.bf16.gmra.mrb[0].mxu0 %v1189
      %v1964 = vpop.f32.mrb[0].mxu0
      %v1965 = vadd.f32 %v475, %v1964
      %v1966 = vpop.f32.mrb[0].mxu0
      %v1967 = vpop.f32.mrb[0].mxu0
      %v1968 = vadd.f32 %v475, %v1967
      %v1969 = vpop.f32.mrb[0].mxu0
      %1970 = vmatprep.mubr.bf16.mxu0 %v1193
      %1971 = vmatmul.mubr.bf16.gmra.mrb[0].mxu0 %v1192
      %v1972 = vpop.f32.mrb[0].mxu0
      %v1973 = vadd.f32 %v475, %v1972
      %v1974 = vpop.f32.mrb[0].mxu0
      %v1975 = vpop.f32.mrb[0].mxu0
      %v1976 = vadd.f32 %v475, %v1975
      %v1977 = vpop.f32.mrb[0].mxu0
      %1978 = vmatprep.mubr.bf16.mxu0 %v1196
      %1979 = vmatmul.mubr.bf16.gmra.mrb[0].mxu0 %v1195
      %v1980 = vpop.f32.mrb[0].mxu0
      %v1981 = vadd.f32 %v475, %v1980
      %v1982 = vpop.f32.mrb[0].mxu0
      %v1983 = vpop.f32.mrb[0].mxu0
      %v1984 = vadd.f32 %v475, %v1983
      %v1985 = vpop.f32.mrb[0].mxu0
      %1986 = vmatprep.mubr.bf16.mxu0 %v1199
      %1987 = vmatmul.mubr.bf16.gmra.mrb[0].mxu0 %v1198
      %v1988 = vpop.f32.mrb[0].mxu0
      %v1989 = vadd.f32 %v475, %v1988
      %v1990 = vpop.f32.mrb[0].mxu0
      %v1991 = vpop.f32.mrb[0].mxu0
      %v1992 = vadd.f32 %v475, %v1991
      %v1993 = vpop.f32.mrb[0].mxu0
      %1994 = vmatprep.mubr.bf16.mxu0 %v1202
      %1995 = vmatmul.mubr.bf16.gmra.mrb[0].mxu0 %v1201
      %v1996 = vpop.f32.mrb[0].mxu0
      %v1997 = vadd.f32 %v475, %v1996
      %v1998 = vpop.f32.mrb[0].mxu0
      %v1999 = vpop.f32.mrb[0].mxu0
      %v2000 = vadd.f32 %v475, %v1999
      %v2001 = vpop.f32.mrb[0].mxu0
      %2002 = vmatprep.mubr.bf16.mxu0 %v1205
      %2003 = vmatmul.mubr.bf16.gmra.mrb[0].mxu0 %v1204
      %v2004 = vpop.f32.mrb[0].mxu0
      %v2005 = vadd.f32 %v475, %v2004
      %v2006 = vpop.f32.mrb[0].mxu0
      %v2007 = vpop.f32.mrb[0].mxu0
      %v2008 = vadd.f32 %v475, %v2007
      %v2009 = vpop.f32.mrb[0].mxu0
      %2010 = vmatprep.mubr.bf16.mxu0 %v1208
      %2011 = vmatmul.mubr.bf16.gmra.mrb[0].mxu0 %v1207
      %v2012 = vpop.f32.mrb[0].mxu0
      %v2013 = vadd.f32 %v475, %v2012
      %v2014 = vpop.f32.mrb[0].mxu0
      %v2015 = vpop.f32.mrb[0].mxu0
      %v2016 = vadd.f32 %v475, %v2015
      %v2017 = vpop.f32.mrb[0].mxu0
      %2018 = vmatprep.mubr.bf16.mxu0 %v1211
      %2019 = vmatmul.mubr.bf16.gmra.mrb[0].mxu0 %v1210
      %v2020 = vpop.f32.mrb[0].mxu0
      %v2021 = vadd.f32 %v475, %v2020
      %v2022 = vpop.f32.mrb[0].mxu0
      %v2023 = vpop.f32.mrb[0].mxu0
      %v2024 = vadd.f32 %v475, %v2023
      %v2025 = vpop.f32.mrb[0].mxu0
      %2026 = vmatprep.mubr.bf16.mxu0 %v1214
      %2027 = vmatmul.mubr.bf16.gmra.mrb[0].mxu0 %v1213
      %v2028 = vpop.f32.mrb[0].mxu0
      %v2029 = vadd.f32 %v475, %v2028
      %v2030 = vpop.f32.mrb[0].mxu0
      %v2031 = vpop.f32.mrb[0].mxu0
      %v2032 = vadd.f32 %v475, %v2031
      %v2033 = vpop.f32.mrb[0].mxu0
      %2034 = vmatprep.mubr.bf16.mxu0 %v1217
      %2035 = vmatmul.mubr.bf16.gmra.mrb[0].mxu0 %v1216
      %v2036 = vpop.f32.mrb[0].mxu0
      %v2037 = vadd.f32 %v475, %v2036
      %v2038 = vpop.f32.mrb[0].mxu0
      %v2039 = vpop.f32.mrb[0].mxu0
      %v2040 = vadd.f32 %v475, %v2039
      %v2041 = vpop.f32.mrb[0].mxu0
      %2042 = vmatprep.mubr.bf16.mxu0 %v1220
      %2043 = vmatmul.mubr.bf16.gmra.mrb[0].mxu0 %v1219
      %v2044 = vpop.f32.mrb[0].mxu0
      %v2045 = vadd.f32 %v475, %v2044
      %v2046 = vpop.f32.mrb[0].mxu0
      %v2047 = vpop.f32.mrb[0].mxu0
      %v2048 = vadd.f32 %v475, %v2047
      %v2049 = vpop.f32.mrb[0].mxu0
      %2050 = vmatprep.mubr.bf16.mxu0 %v1223
      %2051 = vmatmul.mubr.bf16.gmra.mrb[0].mxu0 %v1222
      %v2052 = vpop.f32.mrb[0].mxu0
      %v2053 = vadd.f32 %v475, %v2052
      %v2054 = vpop.f32.mrb[0].mxu0
      %v2055 = vpop.f32.mrb[0].mxu0
      %v2056 = vadd.f32 %v475, %v2055
      %v2057 = vpop.f32.mrb[0].mxu0
      %2058 = vmatprep.mubr.bf16.mxu0 %v1226
      %2059 = vmatmul.mubr.bf16.gmra.mrb[0].mxu0 %v1225
      %v2060 = vpop.f32.mrb[0].mxu0
      %v2061 = vadd.f32 %v475, %v2060
      %v2062 = vpop.f32.mrb[0].mxu0
      %v2063 = vpop.f32.mrb[0].mxu0
      %v2064 = vadd.f32 %v475, %v2063
      %v2065 = vpop.f32.mrb[0].mxu0
      %2066 = vmatprep.mubr.bf16.mxu0 %v1229
      %2067 = vmatmul.mubr.bf16.gmra.mrb[0].mxu0 %v1228
      %v2068 = vpop.f32.mrb[0].mxu0
      %v2069 = vadd.f32 %v475, %v2068
      %v2070 = vpop.f32.mrb[0].mxu0
      %v2071 = vpop.f32.mrb[0].mxu0
      %v2072 = vadd.f32 %v475, %v2071
      %v2073 = vpop.f32.mrb[0].mxu0
      %2074 = vmatprep.mubr.bf16.mxu0 %v1232
      %2075 = vmatmul.mubr.bf16.gmra.mrb[0].mxu0 %v1231
      %v2076 = vpop.f32.mrb[0].mxu0
      %v2077 = vadd.f32 %v475, %v2076
      %v2078 = vpop.f32.mrb[0].mxu0
      %v2079 = vpop.f32.mrb[0].mxu0
      %v2080 = vadd.f32 %v475, %v2079
      %v2081 = vpop.f32.mrb[0].mxu0
      %2082 = vmatprep.mubr.bf16.mxu0 %v1235
      %2083 = vmatmul.mubr.bf16.gmra.mrb[0].mxu0 %v1234
      %v2084 = vpop.f32.mrb[0].mxu0
      %v2085 = vadd.f32 %v475, %v2084
      %v2086 = vpop.f32.mrb[0].mxu0
      %v2087 = vpop.f32.mrb[0].mxu0
      %v2088 = vadd.f32 %v475, %v2087
      %v2089 = vpop.f32.mrb[0].mxu0
      %2090 = vmatprep.mubr.bf16.mxu0 %v1238
      %2091 = vmatmul.mubr.bf16.gmra.mrb[0].mxu0 %v1237
      %v2092 = vpop.f32.mrb[0].mxu0
      %v2093 = vadd.f32 %v475, %v2092
      %v2094 = vpop.f32.mrb[0].mxu0
      %v2095 = vpop.f32.mrb[0].mxu0
      %v2096 = vadd.f32 %v475, %v2095
      %v2097 = vpop.f32.mrb[0].mxu0
      %2098 = vmatprep.mubr.bf16.mxu0 %v1241
      %2099 = vmatmul.mubr.bf16.gmra.mrb[0].mxu0 %v1240
      %v2100 = vpop.f32.mrb[0].mxu0
      %v2101 = vadd.f32 %v475, %v2100
      %v2102 = vpop.f32.mrb[0].mxu0
      %v2103 = vpop.f32.mrb[0].mxu0
      %v2104 = vadd.f32 %v475, %v2103
      %v2105 = vpop.f32.mrb[0].mxu0
      %2106 = vmatprep.mubr.bf16.mxu0 %v1244
      %2107 = vmatmul.mubr.bf16.gmra.mrb[0].mxu0 %v1243
      %v2108 = vpop.f32.mrb[0].mxu0
      %v2109 = vadd.f32 %v475, %v2108
      %v2110 = vpop.f32.mrb[0].mxu0
      %v2111 = vpop.f32.mrb[0].mxu0
      %v2112 = vadd.f32 %v475, %v2111
      %v2113 = vpop.f32.mrb[0].mxu0
      %2114 = vmatprep.mubr.bf16.mxu0 %v1247
      %2115 = vmatmul.mubr.bf16.gmra.mrb[0].mxu0 %v1246
      %v2116 = vpop.f32.mrb[0].mxu0
      %v2117 = vadd.f32 %v475, %v2116
      %v2118 = vpop.f32.mrb[0].mxu0
      %v2119 = vpop.f32.mrb[0].mxu0
      %v2120 = vadd.f32 %v475, %v2119
      %v2121 = vpop.f32.mrb[0].mxu0
      %2122 = vmatprep.mubr.bf16.mxu0 %v1250
      %2123 = vmatmul.mubr.bf16.gmra.mrb[0].mxu0 %v1249
      %v2124 = vpop.f32.mrb[0].mxu0
      %v2125 = vadd.f32 %v475, %v2124
      %v2126 = vpop.f32.mrb[0].mxu0
      %v2127 = vpop.f32.mrb[0].mxu0
      %v2128 = vadd.f32 %v475, %v2127
      %v2129 = vpop.f32.mrb[0].mxu0
      %2130 = vmatprep.mubr.bf16.mxu0 %v1253
      %2131 = vmatmul.mubr.bf16.gmra.mrb[0].mxu0 %v1252
      %v2132 = vpop.f32.mrb[0].mxu0
      %v2133 = vadd.f32 %v475, %v2132
      %v2134 = vpop.f32.mrb[0].mxu0
      %v2135 = vpop.f32.mrb[0].mxu0
      %v2136 = vadd.f32 %v475, %v2135
      %v2137 = vpop.f32.mrb[0].mxu0
      %2138 = vmatprep.mubr.bf16.mxu0 %v1256
      %2139 = vmatmul.mubr.bf16.gmra.mrb[0].mxu0 %v1255
      %v2140 = vpop.f32.mrb[0].mxu0
      %v2141 = vadd.f32 %v475, %v2140
      %v2142 = vpop.f32.mrb[0].mxu0
      %v2143 = vpop.f32.mrb[0].mxu0
      %v2144 = vadd.f32 %v475, %v2143
      %v2145 = vpop.f32.mrb[0].mxu0
      %2146 = vmatprep.mubr.bf16.mxu0 %v1259
      %2147 = vmatmul.mubr.bf16.gmra.mrb[0].mxu0 %v1258
      %v2148 = vpop.f32.mrb[0].mxu0
      %v2149 = vadd.f32 %v475, %v2148
      %v2150 = vpop.f32.mrb[0].mxu0
      %v2151 = vpop.f32.mrb[0].mxu0
      %v2152 = vadd.f32 %v475, %v2151
      %v2153 = vpop.f32.mrb[0].mxu0
      %2154 = vmatprep.mubr.bf16.mxu0 %v1262
      %2155 = vmatmul.mubr.bf16.gmra.mrb[0].mxu0 %v1261
      %v2156 = vpop.f32.mrb[0].mxu0
      %v2157 = vadd.f32 %v475, %v2156
      %v2158 = vpop.f32.mrb[0].mxu0
      %v2159 = vpop.f32.mrb[0].mxu0
      %v2160 = vadd.f32 %v475, %v2159
      %v2161 = vpop.f32.mrb[0].mxu0
      %2162 = vmatprep.mubr.bf16.mxu0 %v1265
      %2163 = vmatmul.mubr.bf16.gmra.mrb[0].mxu0 %v1264
      %v2164 = vpop.f32.mrb[0].mxu0
      %v2165 = vadd.f32 %v475, %v2164
      %v2166 = vpop.f32.mrb[0].mxu0
      %v2167 = vpop.f32.mrb[0].mxu0
      %v2168 = vadd.f32 %v475, %v2167
      %v2169 = vpop.f32.mrb[0].mxu0
      %2170 = vmatprep.mubr.bf16.mxu0 %v1268
      %2171 = vmatmul.mubr.bf16.gmra.mrb[0].mxu0 %v1267
      %v2172 = vpop.f32.mrb[0].mxu0
      %v2173 = vadd.f32 %v475, %v2172
      %v2174 = vpop.f32.mrb[0].mxu0
      %v2175 = vpop.f32.mrb[0].mxu0
      %v2176 = vadd.f32 %v475, %v2175
      %v2177 = vpop.f32.mrb[0].mxu0
      %2178 = vmatprep.mubr.bf16.mxu0 %v1271
      %2179 = vmatmul.mubr.bf16.gmra.mrb[0].mxu0 %v1270
      %v2180 = vpop.f32.mrb[0].mxu0
      %v2181 = vadd.f32 %v475, %v2180
      %v2182 = vpop.f32.mrb[0].mxu0
      %v2183 = vpop.f32.mrb[0].mxu0
      %v2184 = vadd.f32 %v475, %v2183
      %v2185 = vpop.f32.mrb[0].mxu0
      %2186 = vmatprep.mubr.bf16.mxu0 %v1274
      %2187 = vmatmul.mubr.bf16.gmra.mrb[0].mxu0 %v1273
      %v2188 = vpop.f32.mrb[0].mxu0
      %v2189 = vadd.f32 %v475, %v2188
      %v2190 = vpop.f32.mrb[0].mxu0
      %v2191 = vpop.f32.mrb[0].mxu0
      %v2192 = vadd.f32 %v475, %v2191
      %v2193 = vpop.f32.mrb[0].mxu0
      %2194 = vmatprep.mubr.bf16.mxu0 %v1277
      %2195 = vmatmul.mubr.bf16.gmra.mrb[0].mxu0 %v1276
      %v2196 = vpop.f32.mrb[0].mxu0
      %v2197 = vadd.f32 %v475, %v2196
      %v2198 = vpop.f32.mrb[0].mxu0
      %v2199 = vpop.f32.mrb[0].mxu0
      %v2200 = vadd.f32 %v475, %v2199
      %v2201 = vpop.f32.mrb[0].mxu0
      %2202 = vmatprep.mubr.bf16.mxu0 %v1280
      %2203 = vmatmul.mubr.bf16.gmra.mrb[0].mxu0 %v1279
      %v2204 = vpop.f32.mrb[0].mxu0
      %v2205 = vadd.f32 %v475, %v2204
      %v2206 = vpop.f32.mrb[0].mxu0
      %v2207 = vpop.f32.mrb[0].mxu0
      %v2208 = vadd.f32 %v475, %v2207
      %v2209 = vpop.f32.mrb[0].mxu0
      %2210 = vmatprep.mubr.bf16.mxu0 %v1283
      %2211 = vmatmul.mubr.bf16.gmra.mrb[0].mxu0 %v1282
      %v2212 = vpop.f32.mrb[0].mxu0
      %v2213 = vadd.f32 %v475, %v2212
      %v2214 = vpop.f32.mrb[0].mxu0
      %v2215 = vpop.f32.mrb[0].mxu0
      %v2216 = vadd.f32 %v475, %v2215
      %v2217 = vpop.f32.mrb[0].mxu0
      %2218 = vmatprep.mubr.bf16.mxu0 %v1286
      %2219 = vmatmul.mubr.bf16.gmra.mrb[0].mxu0 %v1285
      %v2220 = vpop.f32.mrb[0].mxu0
      %v2221 = vadd.f32 %v475, %v2220
      %v2222 = vpop.f32.mrb[0].mxu0
      %v2223 = vpop.f32.mrb[0].mxu0
      %v2224 = vadd.f32 %v475, %v2223
      %v2225 = vpop.f32.mrb[0].mxu0
      %2226 = vmatprep.mubr.bf16.mxu0 %v1289
      %2227 = vmatmul.mubr.bf16.gmra.mrb[0].mxu0 %v1288
      %v2228 = vpop.f32.mrb[0].mxu0
      %v2229 = vadd.f32 %v475, %v2228
      %v2230 = vpop.f32.mrb[0].mxu0
      %v2231 = vpop.f32.mrb[0].mxu0
      %v2232 = vadd.f32 %v475, %v2231
      %v2233 = vpop.f32.mrb[0].mxu0
      %2234 = vmatprep.mubr.bf16.mxu0 %v1292
      %2235 = vmatmul.mubr.bf16.gmra.mrb[0].mxu0 %v1291
      %v2236 = vpop.f32.mrb[0].mxu0
      %v2237 = vadd.f32 %v475, %v2236
      %v2238 = vpop.f32.mrb[0].mxu0
      %v2239 = vpop.f32.mrb[0].mxu0
      %v2240 = vadd.f32 %v475, %v2239
      %v2241 = vpop.f32.mrb[0].mxu0
      %2242 = vmatprep.mubr.bf16.mxu0 %v1295
      %2243 = vmatmul.mubr.bf16.gmra.mrb[0].mxu0 %v1294
      %v2244 = vpop.f32.mrb[0].mxu0
      %v2245 = vadd.f32 %v475, %v2244
      %v2246 = vpop.f32.mrb[0].mxu0
      %v2247 = vpop.f32.mrb[0].mxu0
      %v2248 = vadd.f32 %v475, %v2247
      %v2249 = vpop.f32.mrb[0].mxu0
      %2250 = vmatprep.mubr.bf16.mxu0 %v1298
      %2251 = vmatmul.mubr.bf16.gmra.mrb[0].mxu0 %v1297
      %v2252 = vpop.f32.mrb[0].mxu0
      %v2253 = vadd.f32 %v475, %v2252
      %v2254 = vpop.f32.mrb[0].mxu0
      %v2255 = vpop.f32.mrb[0].mxu0
      %v2256 = vadd.f32 %v475, %v2255
      %v2257 = vpop.f32.mrb[0].mxu0
      %2258 = vmatprep.mubr.bf16.mxu0 %v1301
      %2259 = vmatmul.mubr.bf16.gmra.mrb[0].mxu0 %v1300
      %v2260 = vpop.f32.mrb[0].mxu0
      %v2261 = vadd.f32 %v475, %v2260
      %v2262 = vpop.f32.mrb[0].mxu0
      %v2263 = vpop.f32.mrb[0].mxu0
      %v2264 = vadd.f32 %v475, %v2263
      %v2265 = vpop.f32.mrb[0].mxu0
      %2266 = vmatprep.mubr.bf16.mxu0 %v1304
      %2267 = vmatmul.mubr.bf16.gmra.mrb[0].mxu0 %v1303
      %v2268 = vpop.f32.mrb[0].mxu0
      %v2269 = vadd.f32 %v475, %v2268
      %v2270 = vpop.f32.mrb[0].mxu0
      %v2271 = vpop.f32.mrb[0].mxu0
      %v2272 = vadd.f32 %v475, %v2271
      %v2273 = vpop.f32.mrb[0].mxu0
      %2274 = vmatprep.mubr.bf16.mxu0 %v1307
      %2275 = vmatmul.mubr.bf16.gmra.mrb[0].mxu0 %v1306
      %v2276 = vpop.f32.mrb[0].mxu0
      %v2277 = vadd.f32 %v475, %v2276
      %v2278 = vpop.f32.mrb[0].mxu0
      %v2279 = vpop.f32.mrb[0].mxu0
      %v2280 = vadd.f32 %v475, %v2279
      %v2281 = vpop.f32.mrb[0].mxu0
      %2282 = vdwg.mxu0
      %2283 = vmatprep.subr.bf16.mxu0 0
      %2284 = vmatpush1.bf16.msra.mxu0 %v1525
      %2285 = vmatprep.subr.bf16.mxu0 0
      %2286 = vmatpush1.bf16.msra.mxu0 %v1526
      %2287 = vmatprep.subr.bf16.mxu0 0
      %2288 = vmatpush1.bf16.msra.mxu0 0
      %2289 = vmatprep.subr.bf16.mxu0 0
      %2290 = vmatpush1.bf16.msra.mxu0 0
      %2291 = vmatprep.subr.bf16.mxu0 0
      %2292 = vmatpush1.bf16.msra.mxu0 0
      %2293 = vmatprep.subr.bf16.mxu0 0
      %2294 = vmatpush1.bf16.msra.mxu0 0
      %2295 = vmatprep.subr.bf16.mxu0 0
      %2296 = vmatpush1.bf16.msra.mxu0 0
      %2297 = vmatprep.subr.bf16.mxu0 0
      %2298 = vmatpush1.bf16.msra.mxu0 0
      %2299 = vmatprep.subr.bf16.mxu0 0
      %2300 = vmatpush1.bf16.msra.mxu0 0
      %2301 = vmatprep.subr.bf16.mxu0 0
      %2302 = vmatpush1.bf16.msra.mxu0 0
      %2303 = vmatprep.subr.bf16.mxu0 0
      %2304 = vmatpush1.bf16.msra.mxu0 0
      %2305 = vmatprep.subr.bf16.mxu0 0
      %2306 = vmatpush1.bf16.msra.mxu0 0
      %2307 = vmatprep.subr.bf16.mxu0 0
      %2308 = vmatpush1.bf16.msra.mxu0 0
      %2309 = vmatprep.subr.bf16.mxu0 0
      %2310 = vmatpush1.bf16.msra.mxu0 0
      %2311 = vmatprep.subr.bf16.mxu0 0
      %2312 = vmatpush1.bf16.msra.mxu0 0
      %2313 = vmatprep.subr.bf16.mxu0 0
      %2314 = vmatpush1.bf16.msra.mxu0 0
      %2315 = vmatprep.mubr.bf16.mxu0 0
      %2316 = vmatmul.mubr.bf16.gmra.mrb[0].mxu0 %v1547
      %v2317 = vpop.f32.mrb[0].mxu0
      %v2318 = vadd.f32 %v1773, %v2317
      %v2319 = vpop.f32.mrb[0].mxu0
      %v2320 = vpop.f32.mrb[0].mxu0
      %v2321 = vadd.f32 %v1776, %v2320
      %v2322 = vpop.f32.mrb[0].mxu0
      %2323 = vmatprep.mubr.bf16.mxu0 0
      %2324 = vmatmul.mubr.bf16.gmra.mrb[0].mxu0 %v1550
      %v2325 = vpop.f32.mrb[0].mxu0
      %v2326 = vadd.f32 %v1781, %v2325
      %v2327 = vpop.f32.mrb[0].mxu0
      %v2328 = vpop.f32.mrb[0].mxu0
      %v2329 = vadd.f32 %v1784, %v2328
      %v2330 = vpop.f32.mrb[0].mxu0
      %2331 = vmatprep.mubr.bf16.mxu0 0
      %2332 = vmatmul.mubr.bf16.gmra.mrb[0].mxu0 %v1553
      %v2333 = vpop.f32.mrb[0].mxu0
      %v2334 = vadd.f32 %v1789, %v2333
      %v2335 = vpop.f32.mrb[0].mxu0
      %v2336 = vpop.f32.mrb[0].mxu0
      %v2337 = vadd.f32 %v1792, %v2336
      %v2338 = vpop.f32.mrb[0].mxu0
      %2339 = vmatprep.mubr.bf16.mxu0 0
      %2340 = vmatmul.mubr.bf16.gmra.mrb[0].mxu0 %v1556
      %v2341 = vpop.f32.mrb[0].mxu0
      %v2342 = vadd.f32 %v1797, %v2341
      %v2343 = vpop.f32.mrb[0].mxu0
      %v2344 = vpop.f32.mrb[0].mxu0
      %v2345 = vadd.f32 %v1800, %v2344
      %v2346 = vpop.f32.mrb[0].mxu0
      %2347 = vmatprep.mubr.bf16.mxu0 0
      %2348 = vmatmul.mubr.bf16.gmra.mrb[0].mxu0 %v1559
      %v2349 = vpop.f32.mrb[0].mxu0
      %v2350 = vadd.f32 %v1805, %v2349
      %v2351 = vpop.f32.mrb[0].mxu0
      %v2352 = vpop.f32.mrb[0].mxu0
      %v2353 = vadd.f32 %v1808, %v2352
      %v2354 = vpop.f32.mrb[0].mxu0
      %2355 = vmatprep.mubr.bf16.mxu0 0
      %2356 = vmatmul.mubr.bf16.gmra.mrb[0].mxu0 %v1562
      %v2357 = vpop.f32.mrb[0].mxu0
      %v2358 = vadd.f32 %v1813, %v2357
      %v2359 = vpop.f32.mrb[0].mxu0
      %v2360 = vpop.f32.mrb[0].mxu0
      %v2361 = vadd.f32 %v1816, %v2360
      %v2362 = vpop.f32.mrb[0].mxu0
      %2363 = vmatprep.mubr.bf16.mxu0 0
      %2364 = vmatmul.mubr.bf16.gmra.mrb[0].mxu0 %v1565
      %v2365 = vpop.f32.mrb[0].mxu0
      %v2366 = vadd.f32 %v1821, %v2365
      %v2367 = vpop.f32.mrb[0].mxu0
      %v2368 = vpop.f32.mrb[0].mxu0
      %v2369 = vadd.f32 %v1824, %v2368
      %v2370 = vpop.f32.mrb[0].mxu0
      %2371 = vmatprep.mubr.bf16.mxu0 0
      %2372 = vmatmul.mubr.bf16.gmra.mrb[0].mxu0 %v1568
      %v2373 = vpop.f32.mrb[0].mxu0
      %v2374 = vadd.f32 %v1829, %v2373
      %v2375 = vpop.f32.mrb[0].mxu0
      %v2376 = vpop.f32.mrb[0].mxu0
      %v2377 = vadd.f32 %v1832, %v2376
      %v2378 = vpop.f32.mrb[0].mxu0
      %2379 = vmatprep.mubr.bf16.mxu0 0
      %2380 = vmatmul.mubr.bf16.gmra.mrb[0].mxu0 %v1571
      %v2381 = vpop.f32.mrb[0].mxu0
      %v2382 = vadd.f32 %v1837, %v2381
      %v2383 = vpop.f32.mrb[0].mxu0
      %v2384 = vpop.f32.mrb[0].mxu0
      %v2385 = vadd.f32 %v1840, %v2384
      %v2386 = vpop.f32.mrb[0].mxu0
      %2387 = vmatprep.mubr.bf16.mxu0 0
      %2388 = vmatmul.mubr.bf16.gmra.mrb[0].mxu0 %v1574
      %v2389 = vpop.f32.mrb[0].mxu0
      %v2390 = vadd.f32 %v1845, %v2389
      %v2391 = vpop.f32.mrb[0].mxu0
      %v2392 = vpop.f32.mrb[0].mxu0
      %v2393 = vadd.f32 %v1848, %v2392
      %v2394 = vpop.f32.mrb[0].mxu0
      %2395 = vmatprep.mubr.bf16.mxu0 0
      %2396 = vmatmul.mubr.bf16.gmra.mrb[0].mxu0 %v1577
      %v2397 = vpop.f32.mrb[0].mxu0
      %v2398 = vadd.f32 %v1853, %v2397
      %v2399 = vpop.f32.mrb[0].mxu0
      %v2400 = vpop.f32.mrb[0].mxu0
      %v2401 = vadd.f32 %v1856, %v2400
      %v2402 = vpop.f32.mrb[0].mxu0
      %2403 = vmatprep.mubr.bf16.mxu0 0
      %2404 = vmatmul.mubr.bf16.gmra.mrb[0].mxu0 %v1580
      %v2405 = vpop.f32.mrb[0].mxu0
      %v2406 = vadd.f32 %v1861, %v2405
      %v2407 = vpop.f32.mrb[0].mxu0
      %v2408 = vpop.f32.mrb[0].mxu0
      %v2409 = vadd.f32 %v1864, %v2408
      %v2410 = vpop.f32.mrb[0].mxu0
      %2411 = vmatprep.mubr.bf16.mxu0 0
      %2412 = vmatmul.mubr.bf16.gmra.mrb[0].mxu0 %v1583
      %v2413 = vpop.f32.mrb[0].mxu0
      %v2414 = vadd.f32 %v1869, %v2413
      %v2415 = vpop.f32.mrb[0].mxu0
      %v2416 = vpop.f32.mrb[0].mxu0
      %v2417 = vadd.f32 %v1872, %v2416
      %v2418 = vpop.f32.mrb[0].mxu0
      %2419 = vmatprep.mubr.bf16.mxu0 0
      %2420 = vmatmul.mubr.bf16.gmra.mrb[0].mxu0 %v1586
      %v2421 = vpop.f32.mrb[0].mxu0
      %v2422 = vadd.f32 %v1877, %v2421
      %v2423 = vpop.f32.mrb[0].mxu0
      %v2424 = vpop.f32.mrb[0].mxu0
      %v2425 = vadd.f32 %v1880, %v2424
      %v2426 = vpop.f32.mrb[0].mxu0
      %2427 = vmatprep.mubr.bf16.mxu0 0
      %2428 = vmatmul.mubr.bf16.gmra.mrb[0].mxu0 %v1589
      %v2429 = vpop.f32.mrb[0].mxu0
      %v2430 = vadd.f32 %v1885, %v2429
      %v2431 = vpop.f32.mrb[0].mxu0
      %v2432 = vpop.f32.mrb[0].mxu0
      %v2433 = vadd.f32 %v1888, %v2432
      %v2434 = vpop.f32.mrb[0].mxu0
      %2435 = vmatprep.mubr.bf16.mxu0 0
      %2436 = vmatmul.mubr.bf16.gmra.mrb[0].mxu0 %v1592
      %v2437 = vpop.f32.mrb[0].mxu0
      %v2438 = vadd.f32 %v1893, %v2437
      %v2439 = vpop.f32.mrb[0].mxu0
      %v2440 = vpop.f32.mrb[0].mxu0
      %v2441 = vadd.f32 %v1896, %v2440
      %v2442 = vpop.f32.mrb[0].mxu0
      %2443 = vmatprep.mubr.bf16.mxu0 0
      %2444 = vmatmul.mubr.bf16.gmra.mrb[0].mxu0 %v1595
      %v2445 = vpop.f32.mrb[0].mxu0
      %v2446 = vadd.f32 %v1901, %v2445
      %v2447 = vpop.f32.mrb[0].mxu0
      %v2448 = vpop.f32.mrb[0].mxu0
      %v2449 = vadd.f32 %v1904, %v2448
      %v2450 = vpop.f32.mrb[0].mxu0
      %2451 = vmatprep.mubr.bf16.mxu0 0
      %2452 = vmatmul.mubr.bf16.gmra.mrb[0].mxu0 %v1598
      %v2453 = vpop.f32.mrb[0].mxu0
      %v2454 = vadd.f32 %v1909, %v2453
      %v2455 = vpop.f32.mrb[0].mxu0
      %v2456 = vpop.f32.mrb[0].mxu0
      %v2457 = vadd.f32 %v1912, %v2456
      %v2458 = vpop.f32.mrb[0].mxu0
      %2459 = vmatprep.mubr.bf16.mxu0 0
      %2460 = vmatmul.mubr.bf16.gmra.mrb[0].mxu0 %v1601
      %v2461 = vpop.f32.mrb[0].mxu0
      %v2462 = vadd.f32 %v1917, %v2461
      %v2463 = vpop.f32.mrb[0].mxu0
      %v2464 = vpop.f32.mrb[0].mxu0
      %v2465 = vadd.f32 %v1920, %v2464
      %v2466 = vpop.f32.mrb[0].mxu0
      %2467 = vmatprep.mubr.bf16.mxu0 0
      %2468 = vmatmul.mubr.bf16.gmra.mrb[0].mxu0 %v1604
      %v2469 = vpop.f32.mrb[0].mxu0
      %v2470 = vadd.f32 %v1925, %v2469
      %v2471 = vpop.f32.mrb[0].mxu0
      %v2472 = vpop.f32.mrb[0].mxu0
      %v2473 = vadd.f32 %v1928, %v2472
      %v2474 = vpop.f32.mrb[0].mxu0
      %2475 = vmatprep.mubr.bf16.mxu0 0
      %2476 = vmatmul.mubr.bf16.gmra.mrb[0].mxu0 %v1607
      %v2477 = vpop.f32.mrb[0].mxu0
      %v2478 = vadd.f32 %v1933, %v2477
      %v2479 = vpop.f32.mrb[0].mxu0
      %v2480 = vpop.f32.mrb[0].mxu0
      %v2481 = vadd.f32 %v1936, %v2480
      %v2482 = vpop.f32.mrb[0].mxu0
      %2483 = vmatprep.mubr.bf16.mxu0 0
      %2484 = vmatmul.mubr.bf16.gmra.mrb[0].mxu0 %v1610
      %v2485 = vpop.f32.mrb[0].mxu0
      %v2486 = vadd.f32 %v1941, %v2485
      %v2487 = vpop.f32.mrb[0].mxu0
      %v2488 = vpop.f32.mrb[0].mxu0
      %v2489 = vadd.f32 %v1944, %v2488
      %v2490 = vpop.f32.mrb[0].mxu0
      %2491 = vmatprep.mubr.bf16.mxu0 0
      %2492 = vmatmul.mubr.bf16.gmra.mrb[0].mxu0 %v1613
      %v2493 = vpop.f32.mrb[0].mxu0
      %v2494 = vadd.f32 %v1949, %v2493
      %v2495 = vpop.f32.mrb[0].mxu0
      %v2496 = vpop.f32.mrb[0].mxu0
      %v2497 = vadd.f32 %v1952, %v2496
      %v2498 = vpop.f32.mrb[0].mxu0
      %2499 = vmatprep.mubr.bf16.mxu0 0
      %2500 = vmatmul.mubr.bf16.gmra.mrb[0].mxu0 %v1616
      %v2501 = vpop.f32.mrb[0].mxu0
      %v2502 = vadd.f32 %v1957, %v2501
      %v2503 = vpop.f32.mrb[0].mxu0
      %v2504 = vpop.f32.mrb[0].mxu0
      %v2505 = vadd.f32 %v1960, %v2504
      %v2506 = vpop.f32.mrb[0].mxu0
      %2507 = vmatprep.mubr.bf16.mxu0 0
      %2508 = vmatmul.mubr.bf16.gmra.mrb[0].mxu0 %v1619
      %v2509 = vpop.f32.mrb[0].mxu0
      %v2510 = vadd.f32 %v1965, %v2509
      %v2511 = vpop.f32.mrb[0].mxu0
      %v2512 = vpop.f32.mrb[0].mxu0
      %v2513 = vadd.f32 %v1968, %v2512
      %v2514 = vpop.f32.mrb[0].mxu0
      %2515 = vmatprep.mubr.bf16.mxu0 0
      %2516 = vmatmul.mubr.bf16.gmra.mrb[0].mxu0 %v1622
      %v2517 = vpop.f32.mrb[0].mxu0
      %v2518 = vadd.f32 %v1973, %v2517
      %v2519 = vpop.f32.mrb[0].mxu0
      %v2520 = vpop.f32.mrb[0].mxu0
      %v2521 = vadd.f32 %v1976, %v2520
      %v2522 = vpop.f32.mrb[0].mxu0
      %2523 = vmatprep.mubr.bf16.mxu0 0
      %2524 = vmatmul.mubr.bf16.gmra.mrb[0].mxu0 %v1625
      %v2525 = vpop.f32.mrb[0].mxu0
      %v2526 = vadd.f32 %v1981, %v2525
      %v2527 = vpop.f32.mrb[0].mxu0
      %v2528 = vpop.f32.mrb[0].mxu0
      %v2529 = vadd.f32 %v1984, %v2528
      %v2530 = vpop.f32.mrb[0].mxu0
      %2531 = vmatprep.mubr.bf16.mxu0 0
      %2532 = vmatmul.mubr.bf16.gmra.mrb[0].mxu0 %v1628
      %v2533 = vpop.f32.mrb[0].mxu0
      %v2534 = vadd.f32 %v1989, %v2533
      %v2535 = vpop.f32.mrb[0].mxu0
      %v2536 = vpop.f32.mrb[0].mxu0
      %v2537 = vadd.f32 %v1992, %v2536
      %v2538 = vpop.f32.mrb[0].mxu0
      %2539 = vmatprep.mubr.bf16.mxu0 0
      %2540 = vmatmul.mubr.bf16.gmra.mrb[0].mxu0 %v1631
      %v2541 = vpop.f32.mrb[0].mxu0
      %v2542 = vadd.f32 %v1997, %v2541
      %v2543 = vpop.f32.mrb[0].mxu0
      %v2544 = vpop.f32.mrb[0].mxu0
      %v2545 = vadd.f32 %v2000, %v2544
      %v2546 = vpop.f32.mrb[0].mxu0
      %2547 = vmatprep.mubr.bf16.mxu0 0
      %2548 = vmatmul.mubr.bf16.gmra.mrb[0].mxu0 %v1634
      %v2549 = vpop.f32.mrb[0].mxu0
      %v2550 = vadd.f32 %v2005, %v2549
      %v2551 = vpop.f32.mrb[0].mxu0
      %v2552 = vpop.f32.mrb[0].mxu0
      %v2553 = vadd.f32 %v2008, %v2552
      %v2554 = vpop.f32.mrb[0].mxu0
      %2555 = vmatprep.mubr.bf16.mxu0 0
      %2556 = vmatmul.mubr.bf16.gmra.mrb[0].mxu0 %v1637
      %v2557 = vpop.f32.mrb[0].mxu0
      %v2558 = vadd.f32 %v2013, %v2557
      %v2559 = vpop.f32.mrb[0].mxu0
      %v2560 = vpop.f32.mrb[0].mxu0
      %v2561 = vadd.f32 %v2016, %v2560
      %v2562 = vpop.f32.mrb[0].mxu0
      %2563 = vmatprep.mubr.bf16.mxu0 0
      %2564 = vmatmul.mubr.bf16.gmra.mrb[0].mxu0 %v1640
      %v2565 = vpop.f32.mrb[0].mxu0
      %v2566 = vadd.f32 %v2021, %v2565
      %v2567 = vpop.f32.mrb[0].mxu0
      %v2568 = vpop.f32.mrb[0].mxu0
      %v2569 = vadd.f32 %v2024, %v2568
      %v2570 = vpop.f32.mrb[0].mxu0
      %2571 = vmatprep.mubr.bf16.mxu0 0
      %2572 = vmatmul.mubr.bf16.gmra.mrb[0].mxu0 %v1643
      %v2573 = vpop.f32.mrb[0].mxu0
      %v2574 = vadd.f32 %v2029, %v2573
      %v2575 = vpop.f32.mrb[0].mxu0
      %v2576 = vpop.f32.mrb[0].mxu0
      %v2577 = vadd.f32 %v2032, %v2576
      %v2578 = vpop.f32.mrb[0].mxu0
      %2579 = vmatprep.mubr.bf16.mxu0 0
      %2580 = vmatmul.mubr.bf16.gmra.mrb[0].mxu0 %v1646
      %v2581 = vpop.f32.mrb[0].mxu0
      %v2582 = vadd.f32 %v2037, %v2581
      %v2583 = vpop.f32.mrb[0].mxu0
      %v2584 = vpop.f32.mrb[0].mxu0
      %v2585 = vadd.f32 %v2040, %v2584
      %v2586 = vpop.f32.mrb[0].mxu0
      %2587 = vmatprep.mubr.bf16.mxu0 0
      %2588 = vmatmul.mubr.bf16.gmra.mrb[0].mxu0 %v1649
      %v2589 = vpop.f32.mrb[0].mxu0
      %v2590 = vadd.f32 %v2045, %v2589
      %v2591 = vpop.f32.mrb[0].mxu0
      %v2592 = vpop.f32.mrb[0].mxu0
      %v2593 = vadd.f32 %v2048, %v2592
      %v2594 = vpop.f32.mrb[0].mxu0
      %2595 = vmatprep.mubr.bf16.mxu0 0
      %2596 = vmatmul.mubr.bf16.gmra.mrb[0].mxu0 %v1652
      %v2597 = vpop.f32.mrb[0].mxu0
      %v2598 = vadd.f32 %v2053, %v2597
      %v2599 = vpop.f32.mrb[0].mxu0
      %v2600 = vpop.f32.mrb[0].mxu0
      %v2601 = vadd.f32 %v2056, %v2600
      %v2602 = vpop.f32.mrb[0].mxu0
      %2603 = vmatprep.mubr.bf16.mxu0 0
      %2604 = vmatmul.mubr.bf16.gmra.mrb[0].mxu0 %v1655
      %v2605 = vpop.f32.mrb[0].mxu0
      %v2606 = vadd.f32 %v2061, %v2605
      %v2607 = vpop.f32.mrb[0].mxu0
      %v2608 = vpop.f32.mrb[0].mxu0
      %v2609 = vadd.f32 %v2064, %v2608
      %v2610 = vpop.f32.mrb[0].mxu0
      %2611 = vmatprep.mubr.bf16.mxu0 0
      %2612 = vmatmul.mubr.bf16.gmra.mrb[0].mxu0 %v1658
      %v2613 = vpop.f32.mrb[0].mxu0
      %v2614 = vadd.f32 %v2069, %v2613
      %v2615 = vpop.f32.mrb[0].mxu0
      %v2616 = vpop.f32.mrb[0].mxu0
      %v2617 = vadd.f32 %v2072, %v2616
      %v2618 = vpop.f32.mrb[0].mxu0
      %2619 = vmatprep.mubr.bf16.mxu0 0
      %2620 = vmatmul.mubr.bf16.gmra.mrb[0].mxu0 %v1661
      %v2621 = vpop.f32.mrb[0].mxu0
      %v2622 = vadd.f32 %v2077, %v2621
      %v2623 = vpop.f32.mrb[0].mxu0
      %v2624 = vpop.f32.mrb[0].mxu0
      %v2625 = vadd.f32 %v2080, %v2624
      %v2626 = vpop.f32.mrb[0].mxu0
      %2627 = vmatprep.mubr.bf16.mxu0 0
      %2628 = vmatmul.mubr.bf16.gmra.mrb[0].mxu0 %v1664
      %v2629 = vpop.f32.mrb[0].mxu0
      %v2630 = vadd.f32 %v2085, %v2629
      %v2631 = vpop.f32.mrb[0].mxu0
      %v2632 = vpop.f32.mrb[0].mxu0
      %v2633 = vadd.f32 %v2088, %v2632
      %v2634 = vpop.f32.mrb[0].mxu0
      %2635 = vmatprep.mubr.bf16.mxu0 0
      %2636 = vmatmul.mubr.bf16.gmra.mrb[0].mxu0 %v1667
      %v2637 = vpop.f32.mrb[0].mxu0
      %v2638 = vadd.f32 %v2093, %v2637
      %v2639 = vpop.f32.mrb[0].mxu0
      %v2640 = vpop.f32.mrb[0].mxu0
      %v2641 = vadd.f32 %v2096, %v2640
      %v2642 = vpop.f32.mrb[0].mxu0
      %2643 = vmatprep.mubr.bf16.mxu0 0
      %2644 = vmatmul.mubr.bf16.gmra.mrb[0].mxu0 %v1670
      %v2645 = vpop.f32.mrb[0].mxu0
      %v2646 = vadd.f32 %v2101, %v2645
      %v2647 = vpop.f32.mrb[0].mxu0
      %v2648 = vpop.f32.mrb[0].mxu0
      %v2649 = vadd.f32 %v2104, %v2648
      %v2650 = vpop.f32.mrb[0].mxu0
      %2651 = vmatprep.mubr.bf16.mxu0 0
      %2652 = vmatmul.mubr.bf16.gmra.mrb[0].mxu0 %v1673
      %v2653 = vpop.f32.mrb[0].mxu0
      %v2654 = vadd.f32 %v2109, %v2653
      %v2655 = vpop.f32.mrb[0].mxu0
      %v2656 = vpop.f32.mrb[0].mxu0
      %v2657 = vadd.f32 %v2112, %v2656
      %v2658 = vpop.f32.mrb[0].mxu0
      %2659 = vmatprep.mubr.bf16.mxu0 0
      %2660 = vmatmul.mubr.bf16.gmra.mrb[0].mxu0 %v1676
      %v2661 = vpop.f32.mrb[0].mxu0
      %v2662 = vadd.f32 %v2117, %v2661
      %v2663 = vpop.f32.mrb[0].mxu0
      %v2664 = vpop.f32.mrb[0].mxu0
      %v2665 = vadd.f32 %v2120, %v2664
      %v2666 = vpop.f32.mrb[0].mxu0
      %2667 = vmatprep.mubr.bf16.mxu0 0
      %2668 = vmatmul.mubr.bf16.gmra.mrb[0].mxu0 %v1679
      %v2669 = vpop.f32.mrb[0].mxu0
      %v2670 = vadd.f32 %v2125, %v2669
      %v2671 = vpop.f32.mrb[0].mxu0
      %v2672 = vpop.f32.mrb[0].mxu0
      %v2673 = vadd.f32 %v2128, %v2672
      %v2674 = vpop.f32.mrb[0].mxu0
      %2675 = vmatprep.mubr.bf16.mxu0 0
      %2676 = vmatmul.mubr.bf16.gmra.mrb[0].mxu0 %v1682
      %v2677 = vpop.f32.mrb[0].mxu0
      %v2678 = vadd.f32 %v2133, %v2677
      %v2679 = vpop.f32.mrb[0].mxu0
      %v2680 = vpop.f32.mrb[0].mxu0
      %v2681 = vadd.f32 %v2136, %v2680
      %v2682 = vpop.f32.mrb[0].mxu0
      %2683 = vmatprep.mubr.bf16.mxu0 0
      %2684 = vmatmul.mubr.bf16.gmra.mrb[0].mxu0 %v1685
      %v2685 = vpop.f32.mrb[0].mxu0
      %v2686 = vadd.f32 %v2141, %v2685
      %v2687 = vpop.f32.mrb[0].mxu0
      %v2688 = vpop.f32.mrb[0].mxu0
      %v2689 = vadd.f32 %v2144, %v2688
      %v2690 = vpop.f32.mrb[0].mxu0
      %2691 = vmatprep.mubr.bf16.mxu0 0
      %2692 = vmatmul.mubr.bf16.gmra.mrb[0].mxu0 %v1688
      %v2693 = vpop.f32.mrb[0].mxu0
      %v2694 = vadd.f32 %v2149, %v2693
      %v2695 = vpop.f32.mrb[0].mxu0
      %v2696 = vpop.f32.mrb[0].mxu0
      %v2697 = vadd.f32 %v2152, %v2696
      %v2698 = vpop.f32.mrb[0].mxu0
      %2699 = vmatprep.mubr.bf16.mxu0 0
      %2700 = vmatmul.mubr.bf16.gmra.mrb[0].mxu0 %v1691
      %v2701 = vpop.f32.mrb[0].mxu0
      %v2702 = vadd.f32 %v2157, %v2701
      %v2703 = vpop.f32.mrb[0].mxu0
      %v2704 = vpop.f32.mrb[0].mxu0
      %v2705 = vadd.f32 %v2160, %v2704
      %v2706 = vpop.f32.mrb[0].mxu0
      %2707 = vmatprep.mubr.bf16.mxu0 0
      %2708 = vmatmul.mubr.bf16.gmra.mrb[0].mxu0 %v1694
      %v2709 = vpop.f32.mrb[0].mxu0
      %v2710 = vadd.f32 %v2165, %v2709
      %v2711 = vpop.f32.mrb[0].mxu0
      %v2712 = vpop.f32.mrb[0].mxu0
      %v2713 = vadd.f32 %v2168, %v2712
      %v2714 = vpop.f32.mrb[0].mxu0
      %2715 = vmatprep.mubr.bf16.mxu0 0
      %2716 = vmatmul.mubr.bf16.gmra.mrb[0].mxu0 %v1697
      %v2717 = vpop.f32.mrb[0].mxu0
      %v2718 = vadd.f32 %v2173, %v2717
      %v2719 = vpop.f32.mrb[0].mxu0
      %v2720 = vpop.f32.mrb[0].mxu0
      %v2721 = vadd.f32 %v2176, %v2720
      %v2722 = vpop.f32.mrb[0].mxu0
      %2723 = vmatprep.mubr.bf16.mxu0 0
      %2724 = vmatmul.mubr.bf16.gmra.mrb[0].mxu0 %v1700
      %v2725 = vpop.f32.mrb[0].mxu0
      %v2726 = vadd.f32 %v2181, %v2725
      %v2727 = vpop.f32.mrb[0].mxu0
      %v2728 = vpop.f32.mrb[0].mxu0
      %v2729 = vadd.f32 %v2184, %v2728
      %v2730 = vpop.f32.mrb[0].mxu0
      %2731 = vmatprep.mubr.bf16.mxu0 0
      %2732 = vmatmul.mubr.bf16.gmra.mrb[0].mxu0 %v1703
      %v2733 = vpop.f32.mrb[0].mxu0
      %v2734 = vadd.f32 %v2189, %v2733
      %v2735 = vpop.f32.mrb[0].mxu0
      %v2736 = vpop.f32.mrb[0].mxu0
      %v2737 = vadd.f32 %v2192, %v2736
      %v2738 = vpop.f32.mrb[0].mxu0
      %2739 = vmatprep.mubr.bf16.mxu0 0
      %2740 = vmatmul.mubr.bf16.gmra.mrb[0].mxu0 %v1706
      %v2741 = vpop.f32.mrb[0].mxu0
      %v2742 = vadd.f32 %v2197, %v2741
      %v2743 = vpop.f32.mrb[0].mxu0
      %v2744 = vpop.f32.mrb[0].mxu0
      %v2745 = vadd.f32 %v2200, %v2744
      %v2746 = vpop.f32.mrb[0].mxu0
      %2747 = vmatprep.mubr.bf16.mxu0 0
      %2748 = vmatmul.mubr.bf16.gmra.mrb[0].mxu0 %v1709
      %v2749 = vpop.f32.mrb[0].mxu0
      %v2750 = vadd.f32 %v2205, %v2749
      %v2751 = vpop.f32.mrb[0].mxu0
      %v2752 = vpop.f32.mrb[0].mxu0
      %v2753 = vadd.f32 %v2208, %v2752
      %v2754 = vpop.f32.mrb[0].mxu0
      %2755 = vmatprep.mubr.bf16.mxu0 0
      %2756 = vmatmul.mubr.bf16.gmra.mrb[0].mxu0 %v1712
      %v2757 = vpop.f32.mrb[0].mxu0
      %v2758 = vadd.f32 %v2213, %v2757
      %v2759 = vpop.f32.mrb[0].mxu0
      %v2760 = vpop.f32.mrb[0].mxu0
      %v2761 = vadd.f32 %v2216, %v2760
      %v2762 = vpop.f32.mrb[0].mxu0
      %2763 = vmatprep.mubr.bf16.mxu0 0
      %2764 = vmatmul.mubr.bf16.gmra.mrb[0].mxu0 %v1715
      %v2765 = vpop.f32.mrb[0].mxu0
      %v2766 = vadd.f32 %v2221, %v2765
      %v2767 = vpop.f32.mrb[0].mxu0
      %v2768 = vpop.f32.mrb[0].mxu0
      %v2769 = vadd.f32 %v2224, %v2768
      %v2770 = vpop.f32.mrb[0].mxu0
      %2771 = vmatprep.mubr.bf16.mxu0 0
      %2772 = vmatmul.mubr.bf16.gmra.mrb[0].mxu0 %v1718
      %v2773 = vpop.f32.mrb[0].mxu0
      %v2774 = vadd.f32 %v2229, %v2773
      %v2775 = vpop.f32.mrb[0].mxu0
      %v2776 = vpop.f32.mrb[0].mxu0
      %v2777 = vadd.f32 %v2232, %v2776
      %v2778 = vpop.f32.mrb[0].mxu0
      %2779 = vmatprep.mubr.bf16.mxu0 0
      %2780 = vmatmul.mubr.bf16.gmra.mrb[0].mxu0 %v1721
      %v2781 = vpop.f32.mrb[0].mxu0
      %v2782 = vadd.f32 %v2237, %v2781
      %v2783 = vpop.f32.mrb[0].mxu0
      %v2784 = vpop.f32.mrb[0].mxu0
      %v2785 = vadd.f32 %v2240, %v2784
      %v2786 = vpop.f32.mrb[0].mxu0
      %2787 = vmatprep.mubr.bf16.mxu0 0
      %2788 = vmatmul.mubr.bf16.gmra.mrb[0].mxu0 %v1724
      %v2789 = vpop.f32.mrb[0].mxu0
      %v2790 = vadd.f32 %v2245, %v2789
      %v2791 = vpop.f32.mrb[0].mxu0
      %v2792 = vpop.f32.mrb[0].mxu0
      %v2793 = vadd.f32 %v2248, %v2792
      %v2794 = vpop.f32.mrb[0].mxu0
      %2795 = vmatprep.mubr.bf16.mxu0 0
      %2796 = vmatmul.mubr.bf16.gmra.mrb[0].mxu0 %v1727
      %v2797 = vpop.f32.mrb[0].mxu0
      %v2798 = vadd.f32 %v2253, %v2797
      %v2799 = vpop.f32.mrb[0].mxu0
      %v2800 = vpop.f32.mrb[0].mxu0
      %v2801 = vadd.f32 %v2256, %v2800
      %v2802 = vpop.f32.mrb[0].mxu0
      %2803 = vmatprep.mubr.bf16.mxu0 0
      %2804 = vmatmul.mubr.bf16.gmra.mrb[0].mxu0 %v1730
      %v2805 = vpop.f32.mrb[0].mxu0
      %v2806 = vadd.f32 %v2261, %v2805
      %v2807 = vpop.f32.mrb[0].mxu0
      %v2808 = vpop.f32.mrb[0].mxu0
      %v2809 = vadd.f32 %v2264, %v2808
      %v2810 = vpop.f32.mrb[0].mxu0
      %2811 = vmatprep.mubr.bf16.mxu0 0
      %2812 = vmatmul.mubr.bf16.gmra.mrb[0].mxu0 %v1733
      %v2813 = vpop.f32.mrb[0].mxu0
      %v2814 = vadd.f32 %v2269, %v2813
      %v2815 = vpop.f32.mrb[0].mxu0
      %v2816 = vpop.f32.mrb[0].mxu0
      %v2817 = vadd.f32 %v2272, %v2816
      %v2818 = vpop.f32.mrb[0].mxu0
      %2819 = vmatprep.mubr.bf16.mxu0 0
      %2820 = vmatmul.mubr.bf16.gmra.mrb[0].mxu0 %v1736
      %v2821 = vpop.f32.mrb[0].mxu0
      %v2822 = vadd.f32 %v2277, %v2821
      %v2823 = vpop.f32.mrb[0].mxu0
      %v2824 = vpop.f32.mrb[0].mxu0
      %v2825 = vadd.f32 %v2280, %v2824
      %v2826 = vpop.f32.mrb[0].mxu0
      %2827 = vdwg.mxu0
      %v2828 = vmul.f32 %v2318, 0.5
      %v2829 = vmul.f32 %v2321, 0.5
      %v2830 = vmul.f32 %v2326, 0.5
      %v2831 = vmul.f32 %v2329, 0.5
      %v2832 = vmul.f32 %v2334, 0.5
      %v2833 = vmul.f32 %v2337, 0.5
      %v2834 = vmul.f32 %v2342, 0.5
      %v2835 = vmul.f32 %v2345, 0.5
      %v2836 = vmul.f32 %v2350, 0.5
      %v2837 = vmul.f32 %v2353, 0.5
      %v2838 = vmul.f32 %v2358, 0.5
      %v2839 = vmul.f32 %v2361, 0.5
      %v2840 = vmul.f32 %v2366, 0.5
      %v2841 = vmul.f32 %v2369, 0.5
      %v2842 = vmul.f32 %v2374, 0.5
      %v2843 = vmul.f32 %v2377, 0.5
      %v2844 = vmul.f32 %v2382, 0.5
      %v2845 = vmul.f32 %v2385, 0.5
      %v2846 = vmul.f32 %v2390, 0.5
      %v2847 = vmul.f32 %v2393, 0.5
      %v2848 = vmul.f32 %v2398, 0.5
      %v2849 = vmul.f32 %v2401, 0.5
      %v2850 = vmul.f32 %v2406, 0.5
      %v2851 = vmul.f32 %v2409, 0.5
      %v2852 = vmul.f32 %v2414, 0.5
      %v2853 = vmul.f32 %v2417, 0.5
      %v2854 = vmul.f32 %v2422, 0.5
      %v2855 = vmul.f32 %v2425, 0.5
      %v2856 = vmul.f32 %v2430, 0.5
      %v2857 = vmul.f32 %v2433, 0.5
      %v2858 = vmul.f32 %v2438, 0.5
      %v2859 = vmul.f32 %v2441, 0.5
      %v2860 = vmul.f32 %v2446, 0.5
      %v2861 = vmul.f32 %v2449, 0.5
      %v2862 = vmul.f32 %v2454, 0.5
      %v2863 = vmul.f32 %v2457, 0.5
      %v2864 = vmul.f32 %v2462, 0.5
      %v2865 = vmul.f32 %v2465, 0.5
      %v2866 = vmul.f32 %v2470, 0.5
      %v2867 = vmul.f32 %v2473, 0.5
      %v2868 = vmul.f32 %v2478, 0.5
      %v2869 = vmul.f32 %v2481, 0.5
      %v2870 = vmul.f32 %v2486, 0.5
      %v2871 = vmul.f32 %v2489, 0.5
      %v2872 = vmul.f32 %v2494, 0.5
      %v2873 = vmul.f32 %v2497, 0.5
      %v2874 = vmul.f32 %v2502, 0.5
      %v2875 = vmul.f32 %v2505, 0.5
      %v2876 = vmul.f32 %v2510, 0.5
      %v2877 = vmul.f32 %v2513, 0.5
      %v2878 = vmul.f32 %v2518, 0.5
      %v2879 = vmul.f32 %v2521, 0.5
      %v2880 = vmul.f32 %v2526, 0.5
      %v2881 = vmul.f32 %v2529, 0.5
      %v2882 = vmul.f32 %v2534, 0.5
      %v2883 = vmul.f32 %v2537, 0.5
      %v2884 = vmul.f32 %v2542, 0.5
      %v2885 = vmul.f32 %v2545, 0.5
      %v2886 = vmul.f32 %v2550, 0.5
      %v2887 = vmul.f32 %v2553, 0.5
      %v2888 = vmul.f32 %v2558, 0.5
      %v2889 = vmul.f32 %v2561, 0.5
      %v2890 = vmul.f32 %v2566, 0.5
      %v2891 = vmul.f32 %v2569, 0.5
      %v2892 = vmul.f32 %v2574, 0.5
      %v2893 = vmul.f32 %v2577, 0.5
      %v2894 = vmul.f32 %v2582, 0.5
      %v2895 = vmul.f32 %v2585, 0.5
      %v2896 = vmul.f32 %v2590, 0.5
      %v2897 = vmul.f32 %v2593, 0.5
      %v2898 = vmul.f32 %v2598, 0.5
      %v2899 = vmul.f32 %v2601, 0.5
      %v2900 = vmul.f32 %v2606, 0.5
      %v2901 = vmul.f32 %v2609, 0.5
      %v2902 = vmul.f32 %v2614, 0.5
      %v2903 = vmul.f32 %v2617, 0.5
      %v2904 = vmul.f32 %v2622, 0.5
      %v2905 = vmul.f32 %v2625, 0.5
      %v2906 = vmul.f32 %v2630, 0.5
      %v2907 = vmul.f32 %v2633, 0.5
      %v2908 = vmul.f32 %v2638, 0.5
      %v2909 = vmul.f32 %v2641, 0.5
      %v2910 = vmul.f32 %v2646, 0.5
      %v2911 = vmul.f32 %v2649, 0.5
      %v2912 = vmul.f32 %v2654, 0.5
      %v2913 = vmul.f32 %v2657, 0.5
      %v2914 = vmul.f32 %v2662, 0.5
      %v2915 = vmul.f32 %v2665, 0.5
      %v2916 = vmul.f32 %v2670, 0.5
      %v2917 = vmul.f32 %v2673, 0.5
      %v2918 = vmul.f32 %v2678, 0.5
      %v2919 = vmul.f32 %v2681, 0.5
      %v2920 = vmul.f32 %v2686, 0.5
      %v2921 = vmul.f32 %v2689, 0.5
      %v2922 = vmul.f32 %v2694, 0.5
      %v2923 = vmul.f32 %v2697, 0.5
      %v2924 = vmul.f32 %v2702, 0.5
      %v2925 = vmul.f32 %v2705, 0.5
      %v2926 = vmul.f32 %v2710, 0.5
      %v2927 = vmul.f32 %v2713, 0.5
      %v2928 = vmul.f32 %v2718, 0.5
      %v2929 = vmul.f32 %v2721, 0.5
      %v2930 = vmul.f32 %v2726, 0.5
      %v2931 = vmul.f32 %v2729, 0.5
      %v2932 = vmul.f32 %v2734, 0.5
      %v2933 = vmul.f32 %v2737, 0.5
      %v2934 = vmul.f32 %v2742, 0.5
      %v2935 = vmul.f32 %v2745, 0.5
      %v2936 = vmul.f32 %v2750, 0.5
      %v2937 = vmul.f32 %v2753, 0.5
      %v2938 = vmul.f32 %v2758, 0.5
      %v2939 = vmul.f32 %v2761, 0.5
      %v2940 = vmul.f32 %v2766, 0.5
      %v2941 = vmul.f32 %v2769, 0.5
      %v2942 = vmul.f32 %v2774, 0.5
      %v2943 = vmul.f32 %v2777, 0.5
      %v2944 = vmul.f32 %v2782, 0.5
      %v2945 = vmul.f32 %v2785, 0.5
      %v2946 = vmul.f32 %v2790, 0.5
      %v2947 = vmul.f32 %v2793, 0.5
      %v2948 = vmul.f32 %v2798, 0.5
      %v2949 = vmul.f32 %v2801, 0.5
      %v2950 = vmul.f32 %v2806, 0.5
      %v2951 = vmul.f32 %v2809, 0.5
      %v2952 = vmul.f32 %v2814, 0.5
      %v2953 = vmul.f32 %v2817, 0.5
      %v2954 = vmul.f32 %v2822, 0.5
      %v2955 = vmul.f32 %v2825, 0.5
      %v2956 = vtanh.pop %v2828
      %v2957 = vtanh.pop %v2829
      %v2958 = vtanh.pop %v2830
      %v2959 = vtanh.pop %v2831
      %v2960 = vtanh.pop %v2832
      %v2961 = vtanh.pop %v2833
      %v2962 = vtanh.pop %v2834
      %v2963 = vtanh.pop %v2835
      %v2964 = vtanh.pop %v2836
      %v2965 = vtanh.pop %v2837
      %v2966 = vtanh.pop %v2838
      %v2967 = vtanh.pop %v2839
      %v2968 = vtanh.pop %v2840
      %v2969 = vtanh.pop %v2841
      %v2970 = vtanh.pop %v2842
      %v2971 = vtanh.pop %v2843
      %v2972 = vtanh.pop %v2844
      %v2973 = vtanh.pop %v2845
      %v2974 = vtanh.pop %v2846
      %v2975 = vtanh.pop %v2847
      %v2976 = vtanh.pop %v2848
      %v2977 = vtanh.pop %v2849
      %v2978 = vtanh.pop %v2850
      %v2979 = vtanh.pop %v2851
      %v2980 = vtanh.pop %v2852
      %v2981 = vtanh.pop %v2853
      %v2982 = vtanh.pop %v2854
      %v2983 = vtanh.pop %v2855
      %v2984 = vtanh.pop %v2856
      %v2985 = vtanh.pop %v2857
      %v2986 = vtanh.pop %v2858
      %v2987 = vtanh.pop %v2859
      %v2988 = vtanh.pop %v2860
      %v2989 = vtanh.pop %v2861
      %v2990 = vtanh.pop %v2862
      %v2991 = vtanh.pop %v2863
      %v2992 = vtanh.pop %v2864
      %v2993 = vtanh.pop %v2865
      %v2994 = vtanh.pop %v2866
      %v2995 = vtanh.pop %v2867
      %v2996 = vtanh.pop %v2868
      %v2997 = vtanh.pop %v2869
      %v2998 = vtanh.pop %v2870
      %v2999 = vtanh.pop %v2871
      %v3000 = vtanh.pop %v2872
      %v3001 = vtanh.pop %v2873
      %v3002 = vtanh.pop %v2874
      %v3003 = vtanh.pop %v2875
      %v3004 = vtanh.pop %v2876
      %v3005 = vtanh.pop %v2877
      %v3006 = vtanh.pop %v2878
      %v3007 = vtanh.pop %v2879
      %v3008 = vtanh.pop %v2880
      %v3009 = vtanh.pop %v2881
      %v3010 = vtanh.pop %v2882
      %v3011 = vtanh.pop %v2883
      %v3012 = vtanh.pop %v2884
      %v3013 = vtanh.pop %v2885
      %v3014 = vtanh.pop %v2886
      %v3015 = vtanh.pop %v2887
      %v3016 = vtanh.pop %v2888
      %v3017 = vtanh.pop %v2889
      %v3018 = vtanh.pop %v2890
      %v3019 = vtanh.pop %v2891
      %v3020 = vtanh.pop %v2892
      %v3021 = vtanh.pop %v2893
      %v3022 = vtanh.pop %v2894
      %v3023 = vtanh.pop %v2895
      %v3024 = vtanh.pop %v2896
      %v3025 = vtanh.pop %v2897
      %v3026 = vtanh.pop %v2898
      %v3027 = vtanh.pop %v2899
      %v3028 = vtanh.pop %v2900
      %v3029 = vtanh.pop %v2901
      %v3030 = vtanh.pop %v2902
      %v3031 = vtanh.pop %v2903
      %v3032 = vtanh.pop %v2904
      %v3033 = vtanh.pop %v2905
      %v3034 = vtanh.pop %v2906
      %v3035 = vtanh.pop %v2907
      %v3036 = vtanh.pop %v2908
      %v3037 = vtanh.pop %v2909
      %v3038 = vtanh.pop %v2910
      %v3039 = vtanh.pop %v2911
      %v3040 = vtanh.pop %v2912
      %v3041 = vtanh.pop %v2913
      %v3042 = vtanh.pop %v2914
      %v3043 = vtanh.pop %v2915
      %v3044 = vtanh.pop %v2916
      %v3045 = vtanh.pop %v2917
      %v3046 = vtanh.pop %v2918
      %v3047 = vtanh.pop %v2919
      %v3048 = vtanh.pop %v2920
      %v3049 = vtanh.pop %v2921
      %v3050 = vtanh.pop %v2922
      %v3051 = vtanh.pop %v2923
      %v3052 = vtanh.pop %v2924
      %v3053 = vtanh.pop %v2925
      %v3054 = vtanh.pop %v2926
      %v3055 = vtanh.pop %v2927
      %v3056 = vtanh.pop %v2928
      %v3057 = vtanh.pop %v2929
      %v3058 = vtanh.pop %v2930
      %v3059 = vtanh.pop %v2931
      %v3060 = vtanh.pop %v2932
      %v3061 = vtanh.pop %v2933
      %v3062 = vtanh.pop %v2934
      %v3063 = vtanh.pop %v2935
      %v3064 = vtanh.pop %v2936
      %v3065 = vtanh.pop %v2937
      %v3066 = vtanh.pop %v2938
      %v3067 = vtanh.pop %v2939
      %v3068 = vtanh.pop %v2940
      %v3069 = vtanh.pop %v2941
      %v3070 = vtanh.pop %v2942
      %v3071 = vtanh.pop %v2943
      %v3072 = vtanh.pop %v2944
      %v3073 = vtanh.pop %v2945
      %v3074 = vtanh.pop %v2946
      %v3075 = vtanh.pop %v2947
      %v3076 = vtanh.pop %v2948
      %v3077 = vtanh.pop %v2949
      %v3078 = vtanh.pop %v2950
      %v3079 = vtanh.pop %v2951
      %v3080 = vtanh.pop %v2952
      %v3081 = vtanh.pop %v2953
      %v3082 = vtanh.pop %v2954
      %v3083 = vtanh.pop %v2955
      %v3084 = vadd.f32 %v2956, 1.0
      %v3085 = vadd.f32 %v2957, 1.0
      %v3086 = vadd.f32 %v2958, 1.0
      %v3087 = vadd.f32 %v2959, 1.0
      %v3088 = vadd.f32 %v2960, 1.0
      %v3089 = vadd.f32 %v2961, 1.0
      %v3090 = vadd.f32 %v2962, 1.0
      %v3091 = vadd.f32 %v2963, 1.0
      %v3092 = vadd.f32 %v2964, 1.0
      %v3093 = vadd.f32 %v2965, 1.0
      %v3094 = vadd.f32 %v2966, 1.0
      %v3095 = vadd.f32 %v2967, 1.0
      %v3096 = vadd.f32 %v2968, 1.0
      %v3097 = vadd.f32 %v2969, 1.0
      %v3098 = vadd.f32 %v2970, 1.0
      %v3099 = vadd.f32 %v2971, 1.0
      %v3100 = vadd.f32 %v2972, 1.0
      %v3101 = vadd.f32 %v2973, 1.0
      %v3102 = vadd.f32 %v2974, 1.0
      %v3103 = vadd.f32 %v2975, 1.0
      %v3104 = vadd.f32 %v2976, 1.0
      %v3105 = vadd.f32 %v2977, 1.0
      %v3106 = vadd.f32 %v2978, 1.0
      %v3107 = vadd.f32 %v2979, 1.0
      %v3108 = vadd.f32 %v2980, 1.0
      %v3109 = vadd.f32 %v2981, 1.0
      %v3110 = vadd.f32 %v2982, 1.0
      %v3111 = vadd.f32 %v2983, 1.0
      %v3112 = vadd.f32 %v2984, 1.0
      %v3113 = vadd.f32 %v2985, 1.0
      %v3114 = vadd.f32 %v2986, 1.0
      %v3115 = vadd.f32 %v2987, 1.0
      %v3116 = vadd.f32 %v2988, 1.0
      %v3117 = vadd.f32 %v2989, 1.0
      %v3118 = vadd.f32 %v2990, 1.0
      %v3119 = vadd.f32 %v2991, 1.0
      %v3120 = vadd.f32 %v2992, 1.0
      %v3121 = vadd.f32 %v2993, 1.0
      %v3122 = vadd.f32 %v2994, 1.0
      %v3123 = vadd.f32 %v2995, 1.0
      %v3124 = vadd.f32 %v2996, 1.0
      %v3125 = vadd.f32 %v2997, 1.0
      %v3126 = vadd.f32 %v2998, 1.0
      %v3127 = vadd.f32 %v2999, 1.0
      %v3128 = vadd.f32 %v3000, 1.0
      %v3129 = vadd.f32 %v3001, 1.0
      %v3130 = vadd.f32 %v3002, 1.0
      %v3131 = vadd.f32 %v3003, 1.0
      %v3132 = vadd.f32 %v3004, 1.0
      %v3133 = vadd.f32 %v3005, 1.0
      %v3134 = vadd.f32 %v3006, 1.0
      %v3135 = vadd.f32 %v3007, 1.0
      %v3136 = vadd.f32 %v3008, 1.0
      %v3137 = vadd.f32 %v3009, 1.0
      %v3138 = vadd.f32 %v3010, 1.0
      %v3139 = vadd.f32 %v3011, 1.0
      %v3140 = vadd.f32 %v3012, 1.0
      %v3141 = vadd.f32 %v3013, 1.0
      %v3142 = vadd.f32 %v3014, 1.0
      %v3143 = vadd.f32 %v3015, 1.0
      %v3144 = vadd.f32 %v3016, 1.0
      %v3145 = vadd.f32 %v3017, 1.0
      %v3146 = vadd.f32 %v3018, 1.0
      %v3147 = vadd.f32 %v3019, 1.0
      %v3148 = vadd.f32 %v3020, 1.0
      %v3149 = vadd.f32 %v3021, 1.0
      %v3150 = vadd.f32 %v3022, 1.0
      %v3151 = vadd.f32 %v3023, 1.0
      %v3152 = vadd.f32 %v3024, 1.0
      %v3153 = vadd.f32 %v3025, 1.0
      %v3154 = vadd.f32 %v3026, 1.0
      %v3155 = vadd.f32 %v3027, 1.0
      %v3156 = vadd.f32 %v3028, 1.0
      %v3157 = vadd.f32 %v3029, 1.0
      %v3158 = vadd.f32 %v3030, 1.0
      %v3159 = vadd.f32 %v3031, 1.0
      %v3160 = vadd.f32 %v3032, 1.0
      %v3161 = vadd.f32 %v3033, 1.0
      %v3162 = vadd.f32 %v3034, 1.0
      %v3163 = vadd.f32 %v3035, 1.0
      %v3164 = vadd.f32 %v3036, 1.0
      %v3165 = vadd.f32 %v3037, 1.0
      %v3166 = vadd.f32 %v3038, 1.0
      %v3167 = vadd.f32 %v3039, 1.0
      %v3168 = vadd.f32 %v3040, 1.0
      %v3169 = vadd.f32 %v3041, 1.0
      %v3170 = vadd.f32 %v3042, 1.0
      %v3171 = vadd.f32 %v3043, 1.0
      %v3172 = vadd.f32 %v3044, 1.0
      %v3173 = vadd.f32 %v3045, 1.0
      %v3174 = vadd.f32 %v3046, 1.0
      %v3175 = vadd.f32 %v3047, 1.0
      %v3176 = vadd.f32 %v3048, 1.0
      %v3177 = vadd.f32 %v3049, 1.0
      %v3178 = vadd.f32 %v3050, 1.0
      %v3179 = vadd.f32 %v3051, 1.0
      %v3180 = vadd.f32 %v3052, 1.0
      %v3181 = vadd.f32 %v3053, 1.0
      %v3182 = vadd.f32 %v3054, 1.0
      %v3183 = vadd.f32 %v3055, 1.0
      %v3184 = vadd.f32 %v3056, 1.0
      %v3185 = vadd.f32 %v3057, 1.0
      %v3186 = vadd.f32 %v3058, 1.0
      %v3187 = vadd.f32 %v3059, 1.0
      %v3188 = vadd.f32 %v3060, 1.0
      %v3189 = vadd.f32 %v3061, 1.0
      %v3190 = vadd.f32 %v3062, 1.0
      %v3191 = vadd.f32 %v3063, 1.0
      %v3192 = vadd.f32 %v3064, 1.0
      %v3193 = vadd.f32 %v3065, 1.0
      %v3194 = vadd.f32 %v3066, 1.0
      %v3195 = vadd.f32 %v3067, 1.0
      %v3196 = vadd.f32 %v3068, 1.0
      %v3197 = vadd.f32 %v3069, 1.0
      %v3198 = vadd.f32 %v3070, 1.0
      %v3199 = vadd.f32 %v3071, 1.0
      %v3200 = vadd.f32 %v3072, 1.0
      %v3201 = vadd.f32 %v3073, 1.0
      %v3202 = vadd.f32 %v3074, 1.0
      %v3203 = vadd.f32 %v3075, 1.0
      %v3204 = vadd.f32 %v3076, 1.0
      %v3205 = vadd.f32 %v3077, 1.0
      %v3206 = vadd.f32 %v3078, 1.0
      %v3207 = vadd.f32 %v3079, 1.0
      %v3208 = vadd.f32 %v3080, 1.0
      %v3209 = vadd.f32 %v3081, 1.0
      %v3210 = vadd.f32 %v3082, 1.0
      %v3211 = vadd.f32 %v3083, 1.0
      %v3212 = vmul.f32 %v3084, 0.5
      %v3213 = vmul.f32 %v3085, 0.5
      %v3214 = vmul.f32 %v3086, 0.5
      %v3215 = vmul.f32 %v3087, 0.5
      %v3216 = vmul.f32 %v3088, 0.5
      %v3217 = vmul.f32 %v3089, 0.5
      %v3218 = vmul.f32 %v3090, 0.5
      %v3219 = vmul.f32 %v3091, 0.5
      %v3220 = vmul.f32 %v3092, 0.5
      %v3221 = vmul.f32 %v3093, 0.5
      %v3222 = vmul.f32 %v3094, 0.5
      %v3223 = vmul.f32 %v3095, 0.5
      %v3224 = vmul.f32 %v3096, 0.5
      %v3225 = vmul.f32 %v3097, 0.5
      %v3226 = vmul.f32 %v3098, 0.5
      %v3227 = vmul.f32 %v3099, 0.5
      %v3228 = vmul.f32 %v3100, 0.5
      %v3229 = vmul.f32 %v3101, 0.5
      %v3230 = vmul.f32 %v3102, 0.5
      %v3231 = vmul.f32 %v3103, 0.5
      %v3232 = vmul.f32 %v3104, 0.5
      %v3233 = vmul.f32 %v3105, 0.5
      %v3234 = vmul.f32 %v3106, 0.5
      %v3235 = vmul.f32 %v3107, 0.5
      %v3236 = vmul.f32 %v3108, 0.5
      %v3237 = vmul.f32 %v3109, 0.5
      %v3238 = vmul.f32 %v3110, 0.5
      %v3239 = vmul.f32 %v3111, 0.5
      %v3240 = vmul.f32 %v3112, 0.5
      %v3241 = vmul.f32 %v3113, 0.5
      %v3242 = vmul.f32 %v3114, 0.5
      %v3243 = vmul.f32 %v3115, 0.5
      %v3244 = vmul.f32 %v3116, 0.5
      %v3245 = vmul.f32 %v3117, 0.5
      %v3246 = vmul.f32 %v3118, 0.5
      %v3247 = vmul.f32 %v3119, 0.5
      %v3248 = vmul.f32 %v3120, 0.5
      %v3249 = vmul.f32 %v3121, 0.5
      %v3250 = vmul.f32 %v3122, 0.5
      %v3251 = vmul.f32 %v3123, 0.5
      %v3252 = vmul.f32 %v3124, 0.5
      %v3253 = vmul.f32 %v3125, 0.5
      %v3254 = vmul.f32 %v3126, 0.5
      %v3255 = vmul.f32 %v3127, 0.5
      %v3256 = vmul.f32 %v3128, 0.5
      %v3257 = vmul.f32 %v3129, 0.5
      %v3258 = vmul.f32 %v3130, 0.5
      %v3259 = vmul.f32 %v3131, 0.5
      %v3260 = vmul.f32 %v3132, 0.5
      %v3261 = vmul.f32 %v3133, 0.5
      %v3262 = vmul.f32 %v3134, 0.5
      %v3263 = vmul.f32 %v3135, 0.5
      %v3264 = vmul.f32 %v3136, 0.5
      %v3265 = vmul.f32 %v3137, 0.5
      %v3266 = vmul.f32 %v3138, 0.5
      %v3267 = vmul.f32 %v3139, 0.5
      %v3268 = vmul.f32 %v3140, 0.5
      %v3269 = vmul.f32 %v3141, 0.5
      %v3270 = vmul.f32 %v3142, 0.5
      %v3271 = vmul.f32 %v3143, 0.5
      %v3272 = vmul.f32 %v3144, 0.5
      %v3273 = vmul.f32 %v3145, 0.5
      %v3274 = vmul.f32 %v3146, 0.5
      %v3275 = vmul.f32 %v3147, 0.5
      %v3276 = vmul.f32 %v3148, 0.5
      %v3277 = vmul.f32 %v3149, 0.5
      %v3278 = vmul.f32 %v3150, 0.5
      %v3279 = vmul.f32 %v3151, 0.5
      %v3280 = vmul.f32 %v3152, 0.5
      %v3281 = vmul.f32 %v3153, 0.5
      %v3282 = vmul.f32 %v3154, 0.5
      %v3283 = vmul.f32 %v3155, 0.5
      %v3284 = vmul.f32 %v3156, 0.5
      %v3285 = vmul.f32 %v3157, 0.5
      %v3286 = vmul.f32 %v3158, 0.5
      %v3287 = vmul.f32 %v3159, 0.5
      %v3288 = vmul.f32 %v3160, 0.5
      %v3289 = vmul.f32 %v3161, 0.5
      %v3290 = vmul.f32 %v3162, 0.5
      %v3291 = vmul.f32 %v3163, 0.5
      %v3292 = vmul.f32 %v3164, 0.5
      %v3293 = vmul.f32 %v3165, 0.5
      %v3294 = vmul.f32 %v3166, 0.5
      %v3295 = vmul.f32 %v3167, 0.5
      %v3296 = vmul.f32 %v3168, 0.5
      %v3297 = vmul.f32 %v3169, 0.5
      %v3298 = vmul.f32 %v3170, 0.5
      %v3299 = vmul.f32 %v3171, 0.5
      %v3300 = vmul.f32 %v3172, 0.5
      %v3301 = vmul.f32 %v3173, 0.5
      %v3302 = vmul.f32 %v3174, 0.5
      %v3303 = vmul.f32 %v3175, 0.5
      %v3304 = vmul.f32 %v3176, 0.5
      %v3305 = vmul.f32 %v3177, 0.5
      %v3306 = vmul.f32 %v3178, 0.5
      %v3307 = vmul.f32 %v3179, 0.5
      %v3308 = vmul.f32 %v3180, 0.5
      %v3309 = vmul.f32 %v3181, 0.5
      %v3310 = vmul.f32 %v3182, 0.5
      %v3311 = vmul.f32 %v3183, 0.5
      %v3312 = vmul.f32 %v3184, 0.5
      %v3313 = vmul.f32 %v3185, 0.5
      %v3314 = vmul.f32 %v3186, 0.5
      %v3315 = vmul.f32 %v3187, 0.5
      %v3316 = vmul.f32 %v3188, 0.5
      %v3317 = vmul.f32 %v3189, 0.5
      %v3318 = vmul.f32 %v3190, 0.5
      %v3319 = vmul.f32 %v3191, 0.5
      %v3320 = vmul.f32 %v3192, 0.5
      %v3321 = vmul.f32 %v3193, 0.5
      %v3322 = vmul.f32 %v3194, 0.5
      %v3323 = vmul.f32 %v3195, 0.5
      %v3324 = vmul.f32 %v3196, 0.5
      %v3325 = vmul.f32 %v3197, 0.5
      %v3326 = vmul.f32 %v3198, 0.5
      %v3327 = vmul.f32 %v3199, 0.5
      %v3328 = vmul.f32 %v3200, 0.5
      %v3329 = vmul.f32 %v3201, 0.5
      %v3330 = vmul.f32 %v3202, 0.5
      %v3331 = vmul.f32 %v3203, 0.5
      %v3332 = vmul.f32 %v3204, 0.5
      %v3333 = vmul.f32 %v3205, 0.5
      %v3334 = vmul.f32 %v3206, 0.5
      %v3335 = vmul.f32 %v3207, 0.5
      %v3336 = vmul.f32 %v3208, 0.5
      %v3337 = vmul.f32 %v3209, 0.5
      %v3338 = vmul.f32 %v3210, 0.5
      %v3339 = vmul.f32 %v3211, 0.5
      %v3340 = vpack.c.bf16 %v3213, %v3212
      %v3341 = vpack.c.bf16 %v3215, %v3214
      %v3342 = vpack.c.bf16 %v3217, %v3216
      %v3343 = vpack.c.bf16 %v3219, %v3218
      %v3344 = vpack.c.bf16 %v3221, %v3220
      %v3345 = vpack.c.bf16 %v3223, %v3222
      %v3346 = vpack.c.bf16 %v3225, %v3224
      %v3347 = vpack.c.bf16 %v3227, %v3226
      %v3348 = vpack.c.bf16 %v3229, %v3228
      %v3349 = vpack.c.bf16 %v3231, %v3230
      %v3350 = vpack.c.bf16 %v3233, %v3232
      %v3351 = vpack.c.bf16 %v3235, %v3234
      %v3352 = vpack.c.bf16 %v3237, %v3236
      %v3353 = vpack.c.bf16 %v3239, %v3238
      %v3354 = vpack.c.bf16 %v3241, %v3240
      %v3355 = vpack.c.bf16 %v3243, %v3242
      %v3356 = vpack.c.bf16 %v3245, %v3244
      %v3357 = vpack.c.bf16 %v3247, %v3246
      %v3358 = vpack.c.bf16 %v3249, %v3248
      %v3359 = vpack.c.bf16 %v3251, %v3250
      %v3360 = vpack.c.bf16 %v3253, %v3252
      %v3361 = vpack.c.bf16 %v3255, %v3254
      %v3362 = vpack.c.bf16 %v3257, %v3256
      %v3363 = vpack.c.bf16 %v3259, %v3258
      %v3364 = vpack.c.bf16 %v3261, %v3260
      %v3365 = vpack.c.bf16 %v3263, %v3262
      %v3366 = vpack.c.bf16 %v3265, %v3264
      %v3367 = vpack.c.bf16 %v3267, %v3266
      %v3368 = vpack.c.bf16 %v3269, %v3268
      %v3369 = vpack.c.bf16 %v3271, %v3270
      %v3370 = vpack.c.bf16 %v3273, %v3272
      %v3371 = vpack.c.bf16 %v3275, %v3274
      %v3372 = vpack.c.bf16 %v3277, %v3276
      %v3373 = vpack.c.bf16 %v3279, %v3278
      %v3374 = vpack.c.bf16 %v3281, %v3280
      %v3375 = vpack.c.bf16 %v3283, %v3282
      %v3376 = vpack.c.bf16 %v3285, %v3284
      %v3377 = vpack.c.bf16 %v3287, %v3286
      %v3378 = vpack.c.bf16 %v3289, %v3288
      %v3379 = vpack.c.bf16 %v3291, %v3290
      %v3380 = vpack.c.bf16 %v3293, %v3292
      %v3381 = vpack.c.bf16 %v3295, %v3294
      %v3382 = vpack.c.bf16 %v3297, %v3296
      %v3383 = vpack.c.bf16 %v3299, %v3298
      %v3384 = vpack.c.bf16 %v3301, %v3300
      %v3385 = vpack.c.bf16 %v3303, %v3302
      %v3386 = vpack.c.bf16 %v3305, %v3304
      %v3387 = vpack.c.bf16 %v3307, %v3306
      %v3388 = vpack.c.bf16 %v3309, %v3308
      %v3389 = vpack.c.bf16 %v3311, %v3310
      %v3390 = vpack.c.bf16 %v3313, %v3312
      %v3391 = vpack.c.bf16 %v3315, %v3314
      %v3392 = vpack.c.bf16 %v3317, %v3316
      %v3393 = vpack.c.bf16 %v3319, %v3318
      %v3394 = vpack.c.bf16 %v3321, %v3320
      %v3395 = vpack.c.bf16 %v3323, %v3322
      %v3396 = vpack.c.bf16 %v3325, %v3324
      %v3397 = vpack.c.bf16 %v3327, %v3326
      %v3398 = vpack.c.bf16 %v3329, %v3328
      %v3399 = vpack.c.bf16 %v3331, %v3330
      %v3400 = vpack.c.bf16 %v3333, %v3332
      %v3401 = vpack.c.bf16 %v3335, %v3334
      %v3402 = vpack.c.bf16 %v3337, %v3336
      %v3403 = vpack.c.bf16 %v3339, %v3338
      %v3468 = vunpack.c.l.b16 %v3340
      %v3469 = vunpack.c.h.b16 %v3340
      %v3470 = vunpack.c.l.b16 %v3341
      %v3471 = vunpack.c.h.b16 %v3341
      %v3472 = vunpack.c.l.b16 %v3342
      %v3473 = vunpack.c.h.b16 %v3342
      %v3474 = vunpack.c.l.b16 %v3343
      %v3475 = vunpack.c.h.b16 %v3343
      %v3476 = vunpack.c.l.b16 %v3344
      %v3477 = vunpack.c.h.b16 %v3344
      %v3478 = vunpack.c.l.b16 %v3345
      %v3479 = vunpack.c.h.b16 %v3345
      %v3480 = vunpack.c.l.b16 %v3346
      %v3481 = vunpack.c.h.b16 %v3346
      %v3482 = vunpack.c.l.b16 %v3347
      %v3483 = vunpack.c.h.b16 %v3347
      %v3484 = vunpack.c.l.b16 %v3348
      %v3485 = vunpack.c.h.b16 %v3348
      %v3486 = vunpack.c.l.b16 %v3349
      %v3487 = vunpack.c.h.b16 %v3349
      %v3488 = vunpack.c.l.b16 %v3350
      %v3489 = vunpack.c.h.b16 %v3350
      %v3490 = vunpack.c.l.b16 %v3351
      %v3491 = vunpack.c.h.b16 %v3351
      %v3492 = vunpack.c.l.b16 %v3352
      %v3493 = vunpack.c.h.b16 %v3352
      %v3494 = vunpack.c.l.b16 %v3353
      %v3495 = vunpack.c.h.b16 %v3353
      %v3496 = vunpack.c.l.b16 %v3354
      %v3497 = vunpack.c.h.b16 %v3354
      %v3498 = vunpack.c.l.b16 %v3355
      %v3499 = vunpack.c.h.b16 %v3355
      %v3500 = vunpack.c.l.b16 %v3356
      %v3501 = vunpack.c.h.b16 %v3356
      %v3502 = vunpack.c.l.b16 %v3357
      %v3503 = vunpack.c.h.b16 %v3357
      %v3504 = vunpack.c.l.b16 %v3358
      %v3505 = vunpack.c.h.b16 %v3358
      %v3506 = vunpack.c.l.b16 %v3359
      %v3507 = vunpack.c.h.b16 %v3359
      %v3508 = vunpack.c.l.b16 %v3360
      %v3509 = vunpack.c.h.b16 %v3360
      %v3510 = vunpack.c.l.b16 %v3361
      %v3511 = vunpack.c.h.b16 %v3361
      %v3512 = vunpack.c.l.b16 %v3362
      %v3513 = vunpack.c.h.b16 %v3362
      %v3514 = vunpack.c.l.b16 %v3363
      %v3515 = vunpack.c.h.b16 %v3363
      %v3516 = vunpack.c.l.b16 %v3364
      %v3517 = vunpack.c.h.b16 %v3364
      %v3518 = vunpack.c.l.b16 %v3365
      %v3519 = vunpack.c.h.b16 %v3365
      %v3520 = vunpack.c.l.b16 %v3366
      %v3521 = vunpack.c.h.b16 %v3366
      %v3522 = vunpack.c.l.b16 %v3367
      %v3523 = vunpack.c.h.b16 %v3367
      %v3524 = vunpack.c.l.b16 %v3368
      %v3525 = vunpack.c.h.b16 %v3368
      %v3526 = vunpack.c.l.b16 %v3369
      %v3527 = vunpack.c.h.b16 %v3369
      %v3528 = vunpack.c.l.b16 %v3370
      %v3529 = vunpack.c.h.b16 %v3370
      %v3530 = vunpack.c.l.b16 %v3371
      %v3531 = vunpack.c.h.b16 %v3371
      %v3532 = vunpack.c.l.b16 %v3372
      %v3533 = vunpack.c.h.b16 %v3372
      %v3534 = vunpack.c.l.b16 %v3373
      %v3535 = vunpack.c.h.b16 %v3373
      %v3536 = vunpack.c.l.b16 %v3374
      %v3537 = vunpack.c.h.b16 %v3374
      %v3538 = vunpack.c.l.b16 %v3375
      %v3539 = vunpack.c.h.b16 %v3375
      %v3540 = vunpack.c.l.b16 %v3376
      %v3541 = vunpack.c.h.b16 %v3376
      %v3542 = vunpack.c.l.b16 %v3377
      %v3543 = vunpack.c.h.b16 %v3377
      %v3544 = vunpack.c.l.b16 %v3378
      %v3545 = vunpack.c.h.b16 %v3378
      %v3546 = vunpack.c.l.b16 %v3379
      %v3547 = vunpack.c.h.b16 %v3379
      %v3548 = vunpack.c.l.b16 %v3380
      %v3549 = vunpack.c.h.b16 %v3380
      %v3550 = vunpack.c.l.b16 %v3381
      %v3551 = vunpack.c.h.b16 %v3381
      %v3552 = vunpack.c.l.b16 %v3382
      %v3553 = vunpack.c.h.b16 %v3382
      %v3554 = vunpack.c.l.b16 %v3383
      %v3555 = vunpack.c.h.b16 %v3383
      %v3556 = vunpack.c.l.b16 %v3384
      %v3557 = vunpack.c.h.b16 %v3384
      %v3558 = vunpack.c.l.b16 %v3385
      %v3559 = vunpack.c.h.b16 %v3385
      %v3560 = vunpack.c.l.b16 %v3386
      %v3561 = vunpack.c.h.b16 %v3386
      %v3562 = vunpack.c.l.b16 %v3387
      %v3563 = vunpack.c.h.b16 %v3387
      %v3564 = vunpack.c.l.b16 %v3388
      %v3565 = vunpack.c.h.b16 %v3388
      %v3566 = vunpack.c.l.b16 %v3389
      %v3567 = vunpack.c.h.b16 %v3389
      %v3568 = vunpack.c.l.b16 %v3390
      %v3569 = vunpack.c.h.b16 %v3390
      %v3570 = vunpack.c.l.b16 %v3391
      %v3571 = vunpack.c.h.b16 %v3391
      %v3572 = vunpack.c.l.b16 %v3392
      %v3573 = vunpack.c.h.b16 %v3392
      %v3574 = vunpack.c.l.b16 %v3393
      %v3575 = vunpack.c.h.b16 %v3393
      %v3576 = vunpack.c.l.b16 %v3394
      %v3577 = vunpack.c.h.b16 %v3394
      %v3578 = vunpack.c.l.b16 %v3395
      %v3579 = vunpack.c.h.b16 %v3395
      %v3580 = vunpack.c.l.b16 %v3396
      %v3581 = vunpack.c.h.b16 %v3396
      %v3582 = vunpack.c.l.b16 %v3397
      %v3583 = vunpack.c.h.b16 %v3397
      %v3584 = vunpack.c.l.b16 %v3398
      %v3585 = vunpack.c.h.b16 %v3398
      %v3586 = vunpack.c.l.b16 %v3399
      %v3587 = vunpack.c.h.b16 %v3399
      %v3588 = vunpack.c.l.b16 %v3400
      %v3589 = vunpack.c.h.b16 %v3400
      %v3590 = vunpack.c.l.b16 %v3401
      %v3591 = vunpack.c.h.b16 %v3401
      %v3592 = vunpack.c.l.b16 %v3402
      %v3593 = vunpack.c.h.b16 %v3402
      %v3594 = vunpack.c.l.b16 %v3403
      %v3595 = vunpack.c.h.b16 %v3403
      %v3596 = vpack.c.b16 %v3468, %v3468
      %v3597 = vpack.c.b16 %v3469, %v3469
      %v3598 = vpack.c.b16 %v3470, %v3470
      %v3599 = vpack.c.b16 %v3471, %v3471
      %v3600 = vpack.c.b16 %v3472, %v3472
      %v3601 = vpack.c.b16 %v3473, %v3473
      %v3602 = vpack.c.b16 %v3474, %v3474
      %v3603 = vpack.c.b16 %v3475, %v3475
      %v3604 = vpack.c.b16 %v3476, %v3476
      %v3605 = vpack.c.b16 %v3477, %v3477
      %v3606 = vpack.c.b16 %v3478, %v3478
      %v3607 = vpack.c.b16 %v3479, %v3479
      %v3608 = vpack.c.b16 %v3480, %v3480
      %v3609 = vpack.c.b16 %v3481, %v3481
      %v3610 = vpack.c.b16 %v3482, %v3482
      %v3611 = vpack.c.b16 %v3483, %v3483
      %v3612 = vpack.c.b16 %v3484, %v3484
      %v3613 = vpack.c.b16 %v3485, %v3485
      %v3614 = vpack.c.b16 %v3486, %v3486
      %v3615 = vpack.c.b16 %v3487, %v3487
      %v3616 = vpack.c.b16 %v3488, %v3488
      %v3617 = vpack.c.b16 %v3489, %v3489
      %v3618 = vpack.c.b16 %v3490, %v3490
      %v3619 = vpack.c.b16 %v3491, %v3491
      %v3620 = vpack.c.b16 %v3492, %v3492
      %v3621 = vpack.c.b16 %v3493, %v3493
      %v3622 = vpack.c.b16 %v3494, %v3494
      %v3623 = vpack.c.b16 %v3495, %v3495
      %v3624 = vpack.c.b16 %v3496, %v3496
      %v3625 = vpack.c.b16 %v3497, %v3497
      %v3626 = vpack.c.b16 %v3498, %v3498
      %v3627 = vpack.c.b16 %v3499, %v3499
      %v3628 = vpack.c.b16 %v3500, %v3500
      %v3629 = vpack.c.b16 %v3501, %v3501
      %v3630 = vpack.c.b16 %v3502, %v3502
      %v3631 = vpack.c.b16 %v3503, %v3503
      %v3632 = vpack.c.b16 %v3504, %v3504
      %v3633 = vpack.c.b16 %v3505, %v3505
      %v3634 = vpack.c.b16 %v3506, %v3506
      %v3635 = vpack.c.b16 %v3507, %v3507
      %v3636 = vpack.c.b16 %v3508, %v3508
      %v3637 = vpack.c.b16 %v3509, %v3509
      %v3638 = vpack.c.b16 %v3510, %v3510
      %v3639 = vpack.c.b16 %v3511, %v3511
      %v3640 = vpack.c.b16 %v3512, %v3512
      %v3641 = vpack.c.b16 %v3513, %v3513
      %v3642 = vpack.c.b16 %v3514, %v3514
      %v3643 = vpack.c.b16 %v3515, %v3515
      %v3644 = vpack.c.b16 %v3516, %v3516
      %v3645 = vpack.c.b16 %v3517, %v3517
      %v3646 = vpack.c.b16 %v3518, %v3518
      %v3647 = vpack.c.b16 %v3519, %v3519
      %v3648 = vpack.c.b16 %v3520, %v3520
      %v3649 = vpack.c.b16 %v3521, %v3521
      %v3650 = vpack.c.b16 %v3522, %v3522
      %v3651 = vpack.c.b16 %v3523, %v3523
      %v3652 = vpack.c.b16 %v3524, %v3524
      %v3653 = vpack.c.b16 %v3525, %v3525
      %v3654 = vpack.c.b16 %v3526, %v3526
      %v3655 = vpack.c.b16 %v3527, %v3527
      %v3656 = vpack.c.b16 %v3528, %v3528
      %v3657 = vpack.c.b16 %v3529, %v3529
      %v3658 = vpack.c.b16 %v3530, %v3530
      %v3659 = vpack.c.b16 %v3531, %v3531
      %v3660 = vpack.c.b16 %v3532, %v3532
      %v3661 = vpack.c.b16 %v3533, %v3533
      %v3662 = vpack.c.b16 %v3534, %v3534
      %v3663 = vpack.c.b16 %v3535, %v3535
      %v3664 = vpack.c.b16 %v3536, %v3536
      %v3665 = vpack.c.b16 %v3537, %v3537
      %v3666 = vpack.c.b16 %v3538, %v3538
      %v3667 = vpack.c.b16 %v3539, %v3539
      %v3668 = vpack.c.b16 %v3540, %v3540
      %v3669 = vpack.c.b16 %v3541, %v3541
      %v3670 = vpack.c.b16 %v3542, %v3542
      %v3671 = vpack.c.b16 %v3543, %v3543
      %v3672 = vpack.c.b16 %v3544, %v3544
      %v3673 = vpack.c.b16 %v3545, %v3545
      %v3674 = vpack.c.b16 %v3546, %v3546
      %v3675 = vpack.c.b16 %v3547, %v3547
      %v3676 = vpack.c.b16 %v3548, %v3548
      %v3677 = vpack.c.b16 %v3549, %v3549
      %v3678 = vpack.c.b16 %v3550, %v3550
      %v3679 = vpack.c.b16 %v3551, %v3551
      %v3680 = vpack.c.b16 %v3552, %v3552
      %v3681 = vpack.c.b16 %v3553, %v3553
      %v3682 = vpack.c.b16 %v3554, %v3554
      %v3683 = vpack.c.b16 %v3555, %v3555
      %v3684 = vpack.c.b16 %v3556, %v3556
      %v3685 = vpack.c.b16 %v3557, %v3557
      %v3686 = vpack.c.b16 %v3558, %v3558
      %v3687 = vpack.c.b16 %v3559, %v3559
      %v3688 = vpack.c.b16 %v3560, %v3560
      %v3689 = vpack.c.b16 %v3561, %v3561
      %v3690 = vpack.c.b16 %v3562, %v3562
      %v3691 = vpack.c.b16 %v3563, %v3563
      %v3692 = vpack.c.b16 %v3564, %v3564
      %v3693 = vpack.c.b16 %v3565, %v3565
      %v3694 = vpack.c.b16 %v3566, %v3566
      %v3695 = vpack.c.b16 %v3567, %v3567
      %v3696 = vpack.c.b16 %v3568, %v3568
      %v3697 = vpack.c.b16 %v3569, %v3569
      %v3698 = vpack.c.b16 %v3570, %v3570
      %v3699 = vpack.c.b16 %v3571, %v3571
      %v3700 = vpack.c.b16 %v3572, %v3572
      %v3701 = vpack.c.b16 %v3573, %v3573
      %v3702 = vpack.c.b16 %v3574, %v3574
      %v3703 = vpack.c.b16 %v3575, %v3575
      %v3704 = vpack.c.b16 %v3576, %v3576
      %v3705 = vpack.c.b16 %v3577, %v3577
      %v3706 = vpack.c.b16 %v3578, %v3578
      %v3707 = vpack.c.b16 %v3579, %v3579
      %v3708 = vpack.c.b16 %v3580, %v3580
      %v3709 = vpack.c.b16 %v3581, %v3581
      %v3710 = vpack.c.b16 %v3582, %v3582
      %v3711 = vpack.c.b16 %v3583, %v3583
      %v3712 = vpack.c.b16 %v3584, %v3584
      %v3713 = vpack.c.b16 %v3585, %v3585
      %v3714 = vpack.c.b16 %v3586, %v3586
      %v3715 = vpack.c.b16 %v3587, %v3587
      %v3716 = vpack.c.b16 %v3588, %v3588
      %v3717 = vpack.c.b16 %v3589, %v3589
      %v3718 = vpack.c.b16 %v3590, %v3590
      %v3719 = vpack.c.b16 %v3591, %v3591
      %v3720 = vpack.c.b16 %v3592, %v3592
      %v3721 = vpack.c.b16 %v3593, %v3593
      %v3722 = vpack.c.b16 %v3594, %v3594
      %v3723 = vpack.c.b16 %v3595, %v3595
      %3852 = vst [vmem:[%s175] sm:$0xf] %v3596
      %3853 = vst [vmem:[%s175 + $0x4] sm:$0xf] %v3597
      %3854 = vst [vmem:[%s175 + $0x8] sm:$0xf] %v3598
      %3855 = vst [vmem:[%s175 + $0xc] sm:$0xf] %v3599
      %3856 = vst [vmem:[%s175 + $0x10] sm:$0xf] %v3600
      %3857 = vst [vmem:[%s175 + $0x14] sm:$0xf] %v3601
      %3858 = vst [vmem:[%s175 + $0x18] sm:$0xf] %v3602
      %3859 = vst [vmem:[%s175 + $0x1c] sm:$0xf] %v3603
      %3860 = vst [vmem:[%s175 + $0x20] sm:$0xf] %v3604
      %3861 = vst [vmem:[%s175 + $0x24] sm:$0xf] %v3605
      %3862 = vst [vmem:[%s175 + $0x28] sm:$0xf] %v3606
      %3863 = vst [vmem:[%s175 + $0x2c] sm:$0xf] %v3607
      %3864 = vst [vmem:[%s175 + $0x30] sm:$0xf] %v3608
      %3865 = vst [vmem:[%s175 + $0x34] sm:$0xf] %v3609
      %3866 = vst [vmem:[%s175 + $0x38] sm:$0xf] %v3610
      %3867 = vst [vmem:[%s175 + $0x3c] sm:$0xf] %v3611
      %3868 = vst [vmem:[%s175 + $0x40] sm:$0xf] %v3612
      %3869 = vst [vmem:[%s175 + $0x44] sm:$0xf] %v3613
      %3870 = vst [vmem:[%s175 + $0x48] sm:$0xf] %v3614
      %3871 = vst [vmem:[%s175 + $0x4c] sm:$0xf] %v3615
      %3872 = vst [vmem:[%s175 + $0x50] sm:$0xf] %v3616
      %3873 = vst [vmem:[%s175 + $0x54] sm:$0xf] %v3617
      %3874 = vst [vmem:[%s175 + $0x58] sm:$0xf] %v3618
      %3875 = vst [vmem:[%s175 + $0x5c] sm:$0xf] %v3619
      %3876 = vst [vmem:[%s175 + $0x60] sm:$0xf] %v3620
      %3877 = vst [vmem:[%s175 + $0x64] sm:$0xf] %v3621
      %3878 = vst [vmem:[%s175 + $0x68] sm:$0xf] %v3622
      %3879 = vst [vmem:[%s175 + $0x6c] sm:$0xf] %v3623
      %3880 = vst [vmem:[%s175 + $0x70] sm:$0xf] %v3624
      %3881 = vst [vmem:[%s175 + $0x74] sm:$0xf] %v3625
      %3882 = vst [vmem:[%s175 + $0x78] sm:$0xf] %v3626
      %3883 = vst [vmem:[%s175 + $0x7c] sm:$0xf] %v3627
      %3884 = vst [vmem:[%s175 + $0x80] sm:$0xf] %v3628
      %3885 = vst [vmem:[%s175 + $0x84] sm:$0xf] %v3629
      %3886 = vst [vmem:[%s175 + $0x88] sm:$0xf] %v3630
      %3887 = vst [vmem:[%s175 + $0x8c] sm:$0xf] %v3631
      %3888 = vst [vmem:[%s175 + $0x90] sm:$0xf] %v3632
      %3889 = vst [vmem:[%s175 + $0x94] sm:$0xf] %v3633
      %3890 = vst [vmem:[%s175 + $0x98] sm:$0xf] %v3634
      %3891 = vst [vmem:[%s175 + $0x9c] sm:$0xf] %v3635
      %3892 = vst [vmem:[%s175 + $0xa0] sm:$0xf] %v3636
      %3893 = vst [vmem:[%s175 + $0xa4] sm:$0xf] %v3637
      %3894 = vst [vmem:[%s175 + $0xa8] sm:$0xf] %v3638
      %3895 = vst [vmem:[%s175 + $0xac] sm:$0xf] %v3639
      %3896 = vst [vmem:[%s175 + $0xb0] sm:$0xf] %v3640
      %3897 = vst [vmem:[%s175 + $0xb4] sm:$0xf] %v3641
      %3898 = vst [vmem:[%s175 + $0xb8] sm:$0xf] %v3642
      %3899 = vst [vmem:[%s175 + $0xbc] sm:$0xf] %v3643
      %3900 = vst [vmem:[%s175 + $0xc0] sm:$0xf] %v3644
      %3901 = vst [vmem:[%s175 + $0xc4] sm:$0xf] %v3645
      %3902 = vst [vmem:[%s175 + $0xc8] sm:$0xf] %v3646
      %3903 = vst [vmem:[%s175 + $0xcc] sm:$0xf] %v3647
      %3904 = vst [vmem:[%s175 + $0xd0] sm:$0xf] %v3648
      %3905 = vst [vmem:[%s175 + $0xd4] sm:$0xf] %v3649
      %3906 = vst [vmem:[%s175 + $0xd8] sm:$0xf] %v3650
      %3907 = vst [vmem:[%s175 + $0xdc] sm:$0xf] %v3651
      %3908 = vst [vmem:[%s175 + $0xe0] sm:$0xf] %v3652
      %3909 = vst [vmem:[%s175 + $0xe4] sm:$0xf] %v3653
      %3910 = vst [vmem:[%s175 + $0xe8] sm:$0xf] %v3654
      %3911 = vst [vmem:[%s175 + $0xec] sm:$0xf] %v3655
      %3912 = vst [vmem:[%s175 + $0xf0] sm:$0xf] %v3656
      %3913 = vst [vmem:[%s175 + $0xf4] sm:$0xf] %v3657
      %3914 = vst [vmem:[%s175 + $0xf8] sm:$0xf] %v3658
      %3915 = vst [vmem:[%s175 + $0xfc] sm:$0xf] %v3659
      %3916 = vst [vmem:[%s175 + $0x100] sm:$0xf] %v3660
      %3917 = vst [vmem:[%s175 + $0x104] sm:$0xf] %v3661
      %3918 = vst [vmem:[%s175 + $0x108] sm:$0xf] %v3662
      %3919 = vst [vmem:[%s175 + $0x10c] sm:$0xf] %v3663
      %3920 = vst [vmem:[%s175 + $0x110] sm:$0xf] %v3664
      %3921 = vst [vmem:[%s175 + $0x114] sm:$0xf] %v3665
      %3922 = vst [vmem:[%s175 + $0x118] sm:$0xf] %v3666
      %3923 = vst [vmem:[%s175 + $0x11c] sm:$0xf] %v3667
      %3924 = vst [vmem:[%s175 + $0x120] sm:$0xf] %v3668
      %3925 = vst [vmem:[%s175 + $0x124] sm:$0xf] %v3669
      %3926 = vst [vmem:[%s175 + $0x128] sm:$0xf] %v3670
      %3927 = vst [vmem:[%s175 + $0x12c] sm:$0xf] %v3671
      %3928 = vst [vmem:[%s175 + $0x130] sm:$0xf] %v3672
      %3929 = vst [vmem:[%s175 + $0x134] sm:$0xf] %v3673
      %3930 = vst [vmem:[%s175 + $0x138] sm:$0xf] %v3674
      %3931 = vst [vmem:[%s175 + $0x13c] sm:$0xf] %v3675
      %3932 = vst [vmem:[%s175 + $0x140] sm:$0xf] %v3676
      %3933 = vst [vmem:[%s175 + $0x144] sm:$0xf] %v3677
      %3934 = vst [vmem:[%s175 + $0x148] sm:$0xf] %v3678
      %3935 = vst [vmem:[%s175 + $0x14c] sm:$0xf] %v3679
      %3936 = vst [vmem:[%s175 + $0x150] sm:$0xf] %v3680
      %3937 = vst [vmem:[%s175 + $0x154] sm:$0xf] %v3681
      %3938 = vst [vmem:[%s175 + $0x158] sm:$0xf] %v3682
      %3939 = vst [vmem:[%s175 + $0x15c] sm:$0xf] %v3683
      %3940 = vst [vmem:[%s175 + $0x160] sm:$0xf] %v3684
      %3941 = vst [vmem:[%s175 + $0x164] sm:$0xf] %v3685
      %3942 = vst [vmem:[%s175 + $0x168] sm:$0xf] %v3686
      %3943 = vst [vmem:[%s175 + $0x16c] sm:$0xf] %v3687
      %3944 = vst [vmem:[%s175 + $0x170] sm:$0xf] %v3688
      %3945 = vst [vmem:[%s175 + $0x174] sm:$0xf] %v3689
      %3946 = vst [vmem:[%s175 + $0x178] sm:$0xf] %v3690
      %3947 = vst [vmem:[%s175 + $0x17c] sm:$0xf] %v3691
      %3948 = vst [vmem:[%s175 + $0x180] sm:$0xf] %v3692
      %3949 = vst [vmem:[%s175 + $0x184] sm:$0xf] %v3693
      %3950 = vst [vmem:[%s175 + $0x188] sm:$0xf] %v3694
      %3951 = vst [vmem:[%s175 + $0x18c] sm:$0xf] %v3695
      %3952 = vst [vmem:[%s175 + $0x190] sm:$0xf] %v3696
      %3953 = vst [vmem:[%s175 + $0x194] sm:$0xf] %v3697
      %3954 = vst [vmem:[%s175 + $0x198] sm:$0xf] %v3698
      %3955 = vst [vmem:[%s175 + $0x19c] sm:$0xf] %v3699
      %3956 = vst [vmem:[%s175 + $0x1a0] sm:$0xf] %v3700
      %3957 = vst [vmem:[%s175 + $0x1a4] sm:$0xf] %v3701
      %3958 = vst [vmem:[%s175 + $0x1a8] sm:$0xf] %v3702
      %3959 = vst [vmem:[%s175 + $0x1ac] sm:$0xf] %v3703
      %3960 = vst [vmem:[%s175 + $0x1b0] sm:$0xf] %v3704
      %3961 = vst [vmem:[%s175 + $0x1b4] sm:$0xf] %v3705
      %3962 = vst [vmem:[%s175 + $0x1b8] sm:$0xf] %v3706
      %3963 = vst [vmem:[%s175 + $0x1bc] sm:$0xf] %v3707
      %3964 = vst [vmem:[%s175 + $0x1c0] sm:$0xf] %v3708
      %3965 = vst [vmem:[%s175 + $0x1c4] sm:$0xf] %v3709
      %3966 = vst [vmem:[%s175 + $0x1c8] sm:$0xf] %v3710
      %3967 = vst [vmem:[%s175 + $0x1cc] sm:$0xf] %v3711
      %3968 = vst [vmem:[%s175 + $0x1d0] sm:$0xf] %v3712
      %3969 = vst [vmem:[%s175 + $0x1d4] sm:$0xf] %v3713
      %3970 = vst [vmem:[%s175 + $0x1d8] sm:$0xf] %v3714
      %3971 = vst [vmem:[%s175 + $0x1dc] sm:$0xf] %v3715
      %3972 = vst [vmem:[%s175 + $0x1e0] sm:$0xf] %v3716
      %3973 = vst [vmem:[%s175 + $0x1e4] sm:$0xf] %v3717
      %3974 = vst [vmem:[%s175 + $0x1e8] sm:$0xf] %v3718
      %3975 = vst [vmem:[%s175 + $0x1ec] sm:$0xf] %v3719
      %3976 = vst [vmem:[%s175 + $0x1f0] sm:$0xf] %v3720
      %3977 = vst [vmem:[%s175 + $0x1f4] sm:$0xf] %v3721
      %3978 = vst [vmem:[%s175 + $0x1f8] sm:$0xf] %v3722
      %3979 = vst [vmem:[%s175 + $0x1fc] sm:$0xf] %v3723
      %s3980 = smul.u32 128, %s14
      %p3981 = scmp.lt.s32.totalorder %s3980, 255
      %s3982 = scalar_select %p3981, %s3980, 255
      %s3983 = smul.addr %s3982, 4
      %s3984 = scalar_lea.vmem %s3, %s3983
      // Predicated region
      $region33: #{autoencoder_forward.8} parent=31 // pred_check
        %p3985 = pneg %p100
      $region34: #{autoencoder_forward.8} parent=31 // pred_check_branch
        %3987 = sbr.rel (%p3985) target = $region36
      $region35: #{autoencoder_forward.8} parent=31 // pred_region
        %s3988 = smul.u32 128, %s14
      $region36: #{autoencoder_forward.8} parent=31 // pred_fallthru
        _
    $region32: #{autoencoder_forward.8} parent=5 // pred_fallthru
      _
    %p3989 = scmp.le.s32.totalorder 2, %s9
    // Predicated region
    $region37: #{autoencoder_forward.8} parent=5 // pred_check
      %p3990 = pneg %p3989
    $region38: #{autoencoder_forward.8} parent=5 // pred_check_branch
      %3992 = sbr.rel (%p3990) target = $region40
    $region39: #{autoencoder_forward.8} parent=5 // pred_region
      %s3993 = ssub.s32 %s9, 2
      // Predicated region
      $region41: #{autoencoder_forward.8} parent=39 // pred_check
        %p3994 = pneg %p106
      $region42: #{autoencoder_forward.8} parent=39 // pred_check_branch
        %3996 = sbr.rel (%p3994) target = $region44
      $region43: #{autoencoder_forward.8} parent=39 // pred_region
        %s3997 = smul.u32 128, %s15
        %p3998 = scmp.lt.s32.totalorder %s3997, 255
        %s3999 = scalar_select %p3998, %s3997, 255
        %s4000 = smul.addr %s3999, 4
        %s4001 = scalar_lea.vmem %s3, %s4000
      $region44: #{autoencoder_forward.8} parent=39 // pred_fallthru
        _
    $region40: #{autoencoder_forward.8} parent=5 // pred_fallthru
      _
  $region6: #{autoencoder_forward.8} parent=0 // loop_footer
    %s13 = sadd.s32 1, %s9
  $region7: #{autoencoder_forward.8} parent=0 // loop_footer_branch
    %8 = sbr.rel target = $region3
  $region8: #{autoencoder_forward.8} parent=0 // loop_exit
    _

</llo_original>
